<compile_context>
chip_gen: v7x
topology: tpu7x:2x2x1
jax: 0.10.0
libtpu: 0.0.40
codegen_flags: <defaults>
</compile_context>

<pallas_src>
import numpy as np

import jax
import jax.numpy as jnp
from jax.experimental import pallas as pl
from jax.experimental.pallas import tpu as pltpu

LANE = 128        # TPU lane width: every channel dim is padded to this
_BN_EPS = 1e-5


# ----------------------------------------------------------------------------
# host-side constants (static shapes -> numpy, baked into the program)
# ----------------------------------------------------------------------------
def _interp_matrix(out_size, in_size):
    """1-D bilinear interpolation matrix, PyTorch align_corners=True."""
    m = np.zeros((out_size, in_size), np.float32)
    if in_size == 1:
        m[:, 0] = 1.0
        return m
    scale = (in_size - 1) / (out_size - 1)
    for o in range(out_size):
        src = o * scale
        i0 = min(int(np.floor(src)), in_size - 2)
        f = src - i0
        m[o, i0] += 1.0 - f
        m[o, i0 + 1] += f
    return m


def _upsample_halo_matrix(hl, wl, ho, wo):
    """((ho+2)*(wo+2), hl*wl) operator: bilinear x2 upsample of an (hl, wl)
    image written into the centre of a zero 1-pixel halo (= the zero padding
    of the 3x3 conv that follows)."""
    u = np.kron(_interp_matrix(ho, hl), _interp_matrix(wo, wl))  # (ho*wo, hl*wl)
    up = np.zeros((ho + 2, wo + 2, hl * wl), np.float32)
    up[1:ho + 1, 1:wo + 1, :] = u.reshape(ho, wo, hl * wl)
    return up.reshape((ho + 2) * (wo + 2), hl * wl)


def _pad_axis_to(a, axis, size):
    pad = [(0, 0)] * a.ndim
    pad[axis] = (0, size - a.shape[axis])
    return jnp.pad(a, pad)


# ----------------------------------------------------------------------------
# fused forward (transpose=False path)
# ----------------------------------------------------------------------------
@jax.jit
def crop_up_forward(uplayer_nchw, samlayer_nchw, params):
    n, cl, hl, wl = uplayer_nchw.shape
    _, cs, hs, ws = samlayer_nchw.shape
    ho, wo = 2 * hl, 2 * wl
    cmid = params["w1"].shape[-1]
    cout = params["w2"].shape[-1]
    cp = LANE
    assert max(cl, cs, cmid, cout) <= cp

    # center_crop offsets (same formula as the PyTorch module)
    ci = int(round((ho - hs) / 2.0))
    cj = int(round((wo - ws) / 2.0))
    assert 0 <= ci <= ho - hs and 0 <= cj <= wo - ws

    # --- fold conv bias + BatchNorm affine into weights / bias --------------
    s1 = params["bn1_gamma"] / jnp.sqrt(params["bn1_var"] + _BN_EPS)
    w1 = params["w1"] * s1
    b1 = (params["b1"] - params["bn1_mean"]) * s1 + params["bn1_beta"]
    s2 = params["bn2_gamma"] / jnp.sqrt(params["bn2_var"] + _BN_EPS)
    w2 = params["w2"] * s2
    b2 = (params["b2"] - params["bn2_mean"]) * s2 + params["bn2_beta"]

    # --- im2col weight layout, channel dims zero-padded to 128 --------------
    #     row index = (kh*3 + kw) * 128 + cin   (matches in-kernel patches)
    w1k = _pad_axis_to(_pad_axis_to(w1, 2, cp), 3, cp)
    w1k = w1k.reshape(9 * cp, cp).astype(jnp.bfloat16)
    w2ak = _pad_axis_to(_pad_axis_to(w2[:, :, :cmid, :], 2, cp), 3, cp)
    w2ak = w2ak.reshape(9 * cp, cp).astype(jnp.bfloat16)     # cropped-tmp group
    w2bk = _pad_axis_to(_pad_axis_to(w2[:, :, cmid:, :], 2, cp), 3, cp)
    w2bk = w2bk.reshape(9 * cp, cp).astype(jnp.bfloat16)     # skip-connection group
    b1k = _pad_axis_to(b1, 0, cp).reshape(1, cp).astype(jnp.float32)
    b2k = _pad_axis_to(b2, 0, cp).reshape(1, cp).astype(jnp.float32)

    # upsample(+halo) operator baked as a bf16 constant
    upmat = jnp.asarray(_upsample_halo_matrix(hl, wl, ho, wo), jnp.bfloat16)

    # boundary-only layout change: NCHW -> NHWC, channels padded to the lane
    # width, bf16 operands (half the activation DMA bytes).
    up_nhwc = _pad_axis_to(jnp.transpose(uplayer_nchw, (0, 2, 3, 1)), 3, cp)
    up_nhwc = up_nhwc.astype(jnp.bfloat16)
    sam_nhwc = _pad_axis_to(jnp.transpose(samlayer_nchw, (0, 2, 3, 1)), 3, cp)
    sam_nhwc = sam_nhwc.astype(jnp.bfloat16)

    def kernel(up_ref, sam_ref, upmat_ref, w1_ref, b1_ref,
               w2a_ref, w2b_ref, b2_ref, o_ref):
        f32 = jnp.float32
        bf16 = jnp.bfloat16

        # ---- self.block: bilinear x2 upsample (+ conv halo) as one matmul --
        x = up_ref[0].reshape(hl * wl, cp)                          # bf16
        up2p = jnp.dot(upmat_ref[...], x, preferred_element_type=f32)
        up2p = up2p.reshape(ho + 2, wo + 2, cp)                     # halo included

        # ---- self.block: 3x3 conv as ONE im2col matmul + bias + ReLU -------
        cols1 = jnp.concatenate(
            [up2p[kh:kh + ho, kw:kw + wo, :].reshape(ho * wo, cp)
             for kh in range(3) for kw in range(3)], axis=-1)       # (ho*wo, 9*cp)
        tmp = jnp.dot(cols1.astype(bf16), w1_ref[...], preferred_element_type=f32)
        tmp = jnp.maximum(tmp + b1_ref[...], 0.0)                   # (ho*wo, cp)
        tmp = tmp.reshape(ho, wo, cp)

        # ---- center_crop + zero halo for the second conv -------------------
        def pad_hw1(a):   # zero-pad H and W by 1 pixel on each side
            hh, ww, cc = a.shape
            zw = jnp.zeros((hh, 1, cc), a.dtype)
            a = jnp.concatenate([zw, a, zw], axis=1)
            zh = jnp.zeros((1, ww + 2, cc), a.dtype)
            return jnp.concatenate([zh, a, zh], axis=0)

        pad_a = pad_hw1(tmp[ci:ci + hs, cj:cj + ws, :])             # (hs+2, ws+2, cp)
        pad_b = pad_hw1(sam_ref[0].astype(f32))                     # (hs+2, ws+2, cp)

        # ---- self.conv: concat-free; one im2col matmul per channel group ---
        cols_a = jnp.concatenate(
            [pad_a[kh:kh + hs, kw:kw + ws, :].reshape(hs * ws, cp)
             for kh in range(3) for kw in range(3)], axis=-1)       # (hs*ws, 9*cp)
        cols_b = jnp.concatenate(
            [pad_b[kh:kh + hs, kw:kw + ws, :].reshape(hs * ws, cp)
             for kh in range(3) for kw in range(3)], axis=-1)
        acc = jnp.dot(cols_a.astype(bf16), w2a_ref[...], preferred_element_type=f32)
        acc = acc + jnp.dot(cols_b.astype(bf16), w2b_ref[...],
                            preferred_element_type=f32)
        out = jnp.maximum(acc + b2_ref[...], 0.0)                   # (hs*ws, cp)

        # lane-dense (128-wide) output store
        o_ref[0] = out.reshape(hs, ws, cp).astype(o_ref.dtype)

    flops = 2 * n * ((ho + 2) * (wo + 2) * hl * wl * cp   # upsample matmul
                     + ho * wo * 9 * cp * cp              # conv 1
                     + 2 * hs * ws * 9 * cp * cp)         # conv 2 (two groups)
    bytes_accessed = (up_nhwc.size * 2 + sam_nhwc.size * 2 + upmat.size * 2
                      + w1k.size * 2 + w2ak.size * 2 + w2bk.size * 2
                      + b1k.size * 4 + b2k.size * 4
                      + n * hs * ws * cp * 4)

    out = pl.pallas_call(
        kernel,
        out_shape=jax.ShapeDtypeStruct((n, hs, ws, cp), jnp.float32),
        grid=(n,),
        in_specs=[
            pl.BlockSpec((1, hl, wl, cp), lambda i: (i, 0, 0, 0)),
            pl.BlockSpec((1, hs, ws, cp), lambda i: (i, 0, 0, 0)),
            pl.BlockSpec(((ho + 2) * (wo + 2), hl * wl), lambda i: (0, 0)),
            pl.BlockSpec((9 * cp, cp), lambda i: (0, 0)),
            pl.BlockSpec((1, cp), lambda i: (0, 0)),
            pl.BlockSpec((9 * cp, cp), lambda i: (0, 0)),
            pl.BlockSpec((9 * cp, cp), lambda i: (0, 0)),
            pl.BlockSpec((1, cp), lambda i: (0, 0)),
        ],
        out_specs=pl.BlockSpec((1, hs, ws, cp), lambda i: (i, 0, 0, 0)),
        compiler_params=pltpu.CompilerParams(
            dimension_semantics=("parallel",),
            vmem_limit_bytes=32 * 1024 * 1024,
        ),
        cost_estimate=pl.CostEstimate(
            flops=flops, transcendentals=0, bytes_accessed=bytes_accessed),
    )(up_nhwc, sam_nhwc, upmat, w1k, b1k, w2ak, w2bk, b2k)

    # drop the channel padding; back to NCHW at the model boundary only
    return jnp.transpose(out[..., :cout], (0, 3, 1, 2))


# ----------------------------------------------------------------------------
# plain-JAX f32 reference (independent implementation, for correctness check)
# ----------------------------------------------------------------------------
def _upsample_coords(out_size, in_size):
    if in_size == 1:
        idx0 = jnp.zeros((out_size,), jnp.int32)
        return idx0, idx0, jnp.zeros((out_size,), jnp.float32)
    src = jnp.arange(out_size, dtype=jnp.float32) * (in_size - 1) / (out_size - 1)
    i0 = jnp.clip(jnp.floor(src).astype(jnp.int32), 0, in_size - 2)
    return i0, i0 + 1, src - i0.astype(jnp.float32)


def _bilinear_up2_ref(x):   # NHWC, align_corners=True
    _, h, w, _ = x.shape
    r0, r1, rf = _upsample_coords(2 * h, h)
    c0, c1, cf = _upsample_coords(2 * w, w)
    rows = (x[:, r0] * (1.0 - rf)[None, :, None, None]
            + x[:, r1] * rf[None, :, None, None])
    return (rows[:, :, c0] * (1.0 - cf)[None, None, :, None]
            + rows[:, :, c1] * cf[None, None, :, None])


def _conv_bn_relu_ref(x, w, b, gamma, beta, mean, var):
    y = jax.lax.conv_general_dilated(
        x, w, window_strides=(1, 1), padding="SAME",
        dimension_numbers=("NHWC", "HWIO", "NHWC")) + b
    y = (y - mean) / jnp.sqrt(var + _BN_EPS) * gamma + beta
    return jnp.maximum(y, 0.0)


def crop_up_reference(uplayer_nchw, samlayer_nchw, params):
    up = jnp.transpose(uplayer_nchw, (0, 2, 3, 1))
    sam = jnp.transpose(samlayer_nchw, (0, 2, 3, 1))
    tmp = _conv_bn_relu_ref(_bilinear_up2_ref(up), params["w1"], params["b1"],
                            params["bn1_gamma"], params["bn1_beta"],
                            params["bn1_mean"], params["bn1_var"])
    th, tw = sam.shape[1], sam.shape[2]
    i = int(round((tmp.shape[1] - th) / 2.0))
    j = int(round((tmp.shape[2] - tw) / 2.0))
    cat = jnp.concatenate([tmp[:, i:i + th, j:j + tw, :], sam], axis=-1)
    out = _conv_bn_relu_ref(cat, params["w2"], params["b2"],
                            params["bn2_gamma"], params["bn2_beta"],
                            params["bn2_mean"], params["bn2_var"])
    return jnp.transpose(out, (0, 3, 1, 2))


# ----------------------------------------------------------------------------
# parameters (synthetic, deterministic; conv weights HWIO, conv bias included)
# ----------------------------------------------------------------------------
def init_params(key, inchannel_low, inchannel_same, middlechannel, outchannel):
    k = jax.random.split(key, 12)
    cin2 = inchannel_same + middlechannel
    return dict(
        w1=0.1 * jax.random.normal(k[0], (3, 3, inchannel_low, middlechannel), jnp.float32),
        b1=0.05 * jax.random.normal(k[1], (middlechannel,), jnp.float32),
        w2=0.1 * jax.random.normal(k[2], (3, 3, cin2, outchannel), jnp.float32),
        b2=0.05 * jax.random.normal(k[3], (outchannel,), jnp.float32),
        bn1_gamma=1.0 + 0.1 * jax.random.normal(k[4], (middlechannel,), jnp.float32),
        bn1_beta=0.1 * jax.random.normal(k[5], (middlechannel,), jnp.float32),
        bn1_mean=0.1 * jax.random.normal(k[6], (middlechannel,), jnp.float32),
        bn1_var=1.0 + 0.2 * jnp.abs(jax.random.normal(k[7], (middlechannel,), jnp.float32)),
        bn2_gamma=1.0 + 0.1 * jax.random.normal(k[8], (outchannel,), jnp.float32),
        bn2_beta=0.1 * jax.random.normal(k[9], (outchannel,), jnp.float32),
        bn2_mean=0.1 * jax.random.normal(k[10], (outchannel,), jnp.float32),
        bn2_var=1.0 + 0.2 * jnp.abs(jax.random.normal(k[11], (outchannel,), jnp.float32)),
    )


if __name__ == "__main__":
    key = jax.random.PRNGKey(0)
    k_up, k_sam, k_p = jax.random.split(key, 3)

    inchannel_low, inchannel_same = 4, 4
    middlechannel, outchannel = 6, 8

    # uplayer: low-resolution feature map (NCHW); samlayer: skip connection.
    uplayer = jax.random.normal(k_up, (2, inchannel_low, 8, 8), jnp.float32)
    samlayer = jax.random.normal(k_sam, (2, inchannel_same, 12, 12), jnp.float32)
    params = init_params(k_p, inchannel_low, inchannel_same, middlechannel, outchannel)

    out = jax.block_until_ready(crop_up_forward(uplayer, samlayer, params))
    assert out.shape == (2, outchannel, 12, 12), out.shape
    assert bool(jnp.all(jnp.isfinite(out)))

    # correctness vs independent plain-JAX f32 reference (bf16 MXU => loose tol)
    ref = jax.block_until_ready(crop_up_reference(uplayer, samlayer, params))
    assert bool(jnp.allclose(out, ref, atol=5e-2, rtol=5e-2)), \
        float(jnp.max(jnp.abs(out - ref)))

    print("KERNEL_OK")
</pallas_src>

<mosaic_0001>
module attributes {stable_mosaic.version = 11 : i64} {
  func.func @kernel(%arg0: i32, %arg1: memref<1x8x8x128xbf16, #tpu.memory_space<vmem>>, %arg2: memref<1x12x12x128xbf16, #tpu.memory_space<vmem>>, %arg3: memref<324x64xbf16, #tpu.memory_space<vmem>>, %arg4: memref<1152x128xbf16, #tpu.memory_space<vmem>>, %arg5: memref<1x128xf32, #tpu.memory_space<vmem>>, %arg6: memref<1152x128xbf16, #tpu.memory_space<vmem>>, %arg7: memref<1152x128xbf16, #tpu.memory_space<vmem>>, %arg8: memref<1x128xf32, #tpu.memory_space<vmem>>, %arg9: memref<1x12x12x128xf32, #tpu.memory_space<vmem>>) attributes {dimension_semantics = [#tpu.dimension_semantics<parallel>], iteration_bounds = array<i64: 2>, scalar_prefetch = 0 : i64, scratch_operands = 0 : i64, tpu.core_type = #tpu.core_type<tc>, window_params = [{transform_indices = @transform_0, window_bounds = array<i64: 1, 8, 8, 128>}, {transform_indices = @transform_1, window_bounds = array<i64: 1, 12, 12, 128>}, {pipeline_mode = #tpu.pipeline_mode<synchronous>, transform_indices = @transform_2, window_bounds = array<i64: 324, 64>}, {pipeline_mode = #tpu.pipeline_mode<synchronous>, transform_indices = @transform_3, window_bounds = array<i64: 1152, 128>}, {pipeline_mode = #tpu.pipeline_mode<synchronous>, transform_indices = @transform_4, window_bounds = array<i64: 1, 128>}, {pipeline_mode = #tpu.pipeline_mode<synchronous>, transform_indices = @transform_5, window_bounds = array<i64: 1152, 128>}, {pipeline_mode = #tpu.pipeline_mode<synchronous>, transform_indices = @transform_6, window_bounds = array<i64: 1152, 128>}, {pipeline_mode = #tpu.pipeline_mode<synchronous>, transform_indices = @transform_7, window_bounds = array<i64: 1, 128>}, {transform_indices = @transform_8, window_bounds = array<i64: 1, 12, 12, 128>}]} {
    %c0 = arith.constant 0 : index
    %c0_0 = arith.constant 0 : index
    %c0_1 = arith.constant 0 : index
    %c0_2 = arith.constant 0 : index
    %0 = vector.load %arg1[%c0, %c0_0, %c0_1, %c0_2] : memref<1x8x8x128xbf16, #tpu.memory_space<vmem>>, vector<1x8x8x128xbf16>
    %1 = vector.shape_cast %0 : vector<1x8x8x128xbf16> to vector<8x8x128xbf16>
    %2 = vector.shape_cast %1 : vector<8x8x128xbf16> to vector<64x128xbf16>
    %c0_3 = arith.constant 0 : index
    %c0_4 = arith.constant 0 : index
    %3 = vector.load %arg3[%c0_3, %c0_4] : memref<324x64xbf16, #tpu.memory_space<vmem>>, vector<324x64xbf16>
    %cst = arith.constant dense<0.000000e+00> : vector<324x128xf32>
    %4 = tpu.matmul %3, %2, %cst {dimension_numbers = #tpu.dot_dimension_numbers<[1], [0], [0], [1], [0, 0, 1, 1], [], []>} : vector<324x64xbf16>, vector<64x128xbf16>, vector<324x128xf32> -> vector<324x128xf32>
    %5 = vector.shape_cast %4 : vector<324x128xf32> to vector<18x18x128xf32>
    %6 = vector.extract_strided_slice %5 {offsets = [0, 0, 0], sizes = [16, 16, 128], strides = [1, 1, 1]} : vector<18x18x128xf32> to vector<16x16x128xf32>
    %7 = vector.shape_cast %6 : vector<16x16x128xf32> to vector<256x128xf32>
    %8 = vector.extract_strided_slice %5 {offsets = [0, 1, 0], sizes = [16, 16, 128], strides = [1, 1, 1]} : vector<18x18x128xf32> to vector<16x16x128xf32>
    %9 = vector.shape_cast %8 : vector<16x16x128xf32> to vector<256x128xf32>
    %10 = vector.extract_strided_slice %5 {offsets = [0, 2, 0], sizes = [16, 16, 128], strides = [1, 1, 1]} : vector<18x18x128xf32> to vector<16x16x128xf32>
    %11 = vector.shape_cast %10 : vector<16x16x128xf32> to vector<256x128xf32>
    %12 = vector.extract_strided_slice %5 {offsets = [1, 0, 0], sizes = [16, 16, 128], strides = [1, 1, 1]} : vector<18x18x128xf32> to vector<16x16x128xf32>
    %13 = vector.shape_cast %12 : vector<16x16x128xf32> to vector<256x128xf32>
    %14 = vector.extract_strided_slice %5 {offsets = [1, 1, 0], sizes = [16, 16, 128], strides = [1, 1, 1]} : vector<18x18x128xf32> to vector<16x16x128xf32>
    %15 = vector.shape_cast %14 : vector<16x16x128xf32> to vector<256x128xf32>
    %16 = vector.extract_strided_slice %5 {offsets = [1, 2, 0], sizes = [16, 16, 128], strides = [1, 1, 1]} : vector<18x18x128xf32> to vector<16x16x128xf32>
    %17 = vector.shape_cast %16 : vector<16x16x128xf32> to vector<256x128xf32>
    %18 = vector.extract_strided_slice %5 {offsets = [2, 0, 0], sizes = [16, 16, 128], strides = [1, 1, 1]} : vector<18x18x128xf32> to vector<16x16x128xf32>
    %19 = vector.shape_cast %18 : vector<16x16x128xf32> to vector<256x128xf32>
    %20 = vector.extract_strided_slice %5 {offsets = [2, 1, 0], sizes = [16, 16, 128], strides = [1, 1, 1]} : vector<18x18x128xf32> to vector<16x16x128xf32>
    %21 = vector.shape_cast %20 : vector<16x16x128xf32> to vector<256x128xf32>
    %22 = vector.extract_strided_slice %5 {offsets = [2, 2, 0], sizes = [16, 16, 128], strides = [1, 1, 1]} : vector<18x18x128xf32> to vector<16x16x128xf32>
    %23 = vector.shape_cast %22 : vector<16x16x128xf32> to vector<256x128xf32>
    %24 = tpu.concatenate %7, %9, %11, %13, %15, %17, %19, %21, %23 in 1 : vector<256x128xf32>, vector<256x128xf32>, vector<256x128xf32>, vector<256x128xf32>, vector<256x128xf32>, vector<256x128xf32>, vector<256x128xf32>, vector<256x128xf32>, vector<256x128xf32> -> vector<256x1152xf32>
    %25 = arith.truncf %24 : vector<256x1152xf32> to vector<256x1152xbf16>
    %c0_5 = arith.constant 0 : index
    %c0_6 = arith.constant 0 : index
    %26 = vector.load %arg4[%c0_5, %c0_6] : memref<1152x128xbf16, #tpu.memory_space<vmem>>, vector<1152x128xbf16>
    %cst_7 = arith.constant dense<0.000000e+00> : vector<256x128xf32>
    %27 = tpu.matmul %25, %26, %cst_7 {dimension_numbers = #tpu.dot_dimension_numbers<[1], [0], [0], [1], [0, 0, 1, 1], [], []>} : vector<256x1152xbf16>, vector<1152x128xbf16>, vector<256x128xf32> -> vector<256x128xf32>
    %c0_8 = arith.constant 0 : index
    %c0_9 = arith.constant 0 : index
    %28 = vector.load %arg5[%c0_8, %c0_9] : memref<1x128xf32, #tpu.memory_space<vmem>>, vector<1x128xf32>
    %29 = vector.broadcast %28 : vector<1x128xf32> to vector<256x128xf32>
    %30 = arith.addf %27, %29 : vector<256x128xf32>
    %cst_10 = arith.constant 0.000000e+00 : f32
    %31 = vector.broadcast %cst_10 : f32 to vector<256x128xf32>
    %32 = arith.maximumf %30, %31 : vector<256x128xf32>
    %33 = vector.shape_cast %32 : vector<256x128xf32> to vector<16x16x128xf32>
    %34 = vector.extract_strided_slice %33 {offsets = [2, 2, 0], sizes = [12, 12, 128], strides = [1, 1, 1]} : vector<16x16x128xf32> to vector<12x12x128xf32>
    %cst_11 = arith.constant 0.000000e+00 : f32
    %35 = vector.broadcast %cst_11 : f32 to vector<12x1x128xf32>
    %36 = tpu.concatenate %35, %34, %35 in 1 : vector<12x1x128xf32>, vector<12x12x128xf32>, vector<12x1x128xf32> -> vector<12x14x128xf32>
    %cst_12 = arith.constant 0.000000e+00 : f32
    %37 = vector.broadcast %cst_12 : f32 to vector<1x14x128xf32>
    %38 = tpu.concatenate %37, %36, %37 in 0 : vector<1x14x128xf32>, vector<12x14x128xf32>, vector<1x14x128xf32> -> vector<14x14x128xf32>
    %c0_13 = arith.constant 0 : index
    %c0_14 = arith.constant 0 : index
    %c0_15 = arith.constant 0 : index
    %c0_16 = arith.constant 0 : index
    %39 = vector.load %arg2[%c0_13, %c0_14, %c0_15, %c0_16] : memref<1x12x12x128xbf16, #tpu.memory_space<vmem>>, vector<1x12x12x128xbf16>
    %40 = vector.shape_cast %39 : vector<1x12x12x128xbf16> to vector<12x12x128xbf16>
    %41 = arith.extf %40 : vector<12x12x128xbf16> to vector<12x12x128xf32>
    %cst_17 = arith.constant 0.000000e+00 : f32
    %42 = vector.broadcast %cst_17 : f32 to vector<12x1x128xf32>
    %43 = tpu.concatenate %42, %41, %42 in 1 : vector<12x1x128xf32>, vector<12x12x128xf32>, vector<12x1x128xf32> -> vector<12x14x128xf32>
    %cst_18 = arith.constant 0.000000e+00 : f32
    %44 = vector.broadcast %cst_18 : f32 to vector<1x14x128xf32>
    %45 = tpu.concatenate %44, %43, %44 in 0 : vector<1x14x128xf32>, vector<12x14x128xf32>, vector<1x14x128xf32> -> vector<14x14x128xf32>
    %46 = vector.extract_strided_slice %38 {offsets = [0, 0, 0], sizes = [12, 12, 128], strides = [1, 1, 1]} : vector<14x14x128xf32> to vector<12x12x128xf32>
    %47 = vector.shape_cast %46 : vector<12x12x128xf32> to vector<144x128xf32>
    %48 = vector.extract_strided_slice %38 {offsets = [0, 1, 0], sizes = [12, 12, 128], strides = [1, 1, 1]} : vector<14x14x128xf32> to vector<12x12x128xf32>
    %49 = vector.shape_cast %48 : vector<12x12x128xf32> to vector<144x128xf32>
    %50 = vector.extract_strided_slice %38 {offsets = [0, 2, 0], sizes = [12, 12, 128], strides = [1, 1, 1]} : vector<14x14x128xf32> to vector<12x12x128xf32>
    %51 = vector.shape_cast %50 : vector<12x12x128xf32> to vector<144x128xf32>
    %52 = vector.extract_strided_slice %38 {offsets = [1, 0, 0], sizes = [12, 12, 128], strides = [1, 1, 1]} : vector<14x14x128xf32> to vector<12x12x128xf32>
    %53 = vector.shape_cast %52 : vector<12x12x128xf32> to vector<144x128xf32>
    %54 = vector.extract_strided_slice %38 {offsets = [1, 1, 0], sizes = [12, 12, 128], strides = [1, 1, 1]} : vector<14x14x128xf32> to vector<12x12x128xf32>
    %55 = vector.shape_cast %54 : vector<12x12x128xf32> to vector<144x128xf32>
    %56 = vector.extract_strided_slice %38 {offsets = [1, 2, 0], sizes = [12, 12, 128], strides = [1, 1, 1]} : vector<14x14x128xf32> to vector<12x12x128xf32>
    %57 = vector.shape_cast %56 : vector<12x12x128xf32> to vector<144x128xf32>
    %58 = vector.extract_strided_slice %38 {offsets = [2, 0, 0], sizes = [12, 12, 128], strides = [1, 1, 1]} : vector<14x14x128xf32> to vector<12x12x128xf32>
    %59 = vector.shape_cast %58 : vector<12x12x128xf32> to vector<144x128xf32>
    %60 = vector.extract_strided_slice %38 {offsets = [2, 1, 0], sizes = [12, 12, 128], strides = [1, 1, 1]} : vector<14x14x128xf32> to vector<12x12x128xf32>
    %61 = vector.shape_cast %60 : vector<12x12x128xf32> to vector<144x128xf32>
    %62 = vector.extract_strided_slice %38 {offsets = [2, 2, 0], sizes = [12, 12, 128], strides = [1, 1, 1]} : vector<14x14x128xf32> to vector<12x12x128xf32>
    %63 = vector.shape_cast %62 : vector<12x12x128xf32> to vector<144x128xf32>
    %64 = tpu.concatenate %47, %49, %51, %53, %55, %57, %59, %61, %63 in 1 : vector<144x128xf32>, vector<144x128xf32>, vector<144x128xf32>, vector<144x128xf32>, vector<144x128xf32>, vector<144x128xf32>, vector<144x128xf32>, vector<144x128xf32>, vector<144x128xf32> -> vector<144x1152xf32>
    %65 = vector.extract_strided_slice %45 {offsets = [0, 0, 0], sizes = [12, 12, 128], strides = [1, 1, 1]} : vector<14x14x128xf32> to vector<12x12x128xf32>
    %66 = vector.shape_cast %65 : vector<12x12x128xf32> to vector<144x128xf32>
    %67 = vector.extract_strided_slice %45 {offsets = [0, 1, 0], sizes = [12, 12, 128], strides = [1, 1, 1]} : vector<14x14x128xf32> to vector<12x12x128xf32>
    %68 = vector.shape_cast %67 : vector<12x12x128xf32> to vector<144x128xf32>
    %69 = vector.extract_strided_slice %45 {offsets = [0, 2, 0], sizes = [12, 12, 128], strides = [1, 1, 1]} : vector<14x14x128xf32> to vector<12x12x128xf32>
    %70 = vector.shape_cast %69 : vector<12x12x128xf32> to vector<144x128xf32>
    %71 = vector.extract_strided_slice %45 {offsets = [1, 0, 0], sizes = [12, 12, 128], strides = [1, 1, 1]} : vector<14x14x128xf32> to vector<12x12x128xf32>
    %72 = vector.shape_cast %71 : vector<12x12x128xf32> to vector<144x128xf32>
    %73 = vector.extract_strided_slice %45 {offsets = [1, 1, 0], sizes = [12, 12, 128], strides = [1, 1, 1]} : vector<14x14x128xf32> to vector<12x12x128xf32>
    %74 = vector.shape_cast %73 : vector<12x12x128xf32> to vector<144x128xf32>
    %75 = vector.extract_strided_slice %45 {offsets = [1, 2, 0], sizes = [12, 12, 128], strides = [1, 1, 1]} : vector<14x14x128xf32> to vector<12x12x128xf32>
    %76 = vector.shape_cast %75 : vector<12x12x128xf32> to vector<144x128xf32>
    %77 = vector.extract_strided_slice %45 {offsets = [2, 0, 0], sizes = [12, 12, 128], strides = [1, 1, 1]} : vector<14x14x128xf32> to vector<12x12x128xf32>
    %78 = vector.shape_cast %77 : vector<12x12x128xf32> to vector<144x128xf32>
    %79 = vector.extract_strided_slice %45 {offsets = [2, 1, 0], sizes = [12, 12, 128], strides = [1, 1, 1]} : vector<14x14x128xf32> to vector<12x12x128xf32>
    %80 = vector.shape_cast %79 : vector<12x12x128xf32> to vector<144x128xf32>
    %81 = vector.extract_strided_slice %45 {offsets = [2, 2, 0], sizes = [12, 12, 128], strides = [1, 1, 1]} : vector<14x14x128xf32> to vector<12x12x128xf32>
    %82 = vector.shape_cast %81 : vector<12x12x128xf32> to vector<144x128xf32>
    %83 = tpu.concatenate %66, %68, %70, %72, %74, %76, %78, %80, %82 in 1 : vector<144x128xf32>, vector<144x128xf32>, vector<144x128xf32>, vector<144x128xf32>, vector<144x128xf32>, vector<144x128xf32>, vector<144x128xf32>, vector<144x128xf32>, vector<144x128xf32> -> vector<144x1152xf32>
    %84 = arith.truncf %64 : vector<144x1152xf32> to vector<144x1152xbf16>
    %c0_19 = arith.constant 0 : index
    %c0_20 = arith.constant 0 : index
    %85 = vector.load %arg6[%c0_19, %c0_20] : memref<1152x128xbf16, #tpu.memory_space<vmem>>, vector<1152x128xbf16>
    %cst_21 = arith.constant dense<0.000000e+00> : vector<144x128xf32>
    %86 = tpu.matmul %84, %85, %cst_21 {dimension_numbers = #tpu.dot_dimension_numbers<[1], [0], [0], [1], [0, 0, 1, 1], [], []>} : vector<144x1152xbf16>, vector<1152x128xbf16>, vector<144x128xf32> -> vector<144x128xf32>
    %87 = arith.truncf %83 : vector<144x1152xf32> to vector<144x1152xbf16>
    %c0_22 = arith.constant 0 : index
    %c0_23 = arith.constant 0 : index
    %88 = vector.load %arg7[%c0_22, %c0_23] : memref<1152x128xbf16, #tpu.memory_space<vmem>>, vector<1152x128xbf16>
    %cst_24 = arith.constant dense<0.000000e+00> : vector<144x128xf32>
    %89 = tpu.matmul %87, %88, %cst_24 {dimension_numbers = #tpu.dot_dimension_numbers<[1], [0], [0], [1], [0, 0, 1, 1], [], []>} : vector<144x1152xbf16>, vector<1152x128xbf16>, vector<144x128xf32> -> vector<144x128xf32>
    %90 = arith.addf %86, %89 : vector<144x128xf32>
    %c0_25 = arith.constant 0 : index
    %c0_26 = arith.constant 0 : index
    %91 = vector.load %arg8[%c0_25, %c0_26] : memref<1x128xf32, #tpu.memory_space<vmem>>, vector<1x128xf32>
    %92 = vector.broadcast %91 : vector<1x128xf32> to vector<144x128xf32>
    %93 = arith.addf %90, %92 : vector<144x128xf32>
    %cst_27 = arith.constant 0.000000e+00 : f32
    %94 = vector.broadcast %cst_27 : f32 to vector<144x128xf32>
    %95 = arith.maximumf %93, %94 : vector<144x128xf32>
    %96 = vector.shape_cast %95 : vector<144x128xf32> to vector<12x12x128xf32>
    %c0_28 = arith.constant 0 : index
    %c0_29 = arith.constant 0 : index
    %c0_30 = arith.constant 0 : index
    %c0_31 = arith.constant 0 : index
    %97 = vector.load %arg9[%c0_28, %c0_29, %c0_30, %c0_31] : memref<1x12x12x128xf32, #tpu.memory_space<vmem>>, vector<1x12x12x128xf32>
    %98 = vector.shape_cast %97 : vector<1x12x12x128xf32> to vector<12x12x128xf32>
    %99 = vector.shape_cast %96 : vector<12x12x128xf32> to vector<1x12x12x128xf32>
    tpu.vector_store %arg9[%c0_28, %c0_29, %c0_30, %c0_31], %99 {strides = array<i32>} : memref<1x12x12x128xf32, #tpu.memory_space<vmem>>, vector<1x12x12x128xf32>,
    return
  }
  func.func @transform_0(%arg0: i32) -> (i32, i32, i32, i32) {
    %c0_i32 = arith.constant 0 : i32
    %c0_i32_0 = arith.constant 0 : i32
    %c0_i32_1 = arith.constant 0 : i32
    %c0_i32_2 = arith.constant 0 : i32
    return %arg0, %c0_i32, %c0_i32_0, %c0_i32_1 : i32, i32, i32, i32
  }
  func.func @transform_1(%arg0: i32) -> (i32, i32, i32, i32) {
    %c0_i32 = arith.constant 0 : i32
    %c0_i32_0 = arith.constant 0 : i32
    %c0_i32_1 = arith.constant 0 : i32
    %c0_i32_2 = arith.constant 0 : i32
    return %arg0, %c0_i32, %c0_i32_0, %c0_i32_1 : i32, i32, i32, i32
  }
  func.func @transform_2(%arg0: i32) -> (i32, i32) {
    %c0_i32 = arith.constant 0 : i32
    %c0_i32_0 = arith.constant 0 : i32
    %c0_i32_1 = arith.constant 0 : i32
    return %c0_i32, %c0_i32_0 : i32, i32
  }
  func.func @transform_3(%arg0: i32) -> (i32, i32) {
    %c0_i32 = arith.constant 0 : i32
    %c0_i32_0 = arith.constant 0 : i32
    %c0_i32_1 = arith.constant 0 : i32
    return %c0_i32, %c0_i32_0 : i32, i32
  }
  func.func @transform_4(%arg0: i32) -> (i32, i32) {
    %c0_i32 = arith.constant 0 : i32
    %c0_i32_0 = arith.constant 0 : i32
    %c0_i32_1 = arith.constant 0 : i32
    return %c0_i32, %c0_i32_0 : i32, i32
  }
  func.func @transform_5(%arg0: i32) -> (i32, i32) {
    %c0_i32 = arith.constant 0 : i32
    %c0_i32_0 = arith.constant 0 : i32
    %c0_i32_1 = arith.constant 0 : i32
    return %c0_i32, %c0_i32_0 : i32, i32
  }
  func.func @transform_6(%arg0: i32) -> (i32, i32) {
    %c0_i32 = arith.constant 0 : i32
    %c0_i32_0 = arith.constant 0 : i32
    %c0_i32_1 = arith.constant 0 : i32
    return %c0_i32, %c0_i32_0 : i32, i32
  }
  func.func @transform_7(%arg0: i32) -> (i32, i32) {
    %c0_i32 = arith.constant 0 : i32
    %c0_i32_0 = arith.constant 0 : i32
    %c0_i32_1 = arith.constant 0 : i32
    return %c0_i32, %c0_i32_0 : i32, i32
  }
  func.func @transform_8(%arg0: i32) -> (i32, i32, i32, i32) {
    %c0_i32 = arith.constant 0 : i32
    %c0_i32_0 = arith.constant 0 : i32
    %c0_i32_1 = arith.constant 0 : i32
    %c0_i32_2 = arith.constant 0 : i32
    return %arg0, %c0_i32, %c0_i32_0, %c0_i32_1 : i32, i32, i32, i32
  }
}

</mosaic_0001>

<llo_original>
// kernel: crop_up_forward.1
$region0: #{crop_up_forward.1}
  #allocation0 [shape = 'u32[]', space=smem, size = 0x4, offset = 0x4, fixed_abs, tag = 'smem constant byte address 0x4 - core index']
  #allocation1 [shape = 'u32[144,128]{1,0:T(1,128)}', space=vmem, size = 0x12000, scoped, tag = 'internal scratch']
  %s0 = inlined_call_operand.vmem [shape: bf16[2,8,8,128], index: 0, kind: input, shape index: {}]
  %s1 = inlined_call_operand.vmem [shape: bf16[2,12,12,128], index: 1, kind: input, shape index: {}]
  %s2 = inlined_call_operand.vmem [shape: bf16[324,64], index: 2, kind: input, shape index: {}]
  %s3 = inlined_call_operand.vmem [shape: bf16[1152,128], index: 3, kind: input, shape index: {}]
  %s4 = inlined_call_operand.vmem [shape: f32[1,128], index: 4, kind: input, shape index: {}]
  %s5 = inlined_call_operand.vmem [shape: bf16[1152,128], index: 5, kind: input, shape index: {}]
  %s6 = inlined_call_operand.vmem [shape: bf16[1152,128], index: 6, kind: input, shape index: {}]
  %s7 = inlined_call_operand.vmem [shape: f32[1,128], index: 7, kind: input, shape index: {}]
  %s8 = inlined_call_operand.vmem [shape: f32[2,12,12,128], index: 8, kind: output, shape index: {}]
  %s9 = sld [smem:[#allocation0]]
  $region65: #{crop_up_forward.1} parent=0
    _
  %s11 = ssub.s32 1, %s9
  %s12 = scalar_select 0, %s11, %s9
  loop: start=0, step=1, limit=4
  $region2: #{crop_up_forward.1} parent=0 // loop_pre_header
    _
  $region3: #{crop_up_forward.1} parent=0 // loop_header
    %s14 = sphi 0, %s18
    %p15 = scmp.ge.s32.totalorder %s14, 4
    %s24 = sphi 0, %s26
    %s27 = sphi 0, %s24
    %s28 = sphi 0, %s27
    %s44 = sphi 0, %s28
    %s50 = sphi 0, %s52
    %s53 = sphi 0, %s50
    %s54 = sphi 0, %s53
    %s70 = sphi 0, %s54
    %s74 = sphi 0, %s74
    %s76 = sphi 0, %s74
    %s77 = sphi 0, %s76
    %s91 = sphi 0, %s77
    %s95 = sphi 0, %s95
    %s97 = sphi 0, %s95
    %s98 = sphi 0, %s97
    %s112 = sphi 0, %s98
    %s116 = sphi 0, %s116
    %s118 = sphi 0, %s116
    %s119 = sphi 0, %s118
    %s133 = sphi 0, %s119
    %s137 = sphi 0, %s137
    %s139 = sphi 0, %s137
    %s140 = sphi 0, %s139
    %s154 = sphi 0, %s140
    %s158 = sphi 0, %s158
    %s160 = sphi 0, %s158
    %s161 = sphi 0, %s160
    %s175 = sphi 0, %s161
    %s179 = sphi 0, %s179
    %s181 = sphi 0, %s179
    %s182 = sphi 0, %s181
    %s196 = sphi 0, %s182
    %s202 = sphi 0, %s204
    %s205 = sphi 0, %s202
    %s206 = sphi 0, %s205
    %s222 = sphi 0, %s206
  $region4: #{crop_up_forward.1} parent=0 // loop_header_branch
    %17 = sbr.rel (%p15) target = $region8
  $region5: #{crop_up_forward.1} parent=0 // loop_body
    %s19 = ssub.s32 %s14, 1
    %s20 = ssub.s32 %s14, 2
    %s21 = sadd.s32 %s14, 1
    %s22 = ssub.s32 %s14, %s21
    %p23 = scmp.eq.s32.totalorder %s22, 0
    %s25 = sadd.s32 %s24, 1
    %s26 = scalar_select %p23, %s24, %s25
    %p29 = pneg %p23
    %p30 = scmp.eq.s32.totalorder %s14, 1
    %p31 = por %p29, %p30
    %p32 = scmp.ne.s32.totalorder %s24, %s27
    %p33 = scmp.eq.s32.totalorder %s14, 0
    %p34 = por %p32, %p33
    %p35 = scmp.ne.s32.totalorder %s24, %s27
    %p36 = scmp.eq.s32.totalorder %s19, 1
    %p37 = por %p35, %p36
    %p38 = scmp.ne.s32.totalorder %s27, %s28
    %p39 = scmp.eq.s32.totalorder %s19, 0
    %p40 = por %p38, %p39
    %p41 = scmp.ne.s32.totalorder %s27, %s28
    %p42 = scmp.eq.s32.totalorder %s20, 1
    %p43 = por %p41, %p42
    %p45 = scmp.ne.s32.totalorder %s28, %s44
    %p46 = scmp.eq.s32.totalorder %s20, 0
    %p47 = por %p45, %p46
    %s48 = ssub.s32 %s14, %s21
    %p49 = scmp.eq.s32.totalorder %s48, 0
    %s51 = sadd.s32 %s50, 1
    %s52 = scalar_select %p49, %s50, %s51
    %p55 = pneg %p49
    %p56 = scmp.eq.s32.totalorder %s14, 1
    %p57 = por %p55, %p56
    %p58 = scmp.ne.s32.totalorder %s50, %s53
    %p59 = scmp.eq.s32.totalorder %s14, 0
    %p60 = por %p58, %p59
    %p61 = scmp.ne.s32.totalorder %s50, %s53
    %p62 = scmp.eq.s32.totalorder %s19, 1
    %p63 = por %p61, %p62
    %p64 = scmp.ne.s32.totalorder %s53, %s54
    %p65 = scmp.eq.s32.totalorder %s19, 0
    %p66 = por %p64, %p65
    %p67 = scmp.ne.s32.totalorder %s53, %s54
    %p68 = scmp.eq.s32.totalorder %s20, 1
    %p69 = por %p67, %p68
    %p71 = scmp.ne.s32.totalorder %s54, %s70
    %p72 = scmp.eq.s32.totalorder %s20, 0
    %p73 = por %p71, %p72
    %s75 = sadd.s32 %s74, 1
    %p78 = scmp.eq.s32.totalorder %s14, 1
    %p79 = scmp.ne.s32.totalorder %s74, %s76
    %p80 = scmp.eq.s32.totalorder %s14, 0
    %p81 = por %p79, %p80
    %p82 = scmp.ne.s32.totalorder %s74, %s76
    %p83 = scmp.eq.s32.totalorder %s19, 1
    %p84 = por %p82, %p83
    %p85 = scmp.ne.s32.totalorder %s76, %s77
    %p86 = scmp.eq.s32.totalorder %s19, 0
    %p87 = por %p85, %p86
    %p88 = scmp.ne.s32.totalorder %s76, %s77
    %p89 = scmp.eq.s32.totalorder %s20, 1
    %p90 = por %p88, %p89
    %p92 = scmp.ne.s32.totalorder %s77, %s91
    %p93 = scmp.eq.s32.totalorder %s20, 0
    %p94 = por %p92, %p93
    %s96 = sadd.s32 %s95, 1
    %p99 = scmp.eq.s32.totalorder %s14, 1
    %p100 = scmp.ne.s32.totalorder %s95, %s97
    %p101 = scmp.eq.s32.totalorder %s14, 0
    %p102 = por %p100, %p101
    %p103 = scmp.ne.s32.totalorder %s95, %s97
    %p104 = scmp.eq.s32.totalorder %s19, 1
    %p105 = por %p103, %p104
    %p106 = scmp.ne.s32.totalorder %s97, %s98
    %p107 = scmp.eq.s32.totalorder %s19, 0
    %p108 = por %p106, %p107
    %p109 = scmp.ne.s32.totalorder %s97, %s98
    %p110 = scmp.eq.s32.totalorder %s20, 1
    %p111 = por %p109, %p110
    %p113 = scmp.ne.s32.totalorder %s98, %s112
    %p114 = scmp.eq.s32.totalorder %s20, 0
    %p115 = por %p113, %p114
    %s117 = sadd.s32 %s116, 1
    %p120 = scmp.eq.s32.totalorder %s14, 1
    %p121 = scmp.ne.s32.totalorder %s116, %s118
    %p122 = scmp.eq.s32.totalorder %s14, 0
    %p123 = por %p121, %p122
    %p124 = scmp.ne.s32.totalorder %s116, %s118
    %p125 = scmp.eq.s32.totalorder %s19, 1
    %p126 = por %p124, %p125
    %p127 = scmp.ne.s32.totalorder %s118, %s119
    %p128 = scmp.eq.s32.totalorder %s19, 0
    %p129 = por %p127, %p128
    %p130 = scmp.ne.s32.totalorder %s118, %s119
    %p131 = scmp.eq.s32.totalorder %s20, 1
    %p132 = por %p130, %p131
    %p134 = scmp.ne.s32.totalorder %s119, %s133
    %p135 = scmp.eq.s32.totalorder %s20, 0
    %p136 = por %p134, %p135
    %s138 = sadd.s32 %s137, 1
    %p141 = scmp.eq.s32.totalorder %s14, 1
    %p142 = scmp.ne.s32.totalorder %s137, %s139
    %p143 = scmp.eq.s32.totalorder %s14, 0
    %p144 = por %p142, %p143
    %p145 = scmp.ne.s32.totalorder %s137, %s139
    %p146 = scmp.eq.s32.totalorder %s19, 1
    %p147 = por %p145, %p146
    %p148 = scmp.ne.s32.totalorder %s139, %s140
    %p149 = scmp.eq.s32.totalorder %s19, 0
    %p150 = por %p148, %p149
    %p151 = scmp.ne.s32.totalorder %s139, %s140
    %p152 = scmp.eq.s32.totalorder %s20, 1
    %p153 = por %p151, %p152
    %p155 = scmp.ne.s32.totalorder %s140, %s154
    %p156 = scmp.eq.s32.totalorder %s20, 0
    %p157 = por %p155, %p156
    %s159 = sadd.s32 %s158, 1
    %p162 = scmp.eq.s32.totalorder %s14, 1
    %p163 = scmp.ne.s32.totalorder %s158, %s160
    %p164 = scmp.eq.s32.totalorder %s14, 0
    %p165 = por %p163, %p164
    %p166 = scmp.ne.s32.totalorder %s158, %s160
    %p167 = scmp.eq.s32.totalorder %s19, 1
    %p168 = por %p166, %p167
    %p169 = scmp.ne.s32.totalorder %s160, %s161
    %p170 = scmp.eq.s32.totalorder %s19, 0
    %p171 = por %p169, %p170
    %p172 = scmp.ne.s32.totalorder %s160, %s161
    %p173 = scmp.eq.s32.totalorder %s20, 1
    %p174 = por %p172, %p173
    %p176 = scmp.ne.s32.totalorder %s161, %s175
    %p177 = scmp.eq.s32.totalorder %s20, 0
    %p178 = por %p176, %p177
    %s180 = sadd.s32 %s179, 1
    %p183 = scmp.eq.s32.totalorder %s14, 1
    %p184 = scmp.ne.s32.totalorder %s179, %s181
    %p185 = scmp.eq.s32.totalorder %s14, 0
    %p186 = por %p184, %p185
    %p187 = scmp.ne.s32.totalorder %s179, %s181
    %p188 = scmp.eq.s32.totalorder %s19, 1
    %p189 = por %p187, %p188
    %p190 = scmp.ne.s32.totalorder %s181, %s182
    %p191 = scmp.eq.s32.totalorder %s19, 0
    %p192 = por %p190, %p191
    %p193 = scmp.ne.s32.totalorder %s181, %s182
    %p194 = scmp.eq.s32.totalorder %s20, 1
    %p195 = por %p193, %p194
    %p197 = scmp.ne.s32.totalorder %s182, %s196
    %p198 = scmp.eq.s32.totalorder %s20, 0
    %p199 = por %p197, %p198
    %s200 = ssub.s32 %s14, %s21
    %p201 = scmp.eq.s32.totalorder %s200, 0
    %s203 = sadd.s32 %s202, 1
    %s204 = scalar_select %p201, %s202, %s203
    %p207 = pneg %p201
    %p208 = scmp.eq.s32.totalorder %s14, 1
    %p209 = por %p207, %p208
    %p210 = scmp.ne.s32.totalorder %s202, %s205
    %p211 = scmp.eq.s32.totalorder %s14, 0
    %p212 = por %p210, %p211
    %p213 = scmp.ne.s32.totalorder %s202, %s205
    %p214 = scmp.eq.s32.totalorder %s19, 1
    %p215 = por %p213, %p214
    %p216 = scmp.ne.s32.totalorder %s205, %s206
    %p217 = scmp.eq.s32.totalorder %s19, 0
    %p218 = por %p216, %p217
    %p219 = scmp.ne.s32.totalorder %s205, %s206
    %p220 = scmp.eq.s32.totalorder %s20, 1
    %p221 = por %p219, %p220
    %p223 = scmp.ne.s32.totalorder %s206, %s222
    %p224 = scmp.eq.s32.totalorder %s20, 0
    %p225 = por %p223, %p224
    %p226 = scmp.le.s32.totalorder 1, %s14
    %p227 = scmp.lt.s32.totalorder %s14, 3
    %p228 = pnand %p226, %p227
    %p229 = pneg %p228
    // Predicated region
    $region9: #{crop_up_forward.1} parent=5 // pred_check
      _
    $region10: #{crop_up_forward.1} parent=5 // pred_check_branch
      %231 = sbr.rel (%p228) target = $region12
    $region11: #{crop_up_forward.1} parent=5 // pred_region
      %s232 = ssub.s32 %s14, 1
      // Predicated region
      $region13: #{crop_up_forward.1} parent=11 // pred_check
        %p233 = pneg %p87
      $region14: #{crop_up_forward.1} parent=11 // pred_check_branch
        %235 = sbr.rel (%p233) target = $region16
      $region15: #{crop_up_forward.1} parent=11 // pred_region
        _
      $region16: #{crop_up_forward.1} parent=11 // pred_fallthru
        _
      // Predicated region
      $region17: #{crop_up_forward.1} parent=11 // pred_check
        %p236 = pneg %p108
      $region18: #{crop_up_forward.1} parent=11 // pred_check_branch
        %238 = sbr.rel (%p236) target = $region20
      $region19: #{crop_up_forward.1} parent=11 // pred_region
        _
      $region20: #{crop_up_forward.1} parent=11 // pred_fallthru
        _
      // Predicated region
      $region21: #{crop_up_forward.1} parent=11 // pred_check
        %p239 = pneg %p129
      $region22: #{crop_up_forward.1} parent=11 // pred_check_branch
        %241 = sbr.rel (%p239) target = $region24
      $region23: #{crop_up_forward.1} parent=11 // pred_region
        _
      $region24: #{crop_up_forward.1} parent=11 // pred_fallthru
        _
      // Predicated region
      $region25: #{crop_up_forward.1} parent=11 // pred_check
        %p242 = pneg %p150
      $region26: #{crop_up_forward.1} parent=11 // pred_check_branch
        %244 = sbr.rel (%p242) target = $region28
      $region27: #{crop_up_forward.1} parent=11 // pred_region
        _
      $region28: #{crop_up_forward.1} parent=11 // pred_fallthru
        _
      // Predicated region
      $region29: #{crop_up_forward.1} parent=11 // pred_check
        %p245 = pneg %p171
      $region30: #{crop_up_forward.1} parent=11 // pred_check_branch
        %247 = sbr.rel (%p245) target = $region32
      $region31: #{crop_up_forward.1} parent=11 // pred_region
        _
      $region32: #{crop_up_forward.1} parent=11 // pred_fallthru
        _
      // Predicated region
      $region33: #{crop_up_forward.1} parent=11 // pred_check
        %p248 = pneg %p192
      $region34: #{crop_up_forward.1} parent=11 // pred_check_branch
        %250 = sbr.rel (%p248) target = $region36
      $region35: #{crop_up_forward.1} parent=11 // pred_region
        _
      $region36: #{crop_up_forward.1} parent=11 // pred_fallthru
        _
    $region12: #{crop_up_forward.1} parent=5 // pred_fallthru
      _
    %p251 = scmp.lt.s32.totalorder %s14, 2
    // Predicated region
    $region37: #{crop_up_forward.1} parent=5 // pred_check
      %p252 = pneg %p251
    $region38: #{crop_up_forward.1} parent=5 // pred_check_branch
      %254 = sbr.rel (%p252) target = $region40
    $region39: #{crop_up_forward.1} parent=5 // pred_region
      // Predicated region
      $region41: #{crop_up_forward.1} parent=39 // pred_check
        %p255 = pneg %p34
      $region42: #{crop_up_forward.1} parent=39 // pred_check_branch
        %257 = sbr.rel (%p255) target = $region44
      $region43: #{crop_up_forward.1} parent=39 // pred_region
        %p258 = scmp.lt.s32.totalorder %s14, 1
        %s259 = scalar_select %p258, %s14, 1
        %s260 = smul.addr %s259, 8
        %s261 = smul.addr %s260, 4
        %s262 = scalar_lea.vmem %s0, %s261
      $region44: #{crop_up_forward.1} parent=39 // pred_fallthru
        _
      // Predicated region
      $region45: #{crop_up_forward.1} parent=39 // pred_check
        %p263 = pneg %p60
      $region46: #{crop_up_forward.1} parent=39 // pred_check_branch
        %265 = sbr.rel (%p263) target = $region48
      $region47: #{crop_up_forward.1} parent=39 // pred_region
        %p266 = scmp.lt.s32.totalorder %s14, 1
        %s267 = scalar_select %p266, %s14, 1
        %s268 = smul.addr %s267, 24
        %s269 = smul.addr %s268, 4
        %s270 = scalar_lea.vmem %s1, %s269
      $region48: #{crop_up_forward.1} parent=39 // pred_fallthru
        _
    $region40: #{crop_up_forward.1} parent=5 // pred_fallthru
      _
    %p271 = scmp.le.s32.totalorder 1, %s14
    %p272 = scmp.lt.s32.totalorder %s14, 3
    %p273 = pnand %p271, %p272
    %p274 = pneg %p273
    // Predicated region
    $region49: #{crop_up_forward.1} parent=5 // pred_check
      _
    $region50: #{crop_up_forward.1} parent=5 // pred_check_branch
      %276 = sbr.rel (%p273) target = $region52
    $region51: #{crop_up_forward.1} parent=5 // pred_region
      %s277 = ssub.s32 %s14, 1
      %p278 = scmp.lt.s32.totalorder %s19, 1
      %s279 = scalar_select %p278, %s19, 1
      %s280 = smul.addr %s279, 8
      %s281 = smul.addr %s280, 4
      %s282 = scalar_lea.vmem %s0, %s281
      %p283 = pneg %p40
      %p284 = pneg %p37
      %p285 = scmp.lt.s32.totalorder %s19, 1
      %s286 = scalar_select %p285, %s19, 1
      %s287 = smul.addr %s286, 24
      %s288 = smul.addr %s287, 4
      %s289 = scalar_lea.vmem %s1, %s288
      %p290 = pneg %p66
      %p291 = pneg %p63
      %p292 = pneg %p87
      %p293 = pneg %p84
      %p294 = pneg %p108
      %p295 = pneg %p105
      %p296 = pneg %p129
      %p297 = pneg %p126
      %p298 = pneg %p150
      %p299 = pneg %p147
      %p300 = pneg %p171
      %p301 = pneg %p168
      %p302 = pneg %p192
      %p303 = pneg %p189
      %p304 = pneg %p218
      %p305 = pneg %p215
      %p306 = scmp.lt.s32.totalorder %s19, 1
      %s307 = scalar_select %p306, %s19, 1
      %s308 = smul.addr %s307, 24
      %s309 = smul.addr %s308, 8
      %s310 = scalar_lea.vmem %s8, %s309
      %p311 = scmp.lt.s32.totalorder %s19, 1
      %s312 = scalar_select %p311, %s19, 1
      %s313 = smul.addr %s312, 8
      %s314 = smul.addr %s313, 4
      %s315 = scalar_lea.vmem %s0, %s314
      %p316 = scmp.lt.s32.totalorder %s19, 1
      %s317 = scalar_select %p316, %s19, 1
      %s318 = smul.addr %s317, 24
      %s319 = smul.addr %s318, 4
      %s320 = scalar_lea.vmem %s1, %s319
      %p321 = scmp.lt.s32.totalorder %s19, 1
      %s322 = scalar_select %p321, %s19, 1
      %s323 = smul.addr %s322, 24
      %s324 = smul.addr %s323, 8
      %s325 = scalar_lea.vmem %s8, %s324
      %v327 = vld [vmem:[%s315] sm:$0xf]
      %v328 = vld [vmem:[%s315 + $0x4] sm:$0xf]
      %v329 = vld [vmem:[%s315 + $0x8] sm:$0xf]
      %v330 = vld [vmem:[%s315 + $0xc] sm:$0xf]
      %v331 = vld [vmem:[%s315 + $0x10] sm:$0xf]
      %v332 = vld [vmem:[%s315 + $0x14] sm:$0xf]
      %v333 = vld [vmem:[%s315 + $0x18] sm:$0xf]
      %v334 = vld [vmem:[%s315 + $0x1c] sm:$0xf]
      %v335 = vld [vmem:[%s2] sm:$0xf]
      %v336 = vld [vmem:[%s2 + $0x4] sm:$0xf]
      %v337 = vld [vmem:[%s2 + $0x8] sm:$0xf]
      %v338 = vld [vmem:[%s2 + $0xc] sm:$0xf]
      %v339 = vld [vmem:[%s2 + $0x10] sm:$0xf]
      %v340 = vld [vmem:[%s2 + $0x14] sm:$0xf]
      %v341 = vld [vmem:[%s2 + $0x18] sm:$0xf]
      %v342 = vld [vmem:[%s2 + $0x1c] sm:$0xf]
      %v343 = vld [vmem:[%s2 + $0x20] sm:$0xf]
      %v344 = vld [vmem:[%s2 + $0x24] sm:$0xf]
      %v345 = vld [vmem:[%s2 + $0x28] sm:$0xf]
      %v346 = vld [vmem:[%s2 + $0x2c] sm:$0xf]
      %v347 = vld [vmem:[%s2 + $0x30] sm:$0xf]
      %v348 = vld [vmem:[%s2 + $0x34] sm:$0xf]
      %v349 = vld [vmem:[%s2 + $0x38] sm:$0xf]
      %v350 = vld [vmem:[%s2 + $0x3c] sm:$0xf]
      %v351 = vld [vmem:[%s2 + $0x40] sm:$0xf]
      %v352 = vld [vmem:[%s2 + $0x44] sm:$0xf]
      %v353 = vld [vmem:[%s2 + $0x48] sm:$0xf]
      %v354 = vld [vmem:[%s2 + $0x4c] sm:$0xf]
      %v355 = vld [vmem:[%s2 + $0x50] sm:$0xf]
      %v356 = vld [vmem:[%s2 + $0x54] sm:$0xf]
      %v357 = vld [vmem:[%s2 + $0x58] sm:$0xf]
      %v358 = vld [vmem:[%s2 + $0x5c] sm:$0xf]
      %v359 = vld [vmem:[%s2 + $0x60] sm:$0xf]
      %v360 = vld [vmem:[%s2 + $0x64] sm:$0xf]
      %v361 = vld [vmem:[%s2 + $0x68] sm:$0xf]
      %v362 = vld [vmem:[%s2 + $0x6c] sm:$0xf]
      %v363 = vld [vmem:[%s2 + $0x70] sm:$0xf]
      %v364 = vld [vmem:[%s2 + $0x74] sm:$0xf]
      %v365 = vld [vmem:[%s2 + $0x78] sm:$0xf]
      %v366 = vld [vmem:[%s2 + $0x7c] sm:$0xf]
      %v367 = vld [vmem:[%s2 + $0x80] sm:$0xf]
      %v368 = vld [vmem:[%s2 + $0x84] sm:$0xf]
      %v369 = vld [vmem:[%s2 + $0x88] sm:$0xf]
      %v370 = vld [vmem:[%s2 + $0x8c] sm:$0xf]
      %v371 = vld [vmem:[%s2 + $0x90] sm:$0xf]
      %v372 = vld [vmem:[%s2 + $0x94] sm:$0xf]
      %v373 = vld [vmem:[%s2 + $0x98] sm:$0xf]
      %v374 = vld [vmem:[%s2 + $0x9c] sm:$0xf]
      %v375 = vld [vmem:[%s2 + $0xa0] sm:$0x3]
      %v417 = vunpack.c.l.b16 %v335
      %v418 = vunpack.c.l.b16 %v336
      %v419 = vunpack.c.l.b16 %v337
      %v420 = vunpack.c.l.b16 %v338
      %v421 = vunpack.c.l.b16 %v339
      %v422 = vunpack.c.l.b16 %v340
      %v423 = vunpack.c.l.b16 %v341
      %v424 = vunpack.c.l.b16 %v342
      %v425 = vunpack.c.l.b16 %v343
      %v426 = vunpack.c.l.b16 %v344
      %v427 = vunpack.c.l.b16 %v345
      %v428 = vunpack.c.l.b16 %v346
      %v429 = vunpack.c.l.b16 %v347
      %v430 = vunpack.c.l.b16 %v348
      %v431 = vunpack.c.l.b16 %v349
      %v432 = vunpack.c.l.b16 %v350
      %v433 = vunpack.c.l.b16 %v351
      %v434 = vunpack.c.l.b16 %v352
      %v435 = vunpack.c.l.b16 %v353
      %v436 = vunpack.c.l.b16 %v354
      %v437 = vunpack.c.l.b16 %v355
      %v438 = vunpack.c.l.b16 %v356
      %v439 = vunpack.c.l.b16 %v357
      %v440 = vunpack.c.l.b16 %v358
      %v441 = vunpack.c.l.b16 %v359
      %v442 = vunpack.c.l.b16 %v360
      %v443 = vunpack.c.l.b16 %v361
      %v444 = vunpack.c.l.b16 %v362
      %v445 = vunpack.c.l.b16 %v363
      %v446 = vunpack.c.l.b16 %v364
      %v447 = vunpack.c.l.b16 %v365
      %v448 = vunpack.c.l.b16 %v366
      %v449 = vunpack.c.l.b16 %v367
      %v450 = vunpack.c.l.b16 %v368
      %v451 = vunpack.c.l.b16 %v369
      %v452 = vunpack.c.l.b16 %v370
      %v453 = vunpack.c.l.b16 %v371
      %v454 = vunpack.c.l.b16 %v372
      %v455 = vunpack.c.l.b16 %v373
      %v456 = vunpack.c.l.b16 %v374
      %v457 = vunpack.c.l.b16 %v375
      %v458 = vpack.c.b16 %v418, %v417
      %v459 = vpack.c.b16 %v420, %v419
      %v460 = vpack.c.b16 %v422, %v421
      %v461 = vpack.c.b16 %v424, %v423
      %v462 = vpack.c.b16 %v426, %v425
      %v463 = vpack.c.b16 %v428, %v427
      %v464 = vpack.c.b16 %v430, %v429
      %v465 = vpack.c.b16 %v432, %v431
      %v466 = vpack.c.b16 %v434, %v433
      %v467 = vpack.c.b16 %v436, %v435
      %v468 = vpack.c.b16 %v438, %v437
      %v469 = vpack.c.b16 %v440, %v439
      %v470 = vpack.c.b16 %v442, %v441
      %v471 = vpack.c.b16 %v444, %v443
      %v472 = vpack.c.b16 %v446, %v445
      %v473 = vpack.c.b16 %v448, %v447
      %v474 = vpack.c.b16 %v450, %v449
      %v475 = vpack.c.b16 %v452, %v451
      %v476 = vpack.c.b16 %v454, %v453
      %v477 = vpack.c.b16 %v456, %v455
      %v478 = vpack.c.b16 %v457, %v457
      %v487 = vunpack.c.l.b16 %v327
      %v488 = vunpack.c.l.b16 %v328
      %v489 = vunpack.c.l.b16 %v329
      %v490 = vunpack.c.l.b16 %v330
      %v491 = vunpack.c.l.b16 %v331
      %v492 = vunpack.c.l.b16 %v332
      %v493 = vunpack.c.l.b16 %v333
      %v494 = vunpack.c.l.b16 %v334
      %v495 = vpack.c.b16 %v488, %v487
      %v496 = vpack.c.b16 %v490, %v489
      %v497 = vpack.c.b16 %v492, %v491
      %v498 = vpack.c.b16 %v494, %v493
      %vm503 = vcmask 523264
      %v505 = vsel %vm503, %v458, 0
      %v508 = vsel %vm503, %v459, 0
      %v511 = vsel %vm503, %v460, 0
      %v514 = vsel %vm503, %v461, 0
      %v517 = vsel %vm503, %v462, 0
      %v520 = vsel %vm503, %v463, 0
      %v523 = vsel %vm503, %v464, 0
      %v526 = vsel %vm503, %v465, 0
      %v529 = vsel %vm503, %v466, 0
      %v532 = vsel %vm503, %v467, 0
      %v535 = vsel %vm503, %v468, 0
      %v538 = vsel %vm503, %v469, 0
      %v541 = vsel %vm503, %v470, 0
      %v544 = vsel %vm503, %v471, 0
      %v547 = vsel %vm503, %v472, 0
      %v550 = vsel %vm503, %v473, 0
      %v553 = vsel %vm503, %v474, 0
      %v556 = vsel %vm503, %v475, 0
      %v559 = vsel %vm503, %v476, 0
      %v562 = vsel %vm503, %v477, 0
      %v565 = vsel %vm503, %v478, 0
      %567 = vmatprep.subr.bf16.mxu0 0
      %568 = vmatpush1.bf16.msra.mxu0 %v495
      %569 = vmatprep.subr.bf16.mxu0 0
      %570 = vmatpush1.bf16.msra.mxu0 %v496
      %571 = vmatprep.subr.bf16.mxu0 0
      %572 = vmatpush1.bf16.msra.mxu0 %v497
      %573 = vmatprep.subr.bf16.mxu0 0
      %574 = vmatpush1.bf16.msra.mxu0 %v498
      %575 = vmatprep.subr.bf16.mxu0 0
      %576 = vmatpush1.bf16.msra.mxu0 0
      %577 = vmatprep.subr.bf16.mxu0 0
      %578 = vmatpush1.bf16.msra.mxu0 0
      %579 = vmatprep.subr.bf16.mxu0 0
      %580 = vmatpush1.bf16.msra.mxu0 0
      %581 = vmatprep.subr.bf16.mxu0 0
      %582 = vmatpush1.bf16.msra.mxu0 0
      %583 = vmatprep.subr.bf16.mxu0 0
      %584 = vmatpush1.bf16.msra.mxu0 0
      %585 = vmatprep.subr.bf16.mxu0 0
      %586 = vmatpush1.bf16.msra.mxu0 0
      %587 = vmatprep.subr.bf16.mxu0 0
      %588 = vmatpush1.bf16.msra.mxu0 0
      %589 = vmatprep.subr.bf16.mxu0 0
      %590 = vmatpush1.bf16.msra.mxu0 0
      %591 = vmatprep.subr.bf16.mxu0 0
      %592 = vmatpush1.bf16.msra.mxu0 0
      %593 = vmatprep.subr.bf16.mxu0 0
      %594 = vmatpush1.bf16.msra.mxu0 0
      %595 = vmatprep.subr.bf16.mxu0 0
      %596 = vmatpush1.bf16.msra.mxu0 0
      %597 = vmatprep.subr.bf16.mxu0 0
      %598 = vmatpush1.bf16.msra.mxu0 0
      %599 = vmatprep.mubr.bf16.mxu0 0
      %600 = vmatmul.mubr.bf16.gmra.mrb[0].mxu0 %v505
      %v601 = vpop.f32.mrb[0].mxu0
      %v602 = vadd.f32 0.0, %v601
      %v603 = vpop.f32.mrb[0].mxu0
      %v604 = vpop.f32.mrb[0].mxu0
      %v605 = vadd.f32 0.0, %v604
      %v606 = vpop.f32.mrb[0].mxu0
      %607 = vmatprep.mubr.bf16.mxu0 0
      %608 = vmatmul.mubr.bf16.gmra.mrb[0].mxu0 %v508
      %v609 = vpop.f32.mrb[0].mxu0
      %v610 = vadd.f32 0.0, %v609
      %v611 = vpop.f32.mrb[0].mxu0
      %v612 = vpop.f32.mrb[0].mxu0
      %v613 = vadd.f32 0.0, %v612
      %v614 = vpop.f32.mrb[0].mxu0
      %615 = vmatprep.mubr.bf16.mxu0 0
      %616 = vmatmul.mubr.bf16.gmra.mrb[0].mxu0 %v511
      %v617 = vpop.f32.mrb[0].mxu0
      %v618 = vadd.f32 0.0, %v617
      %v619 = vpop.f32.mrb[0].mxu0
      %v620 = vpop.f32.mrb[0].mxu0
      %v621 = vadd.f32 0.0, %v620
      %v622 = vpop.f32.mrb[0].mxu0
      %623 = vmatprep.mubr.bf16.mxu0 0
      %624 = vmatmul.mubr.bf16.gmra.mrb[0].mxu0 %v514
      %v625 = vpop.f32.mrb[0].mxu0
      %v626 = vadd.f32 0.0, %v625
      %v627 = vpop.f32.mrb[0].mxu0
      %v628 = vpop.f32.mrb[0].mxu0
      %v629 = vadd.f32 0.0, %v628
      %v630 = vpop.f32.mrb[0].mxu0
      %631 = vmatprep.mubr.bf16.mxu0 0
      %632 = vmatmul.mubr.bf16.gmra.mrb[0].mxu0 %v517
      %v633 = vpop.f32.mrb[0].mxu0
      %v634 = vadd.f32 0.0, %v633
      %v635 = vpop.f32.mrb[0].mxu0
      %v636 = vpop.f32.mrb[0].mxu0
      %v637 = vadd.f32 0.0, %v636
      %v638 = vpop.f32.mrb[0].mxu0
      %639 = vmatprep.mubr.bf16.mxu0 0
      %640 = vmatmul.mubr.bf16.gmra.mrb[0].mxu0 %v520
      %v641 = vpop.f32.mrb[0].mxu0
      %v642 = vadd.f32 0.0, %v641
      %v643 = vpop.f32.mrb[0].mxu0
      %v644 = vpop.f32.mrb[0].mxu0
      %v645 = vadd.f32 0.0, %v644
      %v646 = vpop.f32.mrb[0].mxu0
      %647 = vmatprep.mubr.bf16.mxu0 0
      %648 = vmatmul.mubr.bf16.gmra.mrb[0].mxu0 %v523
      %v649 = vpop.f32.mrb[0].mxu0
      %v650 = vadd.f32 0.0, %v649
      %v651 = vpop.f32.mrb[0].mxu0
      %v652 = vpop.f32.mrb[0].mxu0
      %v653 = vadd.f32 0.0, %v652
      %v654 = vpop.f32.mrb[0].mxu0
      %655 = vmatprep.mubr.bf16.mxu0 0
      %656 = vmatmul.mubr.bf16.gmra.mrb[0].mxu0 %v526
      %v657 = vpop.f32.mrb[0].mxu0
      %v658 = vadd.f32 0.0, %v657
      %v659 = vpop.f32.mrb[0].mxu0
      %v660 = vpop.f32.mrb[0].mxu0
      %v661 = vadd.f32 0.0, %v660
      %v662 = vpop.f32.mrb[0].mxu0
      %663 = vmatprep.mubr.bf16.mxu0 0
      %664 = vmatmul.mubr.bf16.gmra.mrb[0].mxu0 %v529
      %v665 = vpop.f32.mrb[0].mxu0
      %v666 = vadd.f32 0.0, %v665
      %v667 = vpop.f32.mrb[0].mxu0
      %v668 = vpop.f32.mrb[0].mxu0
      %v669 = vadd.f32 0.0, %v668
      %v670 = vpop.f32.mrb[0].mxu0
      %671 = vmatprep.mubr.bf16.mxu0 0
      %672 = vmatmul.mubr.bf16.gmra.mrb[0].mxu0 %v532
      %v673 = vpop.f32.mrb[0].mxu0
      %v674 = vadd.f32 0.0, %v673
      %v675 = vpop.f32.mrb[0].mxu0
      %v676 = vpop.f32.mrb[0].mxu0
      %v677 = vadd.f32 0.0, %v676
      %v678 = vpop.f32.mrb[0].mxu0
      %679 = vmatprep.mubr.bf16.mxu0 0
      %680 = vmatmul.mubr.bf16.gmra.mrb[0].mxu0 %v535
      %v681 = vpop.f32.mrb[0].mxu0
      %v682 = vadd.f32 0.0, %v681
      %v683 = vpop.f32.mrb[0].mxu0
      %v684 = vpop.f32.mrb[0].mxu0
      %v685 = vadd.f32 0.0, %v684
      %v686 = vpop.f32.mrb[0].mxu0
      %687 = vmatprep.mubr.bf16.mxu0 0
      %688 = vmatmul.mubr.bf16.gmra.mrb[0].mxu0 %v538
      %v689 = vpop.f32.mrb[0].mxu0
      %v690 = vadd.f32 0.0, %v689
      %v691 = vpop.f32.mrb[0].mxu0
      %v692 = vpop.f32.mrb[0].mxu0
      %v693 = vadd.f32 0.0, %v692
      %v694 = vpop.f32.mrb[0].mxu0
      %695 = vmatprep.mubr.bf16.mxu0 0
      %696 = vmatmul.mubr.bf16.gmra.mrb[0].mxu0 %v541
      %v697 = vpop.f32.mrb[0].mxu0
      %v698 = vadd.f32 0.0, %v697
      %v699 = vpop.f32.mrb[0].mxu0
      %v700 = vpop.f32.mrb[0].mxu0
      %v701 = vadd.f32 0.0, %v700
      %v702 = vpop.f32.mrb[0].mxu0
      %703 = vmatprep.mubr.bf16.mxu0 0
      %704 = vmatmul.mubr.bf16.gmra.mrb[0].mxu0 %v544
      %v705 = vpop.f32.mrb[0].mxu0
      %v706 = vadd.f32 0.0, %v705
      %v707 = vpop.f32.mrb[0].mxu0
      %v708 = vpop.f32.mrb[0].mxu0
      %v709 = vadd.f32 0.0, %v708
      %v710 = vpop.f32.mrb[0].mxu0
      %711 = vmatprep.mubr.bf16.mxu0 0
      %712 = vmatmul.mubr.bf16.gmra.mrb[0].mxu0 %v547
      %v713 = vpop.f32.mrb[0].mxu0
      %v714 = vadd.f32 0.0, %v713
      %v715 = vpop.f32.mrb[0].mxu0
      %v716 = vpop.f32.mrb[0].mxu0
      %v717 = vadd.f32 0.0, %v716
      %v718 = vpop.f32.mrb[0].mxu0
      %719 = vmatprep.mubr.bf16.mxu0 0
      %720 = vmatmul.mubr.bf16.gmra.mrb[0].mxu0 %v550
      %v721 = vpop.f32.mrb[0].mxu0
      %v722 = vadd.f32 0.0, %v721
      %v723 = vpop.f32.mrb[0].mxu0
      %v724 = vpop.f32.mrb[0].mxu0
      %v725 = vadd.f32 0.0, %v724
      %v726 = vpop.f32.mrb[0].mxu0
      %727 = vmatprep.mubr.bf16.mxu0 0
      %728 = vmatmul.mubr.bf16.gmra.mrb[0].mxu0 %v553
      %v729 = vpop.f32.mrb[0].mxu0
      %v730 = vadd.f32 0.0, %v729
      %v731 = vpop.f32.mrb[0].mxu0
      %v732 = vpop.f32.mrb[0].mxu0
      %v733 = vadd.f32 0.0, %v732
      %v734 = vpop.f32.mrb[0].mxu0
      %735 = vmatprep.mubr.bf16.mxu0 0
      %736 = vmatmul.mubr.bf16.gmra.mrb[0].mxu0 %v556
      %v737 = vpop.f32.mrb[0].mxu0
      %v738 = vadd.f32 0.0, %v737
      %v739 = vpop.f32.mrb[0].mxu0
      %v740 = vpop.f32.mrb[0].mxu0
      %v741 = vadd.f32 0.0, %v740
      %v742 = vpop.f32.mrb[0].mxu0
      %743 = vmatprep.mubr.bf16.mxu0 0
      %744 = vmatmul.mubr.bf16.gmra.mrb[0].mxu0 %v559
      %v745 = vpop.f32.mrb[0].mxu0
      %v746 = vadd.f32 0.0, %v745
      %v747 = vpop.f32.mrb[0].mxu0
      %v748 = vpop.f32.mrb[0].mxu0
      %v749 = vadd.f32 0.0, %v748
      %v750 = vpop.f32.mrb[0].mxu0
      %751 = vmatprep.mubr.bf16.mxu0 0
      %752 = vmatmul.mubr.bf16.gmra.mrb[0].mxu0 %v562
      %v753 = vpop.f32.mrb[0].mxu0
      %v754 = vadd.f32 0.0, %v753
      %v755 = vpop.f32.mrb[0].mxu0
      %v756 = vpop.f32.mrb[0].mxu0
      %v757 = vadd.f32 0.0, %v756
      %v758 = vpop.f32.mrb[0].mxu0
      %759 = vmatprep.mubr.bf16.mxu0 0
      %760 = vmatmul.mubr.bf16.gmra.mrb[0].mxu0 %v565
      %v761 = vpop.f32.mrb[0].mxu0
      %v762 = vadd.f32 0.0, %v761
      %v763 = vpop.f32.mrb[0].mxu0
      %v764 = vpop.f32.mrb[0].mxu0
      %v765 = vpop.f32.mrb[0].mxu0
      %766 = vdwg.mxu0
      %v808 = vcombine.high %v602, %v602
      %v810 = vunpack.c.l.s4 1983009808
      %v811 = vunpack.c.0.s8 %v810
      %v812 = vlaneseq
      %v813 = vshrl.u32 %v812, 7
      %v814 = vsub.s32 %v811, %v813
      %v815 = vrot.slane %v602, %v814
      %v817 = vunpack.c.l.s4 1983009808
      %v818 = vunpack.c.0.s8 %v817
      %v819 = vlaneseq
      %v820 = vshrl.u32 %v819, 7
      %v821 = vsub.s32 %v818, %v820
      %v822 = vrot.slane %v808, %v821
      %v823 = vcombine.high %v815, %v815
      %v824 = vcombine.high %v822, %v822
      %v825 = vcombine.high %v605, %v605
      %v827 = vunpack.c.l.s4 1983009808
      %v828 = vunpack.c.0.s8 %v827
      %v829 = vlaneseq
      %v830 = vshrl.u32 %v829, 7
      %v831 = vsub.s32 %v828, %v830
      %v832 = vrot.slane %v605, %v831
      %v834 = vunpack.c.l.s4 1983009808
      %v835 = vunpack.c.0.s8 %v834
      %v836 = vlaneseq
      %v837 = vshrl.u32 %v836, 7
      %v838 = vsub.s32 %v835, %v837
      %v839 = vrot.slane %v825, %v838
      %v840 = vcombine.high %v832, %v832
      %v841 = vcombine.high %v839, %v839
      %v842 = vcombine.high %v610, %v610
      %v844 = vunpack.c.l.s4 1983009808
      %v845 = vunpack.c.0.s8 %v844
      %v846 = vlaneseq
      %v847 = vshrl.u32 %v846, 7
      %v848 = vsub.s32 %v845, %v847
      %v849 = vrot.slane %v610, %v848
      %v851 = vunpack.c.l.s4 1983009808
      %v852 = vunpack.c.0.s8 %v851
      %v853 = vlaneseq
      %v854 = vshrl.u32 %v853, 7
      %v855 = vsub.s32 %v852, %v854
      %v856 = vrot.slane %v842, %v855
      %v857 = vcombine.high %v849, %v849
      %v858 = vcombine.high %v856, %v856
      %v859 = vcombine.high %v613, %v613
      %v861 = vunpack.c.l.s4 1983009808
      %v862 = vunpack.c.0.s8 %v861
      %v863 = vlaneseq
      %v864 = vshrl.u32 %v863, 7
      %v865 = vsub.s32 %v862, %v864
      %v866 = vrot.slane %v613, %v865
      %v868 = vunpack.c.l.s4 1983009808
      %v869 = vunpack.c.0.s8 %v868
      %v870 = vlaneseq
      %v871 = vshrl.u32 %v870, 7
      %v872 = vsub.s32 %v869, %v871
      %v873 = vrot.slane %v859, %v872
      %v874 = vcombine.high %v866, %v866
      %v875 = vcombine.high %v873, %v873
      %v876 = vcombine.high %v618, %v618
      %v878 = vunpack.c.l.s4 1983009808
      %v879 = vunpack.c.0.s8 %v878
      %v880 = vlaneseq
      %v881 = vshrl.u32 %v880, 7
      %v882 = vsub.s32 %v879, %v881
      %v883 = vrot.slane %v618, %v882
      %v885 = vunpack.c.l.s4 1983009808
      %v886 = vunpack.c.0.s8 %v885
      %v887 = vlaneseq
      %v888 = vshrl.u32 %v887, 7
      %v889 = vsub.s32 %v886, %v888
      %v890 = vrot.slane %v876, %v889
      %v891 = vcombine.high %v883, %v883
      %v892 = vcombine.high %v890, %v890
      %v893 = vcombine.high %v621, %v621
      %v895 = vunpack.c.l.s4 1983009808
      %v896 = vunpack.c.0.s8 %v895
      %v897 = vlaneseq
      %v898 = vshrl.u32 %v897, 7
      %v899 = vsub.s32 %v896, %v898
      %v900 = vrot.slane %v621, %v899
      %v902 = vunpack.c.l.s4 1983009808
      %v903 = vunpack.c.0.s8 %v902
      %v904 = vlaneseq
      %v905 = vshrl.u32 %v904, 7
      %v906 = vsub.s32 %v903, %v905
      %v907 = vrot.slane %v893, %v906
      %v908 = vcombine.high %v900, %v900
      %v909 = vcombine.high %v907, %v907
      %v910 = vcombine.high %v626, %v626
      %v912 = vunpack.c.l.s4 1983009808
      %v913 = vunpack.c.0.s8 %v912
      %v914 = vlaneseq
      %v915 = vshrl.u32 %v914, 7
      %v916 = vsub.s32 %v913, %v915
      %v917 = vrot.slane %v626, %v916
      %v919 = vunpack.c.l.s4 1983009808
      %v920 = vunpack.c.0.s8 %v919
      %v921 = vlaneseq
      %v922 = vshrl.u32 %v921, 7
      %v923 = vsub.s32 %v920, %v922
      %v924 = vrot.slane %v910, %v923
      %v925 = vcombine.high %v917, %v917
      %v926 = vcombine.high %v924, %v924
      %v927 = vcombine.high %v629, %v629
      %v929 = vunpack.c.l.s4 1983009808
      %v930 = vunpack.c.0.s8 %v929
      %v931 = vlaneseq
      %v932 = vshrl.u32 %v931, 7
      %v933 = vsub.s32 %v930, %v932
      %v934 = vrot.slane %v629, %v933
      %v936 = vunpack.c.l.s4 1983009808
      %v937 = vunpack.c.0.s8 %v936
      %v938 = vlaneseq
      %v939 = vshrl.u32 %v938, 7
      %v940 = vsub.s32 %v937, %v939
      %v941 = vrot.slane %v927, %v940
      %v942 = vcombine.high %v934, %v934
      %v943 = vcombine.high %v941, %v941
      %v944 = vcombine.high %v634, %v634
      %v946 = vunpack.c.l.s4 1983009808
      %v947 = vunpack.c.0.s8 %v946
      %v948 = vlaneseq
      %v949 = vshrl.u32 %v948, 7
      %v950 = vsub.s32 %v947, %v949
      %v951 = vrot.slane %v634, %v950
      %v953 = vunpack.c.l.s4 1983009808
      %v954 = vunpack.c.0.s8 %v953
      %v955 = vlaneseq
      %v956 = vshrl.u32 %v955, 7
      %v957 = vsub.s32 %v954, %v956
      %v958 = vrot.slane %v944, %v957
      %v959 = vcombine.high %v951, %v951
      %v960 = vcombine.high %v958, %v958
      %v961 = vcombine.high %v637, %v637
      %v963 = vunpack.c.l.s4 1983009808
      %v964 = vunpack.c.0.s8 %v963
      %v965 = vlaneseq
      %v966 = vshrl.u32 %v965, 7
      %v967 = vsub.s32 %v964, %v966
      %v968 = vrot.slane %v637, %v967
      %v970 = vunpack.c.l.s4 1983009808
      %v971 = vunpack.c.0.s8 %v970
      %v972 = vlaneseq
      %v973 = vshrl.u32 %v972, 7
      %v974 = vsub.s32 %v971, %v973
      %v975 = vrot.slane %v961, %v974
      %v976 = vcombine.high %v968, %v968
      %v977 = vcombine.high %v975, %v975
      %v978 = vcombine.high %v642, %v642
      %v980 = vunpack.c.l.s4 1983009808
      %v981 = vunpack.c.0.s8 %v980
      %v982 = vlaneseq
      %v983 = vshrl.u32 %v982, 7
      %v984 = vsub.s32 %v981, %v983
      %v985 = vrot.slane %v642, %v984
      %v987 = vunpack.c.l.s4 1983009808
      %v988 = vunpack.c.0.s8 %v987
      %v989 = vlaneseq
      %v990 = vshrl.u32 %v989, 7
      %v991 = vsub.s32 %v988, %v990
      %v992 = vrot.slane %v978, %v991
      %v993 = vcombine.high %v985, %v985
      %v994 = vcombine.high %v992, %v992
      %v995 = vcombine.high %v645, %v645
      %v997 = vunpack.c.l.s4 1983009808
      %v998 = vunpack.c.0.s8 %v997
      %v999 = vlaneseq
      %v1000 = vshrl.u32 %v999, 7
      %v1001 = vsub.s32 %v998, %v1000
      %v1002 = vrot.slane %v645, %v1001
      %v1004 = vunpack.c.l.s4 1983009808
      %v1005 = vunpack.c.0.s8 %v1004
      %v1006 = vlaneseq
      %v1007 = vshrl.u32 %v1006, 7
      %v1008 = vsub.s32 %v1005, %v1007
      %v1009 = vrot.slane %v995, %v1008
      %v1010 = vcombine.high %v1002, %v1002
      %v1011 = vcombine.high %v1009, %v1009
      %v1012 = vcombine.high %v650, %v650
      %v1014 = vunpack.c.l.s4 1983009808
      %v1015 = vunpack.c.0.s8 %v1014
      %v1016 = vlaneseq
      %v1017 = vshrl.u32 %v1016, 7
      %v1018 = vsub.s32 %v1015, %v1017
      %v1019 = vrot.slane %v650, %v1018
      %v1021 = vunpack.c.l.s4 1983009808
      %v1022 = vunpack.c.0.s8 %v1021
      %v1023 = vlaneseq
      %v1024 = vshrl.u32 %v1023, 7
      %v1025 = vsub.s32 %v1022, %v1024
      %v1026 = vrot.slane %v1012, %v1025
      %v1027 = vcombine.high %v1019, %v1019
      %v1028 = vcombine.high %v1026, %v1026
      %v1029 = vcombine.high %v653, %v653
      %v1031 = vunpack.c.l.s4 1983009808
      %v1032 = vunpack.c.0.s8 %v1031
      %v1033 = vlaneseq
      %v1034 = vshrl.u32 %v1033, 7
      %v1035 = vsub.s32 %v1032, %v1034
      %v1036 = vrot.slane %v653, %v1035
      %v1038 = vunpack.c.l.s4 1983009808
      %v1039 = vunpack.c.0.s8 %v1038
      %v1040 = vlaneseq
      %v1041 = vshrl.u32 %v1040, 7
      %v1042 = vsub.s32 %v1039, %v1041
      %v1043 = vrot.slane %v1029, %v1042
      %v1044 = vcombine.high %v1036, %v1036
      %v1045 = vcombine.high %v1043, %v1043
      %v1046 = vcombine.high %v658, %v658
      %v1048 = vunpack.c.l.s4 1983009808
      %v1049 = vunpack.c.0.s8 %v1048
      %v1050 = vlaneseq
      %v1051 = vshrl.u32 %v1050, 7
      %v1052 = vsub.s32 %v1049, %v1051
      %v1053 = vrot.slane %v658, %v1052
      %v1055 = vunpack.c.l.s4 1983009808
      %v1056 = vunpack.c.0.s8 %v1055
      %v1057 = vlaneseq
      %v1058 = vshrl.u32 %v1057, 7
      %v1059 = vsub.s32 %v1056, %v1058
      %v1060 = vrot.slane %v1046, %v1059
      %v1061 = vcombine.high %v1053, %v1053
      %v1062 = vcombine.high %v1060, %v1060
      %v1063 = vcombine.high %v661, %v661
      %v1065 = vunpack.c.l.s4 1983009808
      %v1066 = vunpack.c.0.s8 %v1065
      %v1067 = vlaneseq
      %v1068 = vshrl.u32 %v1067, 7
      %v1069 = vsub.s32 %v1066, %v1068
      %v1070 = vrot.slane %v661, %v1069
      %v1072 = vunpack.c.l.s4 1983009808
      %v1073 = vunpack.c.0.s8 %v1072
      %v1074 = vlaneseq
      %v1075 = vshrl.u32 %v1074, 7
      %v1076 = vsub.s32 %v1073, %v1075
      %v1077 = vrot.slane %v1063, %v1076
      %v1078 = vcombine.high %v1070, %v1070
      %v1079 = vcombine.high %v1077, %v1077
      %v1080 = vcombine.high %v666, %v666
      %v1082 = vunpack.c.l.s4 1983009808
      %v1083 = vunpack.c.0.s8 %v1082
      %v1084 = vlaneseq
      %v1085 = vshrl.u32 %v1084, 7
      %v1086 = vsub.s32 %v1083, %v1085
      %v1087 = vrot.slane %v666, %v1086
      %v1089 = vunpack.c.l.s4 1983009808
      %v1090 = vunpack.c.0.s8 %v1089
      %v1091 = vlaneseq
      %v1092 = vshrl.u32 %v1091, 7
      %v1093 = vsub.s32 %v1090, %v1092
      %v1094 = vrot.slane %v1080, %v1093
      %v1095 = vcombine.high %v1087, %v1087
      %v1096 = vcombine.high %v1094, %v1094
      %v1097 = vcombine.high %v669, %v669
      %v1099 = vunpack.c.l.s4 1983009808
      %v1100 = vunpack.c.0.s8 %v1099
      %v1101 = vlaneseq
      %v1102 = vshrl.u32 %v1101, 7
      %v1103 = vsub.s32 %v1100, %v1102
      %v1104 = vrot.slane %v669, %v1103
      %v1106 = vunpack.c.l.s4 1983009808
      %v1107 = vunpack.c.0.s8 %v1106
      %v1108 = vlaneseq
      %v1109 = vshrl.u32 %v1108, 7
      %v1110 = vsub.s32 %v1107, %v1109
      %v1111 = vrot.slane %v1097, %v1110
      %v1112 = vcombine.high %v1104, %v1104
      %v1113 = vcombine.high %v1111, %v1111
      %v1114 = vcombine.high %v674, %v674
      %v1116 = vunpack.c.l.s4 1983009808
      %v1117 = vunpack.c.0.s8 %v1116
      %v1118 = vlaneseq
      %v1119 = vshrl.u32 %v1118, 7
      %v1120 = vsub.s32 %v1117, %v1119
      %v1121 = vrot.slane %v674, %v1120
      %v1123 = vunpack.c.l.s4 1983009808
      %v1124 = vunpack.c.0.s8 %v1123
      %v1125 = vlaneseq
      %v1126 = vshrl.u32 %v1125, 7
      %v1127 = vsub.s32 %v1124, %v1126
      %v1128 = vrot.slane %v1114, %v1127
      %v1129 = vcombine.high %v1121, %v1121
      %v1130 = vcombine.high %v1128, %v1128
      %v1131 = vcombine.high %v677, %v677
      %v1133 = vunpack.c.l.s4 1983009808
      %v1134 = vunpack.c.0.s8 %v1133
      %v1135 = vlaneseq
      %v1136 = vshrl.u32 %v1135, 7
      %v1137 = vsub.s32 %v1134, %v1136
      %v1138 = vrot.slane %v677, %v1137
      %v1140 = vunpack.c.l.s4 1983009808
      %v1141 = vunpack.c.0.s8 %v1140
      %v1142 = vlaneseq
      %v1143 = vshrl.u32 %v1142, 7
      %v1144 = vsub.s32 %v1141, %v1143
      %v1145 = vrot.slane %v1131, %v1144
      %v1146 = vcombine.high %v1138, %v1138
      %v1147 = vcombine.high %v1145, %v1145
      %v1148 = vcombine.high %v682, %v682
      %v1150 = vunpack.c.l.s4 1983009808
      %v1151 = vunpack.c.0.s8 %v1150
      %v1152 = vlaneseq
      %v1153 = vshrl.u32 %v1152, 7
      %v1154 = vsub.s32 %v1151, %v1153
      %v1155 = vrot.slane %v682, %v1154
      %v1157 = vunpack.c.l.s4 1983009808
      %v1158 = vunpack.c.0.s8 %v1157
      %v1159 = vlaneseq
      %v1160 = vshrl.u32 %v1159, 7
      %v1161 = vsub.s32 %v1158, %v1160
      %v1162 = vrot.slane %v1148, %v1161
      %v1163 = vcombine.high %v1155, %v1155
      %v1164 = vcombine.high %v1162, %v1162
      %v1165 = vcombine.high %v685, %v685
      %v1167 = vunpack.c.l.s4 1983009808
      %v1168 = vunpack.c.0.s8 %v1167
      %v1169 = vlaneseq
      %v1170 = vshrl.u32 %v1169, 7
      %v1171 = vsub.s32 %v1168, %v1170
      %v1172 = vrot.slane %v685, %v1171
      %v1174 = vunpack.c.l.s4 1983009808
      %v1175 = vunpack.c.0.s8 %v1174
      %v1176 = vlaneseq
      %v1177 = vshrl.u32 %v1176, 7
      %v1178 = vsub.s32 %v1175, %v1177
      %v1179 = vrot.slane %v1165, %v1178
      %v1180 = vcombine.high %v1172, %v1172
      %v1181 = vcombine.high %v1179, %v1179
      %v1182 = vcombine.high %v690, %v690
      %v1184 = vunpack.c.l.s4 1983009808
      %v1185 = vunpack.c.0.s8 %v1184
      %v1186 = vlaneseq
      %v1187 = vshrl.u32 %v1186, 7
      %v1188 = vsub.s32 %v1185, %v1187
      %v1189 = vrot.slane %v690, %v1188
      %v1191 = vunpack.c.l.s4 1983009808
      %v1192 = vunpack.c.0.s8 %v1191
      %v1193 = vlaneseq
      %v1194 = vshrl.u32 %v1193, 7
      %v1195 = vsub.s32 %v1192, %v1194
      %v1196 = vrot.slane %v1182, %v1195
      %v1197 = vcombine.high %v1189, %v1189
      %v1198 = vcombine.high %v1196, %v1196
      %v1199 = vcombine.high %v693, %v693
      %v1201 = vunpack.c.l.s4 1983009808
      %v1202 = vunpack.c.0.s8 %v1201
      %v1203 = vlaneseq
      %v1204 = vshrl.u32 %v1203, 7
      %v1205 = vsub.s32 %v1202, %v1204
      %v1206 = vrot.slane %v693, %v1205
      %v1208 = vunpack.c.l.s4 1983009808
      %v1209 = vunpack.c.0.s8 %v1208
      %v1210 = vlaneseq
      %v1211 = vshrl.u32 %v1210, 7
      %v1212 = vsub.s32 %v1209, %v1211
      %v1213 = vrot.slane %v1199, %v1212
      %v1214 = vcombine.high %v1206, %v1206
      %v1215 = vcombine.high %v1213, %v1213
      %v1216 = vcombine.high %v698, %v698
      %v1218 = vunpack.c.l.s4 1983009808
      %v1219 = vunpack.c.0.s8 %v1218
      %v1220 = vlaneseq
      %v1221 = vshrl.u32 %v1220, 7
      %v1222 = vsub.s32 %v1219, %v1221
      %v1223 = vrot.slane %v698, %v1222
      %v1225 = vunpack.c.l.s4 1983009808
      %v1226 = vunpack.c.0.s8 %v1225
      %v1227 = vlaneseq
      %v1228 = vshrl.u32 %v1227, 7
      %v1229 = vsub.s32 %v1226, %v1228
      %v1230 = vrot.slane %v1216, %v1229
      %v1231 = vcombine.high %v1223, %v1223
      %v1232 = vcombine.high %v1230, %v1230
      %v1233 = vcombine.high %v701, %v701
      %v1235 = vunpack.c.l.s4 1983009808
      %v1236 = vunpack.c.0.s8 %v1235
      %v1237 = vlaneseq
      %v1238 = vshrl.u32 %v1237, 7
      %v1239 = vsub.s32 %v1236, %v1238
      %v1240 = vrot.slane %v701, %v1239
      %v1242 = vunpack.c.l.s4 1983009808
      %v1243 = vunpack.c.0.s8 %v1242
      %v1244 = vlaneseq
      %v1245 = vshrl.u32 %v1244, 7
      %v1246 = vsub.s32 %v1243, %v1245
      %v1247 = vrot.slane %v1233, %v1246
      %v1248 = vcombine.high %v1240, %v1240
      %v1249 = vcombine.high %v1247, %v1247
      %v1250 = vcombine.high %v706, %v706
      %v1252 = vunpack.c.l.s4 1983009808
      %v1253 = vunpack.c.0.s8 %v1252
      %v1254 = vlaneseq
      %v1255 = vshrl.u32 %v1254, 7
      %v1256 = vsub.s32 %v1253, %v1255
      %v1257 = vrot.slane %v706, %v1256
      %v1259 = vunpack.c.l.s4 1983009808
      %v1260 = vunpack.c.0.s8 %v1259
      %v1261 = vlaneseq
      %v1262 = vshrl.u32 %v1261, 7
      %v1263 = vsub.s32 %v1260, %v1262
      %v1264 = vrot.slane %v1250, %v1263
      %v1265 = vcombine.high %v1257, %v1257
      %v1266 = vcombine.high %v1264, %v1264
      %v1267 = vcombine.high %v709, %v709
      %v1269 = vunpack.c.l.s4 1983009808
      %v1270 = vunpack.c.0.s8 %v1269
      %v1271 = vlaneseq
      %v1272 = vshrl.u32 %v1271, 7
      %v1273 = vsub.s32 %v1270, %v1272
      %v1274 = vrot.slane %v709, %v1273
      %v1276 = vunpack.c.l.s4 1983009808
      %v1277 = vunpack.c.0.s8 %v1276
      %v1278 = vlaneseq
      %v1279 = vshrl.u32 %v1278, 7
      %v1280 = vsub.s32 %v1277, %v1279
      %v1281 = vrot.slane %v1267, %v1280
      %v1282 = vcombine.high %v1274, %v1274
      %v1283 = vcombine.high %v1281, %v1281
      %v1284 = vcombine.high %v714, %v714
      %v1286 = vunpack.c.l.s4 1983009808
      %v1287 = vunpack.c.0.s8 %v1286
      %v1288 = vlaneseq
      %v1289 = vshrl.u32 %v1288, 7
      %v1290 = vsub.s32 %v1287, %v1289
      %v1291 = vrot.slane %v714, %v1290
      %v1293 = vunpack.c.l.s4 1983009808
      %v1294 = vunpack.c.0.s8 %v1293
      %v1295 = vlaneseq
      %v1296 = vshrl.u32 %v1295, 7
      %v1297 = vsub.s32 %v1294, %v1296
      %v1298 = vrot.slane %v1284, %v1297
      %v1299 = vcombine.high %v1291, %v1291
      %v1300 = vcombine.high %v1298, %v1298
      %v1301 = vcombine.high %v717, %v717
      %v1303 = vunpack.c.l.s4 1983009808
      %v1304 = vunpack.c.0.s8 %v1303
      %v1305 = vlaneseq
      %v1306 = vshrl.u32 %v1305, 7
      %v1307 = vsub.s32 %v1304, %v1306
      %v1308 = vrot.slane %v717, %v1307
      %v1310 = vunpack.c.l.s4 1983009808
      %v1311 = vunpack.c.0.s8 %v1310
      %v1312 = vlaneseq
      %v1313 = vshrl.u32 %v1312, 7
      %v1314 = vsub.s32 %v1311, %v1313
      %v1315 = vrot.slane %v1301, %v1314
      %v1316 = vcombine.high %v1308, %v1308
      %v1317 = vcombine.high %v1315, %v1315
      %v1318 = vcombine.high %v722, %v722
      %v1320 = vunpack.c.l.s4 1983009808
      %v1321 = vunpack.c.0.s8 %v1320
      %v1322 = vlaneseq
      %v1323 = vshrl.u32 %v1322, 7
      %v1324 = vsub.s32 %v1321, %v1323
      %v1325 = vrot.slane %v722, %v1324
      %v1327 = vunpack.c.l.s4 1983009808
      %v1328 = vunpack.c.0.s8 %v1327
      %v1329 = vlaneseq
      %v1330 = vshrl.u32 %v1329, 7
      %v1331 = vsub.s32 %v1328, %v1330
      %v1332 = vrot.slane %v1318, %v1331
      %v1333 = vcombine.high %v1325, %v1325
      %v1334 = vcombine.high %v1332, %v1332
      %v1335 = vcombine.high %v725, %v725
      %v1337 = vunpack.c.l.s4 1983009808
      %v1338 = vunpack.c.0.s8 %v1337
      %v1339 = vlaneseq
      %v1340 = vshrl.u32 %v1339, 7
      %v1341 = vsub.s32 %v1338, %v1340
      %v1342 = vrot.slane %v725, %v1341
      %v1344 = vunpack.c.l.s4 1983009808
      %v1345 = vunpack.c.0.s8 %v1344
      %v1346 = vlaneseq
      %v1347 = vshrl.u32 %v1346, 7
      %v1348 = vsub.s32 %v1345, %v1347
      %v1349 = vrot.slane %v1335, %v1348
      %v1350 = vcombine.high %v1342, %v1342
      %v1351 = vcombine.high %v1349, %v1349
      %v1352 = vcombine.high %v730, %v730
      %v1354 = vunpack.c.l.s4 1983009808
      %v1355 = vunpack.c.0.s8 %v1354
      %v1356 = vlaneseq
      %v1357 = vshrl.u32 %v1356, 7
      %v1358 = vsub.s32 %v1355, %v1357
      %v1359 = vrot.slane %v730, %v1358
      %v1361 = vunpack.c.l.s4 1983009808
      %v1362 = vunpack.c.0.s8 %v1361
      %v1363 = vlaneseq
      %v1364 = vshrl.u32 %v1363, 7
      %v1365 = vsub.s32 %v1362, %v1364
      %v1366 = vrot.slane %v1352, %v1365
      %v1367 = vcombine.high %v1359, %v1359
      %v1368 = vcombine.high %v1366, %v1366
      %v1369 = vcombine.high %v733, %v733
      %v1371 = vunpack.c.l.s4 1983009808
      %v1372 = vunpack.c.0.s8 %v1371
      %v1373 = vlaneseq
      %v1374 = vshrl.u32 %v1373, 7
      %v1375 = vsub.s32 %v1372, %v1374
      %v1376 = vrot.slane %v733, %v1375
      %v1378 = vunpack.c.l.s4 1983009808
      %v1379 = vunpack.c.0.s8 %v1378
      %v1380 = vlaneseq
      %v1381 = vshrl.u32 %v1380, 7
      %v1382 = vsub.s32 %v1379, %v1381
      %v1383 = vrot.slane %v1369, %v1382
      %v1384 = vcombine.high %v1376, %v1376
      %v1385 = vcombine.high %v1383, %v1383
      %v1386 = vcombine.high %v738, %v738
      %v1388 = vunpack.c.l.s4 1983009808
      %v1389 = vunpack.c.0.s8 %v1388
      %v1390 = vlaneseq
      %v1391 = vshrl.u32 %v1390, 7
      %v1392 = vsub.s32 %v1389, %v1391
      %v1393 = vrot.slane %v738, %v1392
      %v1395 = vunpack.c.l.s4 1983009808
      %v1396 = vunpack.c.0.s8 %v1395
      %v1397 = vlaneseq
      %v1398 = vshrl.u32 %v1397, 7
      %v1399 = vsub.s32 %v1396, %v1398
      %v1400 = vrot.slane %v1386, %v1399
      %v1401 = vcombine.high %v1393, %v1393
      %v1402 = vcombine.high %v1400, %v1400
      %v1403 = vcombine.high %v741, %v741
      %v1405 = vunpack.c.l.s4 1983009808
      %v1406 = vunpack.c.0.s8 %v1405
      %v1407 = vlaneseq
      %v1408 = vshrl.u32 %v1407, 7
      %v1409 = vsub.s32 %v1406, %v1408
      %v1410 = vrot.slane %v741, %v1409
      %v1412 = vunpack.c.l.s4 1983009808
      %v1413 = vunpack.c.0.s8 %v1412
      %v1414 = vlaneseq
      %v1415 = vshrl.u32 %v1414, 7
      %v1416 = vsub.s32 %v1413, %v1415
      %v1417 = vrot.slane %v1403, %v1416
      %v1418 = vcombine.high %v1410, %v1410
      %v1419 = vcombine.high %v1417, %v1417
      %v1420 = vcombine.high %v746, %v746
      %v1422 = vunpack.c.l.s4 1983009808
      %v1423 = vunpack.c.0.s8 %v1422
      %v1424 = vlaneseq
      %v1425 = vshrl.u32 %v1424, 7
      %v1426 = vsub.s32 %v1423, %v1425
      %v1427 = vrot.slane %v746, %v1426
      %v1429 = vunpack.c.l.s4 1983009808
      %v1430 = vunpack.c.0.s8 %v1429
      %v1431 = vlaneseq
      %v1432 = vshrl.u32 %v1431, 7
      %v1433 = vsub.s32 %v1430, %v1432
      %v1434 = vrot.slane %v1420, %v1433
      %v1435 = vcombine.high %v1427, %v1427
      %v1436 = vcombine.high %v1434, %v1434
      %v1437 = vcombine.high %v749, %v749
      %v1439 = vunpack.c.l.s4 1983009808
      %v1440 = vunpack.c.0.s8 %v1439
      %v1441 = vlaneseq
      %v1442 = vshrl.u32 %v1441, 7
      %v1443 = vsub.s32 %v1440, %v1442
      %v1444 = vrot.slane %v749, %v1443
      %v1446 = vunpack.c.l.s4 1983009808
      %v1447 = vunpack.c.0.s8 %v1446
      %v1448 = vlaneseq
      %v1449 = vshrl.u32 %v1448, 7
      %v1450 = vsub.s32 %v1447, %v1449
      %v1451 = vrot.slane %v1437, %v1450
      %v1452 = vcombine.high %v1444, %v1444
      %v1453 = vcombine.high %v1451, %v1451
      %v1454 = vcombine.high %v754, %v754
      %v1456 = vunpack.c.l.s4 1983009808
      %v1457 = vunpack.c.0.s8 %v1456
      %v1458 = vlaneseq
      %v1459 = vshrl.u32 %v1458, 7
      %v1460 = vsub.s32 %v1457, %v1459
      %v1461 = vrot.slane %v754, %v1460
      %v1463 = vunpack.c.l.s4 1983009808
      %v1464 = vunpack.c.0.s8 %v1463
      %v1465 = vlaneseq
      %v1466 = vshrl.u32 %v1465, 7
      %v1467 = vsub.s32 %v1464, %v1466
      %v1468 = vrot.slane %v1454, %v1467
      %v1469 = vcombine.high %v1461, %v1461
      %v1470 = vcombine.high %v1468, %v1468
      %v1471 = vcombine.high %v757, %v757
      %v1473 = vunpack.c.l.s4 1983009808
      %v1474 = vunpack.c.0.s8 %v1473
      %v1475 = vlaneseq
      %v1476 = vshrl.u32 %v1475, 7
      %v1477 = vsub.s32 %v1474, %v1476
      %v1478 = vrot.slane %v757, %v1477
      %v1480 = vunpack.c.l.s4 1983009808
      %v1481 = vunpack.c.0.s8 %v1480
      %v1482 = vlaneseq
      %v1483 = vshrl.u32 %v1482, 7
      %v1484 = vsub.s32 %v1481, %v1483
      %v1485 = vrot.slane %v1471, %v1484
      %v1486 = vcombine.high %v1478, %v1478
      %v1487 = vcombine.high %v1485, %v1485
      %v1489 = vunpack.c.l.s4 1983009808
      %v1490 = vunpack.c.0.s8 %v1489
      %v1491 = vlaneseq
      %v1492 = vshrl.u32 %v1491, 7
      %v1493 = vsub.s32 %v1490, %v1492
      %v1494 = vrot.slane %v762, %v1493
      %v1495 = vcombine.high %v1494, %v1494
      %vm1496 = vcmask 1040384
      %vm1497 = vcmask 1042434
      %vm1498 = vmor %vm1496, %vm1497
      %vm1499 = vcmask 1044484
      %vm1500 = vmor %vm1498, %vm1499
      %vm1501 = vcmask 1046534
      %vm1502 = vmor %vm1500, %vm1501
      %v1503 = vrot.slane %v815, 7
      %v1504 = vrot.slane %v1503, 2
      %v1505 = vrot.slane %v823, 7
      %v1506 = vsel %vm1502, %v1504, %v1505
      %v1507 = vrot.slane %v1505, 2
      %v1508 = vrot.slane %v822, 7
      %v1509 = vsel %vm1502, %v1507, %v1508
      %v1510 = vrot.slane %v1508, 2
      %v1511 = vrot.slane %v824, 7
      %v1512 = vsel %vm1502, %v1510, %v1511
      %v1513 = vrot.slane %v1511, 2
      %v1514 = vrot.slane %v832, 7
      %v1515 = vsel %vm1502, %v1513, %v1514
      %v1516 = vrot.slane %v1514, 2
      %v1517 = vrot.slane %v840, 7
      %v1518 = vsel %vm1502, %v1516, %v1517
      %v1519 = vrot.slane %v1517, 2
      %v1520 = vrot.slane %v839, 7
      %v1521 = vsel %vm1502, %v1519, %v1520
      %v1522 = vrot.slane %v1520, 2
      %v1523 = vrot.slane %v841, 7
      %v1524 = vsel %vm1502, %v1522, %v1523
      %v1525 = vrot.slane %v1523, 2
      %v1526 = vrot.slane %v849, 7
      %v1527 = vsel %vm1502, %v1525, %v1526
      %v1528 = vrot.slane %v857, 7
      %v1529 = vrot.slane %v1528, 2
      %v1530 = vrot.slane %v856, 7
      %v1531 = vsel %vm1502, %v1529, %v1530
      %v1532 = vrot.slane %v1530, 2
      %v1533 = vrot.slane %v858, 7
      %v1534 = vsel %vm1502, %v1532, %v1533
      %v1535 = vrot.slane %v1533, 2
      %v1536 = vrot.slane %v866, 7
      %v1537 = vsel %vm1502, %v1535, %v1536
      %v1538 = vrot.slane %v1536, 2
      %v1539 = vrot.slane %v874, 7
      %v1540 = vsel %vm1502, %v1538, %v1539
      %v1541 = vrot.slane %v1539, 2
      %v1542 = vrot.slane %v873, 7
      %v1543 = vsel %vm1502, %v1541, %v1542
      %v1544 = vrot.slane %v1542, 2
      %v1545 = vrot.slane %v875, 7
      %v1546 = vsel %vm1502, %v1544, %v1545
      %v1547 = vrot.slane %v1545, 2
      %v1548 = vrot.slane %v883, 7
      %v1549 = vsel %vm1502, %v1547, %v1548
      %v1550 = vrot.slane %v1548, 2
      %v1551 = vrot.slane %v891, 7
      %v1552 = vsel %vm1502, %v1550, %v1551
      %v1553 = vrot.slane %v890, 7
      %v1554 = vrot.slane %v1553, 2
      %v1555 = vrot.slane %v892, 7
      %v1556 = vsel %vm1502, %v1554, %v1555
      %v1557 = vrot.slane %v1555, 2
      %v1558 = vrot.slane %v900, 7
      %v1559 = vsel %vm1502, %v1557, %v1558
      %v1560 = vrot.slane %v1558, 2
      %v1561 = vrot.slane %v908, 7
      %v1562 = vsel %vm1502, %v1560, %v1561
      %v1563 = vrot.slane %v1561, 2
      %v1564 = vrot.slane %v907, 7
      %v1565 = vsel %vm1502, %v1563, %v1564
      %v1566 = vrot.slane %v1564, 2
      %v1567 = vrot.slane %v909, 7
      %v1568 = vsel %vm1502, %v1566, %v1567
      %v1569 = vrot.slane %v1567, 2
      %v1570 = vrot.slane %v917, 7
      %v1571 = vsel %vm1502, %v1569, %v1570
      %v1572 = vrot.slane %v1570, 2
      %v1573 = vrot.slane %v925, 7
      %v1574 = vsel %vm1502, %v1572, %v1573
      %v1575 = vrot.slane %v1573, 2
      %v1576 = vrot.slane %v924, 7
      %v1577 = vsel %vm1502, %v1575, %v1576
      %v1578 = vrot.slane %v926, 7
      %v1579 = vrot.slane %v1578, 2
      %v1580 = vrot.slane %v934, 7
      %v1581 = vsel %vm1502, %v1579, %v1580
      %v1582 = vrot.slane %v1580, 2
      %v1583 = vrot.slane %v942, 7
      %v1584 = vsel %vm1502, %v1582, %v1583
      %v1585 = vrot.slane %v1583, 2
      %v1586 = vrot.slane %v941, 7
      %v1587 = vsel %vm1502, %v1585, %v1586
      %v1588 = vrot.slane %v1586, 2
      %v1589 = vrot.slane %v943, 7
      %v1590 = vsel %vm1502, %v1588, %v1589
      %v1591 = vrot.slane %v1589, 2
      %v1592 = vrot.slane %v951, 7
      %v1593 = vsel %vm1502, %v1591, %v1592
      %v1594 = vrot.slane %v1592, 2
      %v1595 = vrot.slane %v959, 7
      %v1596 = vsel %vm1502, %v1594, %v1595
      %v1597 = vrot.slane %v1595, 2
      %v1598 = vrot.slane %v958, 7
      %v1599 = vsel %vm1502, %v1597, %v1598
      %v1600 = vrot.slane %v1598, 2
      %v1601 = vrot.slane %v960, 7
      %v1602 = vsel %vm1502, %v1600, %v1601
      %v1603 = vrot.slane %v968, 7
      %v1604 = vrot.slane %v1603, 2
      %v1605 = vrot.slane %v976, 7
      %v1606 = vsel %vm1502, %v1604, %v1605
      %v1607 = vrot.slane %v1605, 2
      %v1608 = vrot.slane %v975, 7
      %v1609 = vsel %vm1502, %v1607, %v1608
      %v1610 = vrot.slane %v1608, 2
      %v1611 = vrot.slane %v977, 7
      %v1612 = vsel %vm1502, %v1610, %v1611
      %v1613 = vrot.slane %v1611, 2
      %v1614 = vrot.slane %v985, 7
      %v1615 = vsel %vm1502, %v1613, %v1614
      %v1616 = vrot.slane %v1614, 2
      %v1617 = vrot.slane %v993, 7
      %v1618 = vsel %vm1502, %v1616, %v1617
      %v1619 = vrot.slane %v1617, 2
      %v1620 = vrot.slane %v992, 7
      %v1621 = vsel %vm1502, %v1619, %v1620
      %v1622 = vrot.slane %v1620, 2
      %v1623 = vrot.slane %v994, 7
      %v1624 = vsel %vm1502, %v1622, %v1623
      %v1625 = vrot.slane %v1623, 2
      %v1626 = vrot.slane %v1002, 7
      %v1627 = vsel %vm1502, %v1625, %v1626
      %v1628 = vrot.slane %v1010, 7
      %v1629 = vrot.slane %v1628, 2
      %v1630 = vrot.slane %v1009, 7
      %v1631 = vsel %vm1502, %v1629, %v1630
      %v1632 = vrot.slane %v1630, 2
      %v1633 = vrot.slane %v1011, 7
      %v1634 = vsel %vm1502, %v1632, %v1633
      %v1635 = vrot.slane %v1633, 2
      %v1636 = vrot.slane %v1019, 7
      %v1637 = vsel %vm1502, %v1635, %v1636
      %v1638 = vrot.slane %v1636, 2
      %v1639 = vrot.slane %v1027, 7
      %v1640 = vsel %vm1502, %v1638, %v1639
      %v1641 = vrot.slane %v1639, 2
      %v1642 = vrot.slane %v1026, 7
      %v1643 = vsel %vm1502, %v1641, %v1642
      %v1644 = vrot.slane %v1642, 2
      %v1645 = vrot.slane %v1028, 7
      %v1646 = vsel %vm1502, %v1644, %v1645
      %v1647 = vrot.slane %v1645, 2
      %v1648 = vrot.slane %v1036, 7
      %v1649 = vsel %vm1502, %v1647, %v1648
      %v1650 = vrot.slane %v1648, 2
      %v1651 = vrot.slane %v1044, 7
      %v1652 = vsel %vm1502, %v1650, %v1651
      %v1653 = vrot.slane %v1043, 7
      %v1654 = vrot.slane %v1653, 2
      %v1655 = vrot.slane %v1045, 7
      %v1656 = vsel %vm1502, %v1654, %v1655
      %v1657 = vrot.slane %v1655, 2
      %v1658 = vrot.slane %v1053, 7
      %v1659 = vsel %vm1502, %v1657, %v1658
      %v1660 = vrot.slane %v1658, 2
      %v1661 = vrot.slane %v1061, 7
      %v1662 = vsel %vm1502, %v1660, %v1661
      %v1663 = vrot.slane %v1661, 2
      %v1664 = vrot.slane %v1060, 7
      %v1665 = vsel %vm1502, %v1663, %v1664
      %v1666 = vrot.slane %v1664, 2
      %v1667 = vrot.slane %v1062, 7
      %v1668 = vsel %vm1502, %v1666, %v1667
      %v1669 = vrot.slane %v1667, 2
      %v1670 = vrot.slane %v1070, 7
      %v1671 = vsel %vm1502, %v1669, %v1670
      %v1672 = vrot.slane %v1670, 2
      %v1673 = vrot.slane %v1078, 7
      %v1674 = vsel %vm1502, %v1672, %v1673
      %v1675 = vrot.slane %v1673, 2
      %v1676 = vrot.slane %v1077, 7
      %v1677 = vsel %vm1502, %v1675, %v1676
      %v1678 = vrot.slane %v1079, 7
      %v1679 = vrot.slane %v1678, 2
      %v1680 = vrot.slane %v1087, 7
      %v1681 = vsel %vm1502, %v1679, %v1680
      %v1682 = vrot.slane %v1680, 2
      %v1683 = vrot.slane %v1095, 7
      %v1684 = vsel %vm1502, %v1682, %v1683
      %v1685 = vrot.slane %v1683, 2
      %v1686 = vrot.slane %v1094, 7
      %v1687 = vsel %vm1502, %v1685, %v1686
      %v1688 = vrot.slane %v1686, 2
      %v1689 = vrot.slane %v1096, 7
      %v1690 = vsel %vm1502, %v1688, %v1689
      %v1691 = vrot.slane %v1689, 2
      %v1692 = vrot.slane %v1104, 7
      %v1693 = vsel %vm1502, %v1691, %v1692
      %v1694 = vrot.slane %v1692, 2
      %v1695 = vrot.slane %v1112, 7
      %v1696 = vsel %vm1502, %v1694, %v1695
      %v1697 = vrot.slane %v1695, 2
      %v1698 = vrot.slane %v1111, 7
      %v1699 = vsel %vm1502, %v1697, %v1698
      %v1700 = vrot.slane %v1698, 2
      %v1701 = vrot.slane %v1113, 7
      %v1702 = vsel %vm1502, %v1700, %v1701
      %v1703 = vrot.slane %v1121, 7
      %v1704 = vrot.slane %v1703, 2
      %v1705 = vrot.slane %v1129, 7
      %v1706 = vsel %vm1502, %v1704, %v1705
      %v1707 = vrot.slane %v1705, 2
      %v1708 = vrot.slane %v1128, 7
      %v1709 = vsel %vm1502, %v1707, %v1708
      %v1710 = vrot.slane %v1708, 2
      %v1711 = vrot.slane %v1130, 7
      %v1712 = vsel %vm1502, %v1710, %v1711
      %v1713 = vrot.slane %v1711, 2
      %v1714 = vrot.slane %v1138, 7
      %v1715 = vsel %vm1502, %v1713, %v1714
      %v1716 = vrot.slane %v1714, 2
      %v1717 = vrot.slane %v1146, 7
      %v1718 = vsel %vm1502, %v1716, %v1717
      %v1719 = vrot.slane %v1717, 2
      %v1720 = vrot.slane %v1145, 7
      %v1721 = vsel %vm1502, %v1719, %v1720
      %v1722 = vrot.slane %v1720, 2
      %v1723 = vrot.slane %v1147, 7
      %v1724 = vsel %vm1502, %v1722, %v1723
      %v1725 = vrot.slane %v1723, 2
      %v1726 = vrot.slane %v1155, 7
      %v1727 = vsel %vm1502, %v1725, %v1726
      %v1728 = vrot.slane %v1163, 7
      %v1729 = vrot.slane %v1728, 2
      %v1730 = vrot.slane %v1162, 7
      %v1731 = vsel %vm1502, %v1729, %v1730
      %v1732 = vrot.slane %v1730, 2
      %v1733 = vrot.slane %v1164, 7
      %v1734 = vsel %vm1502, %v1732, %v1733
      %v1735 = vrot.slane %v1733, 2
      %v1736 = vrot.slane %v1172, 7
      %v1737 = vsel %vm1502, %v1735, %v1736
      %v1738 = vrot.slane %v1736, 2
      %v1739 = vrot.slane %v1180, 7
      %v1740 = vsel %vm1502, %v1738, %v1739
      %v1741 = vrot.slane %v1739, 2
      %v1742 = vrot.slane %v1179, 7
      %v1743 = vsel %vm1502, %v1741, %v1742
      %v1744 = vrot.slane %v1742, 2
      %v1745 = vrot.slane %v1181, 7
      %v1746 = vsel %vm1502, %v1744, %v1745
      %v1747 = vrot.slane %v1745, 2
      %v1748 = vrot.slane %v1189, 7
      %v1749 = vsel %vm1502, %v1747, %v1748
      %v1750 = vrot.slane %v1748, 2
      %v1751 = vrot.slane %v1197, 7
      %v1752 = vsel %vm1502, %v1750, %v1751
      %v1753 = vrot.slane %v1196, 7
      %v1754 = vrot.slane %v1753, 2
      %v1755 = vrot.slane %v1198, 7
      %v1756 = vsel %vm1502, %v1754, %v1755
      %v1757 = vrot.slane %v1755, 2
      %v1758 = vrot.slane %v1206, 7
      %v1759 = vsel %vm1502, %v1757, %v1758
      %v1760 = vrot.slane %v1758, 2
      %v1761 = vrot.slane %v1214, 7
      %v1762 = vsel %vm1502, %v1760, %v1761
      %v1763 = vrot.slane %v1761, 2
      %v1764 = vrot.slane %v1213, 7
      %v1765 = vsel %vm1502, %v1763, %v1764
      %v1766 = vrot.slane %v1764, 2
      %v1767 = vrot.slane %v1215, 7
      %v1768 = vsel %vm1502, %v1766, %v1767
      %v1769 = vrot.slane %v1767, 2
      %v1770 = vrot.slane %v1223, 7
      %v1771 = vsel %vm1502, %v1769, %v1770
      %v1772 = vrot.slane %v1770, 2
      %v1773 = vrot.slane %v1231, 7
      %v1774 = vsel %vm1502, %v1772, %v1773
      %v1775 = vrot.slane %v1773, 2
      %v1776 = vrot.slane %v1230, 7
      %v1777 = vsel %vm1502, %v1775, %v1776
      %v1778 = vrot.slane %v1232, 7
      %v1779 = vrot.slane %v1778, 2
      %v1780 = vrot.slane %v1240, 7
      %v1781 = vsel %vm1502, %v1779, %v1780
      %v1782 = vrot.slane %v1780, 2
      %v1783 = vrot.slane %v1248, 7
      %v1784 = vsel %vm1502, %v1782, %v1783
      %v1785 = vrot.slane %v1783, 2
      %v1786 = vrot.slane %v1247, 7
      %v1787 = vsel %vm1502, %v1785, %v1786
      %v1788 = vrot.slane %v1786, 2
      %v1789 = vrot.slane %v1249, 7
      %v1790 = vsel %vm1502, %v1788, %v1789
      %v1791 = vrot.slane %v1789, 2
      %v1792 = vrot.slane %v1257, 7
      %v1793 = vsel %vm1502, %v1791, %v1792
      %v1794 = vrot.slane %v1792, 2
      %v1795 = vrot.slane %v1265, 7
      %v1796 = vsel %vm1502, %v1794, %v1795
      %v1797 = vrot.slane %v1795, 2
      %v1798 = vrot.slane %v1264, 7
      %v1799 = vsel %vm1502, %v1797, %v1798
      %v1800 = vrot.slane %v1798, 2
      %v1801 = vrot.slane %v1266, 7
      %v1802 = vsel %vm1502, %v1800, %v1801
      %v1803 = vrot.slane %v1274, 7
      %v1804 = vrot.slane %v1803, 2
      %v1805 = vrot.slane %v1282, 7
      %v1806 = vsel %vm1502, %v1804, %v1805
      %v1807 = vrot.slane %v1805, 2
      %v1808 = vrot.slane %v1281, 7
      %v1809 = vsel %vm1502, %v1807, %v1808
      %v1810 = vrot.slane %v1808, 2
      %v1811 = vrot.slane %v1283, 7
      %v1812 = vsel %vm1502, %v1810, %v1811
      %v1813 = vrot.slane %v1811, 2
      %v1814 = vrot.slane %v1291, 7
      %v1815 = vsel %vm1502, %v1813, %v1814
      %v1816 = vrot.slane %v1814, 2
      %v1817 = vrot.slane %v1299, 7
      %v1818 = vsel %vm1502, %v1816, %v1817
      %v1819 = vrot.slane %v1817, 2
      %v1820 = vrot.slane %v1298, 7
      %v1821 = vsel %vm1502, %v1819, %v1820
      %v1822 = vrot.slane %v1820, 2
      %v1823 = vrot.slane %v1300, 7
      %v1824 = vsel %vm1502, %v1822, %v1823
      %v1825 = vrot.slane %v1823, 2
      %v1826 = vrot.slane %v1308, 7
      %v1827 = vsel %vm1502, %v1825, %v1826
      %v1828 = vrot.slane %v1316, 7
      %v1829 = vrot.slane %v1828, 2
      %v1830 = vrot.slane %v1315, 7
      %v1831 = vsel %vm1502, %v1829, %v1830
      %v1832 = vrot.slane %v1830, 2
      %v1833 = vrot.slane %v1317, 7
      %v1834 = vsel %vm1502, %v1832, %v1833
      %v1835 = vrot.slane %v1833, 2
      %v1836 = vrot.slane %v1325, 7
      %v1837 = vsel %vm1502, %v1835, %v1836
      %v1838 = vrot.slane %v1836, 2
      %v1839 = vrot.slane %v1333, 7
      %v1840 = vsel %vm1502, %v1838, %v1839
      %v1841 = vrot.slane %v1839, 2
      %v1842 = vrot.slane %v1332, 7
      %v1843 = vsel %vm1502, %v1841, %v1842
      %v1844 = vrot.slane %v1842, 2
      %v1845 = vrot.slane %v1334, 7
      %v1846 = vsel %vm1502, %v1844, %v1845
      %v1847 = vrot.slane %v1845, 2
      %v1848 = vrot.slane %v1342, 7
      %v1849 = vsel %vm1502, %v1847, %v1848
      %v1850 = vrot.slane %v1848, 2
      %v1851 = vrot.slane %v1350, 7
      %v1852 = vsel %vm1502, %v1850, %v1851
      %v1853 = vrot.slane %v1349, 7
      %v1854 = vrot.slane %v1853, 2
      %v1855 = vrot.slane %v1351, 7
      %v1856 = vsel %vm1502, %v1854, %v1855
      %v1857 = vrot.slane %v1855, 2
      %v1858 = vrot.slane %v1359, 7
      %v1859 = vsel %vm1502, %v1857, %v1858
      %v1860 = vrot.slane %v1858, 2
      %v1861 = vrot.slane %v1367, 7
      %v1862 = vsel %vm1502, %v1860, %v1861
      %v1863 = vrot.slane %v1861, 2
      %v1864 = vrot.slane %v1366, 7
      %v1865 = vsel %vm1502, %v1863, %v1864
      %v1866 = vrot.slane %v1864, 2
      %v1867 = vrot.slane %v1368, 7
      %v1868 = vsel %vm1502, %v1866, %v1867
      %v1869 = vrot.slane %v1867, 2
      %v1870 = vrot.slane %v1376, 7
      %v1871 = vsel %vm1502, %v1869, %v1870
      %v1872 = vrot.slane %v1870, 2
      %v1873 = vrot.slane %v1384, 7
      %v1874 = vsel %vm1502, %v1872, %v1873
      %v1875 = vrot.slane %v1873, 2
      %v1876 = vrot.slane %v1383, 7
      %v1877 = vsel %vm1502, %v1875, %v1876
      %v1878 = vrot.slane %v1385, 7
      %v1879 = vrot.slane %v1878, 2
      %v1880 = vrot.slane %v1393, 7
      %v1881 = vsel %vm1502, %v1879, %v1880
      %v1882 = vrot.slane %v1880, 2
      %v1883 = vrot.slane %v1401, 7
      %v1884 = vsel %vm1502, %v1882, %v1883
      %v1885 = vrot.slane %v1883, 2
      %v1886 = vrot.slane %v1400, 7
      %v1887 = vsel %vm1502, %v1885, %v1886
      %v1888 = vrot.slane %v1886, 2
      %v1889 = vrot.slane %v1402, 7
      %v1890 = vsel %vm1502, %v1888, %v1889
      %v1891 = vrot.slane %v1889, 2
      %v1892 = vrot.slane %v1410, 7
      %v1893 = vsel %vm1502, %v1891, %v1892
      %v1894 = vrot.slane %v1892, 2
      %v1895 = vrot.slane %v1418, 7
      %v1896 = vsel %vm1502, %v1894, %v1895
      %v1897 = vrot.slane %v1895, 2
      %v1898 = vrot.slane %v1417, 7
      %v1899 = vsel %vm1502, %v1897, %v1898
      %v1900 = vrot.slane %v1898, 2
      %v1901 = vrot.slane %v1419, 7
      %v1902 = vsel %vm1502, %v1900, %v1901
      %v1903 = vrot.slane %v1427, 7
      %v1904 = vrot.slane %v1903, 2
      %v1905 = vrot.slane %v1435, 7
      %v1906 = vsel %vm1502, %v1904, %v1905
      %v1907 = vrot.slane %v1905, 2
      %v1908 = vrot.slane %v1434, 7
      %v1909 = vsel %vm1502, %v1907, %v1908
      %v1910 = vrot.slane %v1908, 2
      %v1911 = vrot.slane %v1436, 7
      %v1912 = vsel %vm1502, %v1910, %v1911
      %v1913 = vrot.slane %v1911, 2
      %v1914 = vrot.slane %v1444, 7
      %v1915 = vsel %vm1502, %v1913, %v1914
      %v1916 = vrot.slane %v1914, 2
      %v1917 = vrot.slane %v1452, 7
      %v1918 = vsel %vm1502, %v1916, %v1917
      %v1919 = vrot.slane %v1917, 2
      %v1920 = vrot.slane %v1451, 7
      %v1921 = vsel %vm1502, %v1919, %v1920
      %v1922 = vrot.slane %v1920, 2
      %v1923 = vrot.slane %v1453, 7
      %v1924 = vsel %vm1502, %v1922, %v1923
      %v1925 = vrot.slane %v1923, 2
      %v1926 = vrot.slane %v1461, 7
      %v1927 = vsel %vm1502, %v1925, %v1926
      %v1928 = vrot.slane %v1469, 7
      %v1929 = vrot.slane %v1928, 2
      %v1930 = vrot.slane %v1468, 7
      %v1931 = vsel %vm1502, %v1929, %v1930
      %v1932 = vrot.slane %v1930, 2
      %v1933 = vrot.slane %v1470, 7
      %v1934 = vsel %vm1502, %v1932, %v1933
      %v1935 = vrot.slane %v1933, 2
      %v1936 = vrot.slane %v1478, 7
      %v1937 = vsel %vm1502, %v1935, %v1936
      %v1938 = vrot.slane %v1936, 2
      %v1939 = vrot.slane %v1486, 7
      %v1940 = vsel %vm1502, %v1938, %v1939
      %v1941 = vrot.slane %v1939, 2
      %v1942 = vrot.slane %v1485, 7
      %v1943 = vsel %vm1502, %v1941, %v1942
      %v1944 = vrot.slane %v1942, 2
      %v1945 = vrot.slane %v1487, 7
      %v1946 = vsel %vm1502, %v1944, %v1945
      %v1947 = vrot.slane %v1945, 2
      %v1948 = vrot.slane %v1494, 7
      %v1949 = vsel %vm1502, %v1947, %v1948
      %v1950 = vrot.slane %v1948, 2
      %v1951 = vrot.slane %v1495, 7
      %v1952 = vsel %vm1502, %v1950, %v1951
      %v1953 = vcombine.low %v815, %v823
      %v1954 = vcombine.low %v822, %v824
      %v1956 = vunpack.c.l.s4 1983009808
      %v1957 = vunpack.c.0.s8 %v1956
      %v1958 = vlaneseq
      %v1959 = vshrl.u32 %v1958, 7
      %v1960 = vsub.s32 %v1957, %v1959
      %v1961 = vrot.slane %v1953, %v1960
      %v1963 = vunpack.c.l.s4 1983009808
      %v1964 = vunpack.c.0.s8 %v1963
      %v1965 = vlaneseq
      %v1966 = vshrl.u32 %v1965, 7
      %v1967 = vsub.s32 %v1964, %v1966
      %v1968 = vrot.slane %v1954, %v1967
      %v1969 = vcombine.low %v1961, %v1968
      %v1970 = vcombine.low %v832, %v840
      %v1971 = vcombine.low %v839, %v841
      %v1973 = vunpack.c.l.s4 1983009808
      %v1974 = vunpack.c.0.s8 %v1973
      %v1975 = vlaneseq
      %v1976 = vshrl.u32 %v1975, 7
      %v1977 = vsub.s32 %v1974, %v1976
      %v1978 = vrot.slane %v1970, %v1977
      %v1980 = vunpack.c.l.s4 1983009808
      %v1981 = vunpack.c.0.s8 %v1980
      %v1982 = vlaneseq
      %v1983 = vshrl.u32 %v1982, 7
      %v1984 = vsub.s32 %v1981, %v1983
      %v1985 = vrot.slane %v1971, %v1984
      %v1986 = vcombine.low %v1978, %v1985
      %v1987 = vcombine.low %v857, %v856
      %v1988 = vcombine.low %v858, %v866
      %v1990 = vunpack.c.l.s4 1983009808
      %v1991 = vunpack.c.0.s8 %v1990
      %v1992 = vlaneseq
      %v1993 = vshrl.u32 %v1992, 7
      %v1994 = vsub.s32 %v1991, %v1993
      %v1995 = vrot.slane %v1987, %v1994
      %v1997 = vunpack.c.l.s4 1983009808
      %v1998 = vunpack.c.0.s8 %v1997
      %v1999 = vlaneseq
      %v2000 = vshrl.u32 %v1999, 7
      %v2001 = vsub.s32 %v1998, %v2000
      %v2002 = vrot.slane %v1988, %v2001
      %v2003 = vcombine.low %v1995, %v2002
      %v2004 = vcombine.low %v874, %v873
      %v2005 = vcombine.low %v875, %v883
      %v2007 = vunpack.c.l.s4 1983009808
      %v2008 = vunpack.c.0.s8 %v2007
      %v2009 = vlaneseq
      %v2010 = vshrl.u32 %v2009, 7
      %v2011 = vsub.s32 %v2008, %v2010
      %v2012 = vrot.slane %v2004, %v2011
      %v2014 = vunpack.c.l.s4 1983009808
      %v2015 = vunpack.c.0.s8 %v2014
      %v2016 = vlaneseq
      %v2017 = vshrl.u32 %v2016, 7
      %v2018 = vsub.s32 %v2015, %v2017
      %v2019 = vrot.slane %v2005, %v2018
      %v2020 = vcombine.low %v2012, %v2019
      %v2021 = vcombine.low %v890, %v892
      %v2022 = vcombine.low %v900, %v908
      %v2024 = vunpack.c.l.s4 1983009808
      %v2025 = vunpack.c.0.s8 %v2024
      %v2026 = vlaneseq
      %v2027 = vshrl.u32 %v2026, 7
      %v2028 = vsub.s32 %v2025, %v2027
      %v2029 = vrot.slane %v2021, %v2028
      %v2031 = vunpack.c.l.s4 1983009808
      %v2032 = vunpack.c.0.s8 %v2031
      %v2033 = vlaneseq
      %v2034 = vshrl.u32 %v2033, 7
      %v2035 = vsub.s32 %v2032, %v2034
      %v2036 = vrot.slane %v2022, %v2035
      %v2037 = vcombine.low %v2029, %v2036
      %v2038 = vcombine.low %v907, %v909
      %v2039 = vcombine.low %v917, %v925
      %v2041 = vunpack.c.l.s4 1983009808
      %v2042 = vunpack.c.0.s8 %v2041
      %v2043 = vlaneseq
      %v2044 = vshrl.u32 %v2043, 7
      %v2045 = vsub.s32 %v2042, %v2044
      %v2046 = vrot.slane %v2038, %v2045
      %v2048 = vunpack.c.l.s4 1983009808
      %v2049 = vunpack.c.0.s8 %v2048
      %v2050 = vlaneseq
      %v2051 = vshrl.u32 %v2050, 7
      %v2052 = vsub.s32 %v2049, %v2051
      %v2053 = vrot.slane %v2039, %v2052
      %v2054 = vcombine.low %v2046, %v2053
      %v2055 = vcombine.low %v926, %v934
      %v2056 = vcombine.low %v942, %v941
      %v2058 = vunpack.c.l.s4 1983009808
      %v2059 = vunpack.c.0.s8 %v2058
      %v2060 = vlaneseq
      %v2061 = vshrl.u32 %v2060, 7
      %v2062 = vsub.s32 %v2059, %v2061
      %v2063 = vrot.slane %v2055, %v2062
      %v2065 = vunpack.c.l.s4 1983009808
      %v2066 = vunpack.c.0.s8 %v2065
      %v2067 = vlaneseq
      %v2068 = vshrl.u32 %v2067, 7
      %v2069 = vsub.s32 %v2066, %v2068
      %v2070 = vrot.slane %v2056, %v2069
      %v2071 = vcombine.low %v2063, %v2070
      %v2072 = vcombine.low %v943, %v951
      %v2073 = vcombine.low %v959, %v958
      %v2075 = vunpack.c.l.s4 1983009808
      %v2076 = vunpack.c.0.s8 %v2075
      %v2077 = vlaneseq
      %v2078 = vshrl.u32 %v2077, 7
      %v2079 = vsub.s32 %v2076, %v2078
      %v2080 = vrot.slane %v2072, %v2079
      %v2082 = vunpack.c.l.s4 1983009808
      %v2083 = vunpack.c.0.s8 %v2082
      %v2084 = vlaneseq
      %v2085 = vshrl.u32 %v2084, 7
      %v2086 = vsub.s32 %v2083, %v2085
      %v2087 = vrot.slane %v2073, %v2086
      %v2088 = vcombine.low %v2080, %v2087
      %v2089 = vcombine.low %v968, %v976
      %v2090 = vcombine.low %v975, %v977
      %v2092 = vunpack.c.l.s4 1983009808
      %v2093 = vunpack.c.0.s8 %v2092
      %v2094 = vlaneseq
      %v2095 = vshrl.u32 %v2094, 7
      %v2096 = vsub.s32 %v2093, %v2095
      %v2097 = vrot.slane %v2089, %v2096
      %v2099 = vunpack.c.l.s4 1983009808
      %v2100 = vunpack.c.0.s8 %v2099
      %v2101 = vlaneseq
      %v2102 = vshrl.u32 %v2101, 7
      %v2103 = vsub.s32 %v2100, %v2102
      %v2104 = vrot.slane %v2090, %v2103
      %v2105 = vcombine.low %v2097, %v2104
      %v2106 = vcombine.low %v985, %v993
      %v2107 = vcombine.low %v992, %v994
      %v2109 = vunpack.c.l.s4 1983009808
      %v2110 = vunpack.c.0.s8 %v2109
      %v2111 = vlaneseq
      %v2112 = vshrl.u32 %v2111, 7
      %v2113 = vsub.s32 %v2110, %v2112
      %v2114 = vrot.slane %v2106, %v2113
      %v2116 = vunpack.c.l.s4 1983009808
      %v2117 = vunpack.c.0.s8 %v2116
      %v2118 = vlaneseq
      %v2119 = vshrl.u32 %v2118, 7
      %v2120 = vsub.s32 %v2117, %v2119
      %v2121 = vrot.slane %v2107, %v2120
      %v2122 = vcombine.low %v2114, %v2121
      %v2123 = vcombine.low %v1010, %v1009
      %v2124 = vcombine.low %v1011, %v1019
      %v2126 = vunpack.c.l.s4 1983009808
      %v2127 = vunpack.c.0.s8 %v2126
      %v2128 = vlaneseq
      %v2129 = vshrl.u32 %v2128, 7
      %v2130 = vsub.s32 %v2127, %v2129
      %v2131 = vrot.slane %v2123, %v2130
      %v2133 = vunpack.c.l.s4 1983009808
      %v2134 = vunpack.c.0.s8 %v2133
      %v2135 = vlaneseq
      %v2136 = vshrl.u32 %v2135, 7
      %v2137 = vsub.s32 %v2134, %v2136
      %v2138 = vrot.slane %v2124, %v2137
      %v2139 = vcombine.low %v2131, %v2138
      %v2140 = vcombine.low %v1027, %v1026
      %v2141 = vcombine.low %v1028, %v1036
      %v2143 = vunpack.c.l.s4 1983009808
      %v2144 = vunpack.c.0.s8 %v2143
      %v2145 = vlaneseq
      %v2146 = vshrl.u32 %v2145, 7
      %v2147 = vsub.s32 %v2144, %v2146
      %v2148 = vrot.slane %v2140, %v2147
      %v2150 = vunpack.c.l.s4 1983009808
      %v2151 = vunpack.c.0.s8 %v2150
      %v2152 = vlaneseq
      %v2153 = vshrl.u32 %v2152, 7
      %v2154 = vsub.s32 %v2151, %v2153
      %v2155 = vrot.slane %v2141, %v2154
      %v2156 = vcombine.low %v2148, %v2155
      %v2157 = vcombine.low %v1043, %v1045
      %v2158 = vcombine.low %v1053, %v1061
      %v2160 = vunpack.c.l.s4 1983009808
      %v2161 = vunpack.c.0.s8 %v2160
      %v2162 = vlaneseq
      %v2163 = vshrl.u32 %v2162, 7
      %v2164 = vsub.s32 %v2161, %v2163
      %v2165 = vrot.slane %v2157, %v2164
      %v2167 = vunpack.c.l.s4 1983009808
      %v2168 = vunpack.c.0.s8 %v2167
      %v2169 = vlaneseq
      %v2170 = vshrl.u32 %v2169, 7
      %v2171 = vsub.s32 %v2168, %v2170
      %v2172 = vrot.slane %v2158, %v2171
      %v2173 = vcombine.low %v2165, %v2172
      %v2174 = vcombine.low %v1060, %v1062
      %v2175 = vcombine.low %v1070, %v1078
      %v2177 = vunpack.c.l.s4 1983009808
      %v2178 = vunpack.c.0.s8 %v2177
      %v2179 = vlaneseq
      %v2180 = vshrl.u32 %v2179, 7
      %v2181 = vsub.s32 %v2178, %v2180
      %v2182 = vrot.slane %v2174, %v2181
      %v2184 = vunpack.c.l.s4 1983009808
      %v2185 = vunpack.c.0.s8 %v2184
      %v2186 = vlaneseq
      %v2187 = vshrl.u32 %v2186, 7
      %v2188 = vsub.s32 %v2185, %v2187
      %v2189 = vrot.slane %v2175, %v2188
      %v2190 = vcombine.low %v2182, %v2189
      %v2191 = vcombine.low %v1079, %v1087
      %v2192 = vcombine.low %v1095, %v1094
      %v2194 = vunpack.c.l.s4 1983009808
      %v2195 = vunpack.c.0.s8 %v2194
      %v2196 = vlaneseq
      %v2197 = vshrl.u32 %v2196, 7
      %v2198 = vsub.s32 %v2195, %v2197
      %v2199 = vrot.slane %v2191, %v2198
      %v2201 = vunpack.c.l.s4 1983009808
      %v2202 = vunpack.c.0.s8 %v2201
      %v2203 = vlaneseq
      %v2204 = vshrl.u32 %v2203, 7
      %v2205 = vsub.s32 %v2202, %v2204
      %v2206 = vrot.slane %v2192, %v2205
      %v2207 = vcombine.low %v2199, %v2206
      %v2208 = vcombine.low %v1096, %v1104
      %v2209 = vcombine.low %v1112, %v1111
      %v2211 = vunpack.c.l.s4 1983009808
      %v2212 = vunpack.c.0.s8 %v2211
      %v2213 = vlaneseq
      %v2214 = vshrl.u32 %v2213, 7
      %v2215 = vsub.s32 %v2212, %v2214
      %v2216 = vrot.slane %v2208, %v2215
      %v2218 = vunpack.c.l.s4 1983009808
      %v2219 = vunpack.c.0.s8 %v2218
      %v2220 = vlaneseq
      %v2221 = vshrl.u32 %v2220, 7
      %v2222 = vsub.s32 %v2219, %v2221
      %v2223 = vrot.slane %v2209, %v2222
      %v2224 = vcombine.low %v2216, %v2223
      %v2225 = vcombine.low %v1121, %v1129
      %v2226 = vcombine.low %v1128, %v1130
      %v2228 = vunpack.c.l.s4 1983009808
      %v2229 = vunpack.c.0.s8 %v2228
      %v2230 = vlaneseq
      %v2231 = vshrl.u32 %v2230, 7
      %v2232 = vsub.s32 %v2229, %v2231
      %v2233 = vrot.slane %v2225, %v2232
      %v2235 = vunpack.c.l.s4 1983009808
      %v2236 = vunpack.c.0.s8 %v2235
      %v2237 = vlaneseq
      %v2238 = vshrl.u32 %v2237, 7
      %v2239 = vsub.s32 %v2236, %v2238
      %v2240 = vrot.slane %v2226, %v2239
      %v2241 = vcombine.low %v2233, %v2240
      %v2242 = vcombine.low %v1138, %v1146
      %v2243 = vcombine.low %v1145, %v1147
      %v2245 = vunpack.c.l.s4 1983009808
      %v2246 = vunpack.c.0.s8 %v2245
      %v2247 = vlaneseq
      %v2248 = vshrl.u32 %v2247, 7
      %v2249 = vsub.s32 %v2246, %v2248
      %v2250 = vrot.slane %v2242, %v2249
      %v2252 = vunpack.c.l.s4 1983009808
      %v2253 = vunpack.c.0.s8 %v2252
      %v2254 = vlaneseq
      %v2255 = vshrl.u32 %v2254, 7
      %v2256 = vsub.s32 %v2253, %v2255
      %v2257 = vrot.slane %v2243, %v2256
      %v2258 = vcombine.low %v2250, %v2257
      %v2259 = vcombine.low %v1163, %v1162
      %v2260 = vcombine.low %v1164, %v1172
      %v2262 = vunpack.c.l.s4 1983009808
      %v2263 = vunpack.c.0.s8 %v2262
      %v2264 = vlaneseq
      %v2265 = vshrl.u32 %v2264, 7
      %v2266 = vsub.s32 %v2263, %v2265
      %v2267 = vrot.slane %v2259, %v2266
      %v2269 = vunpack.c.l.s4 1983009808
      %v2270 = vunpack.c.0.s8 %v2269
      %v2271 = vlaneseq
      %v2272 = vshrl.u32 %v2271, 7
      %v2273 = vsub.s32 %v2270, %v2272
      %v2274 = vrot.slane %v2260, %v2273
      %v2275 = vcombine.low %v2267, %v2274
      %v2276 = vcombine.low %v1180, %v1179
      %v2277 = vcombine.low %v1181, %v1189
      %v2279 = vunpack.c.l.s4 1983009808
      %v2280 = vunpack.c.0.s8 %v2279
      %v2281 = vlaneseq
      %v2282 = vshrl.u32 %v2281, 7
      %v2283 = vsub.s32 %v2280, %v2282
      %v2284 = vrot.slane %v2276, %v2283
      %v2286 = vunpack.c.l.s4 1983009808
      %v2287 = vunpack.c.0.s8 %v2286
      %v2288 = vlaneseq
      %v2289 = vshrl.u32 %v2288, 7
      %v2290 = vsub.s32 %v2287, %v2289
      %v2291 = vrot.slane %v2277, %v2290
      %v2292 = vcombine.low %v2284, %v2291
      %v2293 = vcombine.low %v1196, %v1198
      %v2294 = vcombine.low %v1206, %v1214
      %v2296 = vunpack.c.l.s4 1983009808
      %v2297 = vunpack.c.0.s8 %v2296
      %v2298 = vlaneseq
      %v2299 = vshrl.u32 %v2298, 7
      %v2300 = vsub.s32 %v2297, %v2299
      %v2301 = vrot.slane %v2293, %v2300
      %v2303 = vunpack.c.l.s4 1983009808
      %v2304 = vunpack.c.0.s8 %v2303
      %v2305 = vlaneseq
      %v2306 = vshrl.u32 %v2305, 7
      %v2307 = vsub.s32 %v2304, %v2306
      %v2308 = vrot.slane %v2294, %v2307
      %v2309 = vcombine.low %v2301, %v2308
      %v2310 = vcombine.low %v1213, %v1215
      %v2311 = vcombine.low %v1223, %v1231
      %v2313 = vunpack.c.l.s4 1983009808
      %v2314 = vunpack.c.0.s8 %v2313
      %v2315 = vlaneseq
      %v2316 = vshrl.u32 %v2315, 7
      %v2317 = vsub.s32 %v2314, %v2316
      %v2318 = vrot.slane %v2310, %v2317
      %v2320 = vunpack.c.l.s4 1983009808
      %v2321 = vunpack.c.0.s8 %v2320
      %v2322 = vlaneseq
      %v2323 = vshrl.u32 %v2322, 7
      %v2324 = vsub.s32 %v2321, %v2323
      %v2325 = vrot.slane %v2311, %v2324
      %v2326 = vcombine.low %v2318, %v2325
      %v2327 = vcombine.low %v1232, %v1240
      %v2328 = vcombine.low %v1248, %v1247
      %v2330 = vunpack.c.l.s4 1983009808
      %v2331 = vunpack.c.0.s8 %v2330
      %v2332 = vlaneseq
      %v2333 = vshrl.u32 %v2332, 7
      %v2334 = vsub.s32 %v2331, %v2333
      %v2335 = vrot.slane %v2327, %v2334
      %v2337 = vunpack.c.l.s4 1983009808
      %v2338 = vunpack.c.0.s8 %v2337
      %v2339 = vlaneseq
      %v2340 = vshrl.u32 %v2339, 7
      %v2341 = vsub.s32 %v2338, %v2340
      %v2342 = vrot.slane %v2328, %v2341
      %v2343 = vcombine.low %v2335, %v2342
      %v2344 = vcombine.low %v1249, %v1257
      %v2345 = vcombine.low %v1265, %v1264
      %v2347 = vunpack.c.l.s4 1983009808
      %v2348 = vunpack.c.0.s8 %v2347
      %v2349 = vlaneseq
      %v2350 = vshrl.u32 %v2349, 7
      %v2351 = vsub.s32 %v2348, %v2350
      %v2352 = vrot.slane %v2344, %v2351
      %v2354 = vunpack.c.l.s4 1983009808
      %v2355 = vunpack.c.0.s8 %v2354
      %v2356 = vlaneseq
      %v2357 = vshrl.u32 %v2356, 7
      %v2358 = vsub.s32 %v2355, %v2357
      %v2359 = vrot.slane %v2345, %v2358
      %v2360 = vcombine.low %v2352, %v2359
      %v2361 = vcombine.low %v1274, %v1282
      %v2362 = vcombine.low %v1281, %v1283
      %v2364 = vunpack.c.l.s4 1983009808
      %v2365 = vunpack.c.0.s8 %v2364
      %v2366 = vlaneseq
      %v2367 = vshrl.u32 %v2366, 7
      %v2368 = vsub.s32 %v2365, %v2367
      %v2369 = vrot.slane %v2361, %v2368
      %v2371 = vunpack.c.l.s4 1983009808
      %v2372 = vunpack.c.0.s8 %v2371
      %v2373 = vlaneseq
      %v2374 = vshrl.u32 %v2373, 7
      %v2375 = vsub.s32 %v2372, %v2374
      %v2376 = vrot.slane %v2362, %v2375
      %v2377 = vcombine.low %v2369, %v2376
      %v2378 = vcombine.low %v1291, %v1299
      %v2379 = vcombine.low %v1298, %v1300
      %v2381 = vunpack.c.l.s4 1983009808
      %v2382 = vunpack.c.0.s8 %v2381
      %v2383 = vlaneseq
      %v2384 = vshrl.u32 %v2383, 7
      %v2385 = vsub.s32 %v2382, %v2384
      %v2386 = vrot.slane %v2378, %v2385
      %v2388 = vunpack.c.l.s4 1983009808
      %v2389 = vunpack.c.0.s8 %v2388
      %v2390 = vlaneseq
      %v2391 = vshrl.u32 %v2390, 7
      %v2392 = vsub.s32 %v2389, %v2391
      %v2393 = vrot.slane %v2379, %v2392
      %v2394 = vcombine.low %v2386, %v2393
      %v2395 = vcombine.low %v1316, %v1315
      %v2396 = vcombine.low %v1317, %v1325
      %v2398 = vunpack.c.l.s4 1983009808
      %v2399 = vunpack.c.0.s8 %v2398
      %v2400 = vlaneseq
      %v2401 = vshrl.u32 %v2400, 7
      %v2402 = vsub.s32 %v2399, %v2401
      %v2403 = vrot.slane %v2395, %v2402
      %v2405 = vunpack.c.l.s4 1983009808
      %v2406 = vunpack.c.0.s8 %v2405
      %v2407 = vlaneseq
      %v2408 = vshrl.u32 %v2407, 7
      %v2409 = vsub.s32 %v2406, %v2408
      %v2410 = vrot.slane %v2396, %v2409
      %v2411 = vcombine.low %v2403, %v2410
      %v2412 = vcombine.low %v1333, %v1332
      %v2413 = vcombine.low %v1334, %v1342
      %v2415 = vunpack.c.l.s4 1983009808
      %v2416 = vunpack.c.0.s8 %v2415
      %v2417 = vlaneseq
      %v2418 = vshrl.u32 %v2417, 7
      %v2419 = vsub.s32 %v2416, %v2418
      %v2420 = vrot.slane %v2412, %v2419
      %v2422 = vunpack.c.l.s4 1983009808
      %v2423 = vunpack.c.0.s8 %v2422
      %v2424 = vlaneseq
      %v2425 = vshrl.u32 %v2424, 7
      %v2426 = vsub.s32 %v2423, %v2425
      %v2427 = vrot.slane %v2413, %v2426
      %v2428 = vcombine.low %v2420, %v2427
      %v2429 = vcombine.low %v1349, %v1351
      %v2430 = vcombine.low %v1359, %v1367
      %v2432 = vunpack.c.l.s4 1983009808
      %v2433 = vunpack.c.0.s8 %v2432
      %v2434 = vlaneseq
      %v2435 = vshrl.u32 %v2434, 7
      %v2436 = vsub.s32 %v2433, %v2435
      %v2437 = vrot.slane %v2429, %v2436
      %v2439 = vunpack.c.l.s4 1983009808
      %v2440 = vunpack.c.0.s8 %v2439
      %v2441 = vlaneseq
      %v2442 = vshrl.u32 %v2441, 7
      %v2443 = vsub.s32 %v2440, %v2442
      %v2444 = vrot.slane %v2430, %v2443
      %v2445 = vcombine.low %v2437, %v2444
      %v2446 = vcombine.low %v1366, %v1368
      %v2447 = vcombine.low %v1376, %v1384
      %v2449 = vunpack.c.l.s4 1983009808
      %v2450 = vunpack.c.0.s8 %v2449
      %v2451 = vlaneseq
      %v2452 = vshrl.u32 %v2451, 7
      %v2453 = vsub.s32 %v2450, %v2452
      %v2454 = vrot.slane %v2446, %v2453
      %v2456 = vunpack.c.l.s4 1983009808
      %v2457 = vunpack.c.0.s8 %v2456
      %v2458 = vlaneseq
      %v2459 = vshrl.u32 %v2458, 7
      %v2460 = vsub.s32 %v2457, %v2459
      %v2461 = vrot.slane %v2447, %v2460
      %v2462 = vcombine.low %v2454, %v2461
      %v2463 = vcombine.low %v1385, %v1393
      %v2464 = vcombine.low %v1401, %v1400
      %v2466 = vunpack.c.l.s4 1983009808
      %v2467 = vunpack.c.0.s8 %v2466
      %v2468 = vlaneseq
      %v2469 = vshrl.u32 %v2468, 7
      %v2470 = vsub.s32 %v2467, %v2469
      %v2471 = vrot.slane %v2463, %v2470
      %v2473 = vunpack.c.l.s4 1983009808
      %v2474 = vunpack.c.0.s8 %v2473
      %v2475 = vlaneseq
      %v2476 = vshrl.u32 %v2475, 7
      %v2477 = vsub.s32 %v2474, %v2476
      %v2478 = vrot.slane %v2464, %v2477
      %v2479 = vcombine.low %v2471, %v2478
      %v2480 = vcombine.low %v1402, %v1410
      %v2481 = vcombine.low %v1418, %v1417
      %v2483 = vunpack.c.l.s4 1983009808
      %v2484 = vunpack.c.0.s8 %v2483
      %v2485 = vlaneseq
      %v2486 = vshrl.u32 %v2485, 7
      %v2487 = vsub.s32 %v2484, %v2486
      %v2488 = vrot.slane %v2480, %v2487
      %v2490 = vunpack.c.l.s4 1983009808
      %v2491 = vunpack.c.0.s8 %v2490
      %v2492 = vlaneseq
      %v2493 = vshrl.u32 %v2492, 7
      %v2494 = vsub.s32 %v2491, %v2493
      %v2495 = vrot.slane %v2481, %v2494
      %v2496 = vcombine.low %v2488, %v2495
      %v2529 = vcombine.low %v1506, %v1509
      %v2530 = vcombine.low %v1512, %v1515
      %v2532 = vunpack.c.l.s4 1983009808
      %v2533 = vunpack.c.0.s8 %v2532
      %v2534 = vlaneseq
      %v2535 = vshrl.u32 %v2534, 7
      %v2536 = vsub.s32 %v2533, %v2535
      %v2537 = vrot.slane %v2529, %v2536
      %v2539 = vunpack.c.l.s4 1983009808
      %v2540 = vunpack.c.0.s8 %v2539
      %v2541 = vlaneseq
      %v2542 = vshrl.u32 %v2541, 7
      %v2543 = vsub.s32 %v2540, %v2542
      %v2544 = vrot.slane %v2530, %v2543
      %v2545 = vcombine.low %v2537, %v2544
      %v2546 = vcombine.low %v1518, %v1521
      %v2547 = vcombine.low %v1524, %v1527
      %v2549 = vunpack.c.l.s4 1983009808
      %v2550 = vunpack.c.0.s8 %v2549
      %v2551 = vlaneseq
      %v2552 = vshrl.u32 %v2551, 7
      %v2553 = vsub.s32 %v2550, %v2552
      %v2554 = vrot.slane %v2546, %v2553
      %v2556 = vunpack.c.l.s4 1983009808
      %v2557 = vunpack.c.0.s8 %v2556
      %v2558 = vlaneseq
      %v2559 = vshrl.u32 %v2558, 7
      %v2560 = vsub.s32 %v2557, %v2559
      %v2561 = vrot.slane %v2547, %v2560
      %v2562 = vcombine.low %v2554, %v2561
      %v2563 = vcombine.low %v1531, %v1534
      %v2564 = vcombine.low %v1537, %v1540
      %v2566 = vunpack.c.l.s4 1983009808
      %v2567 = vunpack.c.0.s8 %v2566
      %v2568 = vlaneseq
      %v2569 = vshrl.u32 %v2568, 7
      %v2570 = vsub.s32 %v2567, %v2569
      %v2571 = vrot.slane %v2563, %v2570
      %v2573 = vunpack.c.l.s4 1983009808
      %v2574 = vunpack.c.0.s8 %v2573
      %v2575 = vlaneseq
      %v2576 = vshrl.u32 %v2575, 7
      %v2577 = vsub.s32 %v2574, %v2576
      %v2578 = vrot.slane %v2564, %v2577
      %v2579 = vcombine.low %v2571, %v2578
      %v2580 = vcombine.low %v1543, %v1546
      %v2581 = vcombine.low %v1549, %v1552
      %v2583 = vunpack.c.l.s4 1983009808
      %v2584 = vunpack.c.0.s8 %v2583
      %v2585 = vlaneseq
      %v2586 = vshrl.u32 %v2585, 7
      %v2587 = vsub.s32 %v2584, %v2586
      %v2588 = vrot.slane %v2580, %v2587
      %v2590 = vunpack.c.l.s4 1983009808
      %v2591 = vunpack.c.0.s8 %v2590
      %v2592 = vlaneseq
      %v2593 = vshrl.u32 %v2592, 7
      %v2594 = vsub.s32 %v2591, %v2593
      %v2595 = vrot.slane %v2581, %v2594
      %v2596 = vcombine.low %v2588, %v2595
      %v2597 = vcombine.low %v1556, %v1559
      %v2598 = vcombine.low %v1562, %v1565
      %v2600 = vunpack.c.l.s4 1983009808
      %v2601 = vunpack.c.0.s8 %v2600
      %v2602 = vlaneseq
      %v2603 = vshrl.u32 %v2602, 7
      %v2604 = vsub.s32 %v2601, %v2603
      %v2605 = vrot.slane %v2597, %v2604
      %v2607 = vunpack.c.l.s4 1983009808
      %v2608 = vunpack.c.0.s8 %v2607
      %v2609 = vlaneseq
      %v2610 = vshrl.u32 %v2609, 7
      %v2611 = vsub.s32 %v2608, %v2610
      %v2612 = vrot.slane %v2598, %v2611
      %v2613 = vcombine.low %v2605, %v2612
      %v2614 = vcombine.low %v1568, %v1571
      %v2615 = vcombine.low %v1574, %v1577
      %v2617 = vunpack.c.l.s4 1983009808
      %v2618 = vunpack.c.0.s8 %v2617
      %v2619 = vlaneseq
      %v2620 = vshrl.u32 %v2619, 7
      %v2621 = vsub.s32 %v2618, %v2620
      %v2622 = vrot.slane %v2614, %v2621
      %v2624 = vunpack.c.l.s4 1983009808
      %v2625 = vunpack.c.0.s8 %v2624
      %v2626 = vlaneseq
      %v2627 = vshrl.u32 %v2626, 7
      %v2628 = vsub.s32 %v2625, %v2627
      %v2629 = vrot.slane %v2615, %v2628
      %v2630 = vcombine.low %v2622, %v2629
      %v2631 = vcombine.low %v1581, %v1584
      %v2632 = vcombine.low %v1587, %v1590
      %v2634 = vunpack.c.l.s4 1983009808
      %v2635 = vunpack.c.0.s8 %v2634
      %v2636 = vlaneseq
      %v2637 = vshrl.u32 %v2636, 7
      %v2638 = vsub.s32 %v2635, %v2637
      %v2639 = vrot.slane %v2631, %v2638
      %v2641 = vunpack.c.l.s4 1983009808
      %v2642 = vunpack.c.0.s8 %v2641
      %v2643 = vlaneseq
      %v2644 = vshrl.u32 %v2643, 7
      %v2645 = vsub.s32 %v2642, %v2644
      %v2646 = vrot.slane %v2632, %v2645
      %v2647 = vcombine.low %v2639, %v2646
      %v2648 = vcombine.low %v1593, %v1596
      %v2649 = vcombine.low %v1599, %v1602
      %v2651 = vunpack.c.l.s4 1983009808
      %v2652 = vunpack.c.0.s8 %v2651
      %v2653 = vlaneseq
      %v2654 = vshrl.u32 %v2653, 7
      %v2655 = vsub.s32 %v2652, %v2654
      %v2656 = vrot.slane %v2648, %v2655
      %v2658 = vunpack.c.l.s4 1983009808
      %v2659 = vunpack.c.0.s8 %v2658
      %v2660 = vlaneseq
      %v2661 = vshrl.u32 %v2660, 7
      %v2662 = vsub.s32 %v2659, %v2661
      %v2663 = vrot.slane %v2649, %v2662
      %v2664 = vcombine.low %v2656, %v2663
      %v2665 = vcombine.low %v1606, %v1609
      %v2666 = vcombine.low %v1612, %v1615
      %v2668 = vunpack.c.l.s4 1983009808
      %v2669 = vunpack.c.0.s8 %v2668
      %v2670 = vlaneseq
      %v2671 = vshrl.u32 %v2670, 7
      %v2672 = vsub.s32 %v2669, %v2671
      %v2673 = vrot.slane %v2665, %v2672
      %v2675 = vunpack.c.l.s4 1983009808
      %v2676 = vunpack.c.0.s8 %v2675
      %v2677 = vlaneseq
      %v2678 = vshrl.u32 %v2677, 7
      %v2679 = vsub.s32 %v2676, %v2678
      %v2680 = vrot.slane %v2666, %v2679
      %v2681 = vcombine.low %v2673, %v2680
      %v2682 = vcombine.low %v1618, %v1621
      %v2683 = vcombine.low %v1624, %v1627
      %v2685 = vunpack.c.l.s4 1983009808
      %v2686 = vunpack.c.0.s8 %v2685
      %v2687 = vlaneseq
      %v2688 = vshrl.u32 %v2687, 7
      %v2689 = vsub.s32 %v2686, %v2688
      %v2690 = vrot.slane %v2682, %v2689
      %v2692 = vunpack.c.l.s4 1983009808
      %v2693 = vunpack.c.0.s8 %v2692
      %v2694 = vlaneseq
      %v2695 = vshrl.u32 %v2694, 7
      %v2696 = vsub.s32 %v2693, %v2695
      %v2697 = vrot.slane %v2683, %v2696
      %v2698 = vcombine.low %v2690, %v2697
      %v2699 = vcombine.low %v1631, %v1634
      %v2700 = vcombine.low %v1637, %v1640
      %v2702 = vunpack.c.l.s4 1983009808
      %v2703 = vunpack.c.0.s8 %v2702
      %v2704 = vlaneseq
      %v2705 = vshrl.u32 %v2704, 7
      %v2706 = vsub.s32 %v2703, %v2705
      %v2707 = vrot.slane %v2699, %v2706
      %v2709 = vunpack.c.l.s4 1983009808
      %v2710 = vunpack.c.0.s8 %v2709
      %v2711 = vlaneseq
      %v2712 = vshrl.u32 %v2711, 7
      %v2713 = vsub.s32 %v2710, %v2712
      %v2714 = vrot.slane %v2700, %v2713
      %v2715 = vcombine.low %v2707, %v2714
      %v2716 = vcombine.low %v1643, %v1646
      %v2717 = vcombine.low %v1649, %v1652
      %v2719 = vunpack.c.l.s4 1983009808
      %v2720 = vunpack.c.0.s8 %v2719
      %v2721 = vlaneseq
      %v2722 = vshrl.u32 %v2721, 7
      %v2723 = vsub.s32 %v2720, %v2722
      %v2724 = vrot.slane %v2716, %v2723
      %v2726 = vunpack.c.l.s4 1983009808
      %v2727 = vunpack.c.0.s8 %v2726
      %v2728 = vlaneseq
      %v2729 = vshrl.u32 %v2728, 7
      %v2730 = vsub.s32 %v2727, %v2729
      %v2731 = vrot.slane %v2717, %v2730
      %v2732 = vcombine.low %v2724, %v2731
      %v2733 = vcombine.low %v1656, %v1659
      %v2734 = vcombine.low %v1662, %v1665
      %v2736 = vunpack.c.l.s4 1983009808
      %v2737 = vunpack.c.0.s8 %v2736
      %v2738 = vlaneseq
      %v2739 = vshrl.u32 %v2738, 7
      %v2740 = vsub.s32 %v2737, %v2739
      %v2741 = vrot.slane %v2733, %v2740
      %v2743 = vunpack.c.l.s4 1983009808
      %v2744 = vunpack.c.0.s8 %v2743
      %v2745 = vlaneseq
      %v2746 = vshrl.u32 %v2745, 7
      %v2747 = vsub.s32 %v2744, %v2746
      %v2748 = vrot.slane %v2734, %v2747
      %v2749 = vcombine.low %v2741, %v2748
      %v2750 = vcombine.low %v1668, %v1671
      %v2751 = vcombine.low %v1674, %v1677
      %v2753 = vunpack.c.l.s4 1983009808
      %v2754 = vunpack.c.0.s8 %v2753
      %v2755 = vlaneseq
      %v2756 = vshrl.u32 %v2755, 7
      %v2757 = vsub.s32 %v2754, %v2756
      %v2758 = vrot.slane %v2750, %v2757
      %v2760 = vunpack.c.l.s4 1983009808
      %v2761 = vunpack.c.0.s8 %v2760
      %v2762 = vlaneseq
      %v2763 = vshrl.u32 %v2762, 7
      %v2764 = vsub.s32 %v2761, %v2763
      %v2765 = vrot.slane %v2751, %v2764
      %v2766 = vcombine.low %v2758, %v2765
      %v2767 = vcombine.low %v1681, %v1684
      %v2768 = vcombine.low %v1687, %v1690
      %v2770 = vunpack.c.l.s4 1983009808
      %v2771 = vunpack.c.0.s8 %v2770
      %v2772 = vlaneseq
      %v2773 = vshrl.u32 %v2772, 7
      %v2774 = vsub.s32 %v2771, %v2773
      %v2775 = vrot.slane %v2767, %v2774
      %v2777 = vunpack.c.l.s4 1983009808
      %v2778 = vunpack.c.0.s8 %v2777
      %v2779 = vlaneseq
      %v2780 = vshrl.u32 %v2779, 7
      %v2781 = vsub.s32 %v2778, %v2780
      %v2782 = vrot.slane %v2768, %v2781
      %v2783 = vcombine.low %v2775, %v2782
      %v2784 = vcombine.low %v1693, %v1696
      %v2785 = vcombine.low %v1699, %v1702
      %v2787 = vunpack.c.l.s4 1983009808
      %v2788 = vunpack.c.0.s8 %v2787
      %v2789 = vlaneseq
      %v2790 = vshrl.u32 %v2789, 7
      %v2791 = vsub.s32 %v2788, %v2790
      %v2792 = vrot.slane %v2784, %v2791
      %v2794 = vunpack.c.l.s4 1983009808
      %v2795 = vunpack.c.0.s8 %v2794
      %v2796 = vlaneseq
      %v2797 = vshrl.u32 %v2796, 7
      %v2798 = vsub.s32 %v2795, %v2797
      %v2799 = vrot.slane %v2785, %v2798
      %v2800 = vcombine.low %v2792, %v2799
      %v2801 = vcombine.low %v1706, %v1709
      %v2802 = vcombine.low %v1712, %v1715
      %v2804 = vunpack.c.l.s4 1983009808
      %v2805 = vunpack.c.0.s8 %v2804
      %v2806 = vlaneseq
      %v2807 = vshrl.u32 %v2806, 7
      %v2808 = vsub.s32 %v2805, %v2807
      %v2809 = vrot.slane %v2801, %v2808
      %v2811 = vunpack.c.l.s4 1983009808
      %v2812 = vunpack.c.0.s8 %v2811
      %v2813 = vlaneseq
      %v2814 = vshrl.u32 %v2813, 7
      %v2815 = vsub.s32 %v2812, %v2814
      %v2816 = vrot.slane %v2802, %v2815
      %v2817 = vcombine.low %v2809, %v2816
      %v2818 = vcombine.low %v1718, %v1721
      %v2819 = vcombine.low %v1724, %v1727
      %v2821 = vunpack.c.l.s4 1983009808
      %v2822 = vunpack.c.0.s8 %v2821
      %v2823 = vlaneseq
      %v2824 = vshrl.u32 %v2823, 7
      %v2825 = vsub.s32 %v2822, %v2824
      %v2826 = vrot.slane %v2818, %v2825
      %v2828 = vunpack.c.l.s4 1983009808
      %v2829 = vunpack.c.0.s8 %v2828
      %v2830 = vlaneseq
      %v2831 = vshrl.u32 %v2830, 7
      %v2832 = vsub.s32 %v2829, %v2831
      %v2833 = vrot.slane %v2819, %v2832
      %v2834 = vcombine.low %v2826, %v2833
      %v2835 = vcombine.low %v1731, %v1734
      %v2836 = vcombine.low %v1737, %v1740
      %v2838 = vunpack.c.l.s4 1983009808
      %v2839 = vunpack.c.0.s8 %v2838
      %v2840 = vlaneseq
      %v2841 = vshrl.u32 %v2840, 7
      %v2842 = vsub.s32 %v2839, %v2841
      %v2843 = vrot.slane %v2835, %v2842
      %v2845 = vunpack.c.l.s4 1983009808
      %v2846 = vunpack.c.0.s8 %v2845
      %v2847 = vlaneseq
      %v2848 = vshrl.u32 %v2847, 7
      %v2849 = vsub.s32 %v2846, %v2848
      %v2850 = vrot.slane %v2836, %v2849
      %v2851 = vcombine.low %v2843, %v2850
      %v2852 = vcombine.low %v1743, %v1746
      %v2853 = vcombine.low %v1749, %v1752
      %v2855 = vunpack.c.l.s4 1983009808
      %v2856 = vunpack.c.0.s8 %v2855
      %v2857 = vlaneseq
      %v2858 = vshrl.u32 %v2857, 7
      %v2859 = vsub.s32 %v2856, %v2858
      %v2860 = vrot.slane %v2852, %v2859
      %v2862 = vunpack.c.l.s4 1983009808
      %v2863 = vunpack.c.0.s8 %v2862
      %v2864 = vlaneseq
      %v2865 = vshrl.u32 %v2864, 7
      %v2866 = vsub.s32 %v2863, %v2865
      %v2867 = vrot.slane %v2853, %v2866
      %v2868 = vcombine.low %v2860, %v2867
      %v2869 = vcombine.low %v1756, %v1759
      %v2870 = vcombine.low %v1762, %v1765
      %v2872 = vunpack.c.l.s4 1983009808
      %v2873 = vunpack.c.0.s8 %v2872
      %v2874 = vlaneseq
      %v2875 = vshrl.u32 %v2874, 7
      %v2876 = vsub.s32 %v2873, %v2875
      %v2877 = vrot.slane %v2869, %v2876
      %v2879 = vunpack.c.l.s4 1983009808
      %v2880 = vunpack.c.0.s8 %v2879
      %v2881 = vlaneseq
      %v2882 = vshrl.u32 %v2881, 7
      %v2883 = vsub.s32 %v2880, %v2882
      %v2884 = vrot.slane %v2870, %v2883
      %v2885 = vcombine.low %v2877, %v2884
      %v2886 = vcombine.low %v1768, %v1771
      %v2887 = vcombine.low %v1774, %v1777
      %v2889 = vunpack.c.l.s4 1983009808
      %v2890 = vunpack.c.0.s8 %v2889
      %v2891 = vlaneseq
      %v2892 = vshrl.u32 %v2891, 7
      %v2893 = vsub.s32 %v2890, %v2892
      %v2894 = vrot.slane %v2886, %v2893
      %v2896 = vunpack.c.l.s4 1983009808
      %v2897 = vunpack.c.0.s8 %v2896
      %v2898 = vlaneseq
      %v2899 = vshrl.u32 %v2898, 7
      %v2900 = vsub.s32 %v2897, %v2899
      %v2901 = vrot.slane %v2887, %v2900
      %v2902 = vcombine.low %v2894, %v2901
      %v2903 = vcombine.low %v1781, %v1784
      %v2904 = vcombine.low %v1787, %v1790
      %v2906 = vunpack.c.l.s4 1983009808
      %v2907 = vunpack.c.0.s8 %v2906
      %v2908 = vlaneseq
      %v2909 = vshrl.u32 %v2908, 7
      %v2910 = vsub.s32 %v2907, %v2909
      %v2911 = vrot.slane %v2903, %v2910
      %v2913 = vunpack.c.l.s4 1983009808
      %v2914 = vunpack.c.0.s8 %v2913
      %v2915 = vlaneseq
      %v2916 = vshrl.u32 %v2915, 7
      %v2917 = vsub.s32 %v2914, %v2916
      %v2918 = vrot.slane %v2904, %v2917
      %v2919 = vcombine.low %v2911, %v2918
      %v2920 = vcombine.low %v1793, %v1796
      %v2921 = vcombine.low %v1799, %v1802
      %v2923 = vunpack.c.l.s4 1983009808
      %v2924 = vunpack.c.0.s8 %v2923
      %v2925 = vlaneseq
      %v2926 = vshrl.u32 %v2925, 7
      %v2927 = vsub.s32 %v2924, %v2926
      %v2928 = vrot.slane %v2920, %v2927
      %v2930 = vunpack.c.l.s4 1983009808
      %v2931 = vunpack.c.0.s8 %v2930
      %v2932 = vlaneseq
      %v2933 = vshrl.u32 %v2932, 7
      %v2934 = vsub.s32 %v2931, %v2933
      %v2935 = vrot.slane %v2921, %v2934
      %v2936 = vcombine.low %v2928, %v2935
      %v2937 = vcombine.low %v1806, %v1809
      %v2938 = vcombine.low %v1812, %v1815
      %v2940 = vunpack.c.l.s4 1983009808
      %v2941 = vunpack.c.0.s8 %v2940
      %v2942 = vlaneseq
      %v2943 = vshrl.u32 %v2942, 7
      %v2944 = vsub.s32 %v2941, %v2943
      %v2945 = vrot.slane %v2937, %v2944
      %v2947 = vunpack.c.l.s4 1983009808
      %v2948 = vunpack.c.0.s8 %v2947
      %v2949 = vlaneseq
      %v2950 = vshrl.u32 %v2949, 7
      %v2951 = vsub.s32 %v2948, %v2950
      %v2952 = vrot.slane %v2938, %v2951
      %v2953 = vcombine.low %v2945, %v2952
      %v2954 = vcombine.low %v1818, %v1821
      %v2955 = vcombine.low %v1824, %v1827
      %v2957 = vunpack.c.l.s4 1983009808
      %v2958 = vunpack.c.0.s8 %v2957
      %v2959 = vlaneseq
      %v2960 = vshrl.u32 %v2959, 7
      %v2961 = vsub.s32 %v2958, %v2960
      %v2962 = vrot.slane %v2954, %v2961
      %v2964 = vunpack.c.l.s4 1983009808
      %v2965 = vunpack.c.0.s8 %v2964
      %v2966 = vlaneseq
      %v2967 = vshrl.u32 %v2966, 7
      %v2968 = vsub.s32 %v2965, %v2967
      %v2969 = vrot.slane %v2955, %v2968
      %v2970 = vcombine.low %v2962, %v2969
      %v2971 = vcombine.low %v1831, %v1834
      %v2972 = vcombine.low %v1837, %v1840
      %v2974 = vunpack.c.l.s4 1983009808
      %v2975 = vunpack.c.0.s8 %v2974
      %v2976 = vlaneseq
      %v2977 = vshrl.u32 %v2976, 7
      %v2978 = vsub.s32 %v2975, %v2977
      %v2979 = vrot.slane %v2971, %v2978
      %v2981 = vunpack.c.l.s4 1983009808
      %v2982 = vunpack.c.0.s8 %v2981
      %v2983 = vlaneseq
      %v2984 = vshrl.u32 %v2983, 7
      %v2985 = vsub.s32 %v2982, %v2984
      %v2986 = vrot.slane %v2972, %v2985
      %v2987 = vcombine.low %v2979, %v2986
      %v2988 = vcombine.low %v1843, %v1846
      %v2989 = vcombine.low %v1849, %v1852
      %v2991 = vunpack.c.l.s4 1983009808
      %v2992 = vunpack.c.0.s8 %v2991
      %v2993 = vlaneseq
      %v2994 = vshrl.u32 %v2993, 7
      %v2995 = vsub.s32 %v2992, %v2994
      %v2996 = vrot.slane %v2988, %v2995
      %v2998 = vunpack.c.l.s4 1983009808
      %v2999 = vunpack.c.0.s8 %v2998
      %v3000 = vlaneseq
      %v3001 = vshrl.u32 %v3000, 7
      %v3002 = vsub.s32 %v2999, %v3001
      %v3003 = vrot.slane %v2989, %v3002
      %v3004 = vcombine.low %v2996, %v3003
      %v3005 = vcombine.low %v1856, %v1859
      %v3006 = vcombine.low %v1862, %v1865
      %v3008 = vunpack.c.l.s4 1983009808
      %v3009 = vunpack.c.0.s8 %v3008
      %v3010 = vlaneseq
      %v3011 = vshrl.u32 %v3010, 7
      %v3012 = vsub.s32 %v3009, %v3011
      %v3013 = vrot.slane %v3005, %v3012
      %v3015 = vunpack.c.l.s4 1983009808
      %v3016 = vunpack.c.0.s8 %v3015
      %v3017 = vlaneseq
      %v3018 = vshrl.u32 %v3017, 7
      %v3019 = vsub.s32 %v3016, %v3018
      %v3020 = vrot.slane %v3006, %v3019
      %v3021 = vcombine.low %v3013, %v3020
      %v3022 = vcombine.low %v1868, %v1871
      %v3023 = vcombine.low %v1874, %v1877
      %v3025 = vunpack.c.l.s4 1983009808
      %v3026 = vunpack.c.0.s8 %v3025
      %v3027 = vlaneseq
      %v3028 = vshrl.u32 %v3027, 7
      %v3029 = vsub.s32 %v3026, %v3028
      %v3030 = vrot.slane %v3022, %v3029
      %v3032 = vunpack.c.l.s4 1983009808
      %v3033 = vunpack.c.0.s8 %v3032
      %v3034 = vlaneseq
      %v3035 = vshrl.u32 %v3034, 7
      %v3036 = vsub.s32 %v3033, %v3035
      %v3037 = vrot.slane %v3023, %v3036
      %v3038 = vcombine.low %v3030, %v3037
      %v3039 = vcombine.low %v1881, %v1884
      %v3040 = vcombine.low %v1887, %v1890
      %v3042 = vunpack.c.l.s4 1983009808
      %v3043 = vunpack.c.0.s8 %v3042
      %v3044 = vlaneseq
      %v3045 = vshrl.u32 %v3044, 7
      %v3046 = vsub.s32 %v3043, %v3045
      %v3047 = vrot.slane %v3039, %v3046
      %v3049 = vunpack.c.l.s4 1983009808
      %v3050 = vunpack.c.0.s8 %v3049
      %v3051 = vlaneseq
      %v3052 = vshrl.u32 %v3051, 7
      %v3053 = vsub.s32 %v3050, %v3052
      %v3054 = vrot.slane %v3040, %v3053
      %v3055 = vcombine.low %v3047, %v3054
      %v3056 = vcombine.low %v1893, %v1896
      %v3057 = vcombine.low %v1899, %v1902
      %v3059 = vunpack.c.l.s4 1983009808
      %v3060 = vunpack.c.0.s8 %v3059
      %v3061 = vlaneseq
      %v3062 = vshrl.u32 %v3061, 7
      %v3063 = vsub.s32 %v3060, %v3062
      %v3064 = vrot.slane %v3056, %v3063
      %v3066 = vunpack.c.l.s4 1983009808
      %v3067 = vunpack.c.0.s8 %v3066
      %v3068 = vlaneseq
      %v3069 = vshrl.u32 %v3068, 7
      %v3070 = vsub.s32 %v3067, %v3069
      %v3071 = vrot.slane %v3057, %v3070
      %v3072 = vcombine.low %v3064, %v3071
      %v3105 = vcombine.low %v823, %v822
      %v3106 = vcombine.low %v824, %v832
      %v3108 = vunpack.c.l.s4 1983009808
      %v3109 = vunpack.c.0.s8 %v3108
      %v3110 = vlaneseq
      %v3111 = vshrl.u32 %v3110, 7
      %v3112 = vsub.s32 %v3109, %v3111
      %v3113 = vrot.slane %v3105, %v3112
      %v3115 = vunpack.c.l.s4 1983009808
      %v3116 = vunpack.c.0.s8 %v3115
      %v3117 = vlaneseq
      %v3118 = vshrl.u32 %v3117, 7
      %v3119 = vsub.s32 %v3116, %v3118
      %v3120 = vrot.slane %v3106, %v3119
      %v3121 = vcombine.low %v3113, %v3120
      %v3122 = vcombine.low %v840, %v839
      %v3123 = vcombine.low %v841, %v849
      %v3125 = vunpack.c.l.s4 1983009808
      %v3126 = vunpack.c.0.s8 %v3125
      %v3127 = vlaneseq
      %v3128 = vshrl.u32 %v3127, 7
      %v3129 = vsub.s32 %v3126, %v3128
      %v3130 = vrot.slane %v3122, %v3129
      %v3132 = vunpack.c.l.s4 1983009808
      %v3133 = vunpack.c.0.s8 %v3132
      %v3134 = vlaneseq
      %v3135 = vshrl.u32 %v3134, 7
      %v3136 = vsub.s32 %v3133, %v3135
      %v3137 = vrot.slane %v3123, %v3136
      %v3138 = vcombine.low %v3130, %v3137
      %v3139 = vcombine.low %v856, %v858
      %v3140 = vcombine.low %v866, %v874
      %v3142 = vunpack.c.l.s4 1983009808
      %v3143 = vunpack.c.0.s8 %v3142
      %v3144 = vlaneseq
      %v3145 = vshrl.u32 %v3144, 7
      %v3146 = vsub.s32 %v3143, %v3145
      %v3147 = vrot.slane %v3139, %v3146
      %v3149 = vunpack.c.l.s4 1983009808
      %v3150 = vunpack.c.0.s8 %v3149
      %v3151 = vlaneseq
      %v3152 = vshrl.u32 %v3151, 7
      %v3153 = vsub.s32 %v3150, %v3152
      %v3154 = vrot.slane %v3140, %v3153
      %v3155 = vcombine.low %v3147, %v3154
      %v3156 = vcombine.low %v873, %v875
      %v3157 = vcombine.low %v883, %v891
      %v3159 = vunpack.c.l.s4 1983009808
      %v3160 = vunpack.c.0.s8 %v3159
      %v3161 = vlaneseq
      %v3162 = vshrl.u32 %v3161, 7
      %v3163 = vsub.s32 %v3160, %v3162
      %v3164 = vrot.slane %v3156, %v3163
      %v3166 = vunpack.c.l.s4 1983009808
      %v3167 = vunpack.c.0.s8 %v3166
      %v3168 = vlaneseq
      %v3169 = vshrl.u32 %v3168, 7
      %v3170 = vsub.s32 %v3167, %v3169
      %v3171 = vrot.slane %v3157, %v3170
      %v3172 = vcombine.low %v3164, %v3171
      %v3173 = vcombine.low %v892, %v900
      %v3174 = vcombine.low %v908, %v907
      %v3176 = vunpack.c.l.s4 1983009808
      %v3177 = vunpack.c.0.s8 %v3176
      %v3178 = vlaneseq
      %v3179 = vshrl.u32 %v3178, 7
      %v3180 = vsub.s32 %v3177, %v3179
      %v3181 = vrot.slane %v3173, %v3180
      %v3183 = vunpack.c.l.s4 1983009808
      %v3184 = vunpack.c.0.s8 %v3183
      %v3185 = vlaneseq
      %v3186 = vshrl.u32 %v3185, 7
      %v3187 = vsub.s32 %v3184, %v3186
      %v3188 = vrot.slane %v3174, %v3187
      %v3189 = vcombine.low %v3181, %v3188
      %v3190 = vcombine.low %v909, %v917
      %v3191 = vcombine.low %v925, %v924
      %v3193 = vunpack.c.l.s4 1983009808
      %v3194 = vunpack.c.0.s8 %v3193
      %v3195 = vlaneseq
      %v3196 = vshrl.u32 %v3195, 7
      %v3197 = vsub.s32 %v3194, %v3196
      %v3198 = vrot.slane %v3190, %v3197
      %v3200 = vunpack.c.l.s4 1983009808
      %v3201 = vunpack.c.0.s8 %v3200
      %v3202 = vlaneseq
      %v3203 = vshrl.u32 %v3202, 7
      %v3204 = vsub.s32 %v3201, %v3203
      %v3205 = vrot.slane %v3191, %v3204
      %v3206 = vcombine.low %v3198, %v3205
      %v3207 = vcombine.low %v934, %v942
      %v3208 = vcombine.low %v941, %v943
      %v3210 = vunpack.c.l.s4 1983009808
      %v3211 = vunpack.c.0.s8 %v3210
      %v3212 = vlaneseq
      %v3213 = vshrl.u32 %v3212, 7
      %v3214 = vsub.s32 %v3211, %v3213
      %v3215 = vrot.slane %v3207, %v3214
      %v3217 = vunpack.c.l.s4 1983009808
      %v3218 = vunpack.c.0.s8 %v3217
      %v3219 = vlaneseq
      %v3220 = vshrl.u32 %v3219, 7
      %v3221 = vsub.s32 %v3218, %v3220
      %v3222 = vrot.slane %v3208, %v3221
      %v3223 = vcombine.low %v3215, %v3222
      %v3224 = vcombine.low %v951, %v959
      %v3225 = vcombine.low %v958, %v960
      %v3227 = vunpack.c.l.s4 1983009808
      %v3228 = vunpack.c.0.s8 %v3227
      %v3229 = vlaneseq
      %v3230 = vshrl.u32 %v3229, 7
      %v3231 = vsub.s32 %v3228, %v3230
      %v3232 = vrot.slane %v3224, %v3231
      %v3234 = vunpack.c.l.s4 1983009808
      %v3235 = vunpack.c.0.s8 %v3234
      %v3236 = vlaneseq
      %v3237 = vshrl.u32 %v3236, 7
      %v3238 = vsub.s32 %v3235, %v3237
      %v3239 = vrot.slane %v3225, %v3238
      %v3240 = vcombine.low %v3232, %v3239
      %v3241 = vcombine.low %v976, %v975
      %v3242 = vcombine.low %v977, %v985
      %v3244 = vunpack.c.l.s4 1983009808
      %v3245 = vunpack.c.0.s8 %v3244
      %v3246 = vlaneseq
      %v3247 = vshrl.u32 %v3246, 7
      %v3248 = vsub.s32 %v3245, %v3247
      %v3249 = vrot.slane %v3241, %v3248
      %v3251 = vunpack.c.l.s4 1983009808
      %v3252 = vunpack.c.0.s8 %v3251
      %v3253 = vlaneseq
      %v3254 = vshrl.u32 %v3253, 7
      %v3255 = vsub.s32 %v3252, %v3254
      %v3256 = vrot.slane %v3242, %v3255
      %v3257 = vcombine.low %v3249, %v3256
      %v3258 = vcombine.low %v993, %v992
      %v3259 = vcombine.low %v994, %v1002
      %v3261 = vunpack.c.l.s4 1983009808
      %v3262 = vunpack.c.0.s8 %v3261
      %v3263 = vlaneseq
      %v3264 = vshrl.u32 %v3263, 7
      %v3265 = vsub.s32 %v3262, %v3264
      %v3266 = vrot.slane %v3258, %v3265
      %v3268 = vunpack.c.l.s4 1983009808
      %v3269 = vunpack.c.0.s8 %v3268
      %v3270 = vlaneseq
      %v3271 = vshrl.u32 %v3270, 7
      %v3272 = vsub.s32 %v3269, %v3271
      %v3273 = vrot.slane %v3259, %v3272
      %v3274 = vcombine.low %v3266, %v3273
      %v3275 = vcombine.low %v1009, %v1011
      %v3276 = vcombine.low %v1019, %v1027
      %v3278 = vunpack.c.l.s4 1983009808
      %v3279 = vunpack.c.0.s8 %v3278
      %v3280 = vlaneseq
      %v3281 = vshrl.u32 %v3280, 7
      %v3282 = vsub.s32 %v3279, %v3281
      %v3283 = vrot.slane %v3275, %v3282
      %v3285 = vunpack.c.l.s4 1983009808
      %v3286 = vunpack.c.0.s8 %v3285
      %v3287 = vlaneseq
      %v3288 = vshrl.u32 %v3287, 7
      %v3289 = vsub.s32 %v3286, %v3288
      %v3290 = vrot.slane %v3276, %v3289
      %v3291 = vcombine.low %v3283, %v3290
      %v3292 = vcombine.low %v1026, %v1028
      %v3293 = vcombine.low %v1036, %v1044
      %v3295 = vunpack.c.l.s4 1983009808
      %v3296 = vunpack.c.0.s8 %v3295
      %v3297 = vlaneseq
      %v3298 = vshrl.u32 %v3297, 7
      %v3299 = vsub.s32 %v3296, %v3298
      %v3300 = vrot.slane %v3292, %v3299
      %v3302 = vunpack.c.l.s4 1983009808
      %v3303 = vunpack.c.0.s8 %v3302
      %v3304 = vlaneseq
      %v3305 = vshrl.u32 %v3304, 7
      %v3306 = vsub.s32 %v3303, %v3305
      %v3307 = vrot.slane %v3293, %v3306
      %v3308 = vcombine.low %v3300, %v3307
      %v3309 = vcombine.low %v1045, %v1053
      %v3310 = vcombine.low %v1061, %v1060
      %v3312 = vunpack.c.l.s4 1983009808
      %v3313 = vunpack.c.0.s8 %v3312
      %v3314 = vlaneseq
      %v3315 = vshrl.u32 %v3314, 7
      %v3316 = vsub.s32 %v3313, %v3315
      %v3317 = vrot.slane %v3309, %v3316
      %v3319 = vunpack.c.l.s4 1983009808
      %v3320 = vunpack.c.0.s8 %v3319
      %v3321 = vlaneseq
      %v3322 = vshrl.u32 %v3321, 7
      %v3323 = vsub.s32 %v3320, %v3322
      %v3324 = vrot.slane %v3310, %v3323
      %v3325 = vcombine.low %v3317, %v3324
      %v3326 = vcombine.low %v1062, %v1070
      %v3327 = vcombine.low %v1078, %v1077
      %v3329 = vunpack.c.l.s4 1983009808
      %v3330 = vunpack.c.0.s8 %v3329
      %v3331 = vlaneseq
      %v3332 = vshrl.u32 %v3331, 7
      %v3333 = vsub.s32 %v3330, %v3332
      %v3334 = vrot.slane %v3326, %v3333
      %v3336 = vunpack.c.l.s4 1983009808
      %v3337 = vunpack.c.0.s8 %v3336
      %v3338 = vlaneseq
      %v3339 = vshrl.u32 %v3338, 7
      %v3340 = vsub.s32 %v3337, %v3339
      %v3341 = vrot.slane %v3327, %v3340
      %v3342 = vcombine.low %v3334, %v3341
      %v3343 = vcombine.low %v1087, %v1095
      %v3344 = vcombine.low %v1094, %v1096
      %v3346 = vunpack.c.l.s4 1983009808
      %v3347 = vunpack.c.0.s8 %v3346
      %v3348 = vlaneseq
      %v3349 = vshrl.u32 %v3348, 7
      %v3350 = vsub.s32 %v3347, %v3349
      %v3351 = vrot.slane %v3343, %v3350
      %v3353 = vunpack.c.l.s4 1983009808
      %v3354 = vunpack.c.0.s8 %v3353
      %v3355 = vlaneseq
      %v3356 = vshrl.u32 %v3355, 7
      %v3357 = vsub.s32 %v3354, %v3356
      %v3358 = vrot.slane %v3344, %v3357
      %v3359 = vcombine.low %v3351, %v3358
      %v3360 = vcombine.low %v1104, %v1112
      %v3361 = vcombine.low %v1111, %v1113
      %v3363 = vunpack.c.l.s4 1983009808
      %v3364 = vunpack.c.0.s8 %v3363
      %v3365 = vlaneseq
      %v3366 = vshrl.u32 %v3365, 7
      %v3367 = vsub.s32 %v3364, %v3366
      %v3368 = vrot.slane %v3360, %v3367
      %v3370 = vunpack.c.l.s4 1983009808
      %v3371 = vunpack.c.0.s8 %v3370
      %v3372 = vlaneseq
      %v3373 = vshrl.u32 %v3372, 7
      %v3374 = vsub.s32 %v3371, %v3373
      %v3375 = vrot.slane %v3361, %v3374
      %v3376 = vcombine.low %v3368, %v3375
      %v3377 = vcombine.low %v1129, %v1128
      %v3378 = vcombine.low %v1130, %v1138
      %v3380 = vunpack.c.l.s4 1983009808
      %v3381 = vunpack.c.0.s8 %v3380
      %v3382 = vlaneseq
      %v3383 = vshrl.u32 %v3382, 7
      %v3384 = vsub.s32 %v3381, %v3383
      %v3385 = vrot.slane %v3377, %v3384
      %v3387 = vunpack.c.l.s4 1983009808
      %v3388 = vunpack.c.0.s8 %v3387
      %v3389 = vlaneseq
      %v3390 = vshrl.u32 %v3389, 7
      %v3391 = vsub.s32 %v3388, %v3390
      %v3392 = vrot.slane %v3378, %v3391
      %v3393 = vcombine.low %v3385, %v3392
      %v3394 = vcombine.low %v1146, %v1145
      %v3395 = vcombine.low %v1147, %v1155
      %v3397 = vunpack.c.l.s4 1983009808
      %v3398 = vunpack.c.0.s8 %v3397
      %v3399 = vlaneseq
      %v3400 = vshrl.u32 %v3399, 7
      %v3401 = vsub.s32 %v3398, %v3400
      %v3402 = vrot.slane %v3394, %v3401
      %v3404 = vunpack.c.l.s4 1983009808
      %v3405 = vunpack.c.0.s8 %v3404
      %v3406 = vlaneseq
      %v3407 = vshrl.u32 %v3406, 7
      %v3408 = vsub.s32 %v3405, %v3407
      %v3409 = vrot.slane %v3395, %v3408
      %v3410 = vcombine.low %v3402, %v3409
      %v3411 = vcombine.low %v1162, %v1164
      %v3412 = vcombine.low %v1172, %v1180
      %v3414 = vunpack.c.l.s4 1983009808
      %v3415 = vunpack.c.0.s8 %v3414
      %v3416 = vlaneseq
      %v3417 = vshrl.u32 %v3416, 7
      %v3418 = vsub.s32 %v3415, %v3417
      %v3419 = vrot.slane %v3411, %v3418
      %v3421 = vunpack.c.l.s4 1983009808
      %v3422 = vunpack.c.0.s8 %v3421
      %v3423 = vlaneseq
      %v3424 = vshrl.u32 %v3423, 7
      %v3425 = vsub.s32 %v3422, %v3424
      %v3426 = vrot.slane %v3412, %v3425
      %v3427 = vcombine.low %v3419, %v3426
      %v3428 = vcombine.low %v1179, %v1181
      %v3429 = vcombine.low %v1189, %v1197
      %v3431 = vunpack.c.l.s4 1983009808
      %v3432 = vunpack.c.0.s8 %v3431
      %v3433 = vlaneseq
      %v3434 = vshrl.u32 %v3433, 7
      %v3435 = vsub.s32 %v3432, %v3434
      %v3436 = vrot.slane %v3428, %v3435
      %v3438 = vunpack.c.l.s4 1983009808
      %v3439 = vunpack.c.0.s8 %v3438
      %v3440 = vlaneseq
      %v3441 = vshrl.u32 %v3440, 7
      %v3442 = vsub.s32 %v3439, %v3441
      %v3443 = vrot.slane %v3429, %v3442
      %v3444 = vcombine.low %v3436, %v3443
      %v3445 = vcombine.low %v1198, %v1206
      %v3446 = vcombine.low %v1214, %v1213
      %v3448 = vunpack.c.l.s4 1983009808
      %v3449 = vunpack.c.0.s8 %v3448
      %v3450 = vlaneseq
      %v3451 = vshrl.u32 %v3450, 7
      %v3452 = vsub.s32 %v3449, %v3451
      %v3453 = vrot.slane %v3445, %v3452
      %v3455 = vunpack.c.l.s4 1983009808
      %v3456 = vunpack.c.0.s8 %v3455
      %v3457 = vlaneseq
      %v3458 = vshrl.u32 %v3457, 7
      %v3459 = vsub.s32 %v3456, %v3458
      %v3460 = vrot.slane %v3446, %v3459
      %v3461 = vcombine.low %v3453, %v3460
      %v3462 = vcombine.low %v1215, %v1223
      %v3463 = vcombine.low %v1231, %v1230
      %v3465 = vunpack.c.l.s4 1983009808
      %v3466 = vunpack.c.0.s8 %v3465
      %v3467 = vlaneseq
      %v3468 = vshrl.u32 %v3467, 7
      %v3469 = vsub.s32 %v3466, %v3468
      %v3470 = vrot.slane %v3462, %v3469
      %v3472 = vunpack.c.l.s4 1983009808
      %v3473 = vunpack.c.0.s8 %v3472
      %v3474 = vlaneseq
      %v3475 = vshrl.u32 %v3474, 7
      %v3476 = vsub.s32 %v3473, %v3475
      %v3477 = vrot.slane %v3463, %v3476
      %v3478 = vcombine.low %v3470, %v3477
      %v3479 = vcombine.low %v1240, %v1248
      %v3480 = vcombine.low %v1247, %v1249
      %v3482 = vunpack.c.l.s4 1983009808
      %v3483 = vunpack.c.0.s8 %v3482
      %v3484 = vlaneseq
      %v3485 = vshrl.u32 %v3484, 7
      %v3486 = vsub.s32 %v3483, %v3485
      %v3487 = vrot.slane %v3479, %v3486
      %v3489 = vunpack.c.l.s4 1983009808
      %v3490 = vunpack.c.0.s8 %v3489
      %v3491 = vlaneseq
      %v3492 = vshrl.u32 %v3491, 7
      %v3493 = vsub.s32 %v3490, %v3492
      %v3494 = vrot.slane %v3480, %v3493
      %v3495 = vcombine.low %v3487, %v3494
      %v3496 = vcombine.low %v1257, %v1265
      %v3497 = vcombine.low %v1264, %v1266
      %v3499 = vunpack.c.l.s4 1983009808
      %v3500 = vunpack.c.0.s8 %v3499
      %v3501 = vlaneseq
      %v3502 = vshrl.u32 %v3501, 7
      %v3503 = vsub.s32 %v3500, %v3502
      %v3504 = vrot.slane %v3496, %v3503
      %v3506 = vunpack.c.l.s4 1983009808
      %v3507 = vunpack.c.0.s8 %v3506
      %v3508 = vlaneseq
      %v3509 = vshrl.u32 %v3508, 7
      %v3510 = vsub.s32 %v3507, %v3509
      %v3511 = vrot.slane %v3497, %v3510
      %v3512 = vcombine.low %v3504, %v3511
      %v3513 = vcombine.low %v1282, %v1281
      %v3514 = vcombine.low %v1283, %v1291
      %v3516 = vunpack.c.l.s4 1983009808
      %v3517 = vunpack.c.0.s8 %v3516
      %v3518 = vlaneseq
      %v3519 = vshrl.u32 %v3518, 7
      %v3520 = vsub.s32 %v3517, %v3519
      %v3521 = vrot.slane %v3513, %v3520
      %v3523 = vunpack.c.l.s4 1983009808
      %v3524 = vunpack.c.0.s8 %v3523
      %v3525 = vlaneseq
      %v3526 = vshrl.u32 %v3525, 7
      %v3527 = vsub.s32 %v3524, %v3526
      %v3528 = vrot.slane %v3514, %v3527
      %v3529 = vcombine.low %v3521, %v3528
      %v3530 = vcombine.low %v1299, %v1298
      %v3531 = vcombine.low %v1300, %v1308
      %v3533 = vunpack.c.l.s4 1983009808
      %v3534 = vunpack.c.0.s8 %v3533
      %v3535 = vlaneseq
      %v3536 = vshrl.u32 %v3535, 7
      %v3537 = vsub.s32 %v3534, %v3536
      %v3538 = vrot.slane %v3530, %v3537
      %v3540 = vunpack.c.l.s4 1983009808
      %v3541 = vunpack.c.0.s8 %v3540
      %v3542 = vlaneseq
      %v3543 = vshrl.u32 %v3542, 7
      %v3544 = vsub.s32 %v3541, %v3543
      %v3545 = vrot.slane %v3531, %v3544
      %v3546 = vcombine.low %v3538, %v3545
      %v3547 = vcombine.low %v1315, %v1317
      %v3548 = vcombine.low %v1325, %v1333
      %v3550 = vunpack.c.l.s4 1983009808
      %v3551 = vunpack.c.0.s8 %v3550
      %v3552 = vlaneseq
      %v3553 = vshrl.u32 %v3552, 7
      %v3554 = vsub.s32 %v3551, %v3553
      %v3555 = vrot.slane %v3547, %v3554
      %v3557 = vunpack.c.l.s4 1983009808
      %v3558 = vunpack.c.0.s8 %v3557
      %v3559 = vlaneseq
      %v3560 = vshrl.u32 %v3559, 7
      %v3561 = vsub.s32 %v3558, %v3560
      %v3562 = vrot.slane %v3548, %v3561
      %v3563 = vcombine.low %v3555, %v3562
      %v3564 = vcombine.low %v1332, %v1334
      %v3565 = vcombine.low %v1342, %v1350
      %v3567 = vunpack.c.l.s4 1983009808
      %v3568 = vunpack.c.0.s8 %v3567
      %v3569 = vlaneseq
      %v3570 = vshrl.u32 %v3569, 7
      %v3571 = vsub.s32 %v3568, %v3570
      %v3572 = vrot.slane %v3564, %v3571
      %v3574 = vunpack.c.l.s4 1983009808
      %v3575 = vunpack.c.0.s8 %v3574
      %v3576 = vlaneseq
      %v3577 = vshrl.u32 %v3576, 7
      %v3578 = vsub.s32 %v3575, %v3577
      %v3579 = vrot.slane %v3565, %v3578
      %v3580 = vcombine.low %v3572, %v3579
      %v3581 = vcombine.low %v1351, %v1359
      %v3582 = vcombine.low %v1367, %v1366
      %v3584 = vunpack.c.l.s4 1983009808
      %v3585 = vunpack.c.0.s8 %v3584
      %v3586 = vlaneseq
      %v3587 = vshrl.u32 %v3586, 7
      %v3588 = vsub.s32 %v3585, %v3587
      %v3589 = vrot.slane %v3581, %v3588
      %v3591 = vunpack.c.l.s4 1983009808
      %v3592 = vunpack.c.0.s8 %v3591
      %v3593 = vlaneseq
      %v3594 = vshrl.u32 %v3593, 7
      %v3595 = vsub.s32 %v3592, %v3594
      %v3596 = vrot.slane %v3582, %v3595
      %v3597 = vcombine.low %v3589, %v3596
      %v3598 = vcombine.low %v1368, %v1376
      %v3599 = vcombine.low %v1384, %v1383
      %v3601 = vunpack.c.l.s4 1983009808
      %v3602 = vunpack.c.0.s8 %v3601
      %v3603 = vlaneseq
      %v3604 = vshrl.u32 %v3603, 7
      %v3605 = vsub.s32 %v3602, %v3604
      %v3606 = vrot.slane %v3598, %v3605
      %v3608 = vunpack.c.l.s4 1983009808
      %v3609 = vunpack.c.0.s8 %v3608
      %v3610 = vlaneseq
      %v3611 = vshrl.u32 %v3610, 7
      %v3612 = vsub.s32 %v3609, %v3611
      %v3613 = vrot.slane %v3599, %v3612
      %v3614 = vcombine.low %v3606, %v3613
      %v3615 = vcombine.low %v1393, %v1401
      %v3616 = vcombine.low %v1400, %v1402
      %v3618 = vunpack.c.l.s4 1983009808
      %v3619 = vunpack.c.0.s8 %v3618
      %v3620 = vlaneseq
      %v3621 = vshrl.u32 %v3620, 7
      %v3622 = vsub.s32 %v3619, %v3621
      %v3623 = vrot.slane %v3615, %v3622
      %v3625 = vunpack.c.l.s4 1983009808
      %v3626 = vunpack.c.0.s8 %v3625
      %v3627 = vlaneseq
      %v3628 = vshrl.u32 %v3627, 7
      %v3629 = vsub.s32 %v3626, %v3628
      %v3630 = vrot.slane %v3616, %v3629
      %v3631 = vcombine.low %v3623, %v3630
      %v3632 = vcombine.low %v1410, %v1418
      %v3633 = vcombine.low %v1417, %v1419
      %v3635 = vunpack.c.l.s4 1983009808
      %v3636 = vunpack.c.0.s8 %v3635
      %v3637 = vlaneseq
      %v3638 = vshrl.u32 %v3637, 7
      %v3639 = vsub.s32 %v3636, %v3638
      %v3640 = vrot.slane %v3632, %v3639
      %v3642 = vunpack.c.l.s4 1983009808
      %v3643 = vunpack.c.0.s8 %v3642
      %v3644 = vlaneseq
      %v3645 = vshrl.u32 %v3644, 7
      %v3646 = vsub.s32 %v3643, %v3645
      %v3647 = vrot.slane %v3633, %v3646
      %v3648 = vcombine.low %v3640, %v3647
      %v3681 = vcombine.low %v1427, %v1435
      %v3682 = vcombine.low %v1434, %v1436
      %v3684 = vunpack.c.l.s4 1983009808
      %v3685 = vunpack.c.0.s8 %v3684
      %v3686 = vlaneseq
      %v3687 = vshrl.u32 %v3686, 7
      %v3688 = vsub.s32 %v3685, %v3687
      %v3689 = vrot.slane %v3681, %v3688
      %v3691 = vunpack.c.l.s4 1983009808
      %v3692 = vunpack.c.0.s8 %v3691
      %v3693 = vlaneseq
      %v3694 = vshrl.u32 %v3693, 7
      %v3695 = vsub.s32 %v3692, %v3694
      %v3696 = vrot.slane %v3682, %v3695
      %v3697 = vcombine.low %v3689, %v3696
      %v3698 = vcombine.low %v1444, %v1452
      %v3699 = vcombine.low %v1451, %v1453
      %v3701 = vunpack.c.l.s4 1983009808
      %v3702 = vunpack.c.0.s8 %v3701
      %v3703 = vlaneseq
      %v3704 = vshrl.u32 %v3703, 7
      %v3705 = vsub.s32 %v3702, %v3704
      %v3706 = vrot.slane %v3698, %v3705
      %v3708 = vunpack.c.l.s4 1983009808
      %v3709 = vunpack.c.0.s8 %v3708
      %v3710 = vlaneseq
      %v3711 = vshrl.u32 %v3710, 7
      %v3712 = vsub.s32 %v3709, %v3711
      %v3713 = vrot.slane %v3699, %v3712
      %v3714 = vcombine.low %v3706, %v3713
      %v3717 = vcombine.low %v1906, %v1909
      %v3718 = vcombine.low %v1912, %v1915
      %v3720 = vunpack.c.l.s4 1983009808
      %v3721 = vunpack.c.0.s8 %v3720
      %v3722 = vlaneseq
      %v3723 = vshrl.u32 %v3722, 7
      %v3724 = vsub.s32 %v3721, %v3723
      %v3725 = vrot.slane %v3717, %v3724
      %v3727 = vunpack.c.l.s4 1983009808
      %v3728 = vunpack.c.0.s8 %v3727
      %v3729 = vlaneseq
      %v3730 = vshrl.u32 %v3729, 7
      %v3731 = vsub.s32 %v3728, %v3730
      %v3732 = vrot.slane %v3718, %v3731
      %v3733 = vcombine.low %v3725, %v3732
      %v3734 = vcombine.low %v1918, %v1921
      %v3735 = vcombine.low %v1924, %v1927
      %v3737 = vunpack.c.l.s4 1983009808
      %v3738 = vunpack.c.0.s8 %v3737
      %v3739 = vlaneseq
      %v3740 = vshrl.u32 %v3739, 7
      %v3741 = vsub.s32 %v3738, %v3740
      %v3742 = vrot.slane %v3734, %v3741
      %v3744 = vunpack.c.l.s4 1983009808
      %v3745 = vunpack.c.0.s8 %v3744
      %v3746 = vlaneseq
      %v3747 = vshrl.u32 %v3746, 7
      %v3748 = vsub.s32 %v3745, %v3747
      %v3749 = vrot.slane %v3735, %v3748
      %v3750 = vcombine.low %v3742, %v3749
      %v3753 = vcombine.low %v1435, %v1434
      %v3754 = vcombine.low %v1436, %v1444
      %v3756 = vunpack.c.l.s4 1983009808
      %v3757 = vunpack.c.0.s8 %v3756
      %v3758 = vlaneseq
      %v3759 = vshrl.u32 %v3758, 7
      %v3760 = vsub.s32 %v3757, %v3759
      %v3761 = vrot.slane %v3753, %v3760
      %v3763 = vunpack.c.l.s4 1983009808
      %v3764 = vunpack.c.0.s8 %v3763
      %v3765 = vlaneseq
      %v3766 = vshrl.u32 %v3765, 7
      %v3767 = vsub.s32 %v3764, %v3766
      %v3768 = vrot.slane %v3754, %v3767
      %v3769 = vcombine.low %v3761, %v3768
      %v3770 = vcombine.low %v1452, %v1451
      %v3771 = vcombine.low %v1453, %v1461
      %v3773 = vunpack.c.l.s4 1983009808
      %v3774 = vunpack.c.0.s8 %v3773
      %v3775 = vlaneseq
      %v3776 = vshrl.u32 %v3775, 7
      %v3777 = vsub.s32 %v3774, %v3776
      %v3778 = vrot.slane %v3770, %v3777
      %v3780 = vunpack.c.l.s4 1983009808
      %v3781 = vunpack.c.0.s8 %v3780
      %v3782 = vlaneseq
      %v3783 = vshrl.u32 %v3782, 7
      %v3784 = vsub.s32 %v3781, %v3783
      %v3785 = vrot.slane %v3771, %v3784
      %v3786 = vcombine.low %v3778, %v3785
      %v3789 = vcombine.low %v1469, %v1468
      %v3790 = vcombine.low %v1470, %v1478
      %v3792 = vunpack.c.l.s4 1983009808
      %v3793 = vunpack.c.0.s8 %v3792
      %v3794 = vlaneseq
      %v3795 = vshrl.u32 %v3794, 7
      %v3796 = vsub.s32 %v3793, %v3795
      %v3797 = vrot.slane %v3789, %v3796
      %v3799 = vunpack.c.l.s4 1983009808
      %v3800 = vunpack.c.0.s8 %v3799
      %v3801 = vlaneseq
      %v3802 = vshrl.u32 %v3801, 7
      %v3803 = vsub.s32 %v3800, %v3802
      %v3804 = vrot.slane %v3790, %v3803
      %v3805 = vcombine.low %v3797, %v3804
      %v3806 = vcombine.low %v1486, %v1485
      %v3807 = vcombine.low %v1487, %v1494
      %v3809 = vunpack.c.l.s4 1983009808
      %v3810 = vunpack.c.0.s8 %v3809
      %v3811 = vlaneseq
      %v3812 = vshrl.u32 %v3811, 7
      %v3813 = vsub.s32 %v3810, %v3812
      %v3814 = vrot.slane %v3806, %v3813
      %v3816 = vunpack.c.l.s4 1983009808
      %v3817 = vunpack.c.0.s8 %v3816
      %v3818 = vlaneseq
      %v3819 = vshrl.u32 %v3818, 7
      %v3820 = vsub.s32 %v3817, %v3819
      %v3821 = vrot.slane %v3807, %v3820
      %v3822 = vcombine.low %v3814, %v3821
      %v3825 = vcombine.low %v1931, %v1934
      %v3826 = vcombine.low %v1937, %v1940
      %v3828 = vunpack.c.l.s4 1983009808
      %v3829 = vunpack.c.0.s8 %v3828
      %v3830 = vlaneseq
      %v3831 = vshrl.u32 %v3830, 7
      %v3832 = vsub.s32 %v3829, %v3831
      %v3833 = vrot.slane %v3825, %v3832
      %v3835 = vunpack.c.l.s4 1983009808
      %v3836 = vunpack.c.0.s8 %v3835
      %v3837 = vlaneseq
      %v3838 = vshrl.u32 %v3837, 7
      %v3839 = vsub.s32 %v3836, %v3838
      %v3840 = vrot.slane %v3826, %v3839
      %v3841 = vcombine.low %v3833, %v3840
      %v3842 = vcombine.low %v1943, %v1946
      %v3843 = vcombine.low %v1949, %v1952
      %v3845 = vunpack.c.l.s4 1983009808
      %v3846 = vunpack.c.0.s8 %v3845
      %v3847 = vlaneseq
      %v3848 = vshrl.u32 %v3847, 7
      %v3849 = vsub.s32 %v3846, %v3848
      %v3850 = vrot.slane %v3842, %v3849
      %v3852 = vunpack.c.l.s4 1983009808
      %v3853 = vunpack.c.0.s8 %v3852
      %v3854 = vlaneseq
      %v3855 = vshrl.u32 %v3854, 7
      %v3856 = vsub.s32 %v3853, %v3855
      %v3857 = vrot.slane %v3843, %v3856
      %v3858 = vcombine.low %v3850, %v3857
      %v3861 = vcombine.low %v1468, %v1470
      %v3862 = vcombine.low %v1478, %v1486
      %v3864 = vunpack.c.l.s4 1983009808
      %v3865 = vunpack.c.0.s8 %v3864
      %v3866 = vlaneseq
      %v3867 = vshrl.u32 %v3866, 7
      %v3868 = vsub.s32 %v3865, %v3867
      %v3869 = vrot.slane %v3861, %v3868
      %v3871 = vunpack.c.l.s4 1983009808
      %v3872 = vunpack.c.0.s8 %v3871
      %v3873 = vlaneseq
      %v3874 = vshrl.u32 %v3873, 7
      %v3875 = vsub.s32 %v3872, %v3874
      %v3876 = vrot.slane %v3862, %v3875
      %v3877 = vcombine.low %v3869, %v3876
      %v3878 = vcombine.low %v1485, %v1487
      %v3879 = vcombine.low %v1494, %v1495
      %v3881 = vunpack.c.l.s4 1983009808
      %v3882 = vunpack.c.0.s8 %v3881
      %v3883 = vlaneseq
      %v3884 = vshrl.u32 %v3883, 7
      %v3885 = vsub.s32 %v3882, %v3884
      %v3886 = vrot.slane %v3878, %v3885
      %v3888 = vunpack.c.l.s4 1983009808
      %v3889 = vunpack.c.0.s8 %v3888
      %v3890 = vlaneseq
      %v3891 = vshrl.u32 %v3890, 7
      %v3892 = vsub.s32 %v3889, %v3891
      %v3893 = vrot.slane %v3879, %v3892
      %v3894 = vcombine.low %v3886, %v3893
      %v3897 = vpack.c.bf16 %v1986, %v1969
      %v3898 = vpack.c.bf16 %v2562, %v2545
      %v3899 = vpack.c.bf16 %v3138, %v3121
      %v3900 = vpack.c.bf16 %v2020, %v2003
      %v3901 = vpack.c.bf16 %v2596, %v2579
      %v3902 = vpack.c.bf16 %v3172, %v3155
      %v3903 = vpack.c.bf16 %v2054, %v2037
      %v3904 = vpack.c.bf16 %v2630, %v2613
      %v3905 = vpack.c.bf16 %v3206, %v3189
      %v3906 = vpack.c.bf16 %v2088, %v2071
      %v3907 = vpack.c.bf16 %v2664, %v2647
      %v3908 = vpack.c.bf16 %v3240, %v3223
      %v3909 = vpack.c.bf16 %v2122, %v2105
      %v3910 = vpack.c.bf16 %v2698, %v2681
      %v3911 = vpack.c.bf16 %v3274, %v3257
      %v3912 = vpack.c.bf16 %v2156, %v2139
      %v3913 = vpack.c.bf16 %v2732, %v2715
      %v3914 = vpack.c.bf16 %v3308, %v3291
      %v3915 = vpack.c.bf16 %v2190, %v2173
      %v3916 = vpack.c.bf16 %v2766, %v2749
      %v3917 = vpack.c.bf16 %v3342, %v3325
      %v3918 = vpack.c.bf16 %v2224, %v2207
      %v3919 = vpack.c.bf16 %v2800, %v2783
      %v3920 = vpack.c.bf16 %v3376, %v3359
      %v3921 = vpack.c.bf16 %v2258, %v2241
      %v3922 = vpack.c.bf16 %v2834, %v2817
      %v3923 = vpack.c.bf16 %v3410, %v3393
      %v3924 = vpack.c.bf16 %v2292, %v2275
      %v3925 = vpack.c.bf16 %v2868, %v2851
      %v3926 = vpack.c.bf16 %v3444, %v3427
      %v3927 = vpack.c.bf16 %v2326, %v2309
      %v3928 = vpack.c.bf16 %v2902, %v2885
      %v3929 = vpack.c.bf16 %v3478, %v3461
      %v3930 = vpack.c.bf16 %v2360, %v2343
      %v3931 = vpack.c.bf16 %v2936, %v2919
      %v3932 = vpack.c.bf16 %v3512, %v3495
      %v3933 = vpack.c.bf16 %v2394, %v2377
      %v3934 = vpack.c.bf16 %v2970, %v2953
      %v3935 = vpack.c.bf16 %v3546, %v3529
      %v3936 = vpack.c.bf16 %v2428, %v2411
      %v3937 = vpack.c.bf16 %v3004, %v2987
      %v3938 = vpack.c.bf16 %v3580, %v3563
      %v3939 = vpack.c.bf16 %v2462, %v2445
      %v3940 = vpack.c.bf16 %v3038, %v3021
      %v3941 = vpack.c.bf16 %v3614, %v3597
      %v3942 = vpack.c.bf16 %v2496, %v2479
      %v3943 = vpack.c.bf16 %v3072, %v3055
      %v3944 = vpack.c.bf16 %v3648, %v3631
      %v3945 = vpack.c.bf16 %v3714, %v3697
      %v3946 = vpack.c.bf16 %v3750, %v3733
      %v3947 = vpack.c.bf16 %v3786, %v3769
      %v3948 = vpack.c.bf16 %v3822, %v3805
      %v3949 = vpack.c.bf16 %v3858, %v3841
      %v3950 = vpack.c.bf16 %v3894, %v3877
      %v3951 = vld [vmem:[%s3] sm:$0xf]
      %v3952 = vld [vmem:[%s3 + $0x4] sm:$0xf]
      %v3953 = vld [vmem:[%s3 + $0x8] sm:$0xf]
      %v3954 = vld [vmem:[%s3 + $0xc] sm:$0xf]
      %v3955 = vld [vmem:[%s3 + $0x10] sm:$0xf]
      %v3956 = vld [vmem:[%s3 + $0x14] sm:$0xf]
      %v3957 = vld [vmem:[%s3 + $0x18] sm:$0xf]
      %v3958 = vld [vmem:[%s3 + $0x1c] sm:$0xf]
      %v3959 = vld [vmem:[%s3 + $0x20] sm:$0xf]
      %v3960 = vld [vmem:[%s3 + $0x24] sm:$0xf]
      %v3961 = vld [vmem:[%s3 + $0x28] sm:$0xf]
      %v3962 = vld [vmem:[%s3 + $0x2c] sm:$0xf]
      %v3963 = vld [vmem:[%s3 + $0x30] sm:$0xf]
      %v3964 = vld [vmem:[%s3 + $0x34] sm:$0xf]
      %v3965 = vld [vmem:[%s3 + $0x38] sm:$0xf]
      %v3966 = vld [vmem:[%s3 + $0x3c] sm:$0xf]
      %v3967 = vld [vmem:[%s3 + $0x40] sm:$0xf]
      %v3968 = vld [vmem:[%s3 + $0x44] sm:$0xf]
      %v3969 = vld [vmem:[%s3 + $0x48] sm:$0xf]
      %v3970 = vld [vmem:[%s3 + $0x4c] sm:$0xf]
      %v3971 = vld [vmem:[%s3 + $0x50] sm:$0xf]
      %v3972 = vld [vmem:[%s3 + $0x54] sm:$0xf]
      %v3973 = vld [vmem:[%s3 + $0x58] sm:$0xf]
      %v3974 = vld [vmem:[%s3 + $0x5c] sm:$0xf]
      %v3975 = vld [vmem:[%s3 + $0x60] sm:$0xf]
      %v3976 = vld [vmem:[%s3 + $0x64] sm:$0xf]
      %v3977 = vld [vmem:[%s3 + $0x68] sm:$0xf]
      %v3978 = vld [vmem:[%s3 + $0x6c] sm:$0xf]
      %v3979 = vld [vmem:[%s3 + $0x70] sm:$0xf]
      %v3980 = vld [vmem:[%s3 + $0x74] sm:$0xf]
      %v3981 = vld [vmem:[%s3 + $0x78] sm:$0xf]
      %v3982 = vld [vmem:[%s3 + $0x7c] sm:$0xf]
      %v3983 = vld [vmem:[%s3 + $0x80] sm:$0xf]
      %v3984 = vld [vmem:[%s3 + $0x84] sm:$0xf]
      %v3985 = vld [vmem:[%s3 + $0x88] sm:$0xf]
      %v3986 = vld [vmem:[%s3 + $0x8c] sm:$0xf]
      %v3987 = vld [vmem:[%s3 + $0x90] sm:$0xf]
      %v3988 = vld [vmem:[%s3 + $0x94] sm:$0xf]
      %v3989 = vld [vmem:[%s3 + $0x98] sm:$0xf]
      %v3990 = vld [vmem:[%s3 + $0x9c] sm:$0xf]
      %v3991 = vld [vmem:[%s3 + $0xa0] sm:$0xf]
      %v3992 = vld [vmem:[%s3 + $0xa4] sm:$0xf]
      %v3993 = vld [vmem:[%s3 + $0xa8] sm:$0xf]
      %v3994 = vld [vmem:[%s3 + $0xac] sm:$0xf]
      %v3995 = vld [vmem:[%s3 + $0xb0] sm:$0xf]
      %v3996 = vld [vmem:[%s3 + $0xb4] sm:$0xf]
      %v3997 = vld [vmem:[%s3 + $0xb8] sm:$0xf]
      %v3998 = vld [vmem:[%s3 + $0xbc] sm:$0xf]
      %v3999 = vld [vmem:[%s3 + $0xc0] sm:$0xf]
      %v4000 = vld [vmem:[%s3 + $0xc4] sm:$0xf]
      %v4001 = vld [vmem:[%s3 + $0xc8] sm:$0xf]
      %v4002 = vld [vmem:[%s3 + $0xcc] sm:$0xf]
      %v4003 = vld [vmem:[%s3 + $0xd0] sm:$0xf]
      %v4004 = vld [vmem:[%s3 + $0xd4] sm:$0xf]
      %v4005 = vld [vmem:[%s3 + $0xd8] sm:$0xf]
      %v4006 = vld [vmem:[%s3 + $0xdc] sm:$0xf]
      %v4007 = vld [vmem:[%s3 + $0xe0] sm:$0xf]
      %v4008 = vld [vmem:[%s3 + $0xe4] sm:$0xf]
      %v4009 = vld [vmem:[%s3 + $0xe8] sm:$0xf]
      %v4010 = vld [vmem:[%s3 + $0xec] sm:$0xf]
      %v4011 = vld [vmem:[%s3 + $0xf0] sm:$0xf]
      %v4012 = vld [vmem:[%s3 + $0xf4] sm:$0xf]
      %v4013 = vld [vmem:[%s3 + $0xf8] sm:$0xf]
      %v4014 = vld [vmem:[%s3 + $0xfc] sm:$0xf]
      %v4015 = vld [vmem:[%s3 + $0x100] sm:$0xf]
      %v4016 = vld [vmem:[%s3 + $0x104] sm:$0xf]
      %v4017 = vld [vmem:[%s3 + $0x108] sm:$0xf]
      %v4018 = vld [vmem:[%s3 + $0x10c] sm:$0xf]
      %v4019 = vld [vmem:[%s3 + $0x110] sm:$0xf]
      %v4020 = vld [vmem:[%s3 + $0x114] sm:$0xf]
      %v4021 = vld [vmem:[%s3 + $0x118] sm:$0xf]
      %v4022 = vld [vmem:[%s3 + $0x11c] sm:$0xf]
      %v4023 = vld [vmem:[%s3 + $0x120] sm:$0xf]
      %v4024 = vld [vmem:[%s3 + $0x124] sm:$0xf]
      %v4025 = vld [vmem:[%s3 + $0x128] sm:$0xf]
      %v4026 = vld [vmem:[%s3 + $0x12c] sm:$0xf]
      %v4027 = vld [vmem:[%s3 + $0x130] sm:$0xf]
      %v4028 = vld [vmem:[%s3 + $0x134] sm:$0xf]
      %v4029 = vld [vmem:[%s3 + $0x138] sm:$0xf]
      %v4030 = vld [vmem:[%s3 + $0x13c] sm:$0xf]
      %v4031 = vld [vmem:[%s3 + $0x140] sm:$0xf]
      %v4032 = vld [vmem:[%s3 + $0x144] sm:$0xf]
      %v4033 = vld [vmem:[%s3 + $0x148] sm:$0xf]
      %v4034 = vld [vmem:[%s3 + $0x14c] sm:$0xf]
      %v4035 = vld [vmem:[%s3 + $0x150] sm:$0xf]
      %v4036 = vld [vmem:[%s3 + $0x154] sm:$0xf]
      %v4037 = vld [vmem:[%s3 + $0x158] sm:$0xf]
      %v4038 = vld [vmem:[%s3 + $0x15c] sm:$0xf]
      %v4039 = vld [vmem:[%s3 + $0x160] sm:$0xf]
      %v4040 = vld [vmem:[%s3 + $0x164] sm:$0xf]
      %v4041 = vld [vmem:[%s3 + $0x168] sm:$0xf]
      %v4042 = vld [vmem:[%s3 + $0x16c] sm:$0xf]
      %v4043 = vld [vmem:[%s3 + $0x170] sm:$0xf]
      %v4044 = vld [vmem:[%s3 + $0x174] sm:$0xf]
      %v4045 = vld [vmem:[%s3 + $0x178] sm:$0xf]
      %v4046 = vld [vmem:[%s3 + $0x17c] sm:$0xf]
      %v4047 = vld [vmem:[%s3 + $0x180] sm:$0xf]
      %v4048 = vld [vmem:[%s3 + $0x184] sm:$0xf]
      %v4049 = vld [vmem:[%s3 + $0x188] sm:$0xf]
      %v4050 = vld [vmem:[%s3 + $0x18c] sm:$0xf]
      %v4051 = vld [vmem:[%s3 + $0x190] sm:$0xf]
      %v4052 = vld [vmem:[%s3 + $0x194] sm:$0xf]
      %v4053 = vld [vmem:[%s3 + $0x198] sm:$0xf]
      %v4054 = vld [vmem:[%s3 + $0x19c] sm:$0xf]
      %v4055 = vld [vmem:[%s3 + $0x1a0] sm:$0xf]
      %v4056 = vld [vmem:[%s3 + $0x1a4] sm:$0xf]
      %v4057 = vld [vmem:[%s3 + $0x1a8] sm:$0xf]
      %v4058 = vld [vmem:[%s3 + $0x1ac] sm:$0xf]
      %v4059 = vld [vmem:[%s3 + $0x1b0] sm:$0xf]
      %v4060 = vld [vmem:[%s3 + $0x1b4] sm:$0xf]
      %v4061 = vld [vmem:[%s3 + $0x1b8] sm:$0xf]
      %v4062 = vld [vmem:[%s3 + $0x1bc] sm:$0xf]
      %v4063 = vld [vmem:[%s3 + $0x1c0] sm:$0xf]
      %v4064 = vld [vmem:[%s3 + $0x1c4] sm:$0xf]
      %v4065 = vld [vmem:[%s3 + $0x1c8] sm:$0xf]
      %v4066 = vld [vmem:[%s3 + $0x1cc] sm:$0xf]
      %v4067 = vld [vmem:[%s3 + $0x1d0] sm:$0xf]
      %v4068 = vld [vmem:[%s3 + $0x1d4] sm:$0xf]
      %v4069 = vld [vmem:[%s3 + $0x1d8] sm:$0xf]
      %v4070 = vld [vmem:[%s3 + $0x1dc] sm:$0xf]
      %v4071 = vld [vmem:[%s3 + $0x1e0] sm:$0xf]
      %v4072 = vld [vmem:[%s3 + $0x1e4] sm:$0xf]
      %v4073 = vld [vmem:[%s3 + $0x1e8] sm:$0xf]
      %v4074 = vld [vmem:[%s3 + $0x1ec] sm:$0xf]
      %v4075 = vld [vmem:[%s3 + $0x1f0] sm:$0xf]
      %v4076 = vld [vmem:[%s3 + $0x1f4] sm:$0xf]
      %v4077 = vld [vmem:[%s3 + $0x1f8] sm:$0xf]
      %v4078 = vld [vmem:[%s3 + $0x1fc] sm:$0xf]
      %v4079 = vld [vmem:[%s3 + $0x200] sm:$0xf]
      %v4080 = vld [vmem:[%s3 + $0x204] sm:$0xf]
      %v4081 = vld [vmem:[%s3 + $0x208] sm:$0xf]
      %v4082 = vld [vmem:[%s3 + $0x20c] sm:$0xf]
      %v4083 = vld [vmem:[%s3 + $0x210] sm:$0xf]
      %v4084 = vld [vmem:[%s3 + $0x214] sm:$0xf]
      %v4085 = vld [vmem:[%s3 + $0x218] sm:$0xf]
      %v4086 = vld [vmem:[%s3 + $0x21c] sm:$0xf]
      %v4087 = vld [vmem:[%s3 + $0x220] sm:$0xf]
      %v4088 = vld [vmem:[%s3 + $0x224] sm:$0xf]
      %v4089 = vld [vmem:[%s3 + $0x228] sm:$0xf]
      %v4090 = vld [vmem:[%s3 + $0x22c] sm:$0xf]
      %v4091 = vld [vmem:[%s3 + $0x230] sm:$0xf]
      %v4092 = vld [vmem:[%s3 + $0x234] sm:$0xf]
      %v4093 = vld [vmem:[%s3 + $0x238] sm:$0xf]
      %v4094 = vld [vmem:[%s3 + $0x23c] sm:$0xf]
      %v4095 = vld [vmem:[%s4] sm:$0x1]
      %v4097 = vlaneseq
      %v4098 = vshrl.u32 %v4097, 7
      %v4099 = vsub.s32 0, %v4098
      %v4100 = vrot.slane %v4095, %v4099
      %v4246 = vunpack.c.l.b16 %v3951
      %v4247 = vunpack.c.l.b16 %v3952
      %v4248 = vunpack.c.l.b16 %v3953
      %v4249 = vunpack.c.l.b16 %v3954
      %v4250 = vunpack.c.l.b16 %v3955
      %v4251 = vunpack.c.l.b16 %v3956
      %v4252 = vunpack.c.l.b16 %v3957
      %v4253 = vunpack.c.l.b16 %v3958
      %v4254 = vunpack.c.l.b16 %v3959
      %v4255 = vunpack.c.l.b16 %v3960
      %v4256 = vunpack.c.l.b16 %v3961
      %v4257 = vunpack.c.l.b16 %v3962
      %v4258 = vunpack.c.l.b16 %v3963
      %v4259 = vunpack.c.l.b16 %v3964
      %v4260 = vunpack.c.l.b16 %v3965
      %v4261 = vunpack.c.l.b16 %v3966
      %v4262 = vunpack.c.l.b16 %v3967
      %v4263 = vunpack.c.l.b16 %v3968
      %v4264 = vunpack.c.l.b16 %v3969
      %v4265 = vunpack.c.l.b16 %v3970
      %v4266 = vunpack.c.l.b16 %v3971
      %v4267 = vunpack.c.l.b16 %v3972
      %v4268 = vunpack.c.l.b16 %v3973
      %v4269 = vunpack.c.l.b16 %v3974
      %v4270 = vunpack.c.l.b16 %v3975
      %v4271 = vunpack.c.l.b16 %v3976
      %v4272 = vunpack.c.l.b16 %v3977
      %v4273 = vunpack.c.l.b16 %v3978
      %v4274 = vunpack.c.l.b16 %v3979
      %v4275 = vunpack.c.l.b16 %v3980
      %v4276 = vunpack.c.l.b16 %v3981
      %v4277 = vunpack.c.l.b16 %v3982
      %v4278 = vunpack.c.l.b16 %v3983
      %v4279 = vunpack.c.l.b16 %v3984
      %v4280 = vunpack.c.l.b16 %v3985
      %v4281 = vunpack.c.l.b16 %v3986
      %v4282 = vunpack.c.l.b16 %v3987
      %v4283 = vunpack.c.l.b16 %v3988
      %v4284 = vunpack.c.l.b16 %v3989
      %v4285 = vunpack.c.l.b16 %v3990
      %v4286 = vunpack.c.l.b16 %v3991
      %v4287 = vunpack.c.l.b16 %v3992
      %v4288 = vunpack.c.l.b16 %v3993
      %v4289 = vunpack.c.l.b16 %v3994
      %v4290 = vunpack.c.l.b16 %v3995
      %v4291 = vunpack.c.l.b16 %v3996
      %v4292 = vunpack.c.l.b16 %v3997
      %v4293 = vunpack.c.l.b16 %v3998
      %v4294 = vunpack.c.l.b16 %v3999
      %v4295 = vunpack.c.l.b16 %v4000
      %v4296 = vunpack.c.l.b16 %v4001
      %v4297 = vunpack.c.l.b16 %v4002
      %v4298 = vunpack.c.l.b16 %v4003
      %v4299 = vunpack.c.l.b16 %v4004
      %v4300 = vunpack.c.l.b16 %v4005
      %v4301 = vunpack.c.l.b16 %v4006
      %v4302 = vunpack.c.l.b16 %v4007
      %v4303 = vunpack.c.l.b16 %v4008
      %v4304 = vunpack.c.l.b16 %v4009
      %v4305 = vunpack.c.l.b16 %v4010
      %v4306 = vunpack.c.l.b16 %v4011
      %v4307 = vunpack.c.l.b16 %v4012
      %v4308 = vunpack.c.l.b16 %v4013
      %v4309 = vunpack.c.l.b16 %v4014
      %v4310 = vunpack.c.l.b16 %v4015
      %v4311 = vunpack.c.l.b16 %v4016
      %v4312 = vunpack.c.l.b16 %v4017
      %v4313 = vunpack.c.l.b16 %v4018
      %v4314 = vunpack.c.l.b16 %v4019
      %v4315 = vunpack.c.l.b16 %v4020
      %v4316 = vunpack.c.l.b16 %v4021
      %v4317 = vunpack.c.l.b16 %v4022
      %v4318 = vunpack.c.l.b16 %v4023
      %v4319 = vunpack.c.l.b16 %v4024
      %v4320 = vunpack.c.l.b16 %v4025
      %v4321 = vunpack.c.l.b16 %v4026
      %v4322 = vunpack.c.l.b16 %v4027
      %v4323 = vunpack.c.l.b16 %v4028
      %v4324 = vunpack.c.l.b16 %v4029
      %v4325 = vunpack.c.l.b16 %v4030
      %v4326 = vunpack.c.l.b16 %v4031
      %v4327 = vunpack.c.l.b16 %v4032
      %v4328 = vunpack.c.l.b16 %v4033
      %v4329 = vunpack.c.l.b16 %v4034
      %v4330 = vunpack.c.l.b16 %v4035
      %v4331 = vunpack.c.l.b16 %v4036
      %v4332 = vunpack.c.l.b16 %v4037
      %v4333 = vunpack.c.l.b16 %v4038
      %v4334 = vunpack.c.l.b16 %v4039
      %v4335 = vunpack.c.l.b16 %v4040
      %v4336 = vunpack.c.l.b16 %v4041
      %v4337 = vunpack.c.l.b16 %v4042
      %v4338 = vunpack.c.l.b16 %v4043
      %v4339 = vunpack.c.l.b16 %v4044
      %v4340 = vunpack.c.l.b16 %v4045
      %v4341 = vunpack.c.l.b16 %v4046
      %v4342 = vunpack.c.l.b16 %v4047
      %v4343 = vunpack.c.l.b16 %v4048
      %v4344 = vunpack.c.l.b16 %v4049
      %v4345 = vunpack.c.l.b16 %v4050
      %v4346 = vunpack.c.l.b16 %v4051
      %v4347 = vunpack.c.l.b16 %v4052
      %v4348 = vunpack.c.l.b16 %v4053
      %v4349 = vunpack.c.l.b16 %v4054
      %v4350 = vunpack.c.l.b16 %v4055
      %v4351 = vunpack.c.l.b16 %v4056
      %v4352 = vunpack.c.l.b16 %v4057
      %v4353 = vunpack.c.l.b16 %v4058
      %v4354 = vunpack.c.l.b16 %v4059
      %v4355 = vunpack.c.l.b16 %v4060
      %v4356 = vunpack.c.l.b16 %v4061
      %v4357 = vunpack.c.l.b16 %v4062
      %v4358 = vunpack.c.l.b16 %v4063
      %v4359 = vunpack.c.l.b16 %v4064
      %v4360 = vunpack.c.l.b16 %v4065
      %v4361 = vunpack.c.l.b16 %v4066
      %v4362 = vunpack.c.l.b16 %v4067
      %v4363 = vunpack.c.l.b16 %v4068
      %v4364 = vunpack.c.l.b16 %v4069
      %v4365 = vunpack.c.l.b16 %v4070
      %v4366 = vunpack.c.l.b16 %v4071
      %v4367 = vunpack.c.l.b16 %v4072
      %v4368 = vunpack.c.l.b16 %v4073
      %v4369 = vunpack.c.l.b16 %v4074
      %v4370 = vunpack.c.l.b16 %v4075
      %v4371 = vunpack.c.l.b16 %v4076
      %v4372 = vunpack.c.l.b16 %v4077
      %v4373 = vunpack.c.l.b16 %v4078
      %v4374 = vunpack.c.l.b16 %v4079
      %v4375 = vunpack.c.l.b16 %v4080
      %v4376 = vunpack.c.l.b16 %v4081
      %v4377 = vunpack.c.l.b16 %v4082
      %v4378 = vunpack.c.l.b16 %v4083
      %v4379 = vunpack.c.l.b16 %v4084
      %v4380 = vunpack.c.l.b16 %v4085
      %v4381 = vunpack.c.l.b16 %v4086
      %v4382 = vunpack.c.l.b16 %v4087
      %v4383 = vunpack.c.l.b16 %v4088
      %v4384 = vunpack.c.l.b16 %v4089
      %v4385 = vunpack.c.l.b16 %v4090
      %v4386 = vunpack.c.l.b16 %v4091
      %v4387 = vunpack.c.l.b16 %v4092
      %v4388 = vunpack.c.l.b16 %v4093
      %v4389 = vunpack.c.l.b16 %v4094
      %v4390 = vpack.c.b16 %v4247, %v4246
      %v4391 = vpack.c.b16 %v4249, %v4248
      %v4392 = vpack.c.b16 %v4251, %v4250
      %v4393 = vpack.c.b16 %v4253, %v4252
      %v4394 = vpack.c.b16 %v4255, %v4254
      %v4395 = vpack.c.b16 %v4257, %v4256
      %v4396 = vpack.c.b16 %v4259, %v4258
      %v4397 = vpack.c.b16 %v4261, %v4260
      %v4398 = vpack.c.b16 %v4263, %v4262
      %v4399 = vpack.c.b16 %v4265, %v4264
      %v4400 = vpack.c.b16 %v4267, %v4266
      %v4401 = vpack.c.b16 %v4269, %v4268
      %v4402 = vpack.c.b16 %v4271, %v4270
      %v4403 = vpack.c.b16 %v4273, %v4272
      %v4404 = vpack.c.b16 %v4275, %v4274
      %v4405 = vpack.c.b16 %v4277, %v4276
      %v4406 = vpack.c.b16 %v4279, %v4278
      %v4407 = vpack.c.b16 %v4281, %v4280
      %v4408 = vpack.c.b16 %v4283, %v4282
      %v4409 = vpack.c.b16 %v4285, %v4284
      %v4410 = vpack.c.b16 %v4287, %v4286
      %v4411 = vpack.c.b16 %v4289, %v4288
      %v4412 = vpack.c.b16 %v4291, %v4290
      %v4413 = vpack.c.b16 %v4293, %v4292
      %v4414 = vpack.c.b16 %v4295, %v4294
      %v4415 = vpack.c.b16 %v4297, %v4296
      %v4416 = vpack.c.b16 %v4299, %v4298
      %v4417 = vpack.c.b16 %v4301, %v4300
      %v4418 = vpack.c.b16 %v4303, %v4302
      %v4419 = vpack.c.b16 %v4305, %v4304
      %v4420 = vpack.c.b16 %v4307, %v4306
      %v4421 = vpack.c.b16 %v4309, %v4308
      %v4422 = vpack.c.b16 %v4311, %v4310
      %v4423 = vpack.c.b16 %v4313, %v4312
      %v4424 = vpack.c.b16 %v4315, %v4314
      %v4425 = vpack.c.b16 %v4317, %v4316
      %v4426 = vpack.c.b16 %v4319, %v4318
      %v4427 = vpack.c.b16 %v4321, %v4320
      %v4428 = vpack.c.b16 %v4323, %v4322
      %v4429 = vpack.c.b16 %v4325, %v4324
      %v4430 = vpack.c.b16 %v4327, %v4326
      %v4431 = vpack.c.b16 %v4329, %v4328
      %v4432 = vpack.c.b16 %v4331, %v4330
      %v4433 = vpack.c.b16 %v4333, %v4332
      %v4434 = vpack.c.b16 %v4335, %v4334
      %v4435 = vpack.c.b16 %v4337, %v4336
      %v4436 = vpack.c.b16 %v4339, %v4338
      %v4437 = vpack.c.b16 %v4341, %v4340
      %v4438 = vpack.c.b16 %v4343, %v4342
      %v4439 = vpack.c.b16 %v4345, %v4344
      %v4440 = vpack.c.b16 %v4347, %v4346
      %v4441 = vpack.c.b16 %v4349, %v4348
      %v4442 = vpack.c.b16 %v4351, %v4350
      %v4443 = vpack.c.b16 %v4353, %v4352
      %v4444 = vpack.c.b16 %v4355, %v4354
      %v4445 = vpack.c.b16 %v4357, %v4356
      %v4446 = vpack.c.b16 %v4359, %v4358
      %v4447 = vpack.c.b16 %v4361, %v4360
      %v4448 = vpack.c.b16 %v4363, %v4362
      %v4449 = vpack.c.b16 %v4365, %v4364
      %v4450 = vpack.c.b16 %v4367, %v4366
      %v4451 = vpack.c.b16 %v4369, %v4368
      %v4452 = vpack.c.b16 %v4371, %v4370
      %v4453 = vpack.c.b16 %v4373, %v4372
      %v4454 = vpack.c.b16 %v4375, %v4374
      %v4455 = vpack.c.b16 %v4377, %v4376
      %v4456 = vpack.c.b16 %v4379, %v4378
      %v4457 = vpack.c.b16 %v4381, %v4380
      %v4458 = vpack.c.b16 %v4383, %v4382
      %v4459 = vpack.c.b16 %v4385, %v4384
      %v4460 = vpack.c.b16 %v4387, %v4386
      %v4461 = vpack.c.b16 %v4389, %v4388
      %4534 = vmatprep.subr.bf16.mxu0 0
      %4535 = vmatpush1.bf16.msra.mxu0 %v4390
      %4536 = vmatprep.subr.bf16.mxu0 0
      %4537 = vmatpush1.bf16.msra.mxu0 %v4391
      %4538 = vmatprep.subr.bf16.mxu0 0
      %4539 = vmatpush1.bf16.msra.mxu0 %v4392
      %4540 = vmatprep.subr.bf16.mxu0 0
      %4541 = vmatpush1.bf16.msra.mxu0 %v4393
      %4542 = vmatprep.subr.bf16.mxu0 0
      %4543 = vmatpush1.bf16.msra.mxu0 %v4394
      %4544 = vmatprep.subr.bf16.mxu0 0
      %4545 = vmatpush1.bf16.msra.mxu0 %v4395
      %4546 = vmatprep.subr.bf16.mxu0 0
      %4547 = vmatpush1.bf16.msra.mxu0 %v4396
      %4548 = vmatprep.subr.bf16.mxu0 0
      %4549 = vmatpush1.bf16.msra.mxu0 %v4397
      %4550 = vmatprep.subr.bf16.mxu0 0
      %4551 = vmatpush1.bf16.msra.mxu0 %v4398
      %4552 = vmatprep.subr.bf16.mxu0 0
      %4553 = vmatpush1.bf16.msra.mxu0 %v4399
      %4554 = vmatprep.subr.bf16.mxu0 0
      %4555 = vmatpush1.bf16.msra.mxu0 %v4400
      %4556 = vmatprep.subr.bf16.mxu0 0
      %4557 = vmatpush1.bf16.msra.mxu0 %v4401
      %4558 = vmatprep.subr.bf16.mxu0 0
      %4559 = vmatpush1.bf16.msra.mxu0 %v4402
      %4560 = vmatprep.subr.bf16.mxu0 0
      %4561 = vmatpush1.bf16.msra.mxu0 %v4403
      %4562 = vmatprep.subr.bf16.mxu0 0
      %4563 = vmatpush1.bf16.msra.mxu0 %v4404
      %4564 = vmatprep.subr.bf16.mxu0 0
      %4565 = vmatpush1.bf16.msra.mxu0 %v4405
      %4566 = vmatprep.mubr.bf16.mxu0 %v3898
      %4567 = vmatmul.mubr.bf16.gmra.mrb[0].mxu0 %v3897
      %v4568 = vpop.f32.mrb[0].mxu0
      %v4569 = vpop.f32.mrb[0].mxu0
      %v4570 = vpop.f32.mrb[0].mxu0
      %v4571 = vpop.f32.mrb[0].mxu0
      %4572 = vmatprep.mubr.bf16.mxu0 %v3901
      %4573 = vmatmul.mubr.bf16.gmra.mrb[0].mxu0 %v3900
      %v4574 = vpop.f32.mrb[0].mxu0
      %v4575 = vpop.f32.mrb[0].mxu0
      %v4576 = vpop.f32.mrb[0].mxu0
      %v4577 = vpop.f32.mrb[0].mxu0
      %4578 = vmatprep.mubr.bf16.mxu0 %v3904
      %4579 = vmatmul.mubr.bf16.gmra.mrb[0].mxu0 %v3903
      %v4580 = vpop.f32.mrb[0].mxu0
      %v4581 = vadd.f32 %v4100, %v4580
      %v4582 = vpop.f32.mrb[0].mxu0
      %v4583 = vpop.f32.mrb[0].mxu0
      %v4584 = vadd.f32 %v4100, %v4583
      %v4585 = vpop.f32.mrb[0].mxu0
      %4586 = vmatprep.mubr.bf16.mxu0 %v3907
      %4587 = vmatmul.mubr.bf16.gmra.mrb[0].mxu0 %v3906
      %v4588 = vpop.f32.mrb[0].mxu0
      %v4589 = vadd.f32 %v4100, %v4588
      %v4590 = vpop.f32.mrb[0].mxu0
      %v4591 = vpop.f32.mrb[0].mxu0
      %v4592 = vadd.f32 %v4100, %v4591
      %v4593 = vpop.f32.mrb[0].mxu0
      %4594 = vmatprep.mubr.bf16.mxu0 %v3910
      %4595 = vmatmul.mubr.bf16.gmra.mrb[0].mxu0 %v3909
      %v4596 = vpop.f32.mrb[0].mxu0
      %v4597 = vadd.f32 %v4100, %v4596
      %v4598 = vpop.f32.mrb[0].mxu0
      %v4599 = vpop.f32.mrb[0].mxu0
      %v4600 = vadd.f32 %v4100, %v4599
      %v4601 = vpop.f32.mrb[0].mxu0
      %4602 = vmatprep.mubr.bf16.mxu0 %v3913
      %4603 = vmatmul.mubr.bf16.gmra.mrb[0].mxu0 %v3912
      %v4604 = vpop.f32.mrb[0].mxu0
      %v4605 = vadd.f32 %v4100, %v4604
      %v4606 = vpop.f32.mrb[0].mxu0
      %v4607 = vpop.f32.mrb[0].mxu0
      %v4608 = vadd.f32 %v4100, %v4607
      %v4609 = vpop.f32.mrb[0].mxu0
      %4610 = vmatprep.mubr.bf16.mxu0 %v3916
      %4611 = vmatmul.mubr.bf16.gmra.mrb[0].mxu0 %v3915
      %v4612 = vpop.f32.mrb[0].mxu0
      %v4613 = vadd.f32 %v4100, %v4612
      %v4614 = vpop.f32.mrb[0].mxu0
      %v4615 = vpop.f32.mrb[0].mxu0
      %v4616 = vadd.f32 %v4100, %v4615
      %v4617 = vpop.f32.mrb[0].mxu0
      %4618 = vmatprep.mubr.bf16.mxu0 %v3919
      %4619 = vmatmul.mubr.bf16.gmra.mrb[0].mxu0 %v3918
      %v4620 = vpop.f32.mrb[0].mxu0
      %v4621 = vadd.f32 %v4100, %v4620
      %v4622 = vpop.f32.mrb[0].mxu0
      %v4623 = vpop.f32.mrb[0].mxu0
      %v4624 = vadd.f32 %v4100, %v4623
      %v4625 = vpop.f32.mrb[0].mxu0
      %4626 = vmatprep.mubr.bf16.mxu0 %v3922
      %4627 = vmatmul.mubr.bf16.gmra.mrb[0].mxu0 %v3921
      %v4628 = vpop.f32.mrb[0].mxu0
      %v4629 = vadd.f32 %v4100, %v4628
      %v4630 = vpop.f32.mrb[0].mxu0
      %v4631 = vpop.f32.mrb[0].mxu0
      %v4632 = vadd.f32 %v4100, %v4631
      %v4633 = vpop.f32.mrb[0].mxu0
      %4634 = vmatprep.mubr.bf16.mxu0 %v3925
      %4635 = vmatmul.mubr.bf16.gmra.mrb[0].mxu0 %v3924
      %v4636 = vpop.f32.mrb[0].mxu0
      %v4637 = vadd.f32 %v4100, %v4636
      %v4638 = vpop.f32.mrb[0].mxu0
      %v4639 = vpop.f32.mrb[0].mxu0
      %v4640 = vadd.f32 %v4100, %v4639
      %v4641 = vpop.f32.mrb[0].mxu0
      %4642 = vmatprep.mubr.bf16.mxu0 %v3928
      %4643 = vmatmul.mubr.bf16.gmra.mrb[0].mxu0 %v3927
      %v4644 = vpop.f32.mrb[0].mxu0
      %v4645 = vadd.f32 %v4100, %v4644
      %v4646 = vpop.f32.mrb[0].mxu0
      %v4647 = vpop.f32.mrb[0].mxu0
      %v4648 = vadd.f32 %v4100, %v4647
      %v4649 = vpop.f32.mrb[0].mxu0
      %4650 = vmatprep.mubr.bf16.mxu0 %v3931
      %4651 = vmatmul.mubr.bf16.gmra.mrb[0].mxu0 %v3930
      %v4652 = vpop.f32.mrb[0].mxu0
      %v4653 = vadd.f32 %v4100, %v4652
      %v4654 = vpop.f32.mrb[0].mxu0
      %v4655 = vpop.f32.mrb[0].mxu0
      %v4656 = vadd.f32 %v4100, %v4655
      %v4657 = vpop.f32.mrb[0].mxu0
      %4658 = vmatprep.mubr.bf16.mxu0 %v3934
      %4659 = vmatmul.mubr.bf16.gmra.mrb[0].mxu0 %v3933
      %v4660 = vpop.f32.mrb[0].mxu0
      %v4661 = vadd.f32 %v4100, %v4660
      %v4662 = vpop.f32.mrb[0].mxu0
      %v4663 = vpop.f32.mrb[0].mxu0
      %v4664 = vadd.f32 %v4100, %v4663
      %v4665 = vpop.f32.mrb[0].mxu0
      %4666 = vmatprep.mubr.bf16.mxu0 %v3937
      %4667 = vmatmul.mubr.bf16.gmra.mrb[0].mxu0 %v3936
      %v4668 = vpop.f32.mrb[0].mxu0
      %v4669 = vadd.f32 %v4100, %v4668
      %v4670 = vpop.f32.mrb[0].mxu0
      %v4671 = vpop.f32.mrb[0].mxu0
      %v4672 = vadd.f32 %v4100, %v4671
      %v4673 = vpop.f32.mrb[0].mxu0
      %4674 = vmatprep.mubr.bf16.mxu0 %v3940
      %4675 = vmatmul.mubr.bf16.gmra.mrb[0].mxu0 %v3939
      %v4676 = vpop.f32.mrb[0].mxu0
      %v4677 = vpop.f32.mrb[0].mxu0
      %v4678 = vpop.f32.mrb[0].mxu0
      %v4679 = vpop.f32.mrb[0].mxu0
      %4680 = vmatprep.mubr.bf16.mxu0 %v3943
      %4681 = vmatmul.mubr.bf16.gmra.mrb[0].mxu0 %v3942
      %v4682 = vpop.f32.mrb[0].mxu0
      %v4683 = vpop.f32.mrb[0].mxu0
      %v4684 = vpop.f32.mrb[0].mxu0
      %v4685 = vpop.f32.mrb[0].mxu0
      %4686 = vdwg.mxu0
      %4687 = vmatprep.subr.bf16.mxu0 0
      %4688 = vmatpush1.bf16.msra.mxu0 %v4406
      %4689 = vmatprep.subr.bf16.mxu0 0
      %4690 = vmatpush1.bf16.msra.mxu0 %v4407
      %4691 = vmatprep.subr.bf16.mxu0 0
      %4692 = vmatpush1.bf16.msra.mxu0 %v4408
      %4693 = vmatprep.subr.bf16.mxu0 0
      %4694 = vmatpush1.bf16.msra.mxu0 %v4409
      %4695 = vmatprep.subr.bf16.mxu0 0
      %4696 = vmatpush1.bf16.msra.mxu0 %v4410
      %4697 = vmatprep.subr.bf16.mxu0 0
      %4698 = vmatpush1.bf16.msra.mxu0 %v4411
      %4699 = vmatprep.subr.bf16.mxu0 0
      %4700 = vmatpush1.bf16.msra.mxu0 %v4412
      %4701 = vmatprep.subr.bf16.mxu0 0
      %4702 = vmatpush1.bf16.msra.mxu0 %v4413
      %4703 = vmatprep.subr.bf16.mxu0 0
      %4704 = vmatpush1.bf16.msra.mxu0 %v4414
      %4705 = vmatprep.subr.bf16.mxu0 0
      %4706 = vmatpush1.bf16.msra.mxu0 %v4415
      %4707 = vmatprep.subr.bf16.mxu0 0
      %4708 = vmatpush1.bf16.msra.mxu0 %v4416
      %4709 = vmatprep.subr.bf16.mxu0 0
      %4710 = vmatpush1.bf16.msra.mxu0 %v4417
      %4711 = vmatprep.subr.bf16.mxu0 0
      %4712 = vmatpush1.bf16.msra.mxu0 %v4418
      %4713 = vmatprep.subr.bf16.mxu0 0
      %4714 = vmatpush1.bf16.msra.mxu0 %v4419
      %4715 = vmatprep.subr.bf16.mxu0 0
      %4716 = vmatpush1.bf16.msra.mxu0 %v4420
      %4717 = vmatprep.subr.bf16.mxu0 0
      %4718 = vmatpush1.bf16.msra.mxu0 %v4421
      %4719 = vmatprep.mubr.bf16.mxu0 %v3900
      %4720 = vmatmul.mubr.bf16.gmra.mrb[0].mxu0 %v3899
      %v4721 = vpop.f32.mrb[0].mxu0
      %v4722 = vpop.f32.mrb[0].mxu0
      %v4723 = vpop.f32.mrb[0].mxu0
      %v4724 = vpop.f32.mrb[0].mxu0
      %4725 = vmatprep.mubr.bf16.mxu0 %v3903
      %4726 = vmatmul.mubr.bf16.gmra.mrb[0].mxu0 %v3902
      %v4727 = vpop.f32.mrb[0].mxu0
      %v4728 = vpop.f32.mrb[0].mxu0
      %v4729 = vpop.f32.mrb[0].mxu0
      %v4730 = vpop.f32.mrb[0].mxu0
      %4731 = vmatprep.mubr.bf16.mxu0 %v3906
      %4732 = vmatmul.mubr.bf16.gmra.mrb[0].mxu0 %v3905
      %v4733 = vpop.f32.mrb[0].mxu0
      %v4734 = vadd.f32 %v4581, %v4733
      %v4735 = vpop.f32.mrb[0].mxu0
      %v4736 = vpop.f32.mrb[0].mxu0
      %v4737 = vadd.f32 %v4584, %v4736
      %v4738 = vpop.f32.mrb[0].mxu0
      %4739 = vmatprep.mubr.bf16.mxu0 %v3909
      %4740 = vmatmul.mubr.bf16.gmra.mrb[0].mxu0 %v3908
      %v4741 = vpop.f32.mrb[0].mxu0
      %v4742 = vadd.f32 %v4589, %v4741
      %v4743 = vpop.f32.mrb[0].mxu0
      %v4744 = vpop.f32.mrb[0].mxu0
      %v4745 = vadd.f32 %v4592, %v4744
      %v4746 = vpop.f32.mrb[0].mxu0
      %4747 = vmatprep.mubr.bf16.mxu0 %v3912
      %4748 = vmatmul.mubr.bf16.gmra.mrb[0].mxu0 %v3911
      %v4749 = vpop.f32.mrb[0].mxu0
      %v4750 = vadd.f32 %v4597, %v4749
      %v4751 = vpop.f32.mrb[0].mxu0
      %v4752 = vpop.f32.mrb[0].mxu0
      %v4753 = vadd.f32 %v4600, %v4752
      %v4754 = vpop.f32.mrb[0].mxu0
      %4755 = vmatprep.mubr.bf16.mxu0 %v3915
      %4756 = vmatmul.mubr.bf16.gmra.mrb[0].mxu0 %v3914
      %v4757 = vpop.f32.mrb[0].mxu0
      %v4758 = vadd.f32 %v4605, %v4757
      %v4759 = vpop.f32.mrb[0].mxu0
      %v4760 = vpop.f32.mrb[0].mxu0
      %v4761 = vadd.f32 %v4608, %v4760
      %v4762 = vpop.f32.mrb[0].mxu0
      %4763 = vmatprep.mubr.bf16.mxu0 %v3918
      %4764 = vmatmul.mubr.bf16.gmra.mrb[0].mxu0 %v3917
      %v4765 = vpop.f32.mrb[0].mxu0
      %v4766 = vadd.f32 %v4613, %v4765
      %v4767 = vpop.f32.mrb[0].mxu0
      %v4768 = vpop.f32.mrb[0].mxu0
      %v4769 = vadd.f32 %v4616, %v4768
      %v4770 = vpop.f32.mrb[0].mxu0
      %4771 = vmatprep.mubr.bf16.mxu0 %v3921
      %4772 = vmatmul.mubr.bf16.gmra.mrb[0].mxu0 %v3920
      %v4773 = vpop.f32.mrb[0].mxu0
      %v4774 = vadd.f32 %v4621, %v4773
      %v4775 = vpop.f32.mrb[0].mxu0
      %v4776 = vpop.f32.mrb[0].mxu0
      %v4777 = vadd.f32 %v4624, %v4776
      %v4778 = vpop.f32.mrb[0].mxu0
      %4779 = vmatprep.mubr.bf16.mxu0 %v3924
      %4780 = vmatmul.mubr.bf16.gmra.mrb[0].mxu0 %v3923
      %v4781 = vpop.f32.mrb[0].mxu0
      %v4782 = vadd.f32 %v4629, %v4781
      %v4783 = vpop.f32.mrb[0].mxu0
      %v4784 = vpop.f32.mrb[0].mxu0
      %v4785 = vadd.f32 %v4632, %v4784
      %v4786 = vpop.f32.mrb[0].mxu0
      %4787 = vmatprep.mubr.bf16.mxu0 %v3927
      %4788 = vmatmul.mubr.bf16.gmra.mrb[0].mxu0 %v3926
      %v4789 = vpop.f32.mrb[0].mxu0
      %v4790 = vadd.f32 %v4637, %v4789
      %v4791 = vpop.f32.mrb[0].mxu0
      %v4792 = vpop.f32.mrb[0].mxu0
      %v4793 = vadd.f32 %v4640, %v4792
      %v4794 = vpop.f32.mrb[0].mxu0
      %4795 = vmatprep.mubr.bf16.mxu0 %v3930
      %4796 = vmatmul.mubr.bf16.gmra.mrb[0].mxu0 %v3929
      %v4797 = vpop.f32.mrb[0].mxu0
      %v4798 = vadd.f32 %v4645, %v4797
      %v4799 = vpop.f32.mrb[0].mxu0
      %v4800 = vpop.f32.mrb[0].mxu0
      %v4801 = vadd.f32 %v4648, %v4800
      %v4802 = vpop.f32.mrb[0].mxu0
      %4803 = vmatprep.mubr.bf16.mxu0 %v3933
      %4804 = vmatmul.mubr.bf16.gmra.mrb[0].mxu0 %v3932
      %v4805 = vpop.f32.mrb[0].mxu0
      %v4806 = vadd.f32 %v4653, %v4805
      %v4807 = vpop.f32.mrb[0].mxu0
      %v4808 = vpop.f32.mrb[0].mxu0
      %v4809 = vadd.f32 %v4656, %v4808
      %v4810 = vpop.f32.mrb[0].mxu0
      %4811 = vmatprep.mubr.bf16.mxu0 %v3936
      %4812 = vmatmul.mubr.bf16.gmra.mrb[0].mxu0 %v3935
      %v4813 = vpop.f32.mrb[0].mxu0
      %v4814 = vadd.f32 %v4661, %v4813
      %v4815 = vpop.f32.mrb[0].mxu0
      %v4816 = vpop.f32.mrb[0].mxu0
      %v4817 = vadd.f32 %v4664, %v4816
      %v4818 = vpop.f32.mrb[0].mxu0
      %4819 = vmatprep.mubr.bf16.mxu0 %v3939
      %4820 = vmatmul.mubr.bf16.gmra.mrb[0].mxu0 %v3938
      %v4821 = vpop.f32.mrb[0].mxu0
      %v4822 = vadd.f32 %v4669, %v4821
      %v4823 = vpop.f32.mrb[0].mxu0
      %v4824 = vpop.f32.mrb[0].mxu0
      %v4825 = vadd.f32 %v4672, %v4824
      %v4826 = vpop.f32.mrb[0].mxu0
      %4827 = vmatprep.mubr.bf16.mxu0 %v3942
      %4828 = vmatmul.mubr.bf16.gmra.mrb[0].mxu0 %v3941
      %v4829 = vpop.f32.mrb[0].mxu0
      %v4830 = vpop.f32.mrb[0].mxu0
      %v4831 = vpop.f32.mrb[0].mxu0
      %v4832 = vpop.f32.mrb[0].mxu0
      %4833 = vmatprep.mubr.bf16.mxu0 %v3945
      %4834 = vmatmul.mubr.bf16.gmra.mrb[0].mxu0 %v3944
      %v4835 = vpop.f32.mrb[0].mxu0
      %v4836 = vpop.f32.mrb[0].mxu0
      %v4837 = vpop.f32.mrb[0].mxu0
      %v4838 = vpop.f32.mrb[0].mxu0
      %4839 = vdwg.mxu0
      %4840 = vmatprep.subr.bf16.mxu0 0
      %4841 = vmatpush1.bf16.msra.mxu0 %v4422
      %4842 = vmatprep.subr.bf16.mxu0 0
      %4843 = vmatpush1.bf16.msra.mxu0 %v4423
      %4844 = vmatprep.subr.bf16.mxu0 0
      %4845 = vmatpush1.bf16.msra.mxu0 %v4424
      %4846 = vmatprep.subr.bf16.mxu0 0
      %4847 = vmatpush1.bf16.msra.mxu0 %v4425
      %4848 = vmatprep.subr.bf16.mxu0 0
      %4849 = vmatpush1.bf16.msra.mxu0 %v4426
      %4850 = vmatprep.subr.bf16.mxu0 0
      %4851 = vmatpush1.bf16.msra.mxu0 %v4427
      %4852 = vmatprep.subr.bf16.mxu0 0
      %4853 = vmatpush1.bf16.msra.mxu0 %v4428
      %4854 = vmatprep.subr.bf16.mxu0 0
      %4855 = vmatpush1.bf16.msra.mxu0 %v4429
      %4856 = vmatprep.subr.bf16.mxu0 0
      %4857 = vmatpush1.bf16.msra.mxu0 %v4430
      %4858 = vmatprep.subr.bf16.mxu0 0
      %4859 = vmatpush1.bf16.msra.mxu0 %v4431
      %4860 = vmatprep.subr.bf16.mxu0 0
      %4861 = vmatpush1.bf16.msra.mxu0 %v4432
      %4862 = vmatprep.subr.bf16.mxu0 0
      %4863 = vmatpush1.bf16.msra.mxu0 %v4433
      %4864 = vmatprep.subr.bf16.mxu0 0
      %4865 = vmatpush1.bf16.msra.mxu0 %v4434
      %4866 = vmatprep.subr.bf16.mxu0 0
      %4867 = vmatpush1.bf16.msra.mxu0 %v4435
      %4868 = vmatprep.subr.bf16.mxu0 0
      %4869 = vmatpush1.bf16.msra.mxu0 %v4436
      %4870 = vmatprep.subr.bf16.mxu0 0
      %4871 = vmatpush1.bf16.msra.mxu0 %v4437
      %4872 = vmatprep.mubr.bf16.mxu0 %v3902
      %4873 = vmatmul.mubr.bf16.gmra.mrb[0].mxu0 %v3901
      %v4874 = vpop.f32.mrb[0].mxu0
      %v4875 = vpop.f32.mrb[0].mxu0
      %v4876 = vpop.f32.mrb[0].mxu0
      %v4877 = vpop.f32.mrb[0].mxu0
      %4878 = vmatprep.mubr.bf16.mxu0 %v3905
      %4879 = vmatmul.mubr.bf16.gmra.mrb[0].mxu0 %v3904
      %v4880 = vpop.f32.mrb[0].mxu0
      %v4881 = vpop.f32.mrb[0].mxu0
      %v4882 = vpop.f32.mrb[0].mxu0
      %v4883 = vpop.f32.mrb[0].mxu0
      %4884 = vmatprep.mubr.bf16.mxu0 %v3908
      %4885 = vmatmul.mubr.bf16.gmra.mrb[0].mxu0 %v3907
      %v4886 = vpop.f32.mrb[0].mxu0
      %v4887 = vadd.f32 %v4734, %v4886
      %v4888 = vpop.f32.mrb[0].mxu0
      %v4889 = vpop.f32.mrb[0].mxu0
      %v4890 = vadd.f32 %v4737, %v4889
      %v4891 = vpop.f32.mrb[0].mxu0
      %4892 = vmatprep.mubr.bf16.mxu0 %v3911
      %4893 = vmatmul.mubr.bf16.gmra.mrb[0].mxu0 %v3910
      %v4894 = vpop.f32.mrb[0].mxu0
      %v4895 = vadd.f32 %v4742, %v4894
      %v4896 = vpop.f32.mrb[0].mxu0
      %v4897 = vpop.f32.mrb[0].mxu0
      %v4898 = vadd.f32 %v4745, %v4897
      %v4899 = vpop.f32.mrb[0].mxu0
      %4900 = vmatprep.mubr.bf16.mxu0 %v3914
      %4901 = vmatmul.mubr.bf16.gmra.mrb[0].mxu0 %v3913
      %v4902 = vpop.f32.mrb[0].mxu0
      %v4903 = vadd.f32 %v4750, %v4902
      %v4904 = vpop.f32.mrb[0].mxu0
      %v4905 = vpop.f32.mrb[0].mxu0
      %v4906 = vadd.f32 %v4753, %v4905
      %v4907 = vpop.f32.mrb[0].mxu0
      %4908 = vmatprep.mubr.bf16.mxu0 %v3917
      %4909 = vmatmul.mubr.bf16.gmra.mrb[0].mxu0 %v3916
      %v4910 = vpop.f32.mrb[0].mxu0
      %v4911 = vadd.f32 %v4758, %v4910
      %v4912 = vpop.f32.mrb[0].mxu0
      %v4913 = vpop.f32.mrb[0].mxu0
      %v4914 = vadd.f32 %v4761, %v4913
      %v4915 = vpop.f32.mrb[0].mxu0
      %4916 = vmatprep.mubr.bf16.mxu0 %v3920
      %4917 = vmatmul.mubr.bf16.gmra.mrb[0].mxu0 %v3919
      %v4918 = vpop.f32.mrb[0].mxu0
      %v4919 = vadd.f32 %v4766, %v4918
      %v4920 = vpop.f32.mrb[0].mxu0
      %v4921 = vpop.f32.mrb[0].mxu0
      %v4922 = vadd.f32 %v4769, %v4921
      %v4923 = vpop.f32.mrb[0].mxu0
      %4924 = vmatprep.mubr.bf16.mxu0 %v3923
      %4925 = vmatmul.mubr.bf16.gmra.mrb[0].mxu0 %v3922
      %v4926 = vpop.f32.mrb[0].mxu0
      %v4927 = vadd.f32 %v4774, %v4926
      %v4928 = vpop.f32.mrb[0].mxu0
      %v4929 = vpop.f32.mrb[0].mxu0
      %v4930 = vadd.f32 %v4777, %v4929
      %v4931 = vpop.f32.mrb[0].mxu0
      %4932 = vmatprep.mubr.bf16.mxu0 %v3926
      %4933 = vmatmul.mubr.bf16.gmra.mrb[0].mxu0 %v3925
      %v4934 = vpop.f32.mrb[0].mxu0
      %v4935 = vadd.f32 %v4782, %v4934
      %v4936 = vpop.f32.mrb[0].mxu0
      %v4937 = vpop.f32.mrb[0].mxu0
      %v4938 = vadd.f32 %v4785, %v4937
      %v4939 = vpop.f32.mrb[0].mxu0
      %4940 = vmatprep.mubr.bf16.mxu0 %v3929
      %4941 = vmatmul.mubr.bf16.gmra.mrb[0].mxu0 %v3928
      %v4942 = vpop.f32.mrb[0].mxu0
      %v4943 = vadd.f32 %v4790, %v4942
      %v4944 = vpop.f32.mrb[0].mxu0
      %v4945 = vpop.f32.mrb[0].mxu0
      %v4946 = vadd.f32 %v4793, %v4945
      %v4947 = vpop.f32.mrb[0].mxu0
      %4948 = vmatprep.mubr.bf16.mxu0 %v3932
      %4949 = vmatmul.mubr.bf16.gmra.mrb[0].mxu0 %v3931
      %v4950 = vpop.f32.mrb[0].mxu0
      %v4951 = vadd.f32 %v4798, %v4950
      %v4952 = vpop.f32.mrb[0].mxu0
      %v4953 = vpop.f32.mrb[0].mxu0
      %v4954 = vadd.f32 %v4801, %v4953
      %v4955 = vpop.f32.mrb[0].mxu0
      %4956 = vmatprep.mubr.bf16.mxu0 %v3935
      %4957 = vmatmul.mubr.bf16.gmra.mrb[0].mxu0 %v3934
      %v4958 = vpop.f32.mrb[0].mxu0
      %v4959 = vadd.f32 %v4806, %v4958
      %v4960 = vpop.f32.mrb[0].mxu0
      %v4961 = vpop.f32.mrb[0].mxu0
      %v4962 = vadd.f32 %v4809, %v4961
      %v4963 = vpop.f32.mrb[0].mxu0
      %4964 = vmatprep.mubr.bf16.mxu0 %v3938
      %4965 = vmatmul.mubr.bf16.gmra.mrb[0].mxu0 %v3937
      %v4966 = vpop.f32.mrb[0].mxu0
      %v4967 = vadd.f32 %v4814, %v4966
      %v4968 = vpop.f32.mrb[0].mxu0
      %v4969 = vpop.f32.mrb[0].mxu0
      %v4970 = vadd.f32 %v4817, %v4969
      %v4971 = vpop.f32.mrb[0].mxu0
      %4972 = vmatprep.mubr.bf16.mxu0 %v3941
      %4973 = vmatmul.mubr.bf16.gmra.mrb[0].mxu0 %v3940
      %v4974 = vpop.f32.mrb[0].mxu0
      %v4975 = vadd.f32 %v4822, %v4974
      %v4976 = vpop.f32.mrb[0].mxu0
      %v4977 = vpop.f32.mrb[0].mxu0
      %v4978 = vadd.f32 %v4825, %v4977
      %v4979 = vpop.f32.mrb[0].mxu0
      %4980 = vmatprep.mubr.bf16.mxu0 %v3944
      %4981 = vmatmul.mubr.bf16.gmra.mrb[0].mxu0 %v3943
      %v4982 = vpop.f32.mrb[0].mxu0
      %v4983 = vpop.f32.mrb[0].mxu0
      %v4984 = vpop.f32.mrb[0].mxu0
      %v4985 = vpop.f32.mrb[0].mxu0
      %4986 = vmatprep.mubr.bf16.mxu0 %v3947
      %4987 = vmatmul.mubr.bf16.gmra.mrb[0].mxu0 %v3946
      %v4988 = vpop.f32.mrb[0].mxu0
      %v4989 = vpop.f32.mrb[0].mxu0
      %v4990 = vpop.f32.mrb[0].mxu0
      %v4991 = vpop.f32.mrb[0].mxu0
      %4992 = vdwg.mxu0
      %4993 = vmatprep.subr.bf16.mxu0 0
      %4994 = vmatpush1.bf16.msra.mxu0 %v4438
      %4995 = vmatprep.subr.bf16.mxu0 0
      %4996 = vmatpush1.bf16.msra.mxu0 %v4439
      %4997 = vmatprep.subr.bf16.mxu0 0
      %4998 = vmatpush1.bf16.msra.mxu0 %v4440
      %4999 = vmatprep.subr.bf16.mxu0 0
      %5000 = vmatpush1.bf16.msra.mxu0 %v4441
      %5001 = vmatprep.subr.bf16.mxu0 0
      %5002 = vmatpush1.bf16.msra.mxu0 %v4442
      %5003 = vmatprep.subr.bf16.mxu0 0
      %5004 = vmatpush1.bf16.msra.mxu0 %v4443
      %5005 = vmatprep.subr.bf16.mxu0 0
      %5006 = vmatpush1.bf16.msra.mxu0 %v4444
      %5007 = vmatprep.subr.bf16.mxu0 0
      %5008 = vmatpush1.bf16.msra.mxu0 %v4445
      %5009 = vmatprep.subr.bf16.mxu0 0
      %5010 = vmatpush1.bf16.msra.mxu0 %v4446
      %5011 = vmatprep.subr.bf16.mxu0 0
      %5012 = vmatpush1.bf16.msra.mxu0 %v4447
      %5013 = vmatprep.subr.bf16.mxu0 0
      %5014 = vmatpush1.bf16.msra.mxu0 %v4448
      %5015 = vmatprep.subr.bf16.mxu0 0
      %5016 = vmatpush1.bf16.msra.mxu0 %v4449
      %5017 = vmatprep.subr.bf16.mxu0 0
      %5018 = vmatpush1.bf16.msra.mxu0 %v4450
      %5019 = vmatprep.subr.bf16.mxu0 0
      %5020 = vmatpush1.bf16.msra.mxu0 %v4451
      %5021 = vmatprep.subr.bf16.mxu0 0
      %5022 = vmatpush1.bf16.msra.mxu0 %v4452
      %5023 = vmatprep.subr.bf16.mxu0 0
      %5024 = vmatpush1.bf16.msra.mxu0 %v4453
      %5025 = vmatprep.mubr.bf16.mxu0 %v3904
      %5026 = vmatmul.mubr.bf16.gmra.mrb[0].mxu0 %v3903
      %v5027 = vpop.f32.mrb[0].mxu0
      %v5028 = vpop.f32.mrb[0].mxu0
      %v5029 = vpop.f32.mrb[0].mxu0
      %v5030 = vpop.f32.mrb[0].mxu0
      %5031 = vmatprep.mubr.bf16.mxu0 %v3907
      %5032 = vmatmul.mubr.bf16.gmra.mrb[0].mxu0 %v3906
      %v5033 = vpop.f32.mrb[0].mxu0
      %v5034 = vpop.f32.mrb[0].mxu0
      %v5035 = vpop.f32.mrb[0].mxu0
      %v5036 = vpop.f32.mrb[0].mxu0
      %5037 = vmatprep.mubr.bf16.mxu0 %v3910
      %5038 = vmatmul.mubr.bf16.gmra.mrb[0].mxu0 %v3909
      %v5039 = vpop.f32.mrb[0].mxu0
      %v5040 = vadd.f32 %v4887, %v5039
      %v5041 = vpop.f32.mrb[0].mxu0
      %v5042 = vpop.f32.mrb[0].mxu0
      %v5043 = vadd.f32 %v4890, %v5042
      %v5044 = vpop.f32.mrb[0].mxu0
      %5045 = vmatprep.mubr.bf16.mxu0 %v3913
      %5046 = vmatmul.mubr.bf16.gmra.mrb[0].mxu0 %v3912
      %v5047 = vpop.f32.mrb[0].mxu0
      %v5048 = vadd.f32 %v4895, %v5047
      %v5049 = vpop.f32.mrb[0].mxu0
      %v5050 = vpop.f32.mrb[0].mxu0
      %v5051 = vadd.f32 %v4898, %v5050
      %v5052 = vpop.f32.mrb[0].mxu0
      %5053 = vmatprep.mubr.bf16.mxu0 %v3916
      %5054 = vmatmul.mubr.bf16.gmra.mrb[0].mxu0 %v3915
      %v5055 = vpop.f32.mrb[0].mxu0
      %v5056 = vadd.f32 %v4903, %v5055
      %v5057 = vpop.f32.mrb[0].mxu0
      %v5058 = vpop.f32.mrb[0].mxu0
      %v5059 = vadd.f32 %v4906, %v5058
      %v5060 = vpop.f32.mrb[0].mxu0
      %5061 = vmatprep.mubr.bf16.mxu0 %v3919
      %5062 = vmatmul.mubr.bf16.gmra.mrb[0].mxu0 %v3918
      %v5063 = vpop.f32.mrb[0].mxu0
      %v5064 = vadd.f32 %v4911, %v5063
      %v5065 = vpop.f32.mrb[0].mxu0
      %v5066 = vpop.f32.mrb[0].mxu0
      %v5067 = vadd.f32 %v4914, %v5066
      %v5068 = vpop.f32.mrb[0].mxu0
      %5069 = vmatprep.mubr.bf16.mxu0 %v3922
      %5070 = vmatmul.mubr.bf16.gmra.mrb[0].mxu0 %v3921
      %v5071 = vpop.f32.mrb[0].mxu0
      %v5072 = vadd.f32 %v4919, %v5071
      %v5073 = vpop.f32.mrb[0].mxu0
      %v5074 = vpop.f32.mrb[0].mxu0
      %v5075 = vadd.f32 %v4922, %v5074
      %v5076 = vpop.f32.mrb[0].mxu0
      %5077 = vmatprep.mubr.bf16.mxu0 %v3925
      %5078 = vmatmul.mubr.bf16.gmra.mrb[0].mxu0 %v3924
      %v5079 = vpop.f32.mrb[0].mxu0
      %v5080 = vadd.f32 %v4927, %v5079
      %v5081 = vpop.f32.mrb[0].mxu0
      %v5082 = vpop.f32.mrb[0].mxu0
      %v5083 = vadd.f32 %v4930, %v5082
      %v5084 = vpop.f32.mrb[0].mxu0
      %5085 = vmatprep.mubr.bf16.mxu0 %v3928
      %5086 = vmatmul.mubr.bf16.gmra.mrb[0].mxu0 %v3927
      %v5087 = vpop.f32.mrb[0].mxu0
      %v5088 = vadd.f32 %v4935, %v5087
      %v5089 = vpop.f32.mrb[0].mxu0
      %v5090 = vpop.f32.mrb[0].mxu0
      %v5091 = vadd.f32 %v4938, %v5090
      %v5092 = vpop.f32.mrb[0].mxu0
      %5093 = vmatprep.mubr.bf16.mxu0 %v3931
      %5094 = vmatmul.mubr.bf16.gmra.mrb[0].mxu0 %v3930
      %v5095 = vpop.f32.mrb[0].mxu0
      %v5096 = vadd.f32 %v4943, %v5095
      %v5097 = vpop.f32.mrb[0].mxu0
      %v5098 = vpop.f32.mrb[0].mxu0
      %v5099 = vadd.f32 %v4946, %v5098
      %v5100 = vpop.f32.mrb[0].mxu0
      %5101 = vmatprep.mubr.bf16.mxu0 %v3934
      %5102 = vmatmul.mubr.bf16.gmra.mrb[0].mxu0 %v3933
      %v5103 = vpop.f32.mrb[0].mxu0
      %v5104 = vadd.f32 %v4951, %v5103
      %v5105 = vpop.f32.mrb[0].mxu0
      %v5106 = vpop.f32.mrb[0].mxu0
      %v5107 = vadd.f32 %v4954, %v5106
      %v5108 = vpop.f32.mrb[0].mxu0
      %5109 = vmatprep.mubr.bf16.mxu0 %v3937
      %5110 = vmatmul.mubr.bf16.gmra.mrb[0].mxu0 %v3936
      %v5111 = vpop.f32.mrb[0].mxu0
      %v5112 = vadd.f32 %v4959, %v5111
      %v5113 = vpop.f32.mrb[0].mxu0
      %v5114 = vpop.f32.mrb[0].mxu0
      %v5115 = vadd.f32 %v4962, %v5114
      %v5116 = vpop.f32.mrb[0].mxu0
      %5117 = vmatprep.mubr.bf16.mxu0 %v3940
      %5118 = vmatmul.mubr.bf16.gmra.mrb[0].mxu0 %v3939
      %v5119 = vpop.f32.mrb[0].mxu0
      %v5120 = vadd.f32 %v4967, %v5119
      %v5121 = vpop.f32.mrb[0].mxu0
      %v5122 = vpop.f32.mrb[0].mxu0
      %v5123 = vadd.f32 %v4970, %v5122
      %v5124 = vpop.f32.mrb[0].mxu0
      %5125 = vmatprep.mubr.bf16.mxu0 %v3943
      %5126 = vmatmul.mubr.bf16.gmra.mrb[0].mxu0 %v3942
      %v5127 = vpop.f32.mrb[0].mxu0
      %v5128 = vadd.f32 %v4975, %v5127
      %v5129 = vpop.f32.mrb[0].mxu0
      %v5130 = vpop.f32.mrb[0].mxu0
      %v5131 = vadd.f32 %v4978, %v5130
      %v5132 = vpop.f32.mrb[0].mxu0
      %5133 = vmatprep.mubr.bf16.mxu0 %v3946
      %5134 = vmatmul.mubr.bf16.gmra.mrb[0].mxu0 %v3945
      %v5135 = vpop.f32.mrb[0].mxu0
      %v5136 = vpop.f32.mrb[0].mxu0
      %v5137 = vpop.f32.mrb[0].mxu0
      %v5138 = vpop.f32.mrb[0].mxu0
      %5139 = vmatprep.mubr.bf16.mxu0 %v3949
      %5140 = vmatmul.mubr.bf16.gmra.mrb[0].mxu0 %v3948
      %v5141 = vpop.f32.mrb[0].mxu0
      %v5142 = vpop.f32.mrb[0].mxu0
      %v5143 = vpop.f32.mrb[0].mxu0
      %v5144 = vpop.f32.mrb[0].mxu0
      %5145 = vdwg.mxu0
      %5146 = vmatprep.subr.bf16.mxu0 0
      %5147 = vmatpush1.bf16.msra.mxu0 %v4454
      %5148 = vmatprep.subr.bf16.mxu0 0
      %5149 = vmatpush1.bf16.msra.mxu0 %v4455
      %5150 = vmatprep.subr.bf16.mxu0 0
      %5151 = vmatpush1.bf16.msra.mxu0 %v4456
      %5152 = vmatprep.subr.bf16.mxu0 0
      %5153 = vmatpush1.bf16.msra.mxu0 %v4457
      %5154 = vmatprep.subr.bf16.mxu0 0
      %5155 = vmatpush1.bf16.msra.mxu0 %v4458
      %5156 = vmatprep.subr.bf16.mxu0 0
      %5157 = vmatpush1.bf16.msra.mxu0 %v4459
      %5158 = vmatprep.subr.bf16.mxu0 0
      %5159 = vmatpush1.bf16.msra.mxu0 %v4460
      %5160 = vmatprep.subr.bf16.mxu0 0
      %5161 = vmatpush1.bf16.msra.mxu0 %v4461
      %5162 = vmatprep.subr.bf16.mxu0 0
      %5163 = vmatpush1.bf16.msra.mxu0 0
      %5164 = vmatprep.subr.bf16.mxu0 0
      %5165 = vmatpush1.bf16.msra.mxu0 0
      %5166 = vmatprep.subr.bf16.mxu0 0
      %5167 = vmatpush1.bf16.msra.mxu0 0
      %5168 = vmatprep.subr.bf16.mxu0 0
      %5169 = vmatpush1.bf16.msra.mxu0 0
      %5170 = vmatprep.subr.bf16.mxu0 0
      %5171 = vmatpush1.bf16.msra.mxu0 0
      %5172 = vmatprep.subr.bf16.mxu0 0
      %5173 = vmatpush1.bf16.msra.mxu0 0
      %5174 = vmatprep.subr.bf16.mxu0 0
      %5175 = vmatpush1.bf16.msra.mxu0 0
      %5176 = vmatprep.subr.bf16.mxu0 0
      %5177 = vmatpush1.bf16.msra.mxu0 0
      %5178 = vmatprep.mubr.bf16.mxu0 0
      %5179 = vmatmul.mubr.bf16.gmra.mrb[0].mxu0 %v3905
      %v5180 = vpop.f32.mrb[0].mxu0
      %v5181 = vpop.f32.mrb[0].mxu0
      %v5182 = vpop.f32.mrb[0].mxu0
      %v5183 = vpop.f32.mrb[0].mxu0
      %5184 = vmatprep.mubr.bf16.mxu0 0
      %5185 = vmatmul.mubr.bf16.gmra.mrb[0].mxu0 %v3908
      %v5186 = vpop.f32.mrb[0].mxu0
      %v5187 = vpop.f32.mrb[0].mxu0
      %v5188 = vpop.f32.mrb[0].mxu0
      %v5189 = vpop.f32.mrb[0].mxu0
      %5190 = vmatprep.mubr.bf16.mxu0 0
      %5191 = vmatmul.mubr.bf16.gmra.mrb[0].mxu0 %v3911
      %v5192 = vpop.f32.mrb[0].mxu0
      %v5193 = vadd.f32 %v5040, %v5192
      %v5194 = vpop.f32.mrb[0].mxu0
      %v5195 = vpop.f32.mrb[0].mxu0
      %v5196 = vadd.f32 %v5043, %v5195
      %v5197 = vpop.f32.mrb[0].mxu0
      %5198 = vmatprep.mubr.bf16.mxu0 0
      %5199 = vmatmul.mubr.bf16.gmra.mrb[0].mxu0 %v3914
      %v5200 = vpop.f32.mrb[0].mxu0
      %v5201 = vadd.f32 %v5048, %v5200
      %v5202 = vpop.f32.mrb[0].mxu0
      %v5203 = vpop.f32.mrb[0].mxu0
      %v5204 = vadd.f32 %v5051, %v5203
      %v5205 = vpop.f32.mrb[0].mxu0
      %5206 = vmatprep.mubr.bf16.mxu0 0
      %5207 = vmatmul.mubr.bf16.gmra.mrb[0].mxu0 %v3917
      %v5208 = vpop.f32.mrb[0].mxu0
      %v5209 = vadd.f32 %v5056, %v5208
      %v5210 = vpop.f32.mrb[0].mxu0
      %v5211 = vpop.f32.mrb[0].mxu0
      %v5212 = vadd.f32 %v5059, %v5211
      %v5213 = vpop.f32.mrb[0].mxu0
      %5214 = vmatprep.mubr.bf16.mxu0 0
      %5215 = vmatmul.mubr.bf16.gmra.mrb[0].mxu0 %v3920
      %v5216 = vpop.f32.mrb[0].mxu0
      %v5217 = vadd.f32 %v5064, %v5216
      %v5218 = vpop.f32.mrb[0].mxu0
      %v5219 = vpop.f32.mrb[0].mxu0
      %v5220 = vadd.f32 %v5067, %v5219
      %v5221 = vpop.f32.mrb[0].mxu0
      %5222 = vmatprep.mubr.bf16.mxu0 0
      %5223 = vmatmul.mubr.bf16.gmra.mrb[0].mxu0 %v3923
      %v5224 = vpop.f32.mrb[0].mxu0
      %v5225 = vadd.f32 %v5072, %v5224
      %v5226 = vpop.f32.mrb[0].mxu0
      %v5227 = vpop.f32.mrb[0].mxu0
      %v5228 = vadd.f32 %v5075, %v5227
      %v5229 = vpop.f32.mrb[0].mxu0
      %5230 = vmatprep.mubr.bf16.mxu0 0
      %5231 = vmatmul.mubr.bf16.gmra.mrb[0].mxu0 %v3926
      %v5232 = vpop.f32.mrb[0].mxu0
      %v5233 = vadd.f32 %v5080, %v5232
      %v5234 = vpop.f32.mrb[0].mxu0
      %v5235 = vpop.f32.mrb[0].mxu0
      %v5236 = vadd.f32 %v5083, %v5235
      %v5237 = vpop.f32.mrb[0].mxu0
      %5238 = vmatprep.mubr.bf16.mxu0 0
      %5239 = vmatmul.mubr.bf16.gmra.mrb[0].mxu0 %v3929
      %v5240 = vpop.f32.mrb[0].mxu0
      %v5241 = vadd.f32 %v5088, %v5240
      %v5242 = vpop.f32.mrb[0].mxu0
      %v5243 = vpop.f32.mrb[0].mxu0
      %v5244 = vadd.f32 %v5091, %v5243
      %v5245 = vpop.f32.mrb[0].mxu0
      %5246 = vmatprep.mubr.bf16.mxu0 0
      %5247 = vmatmul.mubr.bf16.gmra.mrb[0].mxu0 %v3932
      %v5248 = vpop.f32.mrb[0].mxu0
      %v5249 = vadd.f32 %v5096, %v5248
      %v5250 = vpop.f32.mrb[0].mxu0
      %v5251 = vpop.f32.mrb[0].mxu0
      %v5252 = vadd.f32 %v5099, %v5251
      %v5253 = vpop.f32.mrb[0].mxu0
      %5254 = vmatprep.mubr.bf16.mxu0 0
      %5255 = vmatmul.mubr.bf16.gmra.mrb[0].mxu0 %v3935
      %v5256 = vpop.f32.mrb[0].mxu0
      %v5257 = vadd.f32 %v5104, %v5256
      %v5258 = vpop.f32.mrb[0].mxu0
      %v5259 = vpop.f32.mrb[0].mxu0
      %v5260 = vadd.f32 %v5107, %v5259
      %v5261 = vpop.f32.mrb[0].mxu0
      %5262 = vmatprep.mubr.bf16.mxu0 0
      %5263 = vmatmul.mubr.bf16.gmra.mrb[0].mxu0 %v3938
      %v5264 = vpop.f32.mrb[0].mxu0
      %v5265 = vadd.f32 %v5112, %v5264
      %v5266 = vpop.f32.mrb[0].mxu0
      %v5267 = vpop.f32.mrb[0].mxu0
      %v5268 = vadd.f32 %v5115, %v5267
      %v5269 = vpop.f32.mrb[0].mxu0
      %5270 = vmatprep.mubr.bf16.mxu0 0
      %5271 = vmatmul.mubr.bf16.gmra.mrb[0].mxu0 %v3941
      %v5272 = vpop.f32.mrb[0].mxu0
      %v5273 = vadd.f32 %v5120, %v5272
      %v5274 = vpop.f32.mrb[0].mxu0
      %v5275 = vpop.f32.mrb[0].mxu0
      %v5276 = vadd.f32 %v5123, %v5275
      %v5277 = vpop.f32.mrb[0].mxu0
      %5278 = vmatprep.mubr.bf16.mxu0 0
      %5279 = vmatmul.mubr.bf16.gmra.mrb[0].mxu0 %v3944
      %v5280 = vpop.f32.mrb[0].mxu0
      %v5281 = vadd.f32 %v5128, %v5280
      %v5282 = vpop.f32.mrb[0].mxu0
      %v5283 = vpop.f32.mrb[0].mxu0
      %v5284 = vadd.f32 %v5131, %v5283
      %v5285 = vpop.f32.mrb[0].mxu0
      %5286 = vmatprep.mubr.bf16.mxu0 0
      %5287 = vmatmul.mubr.bf16.gmra.mrb[0].mxu0 %v3947
      %v5288 = vpop.f32.mrb[0].mxu0
      %v5289 = vpop.f32.mrb[0].mxu0
      %v5290 = vpop.f32.mrb[0].mxu0
      %v5291 = vpop.f32.mrb[0].mxu0
      %5292 = vmatprep.mubr.bf16.mxu0 0
      %5293 = vmatmul.mubr.bf16.gmra.mrb[0].mxu0 %v3950
      %v5294 = vpop.f32.mrb[0].mxu0
      %v5295 = vpop.f32.mrb[0].mxu0
      %v5296 = vpop.f32.mrb[0].mxu0
      %v5297 = vpop.f32.mrb[0].mxu0
      %5298 = vdwg.mxu0
      %v5299 = vmax.f32 %v5193, 0.0
      %v5300 = vmax.f32 %v5196, 0.0
      %v5301 = vmax.f32 %v5201, 0.0
      %v5302 = vmax.f32 %v5204, 0.0
      %v5303 = vmax.f32 %v5209, 0.0
      %v5304 = vmax.f32 %v5212, 0.0
      %v5305 = vmax.f32 %v5217, 0.0
      %v5306 = vmax.f32 %v5220, 0.0
      %v5307 = vmax.f32 %v5225, 0.0
      %v5308 = vmax.f32 %v5228, 0.0
      %v5309 = vmax.f32 %v5233, 0.0
      %v5310 = vmax.f32 %v5236, 0.0
      %v5311 = vmax.f32 %v5241, 0.0
      %v5312 = vmax.f32 %v5244, 0.0
      %v5313 = vmax.f32 %v5249, 0.0
      %v5314 = vmax.f32 %v5252, 0.0
      %v5315 = vmax.f32 %v5257, 0.0
      %v5316 = vmax.f32 %v5260, 0.0
      %v5317 = vmax.f32 %v5265, 0.0
      %v5318 = vmax.f32 %v5268, 0.0
      %v5319 = vmax.f32 %v5273, 0.0
      %v5320 = vmax.f32 %v5276, 0.0
      %v5321 = vmax.f32 %v5281, 0.0
      %v5322 = vmax.f32 %v5284, 0.0
      %vm5347 = vcmask 1046528
      %v5348 = vrot.slane %v5299, 1
      %v5349 = vrot.slane %v5300, 1
      %v5350 = vsel %vm5347, %v5348, %v5349
      %v5351 = vrot.slane %v5301, 1
      %v5352 = vrot.slane %v5302, 1
      %v5353 = vsel %vm5347, %v5351, %v5352
      %v5354 = vrot.slane %v5303, 1
      %v5355 = vrot.slane %v5304, 1
      %v5356 = vsel %vm5347, %v5354, %v5355
      %v5357 = vrot.slane %v5305, 1
      %v5358 = vrot.slane %v5306, 1
      %v5359 = vsel %vm5347, %v5357, %v5358
      %v5360 = vrot.slane %v5307, 1
      %v5361 = vrot.slane %v5308, 1
      %v5362 = vsel %vm5347, %v5360, %v5361
      %v5363 = vrot.slane %v5309, 1
      %v5364 = vrot.slane %v5310, 1
      %v5365 = vsel %vm5347, %v5363, %v5364
      %v5366 = vrot.slane %v5311, 1
      %v5367 = vrot.slane %v5312, 1
      %v5368 = vsel %vm5347, %v5366, %v5367
      %v5369 = vrot.slane %v5313, 1
      %v5370 = vrot.slane %v5314, 1
      %v5371 = vsel %vm5347, %v5369, %v5370
      %v5372 = vrot.slane %v5315, 1
      %v5373 = vrot.slane %v5316, 1
      %v5374 = vsel %vm5347, %v5372, %v5373
      %v5375 = vrot.slane %v5317, 1
      %v5376 = vrot.slane %v5318, 1
      %v5377 = vsel %vm5347, %v5375, %v5376
      %v5378 = vrot.slane %v5319, 1
      %v5379 = vrot.slane %v5320, 1
      %v5380 = vsel %vm5347, %v5378, %v5379
      %v5381 = vrot.slane %v5321, 1
      %v5382 = vrot.slane %v5322, 1
      %v5383 = vsel %vm5347, %v5381, %v5382
      %v5408 = vsel %vm1496, 0.0, %v5350
      %v5409 = vsel %vm1496, 0.0, %v5353
      %v5410 = vsel %vm1496, 0.0, %v5356
      %v5411 = vsel %vm1496, 0.0, %v5359
      %v5412 = vsel %vm1496, 0.0, %v5362
      %v5413 = vsel %vm1496, 0.0, %v5365
      %v5414 = vsel %vm1496, 0.0, %v5368
      %v5415 = vsel %vm1496, 0.0, %v5371
      %v5416 = vsel %vm1496, 0.0, %v5374
      %v5417 = vsel %vm1496, 0.0, %v5377
      %v5418 = vsel %vm1496, 0.0, %v5380
      %v5419 = vsel %vm1496, 0.0, %v5383
      %vm5420 = vcmask 1044480
      %v5421 = vsel %vm5420, %v5349, 0.0
      %v5422 = vsel %vm5420, %v5352, 0.0
      %v5423 = vsel %vm5420, %v5355, 0.0
      %v5424 = vsel %vm5420, %v5358, 0.0
      %v5425 = vsel %vm5420, %v5361, 0.0
      %v5426 = vsel %vm5420, %v5364, 0.0
      %v5427 = vsel %vm5420, %v5367, 0.0
      %v5428 = vsel %vm5420, %v5370, 0.0
      %v5429 = vsel %vm5420, %v5373, 0.0
      %v5430 = vsel %vm5420, %v5376, 0.0
      %v5431 = vsel %vm5420, %v5379, 0.0
      %v5432 = vsel %vm5420, %v5382, 0.0
      %v5433 = vld [vmem:[%s320] sm:$0xf]
      %v5434 = vld [vmem:[%s320 + $0x4] sm:$0x3]
      %v5435 = vld [vmem:[%s320 + $0x8] sm:$0xf]
      %v5436 = vld [vmem:[%s320 + $0xc] sm:$0x3]
      %v5437 = vld [vmem:[%s320 + $0x10] sm:$0xf]
      %v5438 = vld [vmem:[%s320 + $0x14] sm:$0x3]
      %v5439 = vld [vmem:[%s320 + $0x18] sm:$0xf]
      %v5440 = vld [vmem:[%s320 + $0x1c] sm:$0x3]
      %v5441 = vld [vmem:[%s320 + $0x20] sm:$0xf]
      %v5442 = vld [vmem:[%s320 + $0x24] sm:$0x3]
      %v5443 = vld [vmem:[%s320 + $0x28] sm:$0xf]
      %v5444 = vld [vmem:[%s320 + $0x2c] sm:$0x3]
      %v5445 = vld [vmem:[%s320 + $0x30] sm:$0xf]
      %v5446 = vld [vmem:[%s320 + $0x34] sm:$0x3]
      %v5447 = vld [vmem:[%s320 + $0x38] sm:$0xf]
      %v5448 = vld [vmem:[%s320 + $0x3c] sm:$0x3]
      %v5449 = vld [vmem:[%s320 + $0x40] sm:$0xf]
      %v5450 = vld [vmem:[%s320 + $0x44] sm:$0x3]
      %v5451 = vld [vmem:[%s320 + $0x48] sm:$0xf]
      %v5452 = vld [vmem:[%s320 + $0x4c] sm:$0x3]
      %v5453 = vld [vmem:[%s320 + $0x50] sm:$0xf]
      %v5454 = vld [vmem:[%s320 + $0x54] sm:$0x3]
      %v5455 = vld [vmem:[%s320 + $0x58] sm:$0xf]
      %v5456 = vld [vmem:[%s320 + $0x5c] sm:$0x3]
      %v5457 = vunpack.c.l.bf16 %v5433
      %v5458 = vunpack.c.l.bf16 %v5434
      %v5459 = vunpack.c.l.bf16 %v5435
      %v5460 = vunpack.c.l.bf16 %v5436
      %v5461 = vunpack.c.l.bf16 %v5437
      %v5462 = vunpack.c.l.bf16 %v5438
      %v5463 = vunpack.c.l.bf16 %v5439
      %v5464 = vunpack.c.l.bf16 %v5440
      %v5465 = vunpack.c.l.bf16 %v5441
      %v5466 = vunpack.c.l.bf16 %v5442
      %v5467 = vunpack.c.l.bf16 %v5443
      %v5468 = vunpack.c.l.bf16 %v5444
      %v5469 = vunpack.c.l.bf16 %v5445
      %v5470 = vunpack.c.l.bf16 %v5446
      %v5471 = vunpack.c.l.bf16 %v5447
      %v5472 = vunpack.c.l.bf16 %v5448
      %v5473 = vunpack.c.l.bf16 %v5449
      %v5474 = vunpack.c.l.bf16 %v5450
      %v5475 = vunpack.c.l.bf16 %v5451
      %v5476 = vunpack.c.l.bf16 %v5452
      %v5477 = vunpack.c.l.bf16 %v5453
      %v5478 = vunpack.c.l.bf16 %v5454
      %v5479 = vunpack.c.l.bf16 %v5455
      %v5480 = vunpack.c.l.bf16 %v5456
      %v5505 = vrot.slane %v5457, 7
      %v5506 = vrot.slane %v5458, 7
      %v5507 = vsel %vm1496, %v5505, %v5506
      %v5508 = vrot.slane %v5459, 7
      %v5509 = vrot.slane %v5460, 7
      %v5510 = vsel %vm1496, %v5508, %v5509
      %v5511 = vrot.slane %v5461, 7
      %v5512 = vrot.slane %v5462, 7
      %v5513 = vsel %vm1496, %v5511, %v5512
      %v5514 = vrot.slane %v5463, 7
      %v5515 = vrot.slane %v5464, 7
      %v5516 = vsel %vm1496, %v5514, %v5515
      %v5517 = vrot.slane %v5465, 7
      %v5518 = vrot.slane %v5466, 7
      %v5519 = vsel %vm1496, %v5517, %v5518
      %v5520 = vrot.slane %v5467, 7
      %v5521 = vrot.slane %v5468, 7
      %v5522 = vsel %vm1496, %v5520, %v5521
      %v5523 = vrot.slane %v5469, 7
      %v5524 = vrot.slane %v5470, 7
      %v5525 = vsel %vm1496, %v5523, %v5524
      %v5526 = vrot.slane %v5471, 7
      %v5527 = vrot.slane %v5472, 7
      %v5528 = vsel %vm1496, %v5526, %v5527
      %v5529 = vrot.slane %v5473, 7
      %v5530 = vrot.slane %v5474, 7
      %v5531 = vsel %vm1496, %v5529, %v5530
      %v5532 = vrot.slane %v5475, 7
      %v5533 = vrot.slane %v5476, 7
      %v5534 = vsel %vm1496, %v5532, %v5533
      %v5535 = vrot.slane %v5477, 7
      %v5536 = vrot.slane %v5478, 7
      %v5537 = vsel %vm1496, %v5535, %v5536
      %v5538 = vrot.slane %v5479, 7
      %v5539 = vrot.slane %v5480, 7
      %v5540 = vsel %vm1496, %v5538, %v5539
      %v5565 = vsel %vm1496, 0.0, %v5505
      %v5566 = vsel %vm1496, 0.0, %v5508
      %v5567 = vsel %vm1496, 0.0, %v5511
      %v5568 = vsel %vm1496, 0.0, %v5514
      %v5569 = vsel %vm1496, 0.0, %v5517
      %v5570 = vsel %vm1496, 0.0, %v5520
      %v5571 = vsel %vm1496, 0.0, %v5523
      %v5572 = vsel %vm1496, 0.0, %v5526
      %v5573 = vsel %vm1496, 0.0, %v5529
      %v5574 = vsel %vm1496, 0.0, %v5532
      %v5575 = vsel %vm1496, 0.0, %v5535
      %v5576 = vsel %vm1496, 0.0, %v5538
      %v5577 = vsel %vm5420, %v5507, 0.0
      %v5578 = vsel %vm5420, %v5510, 0.0
      %v5579 = vsel %vm5420, %v5513, 0.0
      %v5580 = vsel %vm5420, %v5516, 0.0
      %v5581 = vsel %vm5420, %v5519, 0.0
      %v5582 = vsel %vm5420, %v5522, 0.0
      %v5583 = vsel %vm5420, %v5525, 0.0
      %v5584 = vsel %vm5420, %v5528, 0.0
      %v5585 = vsel %vm5420, %v5531, 0.0
      %v5586 = vsel %vm5420, %v5534, 0.0
      %v5587 = vsel %vm5420, %v5537, 0.0
      %v5588 = vsel %vm5420, %v5540, 0.0
      %v5612 = vcombine.high 0.0, 0.0
      %v5613 = vcombine.high %v5408, %v5408
      %v5614 = vcombine.high %v5409, %v5409
      %v5615 = vcombine.high %v5410, %v5410
      %v5616 = vcombine.high %v5411, %v5411
      %v5617 = vcombine.high %v5412, %v5412
      %v5618 = vcombine.high %v5413, %v5413
      %v5619 = vcombine.high %v5414, %v5414
      %v5620 = vcombine.high %v5415, %v5415
      %v5621 = vcombine.high %v5416, %v5416
      %v5622 = vcombine.high %v5417, %v5417
      %v5623 = vcombine.high %v5418, %v5418
      %v5624 = vcombine.high %v5421, %v5421
      %v5625 = vcombine.high %v5422, %v5422
      %v5626 = vcombine.high %v5423, %v5423
      %v5627 = vcombine.high %v5424, %v5424
      %v5628 = vcombine.high %v5425, %v5425
      %v5629 = vcombine.high %v5426, %v5426
      %v5630 = vcombine.high %v5427, %v5427
      %v5631 = vcombine.high %v5428, %v5428
      %v5632 = vcombine.high %v5429, %v5429
      %v5633 = vcombine.high %v5430, %v5430
      %v5634 = vcombine.high %v5431, %v5431
      %vm5635 = vcmask 1042432
      %vm5636 = vcmask 1046532
      %vm5637 = vmor %vm5635, %vm5636
      %v5638 = vrot.slane 0.0, 5
      %v5639 = vrot.slane %v5638, 4
      %v5640 = vrot.slane %v5612, 5
      %v5641 = vsel %vm5637, %v5639, %v5640
      %v5642 = vrot.slane %v5640, 4
      %v5643 = vsel %vm5637, %v5642, %v5638
      %v5644 = vrot.slane %v5408, 5
      %v5645 = vrot.slane %v5644, 4
      %v5646 = vrot.slane %v5613, 5
      %v5647 = vsel %vm5637, %v5645, %v5646
      %v5648 = vrot.slane %v5646, 4
      %v5649 = vrot.slane %v5421, 5
      %v5650 = vsel %vm5637, %v5648, %v5649
      %v5651 = vrot.slane %v5649, 4
      %v5652 = vrot.slane %v5624, 5
      %v5653 = vsel %vm5637, %v5651, %v5652
      %v5654 = vrot.slane %v5409, 5
      %v5655 = vrot.slane %v5654, 4
      %v5656 = vrot.slane %v5614, 5
      %v5657 = vsel %vm5637, %v5655, %v5656
      %v5658 = vrot.slane %v5656, 4
      %v5659 = vrot.slane %v5422, 5
      %v5660 = vsel %vm5637, %v5658, %v5659
      %v5661 = vrot.slane %v5659, 4
      %v5662 = vrot.slane %v5625, 5
      %v5663 = vsel %vm5637, %v5661, %v5662
      %v5664 = vrot.slane %v5410, 5
      %v5665 = vrot.slane %v5664, 4
      %v5666 = vrot.slane %v5615, 5
      %v5667 = vsel %vm5637, %v5665, %v5666
      %v5668 = vrot.slane %v5666, 4
      %v5669 = vrot.slane %v5423, 5
      %v5670 = vsel %vm5637, %v5668, %v5669
      %v5671 = vrot.slane %v5669, 4
      %v5672 = vrot.slane %v5626, 5
      %v5673 = vsel %vm5637, %v5671, %v5672
      %v5674 = vrot.slane %v5411, 5
      %v5675 = vrot.slane %v5674, 4
      %v5676 = vrot.slane %v5616, 5
      %v5677 = vsel %vm5637, %v5675, %v5676
      %v5678 = vrot.slane %v5676, 4
      %v5679 = vrot.slane %v5424, 5
      %v5680 = vsel %vm5637, %v5678, %v5679
      %v5681 = vrot.slane %v5679, 4
      %v5682 = vrot.slane %v5627, 5
      %v5683 = vsel %vm5637, %v5681, %v5682
      %v5684 = vrot.slane %v5412, 5
      %v5685 = vrot.slane %v5684, 4
      %v5686 = vrot.slane %v5617, 5
      %v5687 = vsel %vm5637, %v5685, %v5686
      %v5688 = vrot.slane %v5686, 4
      %v5689 = vrot.slane %v5425, 5
      %v5690 = vsel %vm5637, %v5688, %v5689
      %v5691 = vrot.slane %v5689, 4
      %v5692 = vrot.slane %v5628, 5
      %v5693 = vsel %vm5637, %v5691, %v5692
      %v5694 = vrot.slane %v5413, 5
      %v5695 = vrot.slane %v5694, 4
      %v5696 = vrot.slane %v5618, 5
      %v5697 = vsel %vm5637, %v5695, %v5696
      %v5698 = vrot.slane %v5696, 4
      %v5699 = vrot.slane %v5426, 5
      %v5700 = vsel %vm5637, %v5698, %v5699
      %v5701 = vrot.slane %v5699, 4
      %v5702 = vrot.slane %v5629, 5
      %v5703 = vsel %vm5637, %v5701, %v5702
      %v5704 = vrot.slane %v5414, 5
      %v5705 = vrot.slane %v5704, 4
      %v5706 = vrot.slane %v5619, 5
      %v5707 = vsel %vm5637, %v5705, %v5706
      %v5708 = vrot.slane %v5706, 4
      %v5709 = vrot.slane %v5427, 5
      %v5710 = vsel %vm5637, %v5708, %v5709
      %v5711 = vrot.slane %v5709, 4
      %v5712 = vrot.slane %v5630, 5
      %v5713 = vsel %vm5637, %v5711, %v5712
      %v5714 = vrot.slane %v5415, 5
      %v5715 = vrot.slane %v5714, 4
      %v5716 = vrot.slane %v5620, 5
      %v5717 = vsel %vm5637, %v5715, %v5716
      %v5718 = vrot.slane %v5716, 4
      %v5719 = vrot.slane %v5428, 5
      %v5720 = vsel %vm5637, %v5718, %v5719
      %v5721 = vrot.slane %v5719, 4
      %v5722 = vrot.slane %v5631, 5
      %v5723 = vsel %vm5637, %v5721, %v5722
      %v5724 = vrot.slane %v5416, 5
      %v5725 = vrot.slane %v5724, 4
      %v5726 = vrot.slane %v5621, 5
      %v5727 = vsel %vm5637, %v5725, %v5726
      %v5728 = vrot.slane %v5726, 4
      %v5729 = vrot.slane %v5429, 5
      %v5730 = vsel %vm5637, %v5728, %v5729
      %v5731 = vrot.slane %v5729, 4
      %v5732 = vrot.slane %v5632, 5
      %v5733 = vsel %vm5637, %v5731, %v5732
      %v5734 = vrot.slane %v5417, 5
      %v5735 = vrot.slane %v5734, 4
      %v5736 = vrot.slane %v5622, 5
      %v5737 = vsel %vm5637, %v5735, %v5736
      %v5738 = vrot.slane %v5736, 4
      %v5739 = vrot.slane %v5430, 5
      %v5740 = vsel %vm5637, %v5738, %v5739
      %v5741 = vrot.slane %v5739, 4
      %v5742 = vrot.slane %v5633, 5
      %v5743 = vsel %vm5637, %v5741, %v5742
      %v5744 = vrot.slane %v5418, 5
      %v5745 = vrot.slane %v5744, 4
      %v5746 = vrot.slane %v5623, 5
      %v5747 = vsel %vm5637, %v5745, %v5746
      %v5748 = vrot.slane %v5746, 4
      %v5749 = vrot.slane %v5431, 5
      %v5750 = vsel %vm5637, %v5748, %v5749
      %v5751 = vrot.slane %v5749, 4
      %v5752 = vrot.slane %v5634, 5
      %v5753 = vsel %vm5637, %v5751, %v5752
      %vm5754 = vcmask 1041408
      %vm5755 = vcmask 1045508
      %vm5756 = vmor %vm5754, %vm5755
      %v5757 = vrot.slane 0.0, 6
      %v5758 = vrot.slane %v5757, 4
      %v5759 = vrot.slane %v5612, 6
      %v5760 = vsel %vm5756, %v5758, %v5759
      %v5761 = vrot.slane %v5759, 4
      %v5762 = vsel %vm5756, %v5761, %v5757
      %v5763 = vrot.slane %v5408, 6
      %v5764 = vrot.slane %v5763, 4
      %v5765 = vrot.slane %v5613, 6
      %v5766 = vsel %vm5756, %v5764, %v5765
      %v5767 = vrot.slane %v5765, 4
      %v5768 = vrot.slane %v5421, 6
      %v5769 = vsel %vm5756, %v5767, %v5768
      %v5770 = vrot.slane %v5768, 4
      %v5771 = vrot.slane %v5624, 6
      %v5772 = vsel %vm5756, %v5770, %v5771
      %v5773 = vrot.slane %v5409, 6
      %v5774 = vrot.slane %v5773, 4
      %v5775 = vrot.slane %v5614, 6
      %v5776 = vsel %vm5756, %v5774, %v5775
      %v5777 = vrot.slane %v5775, 4
      %v5778 = vrot.slane %v5422, 6
      %v5779 = vsel %vm5756, %v5777, %v5778
      %v5780 = vrot.slane %v5778, 4
      %v5781 = vrot.slane %v5625, 6
      %v5782 = vsel %vm5756, %v5780, %v5781
      %v5783 = vrot.slane %v5410, 6
      %v5784 = vrot.slane %v5783, 4
      %v5785 = vrot.slane %v5615, 6
      %v5786 = vsel %vm5756, %v5784, %v5785
      %v5787 = vrot.slane %v5785, 4
      %v5788 = vrot.slane %v5423, 6
      %v5789 = vsel %vm5756, %v5787, %v5788
      %v5790 = vrot.slane %v5788, 4
      %v5791 = vrot.slane %v5626, 6
      %v5792 = vsel %vm5756, %v5790, %v5791
      %v5793 = vrot.slane %v5411, 6
      %v5794 = vrot.slane %v5793, 4
      %v5795 = vrot.slane %v5616, 6
      %v5796 = vsel %vm5756, %v5794, %v5795
      %v5797 = vrot.slane %v5795, 4
      %v5798 = vrot.slane %v5424, 6
      %v5799 = vsel %vm5756, %v5797, %v5798
      %v5800 = vrot.slane %v5798, 4
      %v5801 = vrot.slane %v5627, 6
      %v5802 = vsel %vm5756, %v5800, %v5801
      %v5803 = vrot.slane %v5412, 6
      %v5804 = vrot.slane %v5803, 4
      %v5805 = vrot.slane %v5617, 6
      %v5806 = vsel %vm5756, %v5804, %v5805
      %v5807 = vrot.slane %v5805, 4
      %v5808 = vrot.slane %v5425, 6
      %v5809 = vsel %vm5756, %v5807, %v5808
      %v5810 = vrot.slane %v5808, 4
      %v5811 = vrot.slane %v5628, 6
      %v5812 = vsel %vm5756, %v5810, %v5811
      %v5813 = vrot.slane %v5413, 6
      %v5814 = vrot.slane %v5813, 4
      %v5815 = vrot.slane %v5618, 6
      %v5816 = vsel %vm5756, %v5814, %v5815
      %v5817 = vrot.slane %v5815, 4
      %v5818 = vrot.slane %v5426, 6
      %v5819 = vsel %vm5756, %v5817, %v5818
      %v5820 = vrot.slane %v5818, 4
      %v5821 = vrot.slane %v5629, 6
      %v5822 = vsel %vm5756, %v5820, %v5821
      %v5823 = vrot.slane %v5414, 6
      %v5824 = vrot.slane %v5823, 4
      %v5825 = vrot.slane %v5619, 6
      %v5826 = vsel %vm5756, %v5824, %v5825
      %v5827 = vrot.slane %v5825, 4
      %v5828 = vrot.slane %v5427, 6
      %v5829 = vsel %vm5756, %v5827, %v5828
      %v5830 = vrot.slane %v5828, 4
      %v5831 = vrot.slane %v5630, 6
      %v5832 = vsel %vm5756, %v5830, %v5831
      %v5833 = vrot.slane %v5415, 6
      %v5834 = vrot.slane %v5833, 4
      %v5835 = vrot.slane %v5620, 6
      %v5836 = vsel %vm5756, %v5834, %v5835
      %v5837 = vrot.slane %v5835, 4
      %v5838 = vrot.slane %v5428, 6
      %v5839 = vsel %vm5756, %v5837, %v5838
      %v5840 = vrot.slane %v5838, 4
      %v5841 = vrot.slane %v5631, 6
      %v5842 = vsel %vm5756, %v5840, %v5841
      %v5843 = vrot.slane %v5416, 6
      %v5844 = vrot.slane %v5843, 4
      %v5845 = vrot.slane %v5621, 6
      %v5846 = vsel %vm5756, %v5844, %v5845
      %v5847 = vrot.slane %v5845, 4
      %v5848 = vrot.slane %v5429, 6
      %v5849 = vsel %vm5756, %v5847, %v5848
      %v5850 = vrot.slane %v5848, 4
      %v5851 = vrot.slane %v5632, 6
      %v5852 = vsel %vm5756, %v5850, %v5851
      %v5853 = vrot.slane %v5417, 6
      %v5854 = vrot.slane %v5853, 4
      %v5855 = vrot.slane %v5622, 6
      %v5856 = vsel %vm5756, %v5854, %v5855
      %v5857 = vrot.slane %v5855, 4
      %v5858 = vrot.slane %v5430, 6
      %v5859 = vsel %vm5756, %v5857, %v5858
      %v5860 = vrot.slane %v5858, 4
      %v5861 = vrot.slane %v5633, 6
      %v5862 = vsel %vm5756, %v5860, %v5861
      %v5863 = vrot.slane %v5418, 6
      %v5864 = vrot.slane %v5863, 4
      %v5865 = vrot.slane %v5623, 6
      %v5866 = vsel %vm5756, %v5864, %v5865
      %v5867 = vrot.slane %v5865, 4
      %v5868 = vrot.slane %v5431, 6
      %v5869 = vsel %vm5756, %v5867, %v5868
      %v5870 = vrot.slane %v5868, 4
      %v5871 = vrot.slane %v5634, 6
      %v5872 = vsel %vm5756, %v5870, %v5871
      %v5875 = vcombine.high %v5419, %v5419
      %v5876 = vcombine.high %v5432, %v5432
      %v5877 = vrot.slane %v5419, 5
      %v5878 = vrot.slane %v5877, 4
      %v5879 = vrot.slane %v5875, 5
      %v5880 = vsel %vm5637, %v5878, %v5879
      %v5881 = vrot.slane %v5879, 4
      %v5882 = vrot.slane %v5432, 5
      %v5883 = vsel %vm5637, %v5881, %v5882
      %v5884 = vrot.slane %v5882, 4
      %v5885 = vrot.slane %v5876, 5
      %v5886 = vsel %vm5637, %v5884, %v5885
      %v5887 = vrot.slane %v5419, 6
      %v5888 = vrot.slane %v5887, 4
      %v5889 = vrot.slane %v5875, 6
      %v5890 = vsel %vm5756, %v5888, %v5889
      %v5891 = vrot.slane %v5889, 4
      %v5892 = vrot.slane %v5432, 6
      %v5893 = vsel %vm5756, %v5891, %v5892
      %v5894 = vrot.slane %v5892, 4
      %v5895 = vrot.slane %v5876, 6
      %v5896 = vsel %vm5756, %v5894, %v5895
      %v5897 = vcombine.low 0.0, %v5612
      %v5898 = vcombine.low 0.0, %v5408
      %v5899 = vcombine.low %v5613, %v5421
      %v5900 = vcombine.low %v5409, %v5614
      %v5901 = vcombine.low %v5422, %v5410
      %v5902 = vcombine.low %v5615, %v5423
      %v5903 = vcombine.low %v5411, %v5616
      %v5904 = vcombine.low %v5424, %v5412
      %v5905 = vcombine.low %v5617, %v5425
      %v5906 = vcombine.low %v5413, %v5618
      %v5907 = vcombine.low %v5426, %v5414
      %v5908 = vcombine.low %v5619, %v5427
      %v5909 = vcombine.low %v5415, %v5620
      %v5910 = vcombine.low %v5428, %v5416
      %v5911 = vcombine.low %v5621, %v5429
      %v5912 = vcombine.low %v5417, %v5622
      %v5913 = vcombine.low %v5430, %v5418
      %v5914 = vcombine.low %v5623, %v5431
      %v5933 = vcombine.low %v5641, %v5643
      %v5934 = vcombine.low %v5641, %v5647
      %v5935 = vcombine.low %v5650, %v5653
      %v5936 = vcombine.low %v5657, %v5660
      %v5937 = vcombine.low %v5663, %v5667
      %v5938 = vcombine.low %v5670, %v5673
      %v5939 = vcombine.low %v5677, %v5680
      %v5940 = vcombine.low %v5683, %v5687
      %v5941 = vcombine.low %v5690, %v5693
      %v5942 = vcombine.low %v5697, %v5700
      %v5943 = vcombine.low %v5703, %v5707
      %v5944 = vcombine.low %v5710, %v5713
      %v5945 = vcombine.low %v5717, %v5720
      %v5946 = vcombine.low %v5723, %v5727
      %v5947 = vcombine.low %v5730, %v5733
      %v5948 = vcombine.low %v5737, %v5740
      %v5949 = vcombine.low %v5743, %v5747
      %v5950 = vcombine.low %v5750, %v5753
      %v5969 = vcombine.low %v5760, %v5762
      %v5970 = vcombine.low %v5760, %v5766
      %v5971 = vcombine.low %v5769, %v5772
      %v5972 = vcombine.low %v5776, %v5779
      %v5973 = vcombine.low %v5782, %v5786
      %v5974 = vcombine.low %v5789, %v5792
      %v5975 = vcombine.low %v5796, %v5799
      %v5976 = vcombine.low %v5802, %v5806
      %v5977 = vcombine.low %v5809, %v5812
      %v5978 = vcombine.low %v5816, %v5819
      %v5979 = vcombine.low %v5822, %v5826
      %v5980 = vcombine.low %v5829, %v5832
      %v5981 = vcombine.low %v5836, %v5839
      %v5982 = vcombine.low %v5842, %v5846
      %v5983 = vcombine.low %v5849, %v5852
      %v5984 = vcombine.low %v5856, %v5859
      %v5985 = vcombine.low %v5862, %v5866
      %v5986 = vcombine.low %v5869, %v5872
      %v6005 = vcombine.low %v5408, %v5613
      %v6006 = vcombine.low %v5421, %v5409
      %v6007 = vcombine.low %v5614, %v5422
      %v6008 = vcombine.low %v5410, %v5615
      %v6009 = vcombine.low %v5423, %v5411
      %v6010 = vcombine.low %v5616, %v5424
      %v6011 = vcombine.low %v5412, %v5617
      %v6012 = vcombine.low %v5425, %v5413
      %v6013 = vcombine.low %v5618, %v5426
      %v6014 = vcombine.low %v5414, %v5619
      %v6015 = vcombine.low %v5427, %v5415
      %v6016 = vcombine.low %v5620, %v5428
      %v6017 = vcombine.low %v5416, %v5621
      %v6018 = vcombine.low %v5429, %v5417
      %v6019 = vcombine.low %v5622, %v5430
      %v6020 = vcombine.low %v5418, %v5623
      %v6021 = vcombine.low %v5431, %v5419
      %v6022 = vcombine.low %v5875, %v5432
      %v6041 = vcombine.low %v5647, %v5650
      %v6042 = vcombine.low %v5653, %v5657
      %v6043 = vcombine.low %v5660, %v5663
      %v6044 = vcombine.low %v5667, %v5670
      %v6045 = vcombine.low %v5673, %v5677
      %v6046 = vcombine.low %v5680, %v5683
      %v6047 = vcombine.low %v5687, %v5690
      %v6048 = vcombine.low %v5693, %v5697
      %v6049 = vcombine.low %v5700, %v5703
      %v6050 = vcombine.low %v5707, %v5710
      %v6051 = vcombine.low %v5713, %v5717
      %v6052 = vcombine.low %v5720, %v5723
      %v6053 = vcombine.low %v5727, %v5730
      %v6054 = vcombine.low %v5733, %v5737
      %v6055 = vcombine.low %v5740, %v5743
      %v6056 = vcombine.low %v5747, %v5750
      %v6057 = vcombine.low %v5753, %v5880
      %v6058 = vcombine.low %v5883, %v5886
      %v6077 = vcombine.low %v5766, %v5769
      %v6078 = vcombine.low %v5772, %v5776
      %v6079 = vcombine.low %v5779, %v5782
      %v6080 = vcombine.low %v5786, %v5789
      %v6081 = vcombine.low %v5792, %v5796
      %v6082 = vcombine.low %v5799, %v5802
      %v6083 = vcombine.low %v5806, %v5809
      %v6084 = vcombine.low %v5812, %v5816
      %v6085 = vcombine.low %v5819, %v5822
      %v6086 = vcombine.low %v5826, %v5829
      %v6087 = vcombine.low %v5832, %v5836
      %v6088 = vcombine.low %v5839, %v5842
      %v6089 = vcombine.low %v5846, %v5849
      %v6090 = vcombine.low %v5852, %v5856
      %v6091 = vcombine.low %v5859, %v5862
      %v6092 = vcombine.low %v5866, %v5869
      %v6093 = vcombine.low %v5872, %v5890
      %v6094 = vcombine.low %v5893, %v5896
      %v6113 = vcombine.low %v5419, %v5875
      %v6114 = vcombine.low %v5432, 0.0
      %v6115 = vcombine.low %v5612, 0.0
      %v6119 = vcombine.low %v5880, %v5883
      %v6120 = vcombine.low %v5886, %v5641
      %v6121 = vcombine.low %v5643, %v5641
      %v6125 = vcombine.low %v5890, %v5893
      %v6126 = vcombine.low %v5896, %v5760
      %v6127 = vcombine.low %v5762, %v5760
      %v6153 = vcombine.high %v5565, %v5565
      %v6154 = vcombine.high %v5566, %v5566
      %v6155 = vcombine.high %v5567, %v5567
      %v6156 = vcombine.high %v5568, %v5568
      %v6157 = vcombine.high %v5569, %v5569
      %v6158 = vcombine.high %v5570, %v5570
      %v6159 = vcombine.high %v5571, %v5571
      %v6160 = vcombine.high %v5572, %v5572
      %v6161 = vcombine.high %v5573, %v5573
      %v6162 = vcombine.high %v5574, %v5574
      %v6163 = vcombine.high %v5575, %v5575
      %v6164 = vcombine.high %v5577, %v5577
      %v6165 = vcombine.high %v5578, %v5578
      %v6166 = vcombine.high %v5579, %v5579
      %v6167 = vcombine.high %v5580, %v5580
      %v6168 = vcombine.high %v5581, %v5581
      %v6169 = vcombine.high %v5582, %v5582
      %v6170 = vcombine.high %v5583, %v5583
      %v6171 = vcombine.high %v5584, %v5584
      %v6172 = vcombine.high %v5585, %v5585
      %v6173 = vcombine.high %v5586, %v5586
      %v6174 = vcombine.high %v5587, %v5587
      %v6175 = vrot.slane %v5565, 5
      %v6176 = vrot.slane %v6175, 4
      %v6177 = vrot.slane %v6153, 5
      %v6178 = vsel %vm5637, %v6176, %v6177
      %v6179 = vrot.slane %v6177, 4
      %v6180 = vrot.slane %v5577, 5
      %v6181 = vsel %vm5637, %v6179, %v6180
      %v6182 = vrot.slane %v6180, 4
      %v6183 = vrot.slane %v6164, 5
      %v6184 = vsel %vm5637, %v6182, %v6183
      %v6185 = vrot.slane %v5566, 5
      %v6186 = vrot.slane %v6185, 4
      %v6187 = vrot.slane %v6154, 5
      %v6188 = vsel %vm5637, %v6186, %v6187
      %v6189 = vrot.slane %v6187, 4
      %v6190 = vrot.slane %v5578, 5
      %v6191 = vsel %vm5637, %v6189, %v6190
      %v6192 = vrot.slane %v6190, 4
      %v6193 = vrot.slane %v6165, 5
      %v6194 = vsel %vm5637, %v6192, %v6193
      %v6195 = vrot.slane %v5567, 5
      %v6196 = vrot.slane %v6195, 4
      %v6197 = vrot.slane %v6155, 5
      %v6198 = vsel %vm5637, %v6196, %v6197
      %v6199 = vrot.slane %v6197, 4
      %v6200 = vrot.slane %v5579, 5
      %v6201 = vsel %vm5637, %v6199, %v6200
      %v6202 = vrot.slane %v6200, 4
      %v6203 = vrot.slane %v6166, 5
      %v6204 = vsel %vm5637, %v6202, %v6203
      %v6205 = vrot.slane %v5568, 5
      %v6206 = vrot.slane %v6205, 4
      %v6207 = vrot.slane %v6156, 5
      %v6208 = vsel %vm5637, %v6206, %v6207
      %v6209 = vrot.slane %v6207, 4
      %v6210 = vrot.slane %v5580, 5
      %v6211 = vsel %vm5637, %v6209, %v6210
      %v6212 = vrot.slane %v6210, 4
      %v6213 = vrot.slane %v6167, 5
      %v6214 = vsel %vm5637, %v6212, %v6213
      %v6215 = vrot.slane %v5569, 5
      %v6216 = vrot.slane %v6215, 4
      %v6217 = vrot.slane %v6157, 5
      %v6218 = vsel %vm5637, %v6216, %v6217
      %v6219 = vrot.slane %v6217, 4
      %v6220 = vrot.slane %v5581, 5
      %v6221 = vsel %vm5637, %v6219, %v6220
      %v6222 = vrot.slane %v6220, 4
      %v6223 = vrot.slane %v6168, 5
      %v6224 = vsel %vm5637, %v6222, %v6223
      %v6225 = vrot.slane %v5570, 5
      %v6226 = vrot.slane %v6225, 4
      %v6227 = vrot.slane %v6158, 5
      %v6228 = vsel %vm5637, %v6226, %v6227
      %v6229 = vrot.slane %v6227, 4
      %v6230 = vrot.slane %v5582, 5
      %v6231 = vsel %vm5637, %v6229, %v6230
      %v6232 = vrot.slane %v6230, 4
      %v6233 = vrot.slane %v6169, 5
      %v6234 = vsel %vm5637, %v6232, %v6233
      %v6235 = vrot.slane %v5571, 5
      %v6236 = vrot.slane %v6235, 4
      %v6237 = vrot.slane %v6159, 5
      %v6238 = vsel %vm5637, %v6236, %v6237
      %v6239 = vrot.slane %v6237, 4
      %v6240 = vrot.slane %v5583, 5
      %v6241 = vsel %vm5637, %v6239, %v6240
      %v6242 = vrot.slane %v6240, 4
      %v6243 = vrot.slane %v6170, 5
      %v6244 = vsel %vm5637, %v6242, %v6243
      %v6245 = vrot.slane %v5572, 5
      %v6246 = vrot.slane %v6245, 4
      %v6247 = vrot.slane %v6160, 5
      %v6248 = vsel %vm5637, %v6246, %v6247
      %v6249 = vrot.slane %v6247, 4
      %v6250 = vrot.slane %v5584, 5
      %v6251 = vsel %vm5637, %v6249, %v6250
      %v6252 = vrot.slane %v6250, 4
      %v6253 = vrot.slane %v6171, 5
      %v6254 = vsel %vm5637, %v6252, %v6253
      %v6255 = vrot.slane %v5573, 5
      %v6256 = vrot.slane %v6255, 4
      %v6257 = vrot.slane %v6161, 5
      %v6258 = vsel %vm5637, %v6256, %v6257
      %v6259 = vrot.slane %v6257, 4
      %v6260 = vrot.slane %v5585, 5
      %v6261 = vsel %vm5637, %v6259, %v6260
      %v6262 = vrot.slane %v6260, 4
      %v6263 = vrot.slane %v6172, 5
      %v6264 = vsel %vm5637, %v6262, %v6263
      %v6265 = vrot.slane %v5574, 5
      %v6266 = vrot.slane %v6265, 4
      %v6267 = vrot.slane %v6162, 5
      %v6268 = vsel %vm5637, %v6266, %v6267
      %v6269 = vrot.slane %v6267, 4
      %v6270 = vrot.slane %v5586, 5
      %v6271 = vsel %vm5637, %v6269, %v6270
      %v6272 = vrot.slane %v6270, 4
      %v6273 = vrot.slane %v6173, 5
      %v6274 = vsel %vm5637, %v6272, %v6273
      %v6275 = vrot.slane %v5575, 5
      %v6276 = vrot.slane %v6275, 4
      %v6277 = vrot.slane %v6163, 5
      %v6278 = vsel %vm5637, %v6276, %v6277
      %v6279 = vrot.slane %v6277, 4
      %v6280 = vrot.slane %v5587, 5
      %v6281 = vsel %vm5637, %v6279, %v6280
      %v6282 = vrot.slane %v6280, 4
      %v6283 = vrot.slane %v6174, 5
      %v6284 = vsel %vm5637, %v6282, %v6283
      %v6285 = vrot.slane %v5565, 6
      %v6286 = vrot.slane %v6285, 4
      %v6287 = vrot.slane %v6153, 6
      %v6288 = vsel %vm5756, %v6286, %v6287
      %v6289 = vrot.slane %v6287, 4
      %v6290 = vrot.slane %v5577, 6
      %v6291 = vsel %vm5756, %v6289, %v6290
      %v6292 = vrot.slane %v6290, 4
      %v6293 = vrot.slane %v6164, 6
      %v6294 = vsel %vm5756, %v6292, %v6293
      %v6295 = vrot.slane %v5566, 6
      %v6296 = vrot.slane %v6295, 4
      %v6297 = vrot.slane %v6154, 6
      %v6298 = vsel %vm5756, %v6296, %v6297
      %v6299 = vrot.slane %v6297, 4
      %v6300 = vrot.slane %v5578, 6
      %v6301 = vsel %vm5756, %v6299, %v6300
      %v6302 = vrot.slane %v6300, 4
      %v6303 = vrot.slane %v6165, 6
      %v6304 = vsel %vm5756, %v6302, %v6303
      %v6305 = vrot.slane %v5567, 6
      %v6306 = vrot.slane %v6305, 4
      %v6307 = vrot.slane %v6155, 6
      %v6308 = vsel %vm5756, %v6306, %v6307
      %v6309 = vrot.slane %v6307, 4
      %v6310 = vrot.slane %v5579, 6
      %v6311 = vsel %vm5756, %v6309, %v6310
      %v6312 = vrot.slane %v6310, 4
      %v6313 = vrot.slane %v6166, 6
      %v6314 = vsel %vm5756, %v6312, %v6313
      %v6315 = vrot.slane %v5568, 6
      %v6316 = vrot.slane %v6315, 4
      %v6317 = vrot.slane %v6156, 6
      %v6318 = vsel %vm5756, %v6316, %v6317
      %v6319 = vrot.slane %v6317, 4
      %v6320 = vrot.slane %v5580, 6
      %v6321 = vsel %vm5756, %v6319, %v6320
      %v6322 = vrot.slane %v6320, 4
      %v6323 = vrot.slane %v6167, 6
      %v6324 = vsel %vm5756, %v6322, %v6323
      %v6325 = vrot.slane %v5569, 6
      %v6326 = vrot.slane %v6325, 4
      %v6327 = vrot.slane %v6157, 6
      %v6328 = vsel %vm5756, %v6326, %v6327
      %v6329 = vrot.slane %v6327, 4
      %v6330 = vrot.slane %v5581, 6
      %v6331 = vsel %vm5756, %v6329, %v6330
      %v6332 = vrot.slane %v6330, 4
      %v6333 = vrot.slane %v6168, 6
      %v6334 = vsel %vm5756, %v6332, %v6333
      %v6335 = vrot.slane %v5570, 6
      %v6336 = vrot.slane %v6335, 4
      %v6337 = vrot.slane %v6158, 6
      %v6338 = vsel %vm5756, %v6336, %v6337
      %v6339 = vrot.slane %v6337, 4
      %v6340 = vrot.slane %v5582, 6
      %v6341 = vsel %vm5756, %v6339, %v6340
      %v6342 = vrot.slane %v6340, 4
      %v6343 = vrot.slane %v6169, 6
      %v6344 = vsel %vm5756, %v6342, %v6343
      %v6345 = vrot.slane %v5571, 6
      %v6346 = vrot.slane %v6345, 4
      %v6347 = vrot.slane %v6159, 6
      %v6348 = vsel %vm5756, %v6346, %v6347
      %v6349 = vrot.slane %v6347, 4
      %v6350 = vrot.slane %v5583, 6
      %v6351 = vsel %vm5756, %v6349, %v6350
      %v6352 = vrot.slane %v6350, 4
      %v6353 = vrot.slane %v6170, 6
      %v6354 = vsel %vm5756, %v6352, %v6353
      %v6355 = vrot.slane %v5572, 6
      %v6356 = vrot.slane %v6355, 4
      %v6357 = vrot.slane %v6160, 6
      %v6358 = vsel %vm5756, %v6356, %v6357
      %v6359 = vrot.slane %v6357, 4
      %v6360 = vrot.slane %v5584, 6
      %v6361 = vsel %vm5756, %v6359, %v6360
      %v6362 = vrot.slane %v6360, 4
      %v6363 = vrot.slane %v6171, 6
      %v6364 = vsel %vm5756, %v6362, %v6363
      %v6365 = vrot.slane %v5573, 6
      %v6366 = vrot.slane %v6365, 4
      %v6367 = vrot.slane %v6161, 6
      %v6368 = vsel %vm5756, %v6366, %v6367
      %v6369 = vrot.slane %v6367, 4
      %v6370 = vrot.slane %v5585, 6
      %v6371 = vsel %vm5756, %v6369, %v6370
      %v6372 = vrot.slane %v6370, 4
      %v6373 = vrot.slane %v6172, 6
      %v6374 = vsel %vm5756, %v6372, %v6373
      %v6375 = vrot.slane %v5574, 6
      %v6376 = vrot.slane %v6375, 4
      %v6377 = vrot.slane %v6162, 6
      %v6378 = vsel %vm5756, %v6376, %v6377
      %v6379 = vrot.slane %v6377, 4
      %v6380 = vrot.slane %v5586, 6
      %v6381 = vsel %vm5756, %v6379, %v6380
      %v6382 = vrot.slane %v6380, 4
      %v6383 = vrot.slane %v6173, 6
      %v6384 = vsel %vm5756, %v6382, %v6383
      %v6385 = vrot.slane %v5575, 6
      %v6386 = vrot.slane %v6385, 4
      %v6387 = vrot.slane %v6163, 6
      %v6388 = vsel %vm5756, %v6386, %v6387
      %v6389 = vrot.slane %v6387, 4
      %v6390 = vrot.slane %v5587, 6
      %v6391 = vsel %vm5756, %v6389, %v6390
      %v6392 = vrot.slane %v6390, 4
      %v6393 = vrot.slane %v6174, 6
      %v6394 = vsel %vm5756, %v6392, %v6393
      %v6397 = vcombine.high %v5576, %v5576
      %v6398 = vcombine.high %v5588, %v5588
      %v6399 = vrot.slane %v5576, 5
      %v6400 = vrot.slane %v6399, 4
      %v6401 = vrot.slane %v6397, 5
      %v6402 = vsel %vm5637, %v6400, %v6401
      %v6403 = vrot.slane %v6401, 4
      %v6404 = vrot.slane %v5588, 5
      %v6405 = vsel %vm5637, %v6403, %v6404
      %v6406 = vrot.slane %v6404, 4
      %v6407 = vrot.slane %v6398, 5
      %v6408 = vsel %vm5637, %v6406, %v6407
      %v6409 = vrot.slane %v5576, 6
      %v6410 = vrot.slane %v6409, 4
      %v6411 = vrot.slane %v6397, 6
      %v6412 = vsel %vm5756, %v6410, %v6411
      %v6413 = vrot.slane %v6411, 4
      %v6414 = vrot.slane %v5588, 6
      %v6415 = vsel %vm5756, %v6413, %v6414
      %v6416 = vrot.slane %v6414, 4
      %v6417 = vrot.slane %v6398, 6
      %v6418 = vsel %vm5756, %v6416, %v6417
      %v6419 = vcombine.low 0.0, %v5565
      %v6420 = vcombine.low %v6153, %v5577
      %v6421 = vcombine.low %v5566, %v6154
      %v6422 = vcombine.low %v5578, %v5567
      %v6423 = vcombine.low %v6155, %v5579
      %v6424 = vcombine.low %v5568, %v6156
      %v6425 = vcombine.low %v5580, %v5569
      %v6426 = vcombine.low %v6157, %v5581
      %v6427 = vcombine.low %v5570, %v6158
      %v6428 = vcombine.low %v5582, %v5571
      %v6429 = vcombine.low %v6159, %v5583
      %v6430 = vcombine.low %v5572, %v6160
      %v6431 = vcombine.low %v5584, %v5573
      %v6432 = vcombine.low %v6161, %v5585
      %v6433 = vcombine.low %v5574, %v6162
      %v6434 = vcombine.low %v5586, %v5575
      %v6435 = vcombine.low %v6163, %v5587
      %v6453 = vcombine.low %v5641, %v6178
      %v6454 = vcombine.low %v6181, %v6184
      %v6455 = vcombine.low %v6188, %v6191
      %v6456 = vcombine.low %v6194, %v6198
      %v6457 = vcombine.low %v6201, %v6204
      %v6458 = vcombine.low %v6208, %v6211
      %v6459 = vcombine.low %v6214, %v6218
      %v6460 = vcombine.low %v6221, %v6224
      %v6461 = vcombine.low %v6228, %v6231
      %v6462 = vcombine.low %v6234, %v6238
      %v6463 = vcombine.low %v6241, %v6244
      %v6464 = vcombine.low %v6248, %v6251
      %v6465 = vcombine.low %v6254, %v6258
      %v6466 = vcombine.low %v6261, %v6264
      %v6467 = vcombine.low %v6268, %v6271
      %v6468 = vcombine.low %v6274, %v6278
      %v6469 = vcombine.low %v6281, %v6284
      %v6487 = vcombine.low %v5760, %v6288
      %v6488 = vcombine.low %v6291, %v6294
      %v6489 = vcombine.low %v6298, %v6301
      %v6490 = vcombine.low %v6304, %v6308
      %v6491 = vcombine.low %v6311, %v6314
      %v6492 = vcombine.low %v6318, %v6321
      %v6493 = vcombine.low %v6324, %v6328
      %v6494 = vcombine.low %v6331, %v6334
      %v6495 = vcombine.low %v6338, %v6341
      %v6496 = vcombine.low %v6344, %v6348
      %v6497 = vcombine.low %v6351, %v6354
      %v6498 = vcombine.low %v6358, %v6361
      %v6499 = vcombine.low %v6364, %v6368
      %v6500 = vcombine.low %v6371, %v6374
      %v6501 = vcombine.low %v6378, %v6381
      %v6502 = vcombine.low %v6384, %v6388
      %v6503 = vcombine.low %v6391, %v6394
      %v6521 = vcombine.low %v5565, %v6153
      %v6522 = vcombine.low %v5577, %v5566
      %v6523 = vcombine.low %v6154, %v5578
      %v6524 = vcombine.low %v5567, %v6155
      %v6525 = vcombine.low %v5579, %v5568
      %v6526 = vcombine.low %v6156, %v5580
      %v6527 = vcombine.low %v5569, %v6157
      %v6528 = vcombine.low %v5581, %v5570
      %v6529 = vcombine.low %v6158, %v5582
      %v6530 = vcombine.low %v5571, %v6159
      %v6531 = vcombine.low %v5583, %v5572
      %v6532 = vcombine.low %v6160, %v5584
      %v6533 = vcombine.low %v5573, %v6161
      %v6534 = vcombine.low %v5585, %v5574
      %v6535 = vcombine.low %v6162, %v5586
      %v6536 = vcombine.low %v5575, %v6163
      %v6537 = vcombine.low %v5587, %v5576
      %v6538 = vcombine.low %v6397, %v5588
      %v6557 = vcombine.low %v6178, %v6181
      %v6558 = vcombine.low %v6184, %v6188
      %v6559 = vcombine.low %v6191, %v6194
      %v6560 = vcombine.low %v6198, %v6201
      %v6561 = vcombine.low %v6204, %v6208
      %v6562 = vcombine.low %v6211, %v6214
      %v6563 = vcombine.low %v6218, %v6221
      %v6564 = vcombine.low %v6224, %v6228
      %v6565 = vcombine.low %v6231, %v6234
      %v6566 = vcombine.low %v6238, %v6241
      %v6567 = vcombine.low %v6244, %v6248
      %v6568 = vcombine.low %v6251, %v6254
      %v6569 = vcombine.low %v6258, %v6261
      %v6570 = vcombine.low %v6264, %v6268
      %v6571 = vcombine.low %v6271, %v6274
      %v6572 = vcombine.low %v6278, %v6281
      %v6573 = vcombine.low %v6284, %v6402
      %v6574 = vcombine.low %v6405, %v6408
      %v6593 = vcombine.low %v6288, %v6291
      %v6594 = vcombine.low %v6294, %v6298
      %v6595 = vcombine.low %v6301, %v6304
      %v6596 = vcombine.low %v6308, %v6311
      %v6597 = vcombine.low %v6314, %v6318
      %v6598 = vcombine.low %v6321, %v6324
      %v6599 = vcombine.low %v6328, %v6331
      %v6600 = vcombine.low %v6334, %v6338
      %v6601 = vcombine.low %v6341, %v6344
      %v6602 = vcombine.low %v6348, %v6351
      %v6603 = vcombine.low %v6354, %v6358
      %v6604 = vcombine.low %v6361, %v6364
      %v6605 = vcombine.low %v6368, %v6371
      %v6606 = vcombine.low %v6374, %v6378
      %v6607 = vcombine.low %v6381, %v6384
      %v6608 = vcombine.low %v6388, %v6391
      %v6609 = vcombine.low %v6394, %v6412
      %v6610 = vcombine.low %v6415, %v6418
      %v6629 = vcombine.low %v5576, %v6397
      %v6630 = vcombine.low %v5588, 0.0
      %v6633 = vcombine.low %v6402, %v6405
      %v6634 = vcombine.low %v6408, %v5641
      %v6637 = vcombine.low %v6412, %v6415
      %v6638 = vcombine.low %v6418, %v5760
      %v6641 = vpack.c.bf16 %v5898, %v5897
      %v6642 = vpack.c.bf16 %v5934, %v5933
      %v6643 = vpack.c.bf16 %v5970, %v5969
      %v6644 = vpack.c.bf16 %v6006, %v6005
      %v6645 = vpack.c.bf16 %v6042, %v6041
      %v6646 = vpack.c.bf16 %v6078, %v6077
      %v6647 = vpack.c.bf16 %v5901, %v5900
      %v6648 = vpack.c.bf16 %v5937, %v5936
      %v6649 = vpack.c.bf16 %v5973, %v5972
      %v6650 = vpack.c.bf16 %v5900, %v5899
      %v6651 = vpack.c.bf16 %v5936, %v5935
      %v6652 = vpack.c.bf16 %v5972, %v5971
      %v6653 = vpack.c.bf16 %v6008, %v6007
      %v6654 = vpack.c.bf16 %v6044, %v6043
      %v6655 = vpack.c.bf16 %v6080, %v6079
      %v6656 = vpack.c.bf16 %v5903, %v5902
      %v6657 = vpack.c.bf16 %v5939, %v5938
      %v6658 = vpack.c.bf16 %v5975, %v5974
      %v6659 = vpack.c.bf16 %v5902, %v5901
      %v6660 = vpack.c.bf16 %v5938, %v5937
      %v6661 = vpack.c.bf16 %v5974, %v5973
      %v6662 = vpack.c.bf16 %v6010, %v6009
      %v6663 = vpack.c.bf16 %v6046, %v6045
      %v6664 = vpack.c.bf16 %v6082, %v6081
      %v6665 = vpack.c.bf16 %v5905, %v5904
      %v6666 = vpack.c.bf16 %v5941, %v5940
      %v6667 = vpack.c.bf16 %v5977, %v5976
      %v6668 = vpack.c.bf16 %v5904, %v5903
      %v6669 = vpack.c.bf16 %v5940, %v5939
      %v6670 = vpack.c.bf16 %v5976, %v5975
      %v6671 = vpack.c.bf16 %v6012, %v6011
      %v6672 = vpack.c.bf16 %v6048, %v6047
      %v6673 = vpack.c.bf16 %v6084, %v6083
      %v6674 = vpack.c.bf16 %v5907, %v5906
      %v6675 = vpack.c.bf16 %v5943, %v5942
      %v6676 = vpack.c.bf16 %v5979, %v5978
      %v6677 = vpack.c.bf16 %v5906, %v5905
      %v6678 = vpack.c.bf16 %v5942, %v5941
      %v6679 = vpack.c.bf16 %v5978, %v5977
      %v6680 = vpack.c.bf16 %v6014, %v6013
      %v6681 = vpack.c.bf16 %v6050, %v6049
      %v6682 = vpack.c.bf16 %v6086, %v6085
      %v6683 = vpack.c.bf16 %v5909, %v5908
      %v6684 = vpack.c.bf16 %v5945, %v5944
      %v6685 = vpack.c.bf16 %v5981, %v5980
      %v6686 = vpack.c.bf16 %v5908, %v5907
      %v6687 = vpack.c.bf16 %v5944, %v5943
      %v6688 = vpack.c.bf16 %v5980, %v5979
      %v6689 = vpack.c.bf16 %v6016, %v6015
      %v6690 = vpack.c.bf16 %v6052, %v6051
      %v6691 = vpack.c.bf16 %v6088, %v6087
      %v6692 = vpack.c.bf16 %v5911, %v5910
      %v6693 = vpack.c.bf16 %v5947, %v5946
      %v6694 = vpack.c.bf16 %v5983, %v5982
      %v6695 = vpack.c.bf16 %v5910, %v5909
      %v6696 = vpack.c.bf16 %v5946, %v5945
      %v6697 = vpack.c.bf16 %v5982, %v5981
      %v6698 = vpack.c.bf16 %v6018, %v6017
      %v6699 = vpack.c.bf16 %v6054, %v6053
      %v6700 = vpack.c.bf16 %v6090, %v6089
      %v6701 = vpack.c.bf16 %v5913, %v5912
      %v6702 = vpack.c.bf16 %v5949, %v5948
      %v6703 = vpack.c.bf16 %v5985, %v5984
      %v6704 = vpack.c.bf16 %v5912, %v5911
      %v6705 = vpack.c.bf16 %v5948, %v5947
      %v6706 = vpack.c.bf16 %v5984, %v5983
      %v6707 = vpack.c.bf16 %v6020, %v6019
      %v6708 = vpack.c.bf16 %v6056, %v6055
      %v6709 = vpack.c.bf16 %v6092, %v6091
      %v6710 = vpack.c.bf16 %v6113, %v5914
      %v6711 = vpack.c.bf16 %v6119, %v5950
      %v6712 = vpack.c.bf16 %v6125, %v5986
      %v6713 = vpack.c.bf16 %v5914, %v5913
      %v6714 = vpack.c.bf16 %v5950, %v5949
      %v6715 = vpack.c.bf16 %v5986, %v5985
      %v6716 = vpack.c.bf16 %v6022, %v6021
      %v6717 = vpack.c.bf16 %v6058, %v6057
      %v6718 = vpack.c.bf16 %v6094, %v6093
      %v6719 = vpack.c.bf16 %v6115, %v6114
      %v6720 = vpack.c.bf16 %v6121, %v6120
      %v6721 = vpack.c.bf16 %v6127, %v6126
      %v6722 = vld [vmem:[%s5] sm:$0xf]
      %v6723 = vld [vmem:[%s5 + $0x4] sm:$0xf]
      %v6724 = vld [vmem:[%s5 + $0x8] sm:$0xf]
      %v6725 = vld [vmem:[%s5 + $0xc] sm:$0xf]
      %v6726 = vld [vmem:[%s5 + $0x10] sm:$0xf]
      %v6727 = vld [vmem:[%s5 + $0x14] sm:$0xf]
      %v6728 = vld [vmem:[%s5 + $0x18] sm:$0xf]
      %v6729 = vld [vmem:[%s5 + $0x1c] sm:$0xf]
      %v6730 = vld [vmem:[%s5 + $0x20] sm:$0xf]
      %v6731 = vld [vmem:[%s5 + $0x24] sm:$0xf]
      %v6732 = vld [vmem:[%s5 + $0x28] sm:$0xf]
      %v6733 = vld [vmem:[%s5 + $0x2c] sm:$0xf]
      %v6734 = vld [vmem:[%s5 + $0x30] sm:$0xf]
      %v6735 = vld [vmem:[%s5 + $0x34] sm:$0xf]
      %v6736 = vld [vmem:[%s5 + $0x38] sm:$0xf]
      %v6737 = vld [vmem:[%s5 + $0x3c] sm:$0xf]
      %v6738 = vld [vmem:[%s5 + $0x40] sm:$0xf]
      %v6739 = vld [vmem:[%s5 + $0x44] sm:$0xf]
      %v6740 = vld [vmem:[%s5 + $0x48] sm:$0xf]
      %v6741 = vld [vmem:[%s5 + $0x4c] sm:$0xf]
      %v6742 = vld [vmem:[%s5 + $0x50] sm:$0xf]
      %v6743 = vld [vmem:[%s5 + $0x54] sm:$0xf]
      %v6744 = vld [vmem:[%s5 + $0x58] sm:$0xf]
      %v6745 = vld [vmem:[%s5 + $0x5c] sm:$0xf]
      %v6746 = vld [vmem:[%s5 + $0x60] sm:$0xf]
      %v6747 = vld [vmem:[%s5 + $0x64] sm:$0xf]
      %v6748 = vld [vmem:[%s5 + $0x68] sm:$0xf]
      %v6749 = vld [vmem:[%s5 + $0x6c] sm:$0xf]
      %v6750 = vld [vmem:[%s5 + $0x70] sm:$0xf]
      %v6751 = vld [vmem:[%s5 + $0x74] sm:$0xf]
      %v6752 = vld [vmem:[%s5 + $0x78] sm:$0xf]
      %v6753 = vld [vmem:[%s5 + $0x7c] sm:$0xf]
      %v6754 = vld [vmem:[%s5 + $0x80] sm:$0xf]
      %v6755 = vld [vmem:[%s5 + $0x84] sm:$0xf]
      %v6756 = vld [vmem:[%s5 + $0x88] sm:$0xf]
      %v6757 = vld [vmem:[%s5 + $0x8c] sm:$0xf]
      %v6758 = vld [vmem:[%s5 + $0x90] sm:$0xf]
      %v6759 = vld [vmem:[%s5 + $0x94] sm:$0xf]
      %v6760 = vld [vmem:[%s5 + $0x98] sm:$0xf]
      %v6761 = vld [vmem:[%s5 + $0x9c] sm:$0xf]
      %v6762 = vld [vmem:[%s5 + $0xa0] sm:$0xf]
      %v6763 = vld [vmem:[%s5 + $0xa4] sm:$0xf]
      %v6764 = vld [vmem:[%s5 + $0xa8] sm:$0xf]
      %v6765 = vld [vmem:[%s5 + $0xac] sm:$0xf]
      %v6766 = vld [vmem:[%s5 + $0xb0] sm:$0xf]
      %v6767 = vld [vmem:[%s5 + $0xb4] sm:$0xf]
      %v6768 = vld [vmem:[%s5 + $0xb8] sm:$0xf]
      %v6769 = vld [vmem:[%s5 + $0xbc] sm:$0xf]
      %v6770 = vld [vmem:[%s5 + $0xc0] sm:$0xf]
      %v6771 = vld [vmem:[%s5 + $0xc4] sm:$0xf]
      %v6772 = vld [vmem:[%s5 + $0xc8] sm:$0xf]
      %v6773 = vld [vmem:[%s5 + $0xcc] sm:$0xf]
      %v6774 = vld [vmem:[%s5 + $0xd0] sm:$0xf]
      %v6775 = vld [vmem:[%s5 + $0xd4] sm:$0xf]
      %v6776 = vld [vmem:[%s5 + $0xd8] sm:$0xf]
      %v6777 = vld [vmem:[%s5 + $0xdc] sm:$0xf]
      %v6778 = vld [vmem:[%s5 + $0xe0] sm:$0xf]
      %v6779 = vld [vmem:[%s5 + $0xe4] sm:$0xf]
      %v6780 = vld [vmem:[%s5 + $0xe8] sm:$0xf]
      %v6781 = vld [vmem:[%s5 + $0xec] sm:$0xf]
      %v6782 = vld [vmem:[%s5 + $0xf0] sm:$0xf]
      %v6783 = vld [vmem:[%s5 + $0xf4] sm:$0xf]
      %v6784 = vld [vmem:[%s5 + $0xf8] sm:$0xf]
      %v6785 = vld [vmem:[%s5 + $0xfc] sm:$0xf]
      %v6786 = vld [vmem:[%s5 + $0x100] sm:$0xf]
      %v6787 = vld [vmem:[%s5 + $0x104] sm:$0xf]
      %v6788 = vld [vmem:[%s5 + $0x108] sm:$0xf]
      %v6789 = vld [vmem:[%s5 + $0x10c] sm:$0xf]
      %v6790 = vld [vmem:[%s5 + $0x110] sm:$0xf]
      %v6791 = vld [vmem:[%s5 + $0x114] sm:$0xf]
      %v6792 = vld [vmem:[%s5 + $0x118] sm:$0xf]
      %v6793 = vld [vmem:[%s5 + $0x11c] sm:$0xf]
      %v6794 = vld [vmem:[%s5 + $0x120] sm:$0xf]
      %v6795 = vld [vmem:[%s5 + $0x124] sm:$0xf]
      %v6796 = vld [vmem:[%s5 + $0x128] sm:$0xf]
      %v6797 = vld [vmem:[%s5 + $0x12c] sm:$0xf]
      %v6798 = vld [vmem:[%s5 + $0x130] sm:$0xf]
      %v6799 = vld [vmem:[%s5 + $0x134] sm:$0xf]
      %v6800 = vld [vmem:[%s5 + $0x138] sm:$0xf]
      %v6801 = vld [vmem:[%s5 + $0x13c] sm:$0xf]
      %v6802 = vld [vmem:[%s5 + $0x140] sm:$0xf]
      %v6803 = vld [vmem:[%s5 + $0x144] sm:$0xf]
      %v6804 = vld [vmem:[%s5 + $0x148] sm:$0xf]
      %v6805 = vld [vmem:[%s5 + $0x14c] sm:$0xf]
      %v6806 = vld [vmem:[%s5 + $0x150] sm:$0xf]
      %v6807 = vld [vmem:[%s5 + $0x154] sm:$0xf]
      %v6808 = vld [vmem:[%s5 + $0x158] sm:$0xf]
      %v6809 = vld [vmem:[%s5 + $0x15c] sm:$0xf]
      %v6810 = vld [vmem:[%s5 + $0x160] sm:$0xf]
      %v6811 = vld [vmem:[%s5 + $0x164] sm:$0xf]
      %v6812 = vld [vmem:[%s5 + $0x168] sm:$0xf]
      %v6813 = vld [vmem:[%s5 + $0x16c] sm:$0xf]
      %v6814 = vld [vmem:[%s5 + $0x170] sm:$0xf]
      %v6815 = vld [vmem:[%s5 + $0x174] sm:$0xf]
      %v6816 = vld [vmem:[%s5 + $0x178] sm:$0xf]
      %v6817 = vld [vmem:[%s5 + $0x17c] sm:$0xf]
      %v6818 = vld [vmem:[%s5 + $0x180] sm:$0xf]
      %v6819 = vld [vmem:[%s5 + $0x184] sm:$0xf]
      %v6820 = vld [vmem:[%s5 + $0x188] sm:$0xf]
      %v6821 = vld [vmem:[%s5 + $0x18c] sm:$0xf]
      %v6822 = vld [vmem:[%s5 + $0x190] sm:$0xf]
      %v6823 = vld [vmem:[%s5 + $0x194] sm:$0xf]
      %v6824 = vld [vmem:[%s5 + $0x198] sm:$0xf]
      %v6825 = vld [vmem:[%s5 + $0x19c] sm:$0xf]
      %v6826 = vld [vmem:[%s5 + $0x1a0] sm:$0xf]
      %v6827 = vld [vmem:[%s5 + $0x1a4] sm:$0xf]
      %v6828 = vld [vmem:[%s5 + $0x1a8] sm:$0xf]
      %v6829 = vld [vmem:[%s5 + $0x1ac] sm:$0xf]
      %v6830 = vld [vmem:[%s5 + $0x1b0] sm:$0xf]
      %v6831 = vld [vmem:[%s5 + $0x1b4] sm:$0xf]
      %v6832 = vld [vmem:[%s5 + $0x1b8] sm:$0xf]
      %v6833 = vld [vmem:[%s5 + $0x1bc] sm:$0xf]
      %v6834 = vld [vmem:[%s5 + $0x1c0] sm:$0xf]
      %v6835 = vld [vmem:[%s5 + $0x1c4] sm:$0xf]
      %v6836 = vld [vmem:[%s5 + $0x1c8] sm:$0xf]
      %v6837 = vld [vmem:[%s5 + $0x1cc] sm:$0xf]
      %v6838 = vld [vmem:[%s5 + $0x1d0] sm:$0xf]
      %v6839 = vld [vmem:[%s5 + $0x1d4] sm:$0xf]
      %v6840 = vld [vmem:[%s5 + $0x1d8] sm:$0xf]
      %v6841 = vld [vmem:[%s5 + $0x1dc] sm:$0xf]
      %v6842 = vld [vmem:[%s5 + $0x1e0] sm:$0xf]
      %v6843 = vld [vmem:[%s5 + $0x1e4] sm:$0xf]
      %v6844 = vld [vmem:[%s5 + $0x1e8] sm:$0xf]
      %v6845 = vld [vmem:[%s5 + $0x1ec] sm:$0xf]
      %v6846 = vld [vmem:[%s5 + $0x1f0] sm:$0xf]
      %v6847 = vld [vmem:[%s5 + $0x1f4] sm:$0xf]
      %v6848 = vld [vmem:[%s5 + $0x1f8] sm:$0xf]
      %v6849 = vld [vmem:[%s5 + $0x1fc] sm:$0xf]
      %v6850 = vld [vmem:[%s5 + $0x200] sm:$0xf]
      %v6851 = vld [vmem:[%s5 + $0x204] sm:$0xf]
      %v6852 = vld [vmem:[%s5 + $0x208] sm:$0xf]
      %v6853 = vld [vmem:[%s5 + $0x20c] sm:$0xf]
      %v6854 = vld [vmem:[%s5 + $0x210] sm:$0xf]
      %v6855 = vld [vmem:[%s5 + $0x214] sm:$0xf]
      %v6856 = vld [vmem:[%s5 + $0x218] sm:$0xf]
      %v6857 = vld [vmem:[%s5 + $0x21c] sm:$0xf]
      %v6858 = vld [vmem:[%s5 + $0x220] sm:$0xf]
      %v6859 = vld [vmem:[%s5 + $0x224] sm:$0xf]
      %v6860 = vld [vmem:[%s5 + $0x228] sm:$0xf]
      %v6861 = vld [vmem:[%s5 + $0x22c] sm:$0xf]
      %v6862 = vld [vmem:[%s5 + $0x230] sm:$0xf]
      %v6863 = vld [vmem:[%s5 + $0x234] sm:$0xf]
      %v6864 = vld [vmem:[%s5 + $0x238] sm:$0xf]
      %v6865 = vld [vmem:[%s5 + $0x23c] sm:$0xf]
      %v6866 = vpack.c.bf16 %v6419, %v5897
      %v6867 = vpack.c.bf16 %v6453, %v5933
      %v6868 = vpack.c.bf16 %v6487, %v5969
      %v6869 = vpack.c.bf16 %v6522, %v6521
      %v6870 = vpack.c.bf16 %v6558, %v6557
      %v6871 = vpack.c.bf16 %v6594, %v6593
      %v6872 = vpack.c.bf16 %v6422, %v6421
      %v6873 = vpack.c.bf16 %v6456, %v6455
      %v6874 = vpack.c.bf16 %v6490, %v6489
      %v6875 = vpack.c.bf16 %v6421, %v6420
      %v6876 = vpack.c.bf16 %v6455, %v6454
      %v6877 = vpack.c.bf16 %v6489, %v6488
      %v6878 = vpack.c.bf16 %v6524, %v6523
      %v6879 = vpack.c.bf16 %v6560, %v6559
      %v6880 = vpack.c.bf16 %v6596, %v6595
      %v6881 = vpack.c.bf16 %v6424, %v6423
      %v6882 = vpack.c.bf16 %v6458, %v6457
      %v6883 = vpack.c.bf16 %v6492, %v6491
      %v6884 = vpack.c.bf16 %v6423, %v6422
      %v6885 = vpack.c.bf16 %v6457, %v6456
      %v6886 = vpack.c.bf16 %v6491, %v6490
      %v6887 = vpack.c.bf16 %v6526, %v6525
      %v6888 = vpack.c.bf16 %v6562, %v6561
      %v6889 = vpack.c.bf16 %v6598, %v6597
      %v6890 = vpack.c.bf16 %v6426, %v6425
      %v6891 = vpack.c.bf16 %v6460, %v6459
      %v6892 = vpack.c.bf16 %v6494, %v6493
      %v6893 = vpack.c.bf16 %v6425, %v6424
      %v6894 = vpack.c.bf16 %v6459, %v6458
      %v6895 = vpack.c.bf16 %v6493, %v6492
      %v6896 = vpack.c.bf16 %v6528, %v6527
      %v6897 = vpack.c.bf16 %v6564, %v6563
      %v6898 = vpack.c.bf16 %v6600, %v6599
      %v6899 = vpack.c.bf16 %v6428, %v6427
      %v6900 = vpack.c.bf16 %v6462, %v6461
      %v6901 = vpack.c.bf16 %v6496, %v6495
      %v6902 = vpack.c.bf16 %v6427, %v6426
      %v6903 = vpack.c.bf16 %v6461, %v6460
      %v6904 = vpack.c.bf16 %v6495, %v6494
      %v6905 = vpack.c.bf16 %v6530, %v6529
      %v6906 = vpack.c.bf16 %v6566, %v6565
      %v6907 = vpack.c.bf16 %v6602, %v6601
      %v6908 = vpack.c.bf16 %v6430, %v6429
      %v6909 = vpack.c.bf16 %v6464, %v6463
      %v6910 = vpack.c.bf16 %v6498, %v6497
      %v6911 = vpack.c.bf16 %v6429, %v6428
      %v6912 = vpack.c.bf16 %v6463, %v6462
      %v6913 = vpack.c.bf16 %v6497, %v6496
      %v6914 = vpack.c.bf16 %v6532, %v6531
      %v6915 = vpack.c.bf16 %v6568, %v6567
      %v6916 = vpack.c.bf16 %v6604, %v6603
      %v6917 = vpack.c.bf16 %v6432, %v6431
      %v6918 = vpack.c.bf16 %v6466, %v6465
      %v6919 = vpack.c.bf16 %v6500, %v6499
      %v6920 = vpack.c.bf16 %v6431, %v6430
      %v6921 = vpack.c.bf16 %v6465, %v6464
      %v6922 = vpack.c.bf16 %v6499, %v6498
      %v6923 = vpack.c.bf16 %v6534, %v6533
      %v6924 = vpack.c.bf16 %v6570, %v6569
      %v6925 = vpack.c.bf16 %v6606, %v6605
      %v6926 = vpack.c.bf16 %v6434, %v6433
      %v6927 = vpack.c.bf16 %v6468, %v6467
      %v6928 = vpack.c.bf16 %v6502, %v6501
      %v6929 = vpack.c.bf16 %v6433, %v6432
      %v6930 = vpack.c.bf16 %v6467, %v6466
      %v6931 = vpack.c.bf16 %v6501, %v6500
      %v6932 = vpack.c.bf16 %v6536, %v6535
      %v6933 = vpack.c.bf16 %v6572, %v6571
      %v6934 = vpack.c.bf16 %v6608, %v6607
      %v6935 = vpack.c.bf16 %v6629, %v6435
      %v6936 = vpack.c.bf16 %v6633, %v6469
      %v6937 = vpack.c.bf16 %v6637, %v6503
      %v6938 = vpack.c.bf16 %v6435, %v6434
      %v6939 = vpack.c.bf16 %v6469, %v6468
      %v6940 = vpack.c.bf16 %v6503, %v6502
      %v6941 = vpack.c.bf16 %v6538, %v6537
      %v6942 = vpack.c.bf16 %v6574, %v6573
      %v6943 = vpack.c.bf16 %v6610, %v6609
      %v6944 = vpack.c.bf16 %v6115, %v6630
      %v6945 = vpack.c.bf16 %v6121, %v6634
      %v6946 = vpack.c.bf16 %v6127, %v6638
      %v6947 = vld [vmem:[%s6] sm:$0xf]
      %v6948 = vld [vmem:[%s6 + $0x4] sm:$0xf]
      %v6949 = vld [vmem:[%s6 + $0x8] sm:$0xf]
      %v6950 = vld [vmem:[%s6 + $0xc] sm:$0xf]
      %v6951 = vld [vmem:[%s6 + $0x10] sm:$0xf]
      %v6952 = vld [vmem:[%s6 + $0x14] sm:$0xf]
      %v6953 = vld [vmem:[%s6 + $0x18] sm:$0xf]
      %v6954 = vld [vmem:[%s6 + $0x1c] sm:$0xf]
      %v6955 = vld [vmem:[%s6 + $0x20] sm:$0xf]
      %v6956 = vld [vmem:[%s6 + $0x24] sm:$0xf]
      %v6957 = vld [vmem:[%s6 + $0x28] sm:$0xf]
      %v6958 = vld [vmem:[%s6 + $0x2c] sm:$0xf]
      %v6959 = vld [vmem:[%s6 + $0x30] sm:$0xf]
      %v6960 = vld [vmem:[%s6 + $0x34] sm:$0xf]
      %v6961 = vld [vmem:[%s6 + $0x38] sm:$0xf]
      %v6962 = vld [vmem:[%s6 + $0x3c] sm:$0xf]
      %v6963 = vld [vmem:[%s6 + $0x40] sm:$0xf]
      %v6964 = vld [vmem:[%s6 + $0x44] sm:$0xf]
      %v6965 = vld [vmem:[%s6 + $0x48] sm:$0xf]
      %v6966 = vld [vmem:[%s6 + $0x4c] sm:$0xf]
      %v6967 = vld [vmem:[%s6 + $0x50] sm:$0xf]
      %v6968 = vld [vmem:[%s6 + $0x54] sm:$0xf]
      %v6969 = vld [vmem:[%s6 + $0x58] sm:$0xf]
      %v6970 = vld [vmem:[%s6 + $0x5c] sm:$0xf]
      %v6971 = vld [vmem:[%s6 + $0x60] sm:$0xf]
      %v6972 = vld [vmem:[%s6 + $0x64] sm:$0xf]
      %v6973 = vld [vmem:[%s6 + $0x68] sm:$0xf]
      %v6974 = vld [vmem:[%s6 + $0x6c] sm:$0xf]
      %v6975 = vld [vmem:[%s6 + $0x70] sm:$0xf]
      %v6976 = vld [vmem:[%s6 + $0x74] sm:$0xf]
      %v6977 = vld [vmem:[%s6 + $0x78] sm:$0xf]
      %v6978 = vld [vmem:[%s6 + $0x7c] sm:$0xf]
      %v6979 = vld [vmem:[%s6 + $0x80] sm:$0xf]
      %v6980 = vld [vmem:[%s6 + $0x84] sm:$0xf]
      %v6981 = vld [vmem:[%s6 + $0x88] sm:$0xf]
      %v6982 = vld [vmem:[%s6 + $0x8c] sm:$0xf]
      %v6983 = vld [vmem:[%s6 + $0x90] sm:$0xf]
      %v6984 = vld [vmem:[%s6 + $0x94] sm:$0xf]
      %v6985 = vld [vmem:[%s6 + $0x98] sm:$0xf]
      %v6986 = vld [vmem:[%s6 + $0x9c] sm:$0xf]
      %v6987 = vld [vmem:[%s6 + $0xa0] sm:$0xf]
      %v6988 = vld [vmem:[%s6 + $0xa4] sm:$0xf]
      %v6989 = vld [vmem:[%s6 + $0xa8] sm:$0xf]
      %v6990 = vld [vmem:[%s6 + $0xac] sm:$0xf]
      %v6991 = vld [vmem:[%s6 + $0xb0] sm:$0xf]
      %v6992 = vld [vmem:[%s6 + $0xb4] sm:$0xf]
      %v6993 = vld [vmem:[%s6 + $0xb8] sm:$0xf]
      %v6994 = vld [vmem:[%s6 + $0xbc] sm:$0xf]
      %v6995 = vld [vmem:[%s6 + $0xc0] sm:$0xf]
      %v6996 = vld [vmem:[%s6 + $0xc4] sm:$0xf]
      %v6997 = vld [vmem:[%s6 + $0xc8] sm:$0xf]
      %v6998 = vld [vmem:[%s6 + $0xcc] sm:$0xf]
      %v6999 = vld [vmem:[%s6 + $0xd0] sm:$0xf]
      %v7000 = vld [vmem:[%s6 + $0xd4] sm:$0xf]
      %v7001 = vld [vmem:[%s6 + $0xd8] sm:$0xf]
      %v7002 = vld [vmem:[%s6 + $0xdc] sm:$0xf]
      %v7003 = vld [vmem:[%s6 + $0xe0] sm:$0xf]
      %v7004 = vld [vmem:[%s6 + $0xe4] sm:$0xf]
      %v7005 = vld [vmem:[%s6 + $0xe8] sm:$0xf]
      %v7006 = vld [vmem:[%s6 + $0xec] sm:$0xf]
      %v7007 = vld [vmem:[%s6 + $0xf0] sm:$0xf]
      %v7008 = vld [vmem:[%s6 + $0xf4] sm:$0xf]
      %v7009 = vld [vmem:[%s6 + $0xf8] sm:$0xf]
      %v7010 = vld [vmem:[%s6 + $0xfc] sm:$0xf]
      %v7011 = vld [vmem:[%s6 + $0x100] sm:$0xf]
      %v7012 = vld [vmem:[%s6 + $0x104] sm:$0xf]
      %v7013 = vld [vmem:[%s6 + $0x108] sm:$0xf]
      %v7014 = vld [vmem:[%s6 + $0x10c] sm:$0xf]
      %v7015 = vld [vmem:[%s6 + $0x110] sm:$0xf]
      %v7016 = vld [vmem:[%s6 + $0x114] sm:$0xf]
      %v7017 = vld [vmem:[%s6 + $0x118] sm:$0xf]
      %v7018 = vld [vmem:[%s6 + $0x11c] sm:$0xf]
      %v7019 = vld [vmem:[%s6 + $0x120] sm:$0xf]
      %v7020 = vld [vmem:[%s6 + $0x124] sm:$0xf]
      %v7021 = vld [vmem:[%s6 + $0x128] sm:$0xf]
      %v7022 = vld [vmem:[%s6 + $0x12c] sm:$0xf]
      %v7023 = vld [vmem:[%s6 + $0x130] sm:$0xf]
      %v7024 = vld [vmem:[%s6 + $0x134] sm:$0xf]
      %v7025 = vld [vmem:[%s6 + $0x138] sm:$0xf]
      %v7026 = vld [vmem:[%s6 + $0x13c] sm:$0xf]
      %v7027 = vld [vmem:[%s6 + $0x140] sm:$0xf]
      %v7028 = vld [vmem:[%s6 + $0x144] sm:$0xf]
      %v7029 = vld [vmem:[%s6 + $0x148] sm:$0xf]
      %v7030 = vld [vmem:[%s6 + $0x14c] sm:$0xf]
      %v7031 = vld [vmem:[%s6 + $0x150] sm:$0xf]
      %v7032 = vld [vmem:[%s6 + $0x154] sm:$0xf]
      %v7033 = vld [vmem:[%s6 + $0x158] sm:$0xf]
      %v7034 = vld [vmem:[%s6 + $0x15c] sm:$0xf]
      %v7035 = vld [vmem:[%s6 + $0x160] sm:$0xf]
      %v7036 = vld [vmem:[%s6 + $0x164] sm:$0xf]
      %v7037 = vld [vmem:[%s6 + $0x168] sm:$0xf]
      %v7038 = vld [vmem:[%s6 + $0x16c] sm:$0xf]
      %v7039 = vld [vmem:[%s6 + $0x170] sm:$0xf]
      %v7040 = vld [vmem:[%s6 + $0x174] sm:$0xf]
      %v7041 = vld [vmem:[%s6 + $0x178] sm:$0xf]
      %v7042 = vld [vmem:[%s6 + $0x17c] sm:$0xf]
      %v7043 = vld [vmem:[%s6 + $0x180] sm:$0xf]
      %v7044 = vld [vmem:[%s6 + $0x184] sm:$0xf]
      %v7045 = vld [vmem:[%s6 + $0x188] sm:$0xf]
      %v7046 = vld [vmem:[%s6 + $0x18c] sm:$0xf]
      %v7047 = vld [vmem:[%s6 + $0x190] sm:$0xf]
      %v7048 = vld [vmem:[%s6 + $0x194] sm:$0xf]
      %v7049 = vld [vmem:[%s6 + $0x198] sm:$0xf]
      %v7050 = vld [vmem:[%s6 + $0x19c] sm:$0xf]
      %v7051 = vld [vmem:[%s6 + $0x1a0] sm:$0xf]
      %v7052 = vld [vmem:[%s6 + $0x1a4] sm:$0xf]
      %v7053 = vld [vmem:[%s6 + $0x1a8] sm:$0xf]
      %v7054 = vld [vmem:[%s6 + $0x1ac] sm:$0xf]
      %v7055 = vld [vmem:[%s6 + $0x1b0] sm:$0xf]
      %v7056 = vld [vmem:[%s6 + $0x1b4] sm:$0xf]
      %v7057 = vld [vmem:[%s6 + $0x1b8] sm:$0xf]
      %v7058 = vld [vmem:[%s6 + $0x1bc] sm:$0xf]
      %v7059 = vld [vmem:[%s6 + $0x1c0] sm:$0xf]
      %v7060 = vld [vmem:[%s6 + $0x1c4] sm:$0xf]
      %v7061 = vld [vmem:[%s6 + $0x1c8] sm:$0xf]
      %v7062 = vld [vmem:[%s6 + $0x1cc] sm:$0xf]
      %v7063 = vld [vmem:[%s6 + $0x1d0] sm:$0xf]
      %v7064 = vld [vmem:[%s6 + $0x1d4] sm:$0xf]
      %v7065 = vld [vmem:[%s6 + $0x1d8] sm:$0xf]
      %v7066 = vld [vmem:[%s6 + $0x1dc] sm:$0xf]
      %v7067 = vld [vmem:[%s6 + $0x1e0] sm:$0xf]
      %v7068 = vld [vmem:[%s6 + $0x1e4] sm:$0xf]
      %v7069 = vld [vmem:[%s6 + $0x1e8] sm:$0xf]
      %v7070 = vld [vmem:[%s6 + $0x1ec] sm:$0xf]
      %v7071 = vld [vmem:[%s6 + $0x1f0] sm:$0xf]
      %v7072 = vld [vmem:[%s6 + $0x1f4] sm:$0xf]
      %v7073 = vld [vmem:[%s6 + $0x1f8] sm:$0xf]
      %v7074 = vld [vmem:[%s6 + $0x1fc] sm:$0xf]
      %v7075 = vld [vmem:[%s6 + $0x200] sm:$0xf]
      %v7076 = vld [vmem:[%s6 + $0x204] sm:$0xf]
      %v7077 = vld [vmem:[%s6 + $0x208] sm:$0xf]
      %v7078 = vld [vmem:[%s6 + $0x20c] sm:$0xf]
      %v7079 = vld [vmem:[%s6 + $0x210] sm:$0xf]
      %v7080 = vld [vmem:[%s6 + $0x214] sm:$0xf]
      %v7081 = vld [vmem:[%s6 + $0x218] sm:$0xf]
      %v7082 = vld [vmem:[%s6 + $0x21c] sm:$0xf]
      %v7083 = vld [vmem:[%s6 + $0x220] sm:$0xf]
      %v7084 = vld [vmem:[%s6 + $0x224] sm:$0xf]
      %v7085 = vld [vmem:[%s6 + $0x228] sm:$0xf]
      %v7086 = vld [vmem:[%s6 + $0x22c] sm:$0xf]
      %v7087 = vld [vmem:[%s6 + $0x230] sm:$0xf]
      %v7088 = vld [vmem:[%s6 + $0x234] sm:$0xf]
      %v7089 = vld [vmem:[%s6 + $0x238] sm:$0xf]
      %v7090 = vld [vmem:[%s6 + $0x23c] sm:$0xf]
      %v7235 = vunpack.c.l.b16 %v6947
      %v7236 = vunpack.c.l.b16 %v6948
      %v7237 = vunpack.c.l.b16 %v6949
      %v7238 = vunpack.c.l.b16 %v6950
      %v7239 = vunpack.c.l.b16 %v6951
      %v7240 = vunpack.c.l.b16 %v6952
      %v7241 = vunpack.c.l.b16 %v6953
      %v7242 = vunpack.c.l.b16 %v6954
      %v7243 = vunpack.c.l.b16 %v6955
      %v7244 = vunpack.c.l.b16 %v6956
      %v7245 = vunpack.c.l.b16 %v6957
      %v7246 = vunpack.c.l.b16 %v6958
      %v7247 = vunpack.c.l.b16 %v6959
      %v7248 = vunpack.c.l.b16 %v6960
      %v7249 = vunpack.c.l.b16 %v6961
      %v7250 = vunpack.c.l.b16 %v6962
      %v7251 = vunpack.c.l.b16 %v6963
      %v7252 = vunpack.c.l.b16 %v6964
      %v7253 = vunpack.c.l.b16 %v6965
      %v7254 = vunpack.c.l.b16 %v6966
      %v7255 = vunpack.c.l.b16 %v6967
      %v7256 = vunpack.c.l.b16 %v6968
      %v7257 = vunpack.c.l.b16 %v6969
      %v7258 = vunpack.c.l.b16 %v6970
      %v7259 = vunpack.c.l.b16 %v6971
      %v7260 = vunpack.c.l.b16 %v6972
      %v7261 = vunpack.c.l.b16 %v6973
      %v7262 = vunpack.c.l.b16 %v6974
      %v7263 = vunpack.c.l.b16 %v6975
      %v7264 = vunpack.c.l.b16 %v6976
      %v7265 = vunpack.c.l.b16 %v6977
      %v7266 = vunpack.c.l.b16 %v6978
      %v7267 = vunpack.c.l.b16 %v6979
      %v7268 = vunpack.c.l.b16 %v6980
      %v7269 = vunpack.c.l.b16 %v6981
      %v7270 = vunpack.c.l.b16 %v6982
      %v7271 = vunpack.c.l.b16 %v6983
      %v7272 = vunpack.c.l.b16 %v6984
      %v7273 = vunpack.c.l.b16 %v6985
      %v7274 = vunpack.c.l.b16 %v6986
      %v7275 = vunpack.c.l.b16 %v6987
      %v7276 = vunpack.c.l.b16 %v6988
      %v7277 = vunpack.c.l.b16 %v6989
      %v7278 = vunpack.c.l.b16 %v6990
      %v7279 = vunpack.c.l.b16 %v6991
      %v7280 = vunpack.c.l.b16 %v6992
      %v7281 = vunpack.c.l.b16 %v6993
      %v7282 = vunpack.c.l.b16 %v6994
      %v7283 = vunpack.c.l.b16 %v6995
      %v7284 = vunpack.c.l.b16 %v6996
      %v7285 = vunpack.c.l.b16 %v6997
      %v7286 = vunpack.c.l.b16 %v6998
      %v7287 = vunpack.c.l.b16 %v6999
      %v7288 = vunpack.c.l.b16 %v7000
      %v7289 = vunpack.c.l.b16 %v7001
      %v7290 = vunpack.c.l.b16 %v7002
      %v7291 = vunpack.c.l.b16 %v7003
      %v7292 = vunpack.c.l.b16 %v7004
      %v7293 = vunpack.c.l.b16 %v7005
      %v7294 = vunpack.c.l.b16 %v7006
      %v7295 = vunpack.c.l.b16 %v7007
      %v7296 = vunpack.c.l.b16 %v7008
      %v7297 = vunpack.c.l.b16 %v7009
      %v7298 = vunpack.c.l.b16 %v7010
      %v7299 = vunpack.c.l.b16 %v7011
      %v7300 = vunpack.c.l.b16 %v7012
      %v7301 = vunpack.c.l.b16 %v7013
      %v7302 = vunpack.c.l.b16 %v7014
      %v7303 = vunpack.c.l.b16 %v7015
      %v7304 = vunpack.c.l.b16 %v7016
      %v7305 = vunpack.c.l.b16 %v7017
      %v7306 = vunpack.c.l.b16 %v7018
      %v7307 = vunpack.c.l.b16 %v7019
      %v7308 = vunpack.c.l.b16 %v7020
      %v7309 = vunpack.c.l.b16 %v7021
      %v7310 = vunpack.c.l.b16 %v7022
      %v7311 = vunpack.c.l.b16 %v7023
      %v7312 = vunpack.c.l.b16 %v7024
      %v7313 = vunpack.c.l.b16 %v7025
      %v7314 = vunpack.c.l.b16 %v7026
      %v7315 = vunpack.c.l.b16 %v7027
      %v7316 = vunpack.c.l.b16 %v7028
      %v7317 = vunpack.c.l.b16 %v7029
      %v7318 = vunpack.c.l.b16 %v7030
      %v7319 = vunpack.c.l.b16 %v7031
      %v7320 = vunpack.c.l.b16 %v7032
      %v7321 = vunpack.c.l.b16 %v7033
      %v7322 = vunpack.c.l.b16 %v7034
      %v7323 = vunpack.c.l.b16 %v7035
      %v7324 = vunpack.c.l.b16 %v7036
      %v7325 = vunpack.c.l.b16 %v7037
      %v7326 = vunpack.c.l.b16 %v7038
      %v7327 = vunpack.c.l.b16 %v7039
      %v7328 = vunpack.c.l.b16 %v7040
      %v7329 = vunpack.c.l.b16 %v7041
      %v7330 = vunpack.c.l.b16 %v7042
      %v7331 = vunpack.c.l.b16 %v7043
      %v7332 = vunpack.c.l.b16 %v7044
      %v7333 = vunpack.c.l.b16 %v7045
      %v7334 = vunpack.c.l.b16 %v7046
      %v7335 = vunpack.c.l.b16 %v7047
      %v7336 = vunpack.c.l.b16 %v7048
      %v7337 = vunpack.c.l.b16 %v7049
      %v7338 = vunpack.c.l.b16 %v7050
      %v7339 = vunpack.c.l.b16 %v7051
      %v7340 = vunpack.c.l.b16 %v7052
      %v7341 = vunpack.c.l.b16 %v7053
      %v7342 = vunpack.c.l.b16 %v7054
      %v7343 = vunpack.c.l.b16 %v7055
      %v7344 = vunpack.c.l.b16 %v7056
      %v7345 = vunpack.c.l.b16 %v7057
      %v7346 = vunpack.c.l.b16 %v7058
      %v7347 = vunpack.c.l.b16 %v7059
      %v7348 = vunpack.c.l.b16 %v7060
      %v7349 = vunpack.c.l.b16 %v7061
      %v7350 = vunpack.c.l.b16 %v7062
      %v7351 = vunpack.c.l.b16 %v7063
      %v7352 = vunpack.c.l.b16 %v7064
      %v7353 = vunpack.c.l.b16 %v7065
      %v7354 = vunpack.c.l.b16 %v7066
      %v7355 = vunpack.c.l.b16 %v7067
      %v7356 = vunpack.c.l.b16 %v7068
      %v7357 = vunpack.c.l.b16 %v7069
      %v7358 = vunpack.c.l.b16 %v7070
      %v7359 = vunpack.c.l.b16 %v7071
      %v7360 = vunpack.c.l.b16 %v7072
      %v7361 = vunpack.c.l.b16 %v7073
      %v7362 = vunpack.c.l.b16 %v7074
      %v7363 = vunpack.c.l.b16 %v7075
      %v7364 = vunpack.c.l.b16 %v7076
      %v7365 = vunpack.c.l.b16 %v7077
      %v7366 = vunpack.c.l.b16 %v7078
      %v7367 = vunpack.c.l.b16 %v7079
      %v7368 = vunpack.c.l.b16 %v7080
      %v7369 = vunpack.c.l.b16 %v7081
      %v7370 = vunpack.c.l.b16 %v7082
      %v7371 = vunpack.c.l.b16 %v7083
      %v7372 = vunpack.c.l.b16 %v7084
      %v7373 = vunpack.c.l.b16 %v7085
      %v7374 = vunpack.c.l.b16 %v7086
      %v7375 = vunpack.c.l.b16 %v7087
      %v7376 = vunpack.c.l.b16 %v7088
      %v7377 = vunpack.c.l.b16 %v7089
      %v7378 = vunpack.c.l.b16 %v7090
      %v7379 = vpack.c.b16 %v7236, %v7235
      %v7380 = vpack.c.b16 %v7238, %v7237
      %v7381 = vpack.c.b16 %v7240, %v7239
      %v7382 = vpack.c.b16 %v7242, %v7241
      %v7383 = vpack.c.b16 %v7244, %v7243
      %v7384 = vpack.c.b16 %v7246, %v7245
      %v7385 = vpack.c.b16 %v7248, %v7247
      %v7386 = vpack.c.b16 %v7250, %v7249
      %v7387 = vpack.c.b16 %v7252, %v7251
      %v7388 = vpack.c.b16 %v7254, %v7253
      %v7389 = vpack.c.b16 %v7256, %v7255
      %v7390 = vpack.c.b16 %v7258, %v7257
      %v7391 = vpack.c.b16 %v7260, %v7259
      %v7392 = vpack.c.b16 %v7262, %v7261
      %v7393 = vpack.c.b16 %v7264, %v7263
      %v7394 = vpack.c.b16 %v7266, %v7265
      %v7395 = vpack.c.b16 %v7268, %v7267
      %v7396 = vpack.c.b16 %v7270, %v7269
      %v7397 = vpack.c.b16 %v7272, %v7271
      %v7398 = vpack.c.b16 %v7274, %v7273
      %v7399 = vpack.c.b16 %v7276, %v7275
      %v7400 = vpack.c.b16 %v7278, %v7277
      %v7401 = vpack.c.b16 %v7280, %v7279
      %v7402 = vpack.c.b16 %v7282, %v7281
      %v7403 = vpack.c.b16 %v7284, %v7283
      %v7404 = vpack.c.b16 %v7286, %v7285
      %v7405 = vpack.c.b16 %v7288, %v7287
      %v7406 = vpack.c.b16 %v7290, %v7289
      %v7407 = vpack.c.b16 %v7292, %v7291
      %v7408 = vpack.c.b16 %v7294, %v7293
      %v7409 = vpack.c.b16 %v7296, %v7295
      %v7410 = vpack.c.b16 %v7298, %v7297
      %v7411 = vpack.c.b16 %v7300, %v7299
      %v7412 = vpack.c.b16 %v7302, %v7301
      %v7413 = vpack.c.b16 %v7304, %v7303
      %v7414 = vpack.c.b16 %v7306, %v7305
      %v7415 = vpack.c.b16 %v7308, %v7307
      %v7416 = vpack.c.b16 %v7310, %v7309
      %v7417 = vpack.c.b16 %v7312, %v7311
      %v7418 = vpack.c.b16 %v7314, %v7313
      %v7419 = vpack.c.b16 %v7316, %v7315
      %v7420 = vpack.c.b16 %v7318, %v7317
      %v7421 = vpack.c.b16 %v7320, %v7319
      %v7422 = vpack.c.b16 %v7322, %v7321
      %v7423 = vpack.c.b16 %v7324, %v7323
      %v7424 = vpack.c.b16 %v7326, %v7325
      %v7425 = vpack.c.b16 %v7328, %v7327
      %v7426 = vpack.c.b16 %v7330, %v7329
      %v7427 = vpack.c.b16 %v7332, %v7331
      %v7428 = vpack.c.b16 %v7334, %v7333
      %v7429 = vpack.c.b16 %v7336, %v7335
      %v7430 = vpack.c.b16 %v7338, %v7337
      %v7431 = vpack.c.b16 %v7340, %v7339
      %v7432 = vpack.c.b16 %v7342, %v7341
      %v7433 = vpack.c.b16 %v7344, %v7343
      %v7434 = vpack.c.b16 %v7346, %v7345
      %v7435 = vpack.c.b16 %v7348, %v7347
      %v7436 = vpack.c.b16 %v7350, %v7349
      %v7437 = vpack.c.b16 %v7352, %v7351
      %v7438 = vpack.c.b16 %v7354, %v7353
      %v7439 = vpack.c.b16 %v7356, %v7355
      %v7440 = vpack.c.b16 %v7358, %v7357
      %v7441 = vpack.c.b16 %v7360, %v7359
      %v7442 = vpack.c.b16 %v7362, %v7361
      %v7443 = vpack.c.b16 %v7364, %v7363
      %v7444 = vpack.c.b16 %v7366, %v7365
      %v7445 = vpack.c.b16 %v7368, %v7367
      %v7446 = vpack.c.b16 %v7370, %v7369
      %v7447 = vpack.c.b16 %v7372, %v7371
      %v7448 = vpack.c.b16 %v7374, %v7373
      %v7449 = vpack.c.b16 %v7376, %v7375
      %v7450 = vpack.c.b16 %v7378, %v7377
      %7523 = vmatprep.subr.bf16.mxu0 0
      %7524 = vmatpush1.bf16.msra.mxu0 %v7379
      %7525 = vmatprep.subr.bf16.mxu0 0
      %7526 = vmatpush1.bf16.msra.mxu0 %v7380
      %7527 = vmatprep.subr.bf16.mxu0 0
      %7528 = vmatpush1.bf16.msra.mxu0 %v7381
      %7529 = vmatprep.subr.bf16.mxu0 0
      %7530 = vmatpush1.bf16.msra.mxu0 %v7382
      %7531 = vmatprep.subr.bf16.mxu0 0
      %7532 = vmatpush1.bf16.msra.mxu0 %v7383
      %7533 = vmatprep.subr.bf16.mxu0 0
      %7534 = vmatpush1.bf16.msra.mxu0 %v7384
      %7535 = vmatprep.subr.bf16.mxu0 0
      %7536 = vmatpush1.bf16.msra.mxu0 %v7385
      %7537 = vmatprep.subr.bf16.mxu0 0
      %7538 = vmatpush1.bf16.msra.mxu0 %v7386
      %7539 = vmatprep.subr.bf16.mxu0 0
      %7540 = vmatpush1.bf16.msra.mxu0 %v7387
      %7541 = vmatprep.subr.bf16.mxu0 0
      %7542 = vmatpush1.bf16.msra.mxu0 %v7388
      %7543 = vmatprep.subr.bf16.mxu0 0
      %7544 = vmatpush1.bf16.msra.mxu0 %v7389
      %7545 = vmatprep.subr.bf16.mxu0 0
      %7546 = vmatpush1.bf16.msra.mxu0 %v7390
      %7547 = vmatprep.subr.bf16.mxu0 0
      %7548 = vmatpush1.bf16.msra.mxu0 %v7391
      %7549 = vmatprep.subr.bf16.mxu0 0
      %7550 = vmatpush1.bf16.msra.mxu0 %v7392
      %7551 = vmatprep.subr.bf16.mxu0 0
      %7552 = vmatpush1.bf16.msra.mxu0 %v7393
      %7553 = vmatprep.subr.bf16.mxu0 0
      %7554 = vmatpush1.bf16.msra.mxu0 %v7394
      %7555 = vmatprep.mubr.bf16.mxu0 %v6867
      %7556 = vmatmul.mubr.bf16.gmra.mrb[0].mxu0 %v6866
      %v7557 = vpop.f32.mrb[0].mxu0
      %v7558 = vadd.f32 0.0, %v7557
      %v7559 = vpop.f32.mrb[0].mxu0
      %v7560 = vpop.f32.mrb[0].mxu0
      %v7561 = vadd.f32 0.0, %v7560
      %v7562 = vpop.f32.mrb[0].mxu0
      %7563 = vmatprep.mubr.bf16.mxu0 %v6876
      %7564 = vmatmul.mubr.bf16.gmra.mrb[0].mxu0 %v6875
      %v7565 = vpop.f32.mrb[0].mxu0
      %v7566 = vadd.f32 0.0, %v7565
      %v7567 = vpop.f32.mrb[0].mxu0
      %v7568 = vpop.f32.mrb[0].mxu0
      %v7569 = vadd.f32 0.0, %v7568
      %v7570 = vpop.f32.mrb[0].mxu0
      %7571 = vmatprep.mubr.bf16.mxu0 %v6885
      %7572 = vmatmul.mubr.bf16.gmra.mrb[0].mxu0 %v6884
      %v7573 = vpop.f32.mrb[0].mxu0
      %v7574 = vadd.f32 0.0, %v7573
      %v7575 = vpop.f32.mrb[0].mxu0
      %v7576 = vpop.f32.mrb[0].mxu0
      %v7577 = vadd.f32 0.0, %v7576
      %v7578 = vpop.f32.mrb[0].mxu0
      %7579 = vmatprep.mubr.bf16.mxu0 %v6894
      %7580 = vmatmul.mubr.bf16.gmra.mrb[0].mxu0 %v6893
      %v7581 = vpop.f32.mrb[0].mxu0
      %v7582 = vadd.f32 0.0, %v7581
      %v7583 = vpop.f32.mrb[0].mxu0
      %v7584 = vpop.f32.mrb[0].mxu0
      %v7585 = vadd.f32 0.0, %v7584
      %v7586 = vpop.f32.mrb[0].mxu0
      %7587 = vmatprep.mubr.bf16.mxu0 %v6903
      %7588 = vmatmul.mubr.bf16.gmra.mrb[0].mxu0 %v6902
      %v7589 = vpop.f32.mrb[0].mxu0
      %v7590 = vadd.f32 0.0, %v7589
      %v7591 = vpop.f32.mrb[0].mxu0
      %v7592 = vpop.f32.mrb[0].mxu0
      %v7593 = vadd.f32 0.0, %v7592
      %v7594 = vpop.f32.mrb[0].mxu0
      %7595 = vmatprep.mubr.bf16.mxu0 %v6912
      %7596 = vmatmul.mubr.bf16.gmra.mrb[0].mxu0 %v6911
      %v7597 = vpop.f32.mrb[0].mxu0
      %v7598 = vadd.f32 0.0, %v7597
      %v7599 = vpop.f32.mrb[0].mxu0
      %v7600 = vpop.f32.mrb[0].mxu0
      %v7601 = vadd.f32 0.0, %v7600
      %v7602 = vpop.f32.mrb[0].mxu0
      %7603 = vmatprep.mubr.bf16.mxu0 %v6921
      %7604 = vmatmul.mubr.bf16.gmra.mrb[0].mxu0 %v6920
      %v7605 = vpop.f32.mrb[0].mxu0
      %v7606 = vadd.f32 0.0, %v7605
      %v7607 = vpop.f32.mrb[0].mxu0
      %v7608 = vpop.f32.mrb[0].mxu0
      %v7609 = vadd.f32 0.0, %v7608
      %v7610 = vpop.f32.mrb[0].mxu0
      %7611 = vmatprep.mubr.bf16.mxu0 %v6930
      %7612 = vmatmul.mubr.bf16.gmra.mrb[0].mxu0 %v6929
      %v7613 = vpop.f32.mrb[0].mxu0
      %v7614 = vadd.f32 0.0, %v7613
      %v7615 = vpop.f32.mrb[0].mxu0
      %v7616 = vpop.f32.mrb[0].mxu0
      %v7617 = vadd.f32 0.0, %v7616
      %v7618 = vpop.f32.mrb[0].mxu0
      %7619 = vmatprep.mubr.bf16.mxu0 %v6939
      %7620 = vmatmul.mubr.bf16.gmra.mrb[0].mxu0 %v6938
      %v7621 = vpop.f32.mrb[0].mxu0
      %v7622 = vadd.f32 0.0, %v7621
      %v7623 = vpop.f32.mrb[0].mxu0
      %v7624 = vpop.f32.mrb[0].mxu0
      %v7625 = vadd.f32 0.0, %v7624
      %v7626 = vpop.f32.mrb[0].mxu0
      %7627 = vdwg.mxu0
      %7628 = vmatprep.subr.bf16.mxu0 0
      %7629 = vmatpush1.bf16.msra.mxu0 %v7395
      %7630 = vmatprep.subr.bf16.mxu0 0
      %7631 = vmatpush1.bf16.msra.mxu0 %v7396
      %7632 = vmatprep.subr.bf16.mxu0 0
      %7633 = vmatpush1.bf16.msra.mxu0 %v7397
      %7634 = vmatprep.subr.bf16.mxu0 0
      %7635 = vmatpush1.bf16.msra.mxu0 %v7398
      %7636 = vmatprep.subr.bf16.mxu0 0
      %7637 = vmatpush1.bf16.msra.mxu0 %v7399
      %7638 = vmatprep.subr.bf16.mxu0 0
      %7639 = vmatpush1.bf16.msra.mxu0 %v7400
      %7640 = vmatprep.subr.bf16.mxu0 0
      %7641 = vmatpush1.bf16.msra.mxu0 %v7401
      %7642 = vmatprep.subr.bf16.mxu0 0
      %7643 = vmatpush1.bf16.msra.mxu0 %v7402
      %7644 = vmatprep.subr.bf16.mxu0 0
      %7645 = vmatpush1.bf16.msra.mxu0 %v7403
      %7646 = vmatprep.subr.bf16.mxu0 0
      %7647 = vmatpush1.bf16.msra.mxu0 %v7404
      %7648 = vmatprep.subr.bf16.mxu0 0
      %7649 = vmatpush1.bf16.msra.mxu0 %v7405
      %7650 = vmatprep.subr.bf16.mxu0 0
      %7651 = vmatpush1.bf16.msra.mxu0 %v7406
      %7652 = vmatprep.subr.bf16.mxu0 0
      %7653 = vmatpush1.bf16.msra.mxu0 %v7407
      %7654 = vmatprep.subr.bf16.mxu0 0
      %7655 = vmatpush1.bf16.msra.mxu0 %v7408
      %7656 = vmatprep.subr.bf16.mxu0 0
      %7657 = vmatpush1.bf16.msra.mxu0 %v7409
      %7658 = vmatprep.subr.bf16.mxu0 0
      %7659 = vmatpush1.bf16.msra.mxu0 %v7410
      %7660 = vmatprep.mubr.bf16.mxu0 %v6869
      %7661 = vmatmul.mubr.bf16.gmra.mrb[0].mxu0 %v6868
      %v7662 = vpop.f32.mrb[0].mxu0
      %v7663 = vadd.f32 %v7558, %v7662
      %v7664 = vpop.f32.mrb[0].mxu0
      %v7665 = vpop.f32.mrb[0].mxu0
      %v7666 = vadd.f32 %v7561, %v7665
      %v7667 = vpop.f32.mrb[0].mxu0
      %7668 = vmatprep.mubr.bf16.mxu0 %v6878
      %7669 = vmatmul.mubr.bf16.gmra.mrb[0].mxu0 %v6877
      %v7670 = vpop.f32.mrb[0].mxu0
      %v7671 = vadd.f32 %v7566, %v7670
      %v7672 = vpop.f32.mrb[0].mxu0
      %v7673 = vpop.f32.mrb[0].mxu0
      %v7674 = vadd.f32 %v7569, %v7673
      %v7675 = vpop.f32.mrb[0].mxu0
      %7676 = vmatprep.mubr.bf16.mxu0 %v6887
      %7677 = vmatmul.mubr.bf16.gmra.mrb[0].mxu0 %v6886
      %v7678 = vpop.f32.mrb[0].mxu0
      %v7679 = vadd.f32 %v7574, %v7678
      %v7680 = vpop.f32.mrb[0].mxu0
      %v7681 = vpop.f32.mrb[0].mxu0
      %v7682 = vadd.f32 %v7577, %v7681
      %v7683 = vpop.f32.mrb[0].mxu0
      %7684 = vmatprep.mubr.bf16.mxu0 %v6896
      %7685 = vmatmul.mubr.bf16.gmra.mrb[0].mxu0 %v6895
      %v7686 = vpop.f32.mrb[0].mxu0
      %v7687 = vadd.f32 %v7582, %v7686
      %v7688 = vpop.f32.mrb[0].mxu0
      %v7689 = vpop.f32.mrb[0].mxu0
      %v7690 = vadd.f32 %v7585, %v7689
      %v7691 = vpop.f32.mrb[0].mxu0
      %7692 = vmatprep.mubr.bf16.mxu0 %v6905
      %7693 = vmatmul.mubr.bf16.gmra.mrb[0].mxu0 %v6904
      %v7694 = vpop.f32.mrb[0].mxu0
      %v7695 = vadd.f32 %v7590, %v7694
      %v7696 = vpop.f32.mrb[0].mxu0
      %v7697 = vpop.f32.mrb[0].mxu0
      %v7698 = vadd.f32 %v7593, %v7697
      %v7699 = vpop.f32.mrb[0].mxu0
      %7700 = vmatprep.mubr.bf16.mxu0 %v6914
      %7701 = vmatmul.mubr.bf16.gmra.mrb[0].mxu0 %v6913
      %v7702 = vpop.f32.mrb[0].mxu0
      %v7703 = vadd.f32 %v7598, %v7702
      %v7704 = vpop.f32.mrb[0].mxu0
      %v7705 = vpop.f32.mrb[0].mxu0
      %v7706 = vadd.f32 %v7601, %v7705
      %v7707 = vpop.f32.mrb[0].mxu0
      %7708 = vmatprep.mubr.bf16.mxu0 %v6923
      %7709 = vmatmul.mubr.bf16.gmra.mrb[0].mxu0 %v6922
      %v7710 = vpop.f32.mrb[0].mxu0
      %v7711 = vadd.f32 %v7606, %v7710
      %v7712 = vpop.f32.mrb[0].mxu0
      %v7713 = vpop.f32.mrb[0].mxu0
      %v7714 = vadd.f32 %v7609, %v7713
      %v7715 = vpop.f32.mrb[0].mxu0
      %7716 = vmatprep.mubr.bf16.mxu0 %v6932
      %7717 = vmatmul.mubr.bf16.gmra.mrb[0].mxu0 %v6931
      %v7718 = vpop.f32.mrb[0].mxu0
      %v7719 = vadd.f32 %v7614, %v7718
      %v7720 = vpop.f32.mrb[0].mxu0
      %v7721 = vpop.f32.mrb[0].mxu0
      %v7722 = vadd.f32 %v7617, %v7721
      %v7723 = vpop.f32.mrb[0].mxu0
      %7724 = vmatprep.mubr.bf16.mxu0 %v6941
      %7725 = vmatmul.mubr.bf16.gmra.mrb[0].mxu0 %v6940
      %v7726 = vpop.f32.mrb[0].mxu0
      %v7727 = vadd.f32 %v7622, %v7726
      %v7728 = vpop.f32.mrb[0].mxu0
      %v7729 = vpop.f32.mrb[0].mxu0
      %v7730 = vadd.f32 %v7625, %v7729
      %v7731 = vpop.f32.mrb[0].mxu0
      %7732 = vdwg.mxu0
      %7733 = vmatprep.subr.bf16.mxu0 0
      %7734 = vmatpush1.bf16.msra.mxu0 %v7411
      %7735 = vmatprep.subr.bf16.mxu0 0
      %7736 = vmatpush1.bf16.msra.mxu0 %v7412
      %7737 = vmatprep.subr.bf16.mxu0 0
      %7738 = vmatpush1.bf16.msra.mxu0 %v7413
      %7739 = vmatprep.subr.bf16.mxu0 0
      %7740 = vmatpush1.bf16.msra.mxu0 %v7414
      %7741 = vmatprep.subr.bf16.mxu0 0
      %7742 = vmatpush1.bf16.msra.mxu0 %v7415
      %7743 = vmatprep.subr.bf16.mxu0 0
      %7744 = vmatpush1.bf16.msra.mxu0 %v7416
      %7745 = vmatprep.subr.bf16.mxu0 0
      %7746 = vmatpush1.bf16.msra.mxu0 %v7417
      %7747 = vmatprep.subr.bf16.mxu0 0
      %7748 = vmatpush1.bf16.msra.mxu0 %v7418
      %7749 = vmatprep.subr.bf16.mxu0 0
      %7750 = vmatpush1.bf16.msra.mxu0 %v7419
      %7751 = vmatprep.subr.bf16.mxu0 0
      %7752 = vmatpush1.bf16.msra.mxu0 %v7420
      %7753 = vmatprep.subr.bf16.mxu0 0
      %7754 = vmatpush1.bf16.msra.mxu0 %v7421
      %7755 = vmatprep.subr.bf16.mxu0 0
      %7756 = vmatpush1.bf16.msra.mxu0 %v7422
      %7757 = vmatprep.subr.bf16.mxu0 0
      %7758 = vmatpush1.bf16.msra.mxu0 %v7423
      %7759 = vmatprep.subr.bf16.mxu0 0
      %7760 = vmatpush1.bf16.msra.mxu0 %v7424
      %7761 = vmatprep.subr.bf16.mxu0 0
      %7762 = vmatpush1.bf16.msra.mxu0 %v7425
      %7763 = vmatprep.subr.bf16.mxu0 0
      %7764 = vmatpush1.bf16.msra.mxu0 %v7426
      %7765 = vmatprep.mubr.bf16.mxu0 %v6871
      %7766 = vmatmul.mubr.bf16.gmra.mrb[0].mxu0 %v6870
      %v7767 = vpop.f32.mrb[0].mxu0
      %v7768 = vadd.f32 %v7663, %v7767
      %v7769 = vpop.f32.mrb[0].mxu0
      %v7770 = vpop.f32.mrb[0].mxu0
      %v7771 = vadd.f32 %v7666, %v7770
      %v7772 = vpop.f32.mrb[0].mxu0
      %7773 = vmatprep.mubr.bf16.mxu0 %v6880
      %7774 = vmatmul.mubr.bf16.gmra.mrb[0].mxu0 %v6879
      %v7775 = vpop.f32.mrb[0].mxu0
      %v7776 = vadd.f32 %v7671, %v7775
      %v7777 = vpop.f32.mrb[0].mxu0
      %v7778 = vpop.f32.mrb[0].mxu0
      %v7779 = vadd.f32 %v7674, %v7778
      %v7780 = vpop.f32.mrb[0].mxu0
      %7781 = vmatprep.mubr.bf16.mxu0 %v6889
      %7782 = vmatmul.mubr.bf16.gmra.mrb[0].mxu0 %v6888
      %v7783 = vpop.f32.mrb[0].mxu0
      %v7784 = vadd.f32 %v7679, %v7783
      %v7785 = vpop.f32.mrb[0].mxu0
      %v7786 = vpop.f32.mrb[0].mxu0
      %v7787 = vadd.f32 %v7682, %v7786
      %v7788 = vpop.f32.mrb[0].mxu0
      %7789 = vmatprep.mubr.bf16.mxu0 %v6898
      %7790 = vmatmul.mubr.bf16.gmra.mrb[0].mxu0 %v6897
      %v7791 = vpop.f32.mrb[0].mxu0
      %v7792 = vadd.f32 %v7687, %v7791
      %v7793 = vpop.f32.mrb[0].mxu0
      %v7794 = vpop.f32.mrb[0].mxu0
      %v7795 = vadd.f32 %v7690, %v7794
      %v7796 = vpop.f32.mrb[0].mxu0
      %7797 = vmatprep.mubr.bf16.mxu0 %v6907
      %7798 = vmatmul.mubr.bf16.gmra.mrb[0].mxu0 %v6906
      %v7799 = vpop.f32.mrb[0].mxu0
      %v7800 = vadd.f32 %v7695, %v7799
      %v7801 = vpop.f32.mrb[0].mxu0
      %v7802 = vpop.f32.mrb[0].mxu0
      %v7803 = vadd.f32 %v7698, %v7802
      %v7804 = vpop.f32.mrb[0].mxu0
      %7805 = vmatprep.mubr.bf16.mxu0 %v6916
      %7806 = vmatmul.mubr.bf16.gmra.mrb[0].mxu0 %v6915
      %v7807 = vpop.f32.mrb[0].mxu0
      %v7808 = vadd.f32 %v7703, %v7807
      %v7809 = vpop.f32.mrb[0].mxu0
      %v7810 = vpop.f32.mrb[0].mxu0
      %v7811 = vadd.f32 %v7706, %v7810
      %v7812 = vpop.f32.mrb[0].mxu0
      %7813 = vmatprep.mubr.bf16.mxu0 %v6925
      %7814 = vmatmul.mubr.bf16.gmra.mrb[0].mxu0 %v6924
      %v7815 = vpop.f32.mrb[0].mxu0
      %v7816 = vadd.f32 %v7711, %v7815
      %v7817 = vpop.f32.mrb[0].mxu0
      %v7818 = vpop.f32.mrb[0].mxu0
      %v7819 = vadd.f32 %v7714, %v7818
      %v7820 = vpop.f32.mrb[0].mxu0
      %7821 = vmatprep.mubr.bf16.mxu0 %v6934
      %7822 = vmatmul.mubr.bf16.gmra.mrb[0].mxu0 %v6933
      %v7823 = vpop.f32.mrb[0].mxu0
      %v7824 = vadd.f32 %v7719, %v7823
      %v7825 = vpop.f32.mrb[0].mxu0
      %v7826 = vpop.f32.mrb[0].mxu0
      %v7827 = vadd.f32 %v7722, %v7826
      %v7828 = vpop.f32.mrb[0].mxu0
      %7829 = vmatprep.mubr.bf16.mxu0 %v6943
      %7830 = vmatmul.mubr.bf16.gmra.mrb[0].mxu0 %v6942
      %v7831 = vpop.f32.mrb[0].mxu0
      %v7832 = vadd.f32 %v7727, %v7831
      %v7833 = vpop.f32.mrb[0].mxu0
      %v7834 = vpop.f32.mrb[0].mxu0
      %v7835 = vadd.f32 %v7730, %v7834
      %v7836 = vpop.f32.mrb[0].mxu0
      %7837 = vdwg.mxu0
      %7838 = vmatprep.subr.bf16.mxu0 0
      %7839 = vmatpush1.bf16.msra.mxu0 %v7427
      %7840 = vmatprep.subr.bf16.mxu0 0
      %7841 = vmatpush1.bf16.msra.mxu0 %v7428
      %7842 = vmatprep.subr.bf16.mxu0 0
      %7843 = vmatpush1.bf16.msra.mxu0 %v7429
      %7844 = vmatprep.subr.bf16.mxu0 0
      %7845 = vmatpush1.bf16.msra.mxu0 %v7430
      %7846 = vmatprep.subr.bf16.mxu0 0
      %7847 = vmatpush1.bf16.msra.mxu0 %v7431
      %7848 = vmatprep.subr.bf16.mxu0 0
      %7849 = vmatpush1.bf16.msra.mxu0 %v7432
      %7850 = vmatprep.subr.bf16.mxu0 0
      %7851 = vmatpush1.bf16.msra.mxu0 %v7433
      %7852 = vmatprep.subr.bf16.mxu0 0
      %7853 = vmatpush1.bf16.msra.mxu0 %v7434
      %7854 = vmatprep.subr.bf16.mxu0 0
      %7855 = vmatpush1.bf16.msra.mxu0 %v7435
      %7856 = vmatprep.subr.bf16.mxu0 0
      %7857 = vmatpush1.bf16.msra.mxu0 %v7436
      %7858 = vmatprep.subr.bf16.mxu0 0
      %7859 = vmatpush1.bf16.msra.mxu0 %v7437
      %7860 = vmatprep.subr.bf16.mxu0 0
      %7861 = vmatpush1.bf16.msra.mxu0 %v7438
      %7862 = vmatprep.subr.bf16.mxu0 0
      %7863 = vmatpush1.bf16.msra.mxu0 %v7439
      %7864 = vmatprep.subr.bf16.mxu0 0
      %7865 = vmatpush1.bf16.msra.mxu0 %v7440
      %7866 = vmatprep.subr.bf16.mxu0 0
      %7867 = vmatpush1.bf16.msra.mxu0 %v7441
      %7868 = vmatprep.subr.bf16.mxu0 0
      %7869 = vmatpush1.bf16.msra.mxu0 %v7442
      %7870 = vmatprep.mubr.bf16.mxu0 %v6873
      %7871 = vmatmul.mubr.bf16.gmra.mrb[0].mxu0 %v6872
      %v7872 = vpop.f32.mrb[0].mxu0
      %v7873 = vadd.f32 %v7768, %v7872
      %v7874 = vpop.f32.mrb[0].mxu0
      %v7875 = vpop.f32.mrb[0].mxu0
      %v7876 = vadd.f32 %v7771, %v7875
      %v7877 = vpop.f32.mrb[0].mxu0
      %7878 = vmatprep.mubr.bf16.mxu0 %v6882
      %7879 = vmatmul.mubr.bf16.gmra.mrb[0].mxu0 %v6881
      %v7880 = vpop.f32.mrb[0].mxu0
      %v7881 = vadd.f32 %v7776, %v7880
      %v7882 = vpop.f32.mrb[0].mxu0
      %v7883 = vpop.f32.mrb[0].mxu0
      %v7884 = vadd.f32 %v7779, %v7883
      %v7885 = vpop.f32.mrb[0].mxu0
      %7886 = vmatprep.mubr.bf16.mxu0 %v6891
      %7887 = vmatmul.mubr.bf16.gmra.mrb[0].mxu0 %v6890
      %v7888 = vpop.f32.mrb[0].mxu0
      %v7889 = vadd.f32 %v7784, %v7888
      %v7890 = vpop.f32.mrb[0].mxu0
      %v7891 = vpop.f32.mrb[0].mxu0
      %v7892 = vadd.f32 %v7787, %v7891
      %v7893 = vpop.f32.mrb[0].mxu0
      %7894 = vmatprep.mubr.bf16.mxu0 %v6900
      %7895 = vmatmul.mubr.bf16.gmra.mrb[0].mxu0 %v6899
      %v7896 = vpop.f32.mrb[0].mxu0
      %v7897 = vadd.f32 %v7792, %v7896
      %v7898 = vpop.f32.mrb[0].mxu0
      %v7899 = vpop.f32.mrb[0].mxu0
      %v7900 = vadd.f32 %v7795, %v7899
      %v7901 = vpop.f32.mrb[0].mxu0
      %7902 = vmatprep.mubr.bf16.mxu0 %v6909
      %7903 = vmatmul.mubr.bf16.gmra.mrb[0].mxu0 %v6908
      %v7904 = vpop.f32.mrb[0].mxu0
      %v7905 = vadd.f32 %v7800, %v7904
      %v7906 = vpop.f32.mrb[0].mxu0
      %v7907 = vpop.f32.mrb[0].mxu0
      %v7908 = vadd.f32 %v7803, %v7907
      %v7909 = vpop.f32.mrb[0].mxu0
      %7910 = vmatprep.mubr.bf16.mxu0 %v6918
      %7911 = vmatmul.mubr.bf16.gmra.mrb[0].mxu0 %v6917
      %v7912 = vpop.f32.mrb[0].mxu0
      %v7913 = vadd.f32 %v7808, %v7912
      %v7914 = vpop.f32.mrb[0].mxu0
      %v7915 = vpop.f32.mrb[0].mxu0
      %v7916 = vadd.f32 %v7811, %v7915
      %v7917 = vpop.f32.mrb[0].mxu0
      %7918 = vmatprep.mubr.bf16.mxu0 %v6927
      %7919 = vmatmul.mubr.bf16.gmra.mrb[0].mxu0 %v6926
      %v7920 = vpop.f32.mrb[0].mxu0
      %v7921 = vadd.f32 %v7816, %v7920
      %v7922 = vpop.f32.mrb[0].mxu0
      %v7923 = vpop.f32.mrb[0].mxu0
      %v7924 = vadd.f32 %v7819, %v7923
      %v7925 = vpop.f32.mrb[0].mxu0
      %7926 = vmatprep.mubr.bf16.mxu0 %v6936
      %7927 = vmatmul.mubr.bf16.gmra.mrb[0].mxu0 %v6935
      %v7928 = vpop.f32.mrb[0].mxu0
      %v7929 = vadd.f32 %v7824, %v7928
      %v7930 = vpop.f32.mrb[0].mxu0
      %v7931 = vpop.f32.mrb[0].mxu0
      %v7932 = vadd.f32 %v7827, %v7931
      %v7933 = vpop.f32.mrb[0].mxu0
      %7934 = vmatprep.mubr.bf16.mxu0 %v6945
      %7935 = vmatmul.mubr.bf16.gmra.mrb[0].mxu0 %v6944
      %v7936 = vpop.f32.mrb[0].mxu0
      %v7937 = vadd.f32 %v7832, %v7936
      %v7938 = vpop.f32.mrb[0].mxu0
      %v7939 = vpop.f32.mrb[0].mxu0
      %v7940 = vadd.f32 %v7835, %v7939
      %v7941 = vpop.f32.mrb[0].mxu0
      %7942 = vdwg.mxu0
      %7943 = vmatprep.subr.bf16.mxu0 0
      %7944 = vmatpush1.bf16.msra.mxu0 %v7443
      %7945 = vmatprep.subr.bf16.mxu0 0
      %7946 = vmatpush1.bf16.msra.mxu0 %v7444
      %7947 = vmatprep.subr.bf16.mxu0 0
      %7948 = vmatpush1.bf16.msra.mxu0 %v7445
      %7949 = vmatprep.subr.bf16.mxu0 0
      %7950 = vmatpush1.bf16.msra.mxu0 %v7446
      %7951 = vmatprep.subr.bf16.mxu0 0
      %7952 = vmatpush1.bf16.msra.mxu0 %v7447
      %7953 = vmatprep.subr.bf16.mxu0 0
      %7954 = vmatpush1.bf16.msra.mxu0 %v7448
      %7955 = vmatprep.subr.bf16.mxu0 0
      %7956 = vmatpush1.bf16.msra.mxu0 %v7449
      %7957 = vmatprep.subr.bf16.mxu0 0
      %7958 = vmatpush1.bf16.msra.mxu0 %v7450
      %7959 = vmatprep.subr.bf16.mxu0 0
      %7960 = vmatpush1.bf16.msra.mxu0 0
      %7961 = vmatprep.subr.bf16.mxu0 0
      %7962 = vmatpush1.bf16.msra.mxu0 0
      %7963 = vmatprep.subr.bf16.mxu0 0
      %7964 = vmatpush1.bf16.msra.mxu0 0
      %7965 = vmatprep.subr.bf16.mxu0 0
      %7966 = vmatpush1.bf16.msra.mxu0 0
      %7967 = vmatprep.subr.bf16.mxu0 0
      %7968 = vmatpush1.bf16.msra.mxu0 0
      %7969 = vmatprep.subr.bf16.mxu0 0
      %7970 = vmatpush1.bf16.msra.mxu0 0
      %7971 = vmatprep.subr.bf16.mxu0 0
      %7972 = vmatpush1.bf16.msra.mxu0 0
      %7973 = vmatprep.subr.bf16.mxu0 0
      %7974 = vmatpush1.bf16.msra.mxu0 0
      %7975 = vmatprep.mubr.bf16.mxu0 0
      %7976 = vmatmul.mubr.bf16.gmra.mrb[0].mxu0 %v6874
      %v7977 = vpop.f32.mrb[0].mxu0
      %v7978 = vadd.f32 %v7873, %v7977
      %v7979 = vpop.f32.mrb[0].mxu0
      %v7980 = vpop.f32.mrb[0].mxu0
      %v7981 = vadd.f32 %v7876, %v7980
      %v7982 = vpop.f32.mrb[0].mxu0
      %7983 = vmatprep.mubr.bf16.mxu0 0
      %7984 = vmatmul.mubr.bf16.gmra.mrb[0].mxu0 %v6883
      %v7985 = vpop.f32.mrb[0].mxu0
      %v7986 = vadd.f32 %v7881, %v7985
      %v7987 = vpop.f32.mrb[0].mxu0
      %v7988 = vpop.f32.mrb[0].mxu0
      %v7989 = vadd.f32 %v7884, %v7988
      %v7990 = vpop.f32.mrb[0].mxu0
      %7991 = vmatprep.mubr.bf16.mxu0 0
      %7992 = vmatmul.mubr.bf16.gmra.mrb[0].mxu0 %v6892
      %v7993 = vpop.f32.mrb[0].mxu0
      %v7994 = vadd.f32 %v7889, %v7993
      %v7995 = vpop.f32.mrb[0].mxu0
      %v7996 = vpop.f32.mrb[0].mxu0
      %v7997 = vadd.f32 %v7892, %v7996
      %v7998 = vpop.f32.mrb[0].mxu0
      %7999 = vmatprep.mubr.bf16.mxu0 0
      %8000 = vmatmul.mubr.bf16.gmra.mrb[0].mxu0 %v6901
      %v8001 = vpop.f32.mrb[0].mxu0
      %v8002 = vadd.f32 %v7897, %v8001
      %v8003 = vpop.f32.mrb[0].mxu0
      %v8004 = vpop.f32.mrb[0].mxu0
      %v8005 = vadd.f32 %v7900, %v8004
      %v8006 = vpop.f32.mrb[0].mxu0
      %8007 = vmatprep.mubr.bf16.mxu0 0
      %8008 = vmatmul.mubr.bf16.gmra.mrb[0].mxu0 %v6910
      %v8009 = vpop.f32.mrb[0].mxu0
      %v8010 = vadd.f32 %v7905, %v8009
      %v8011 = vpop.f32.mrb[0].mxu0
      %v8012 = vpop.f32.mrb[0].mxu0
      %v8013 = vadd.f32 %v7908, %v8012
      %v8014 = vpop.f32.mrb[0].mxu0
      %8015 = vmatprep.mubr.bf16.mxu0 0
      %8016 = vmatmul.mubr.bf16.gmra.mrb[0].mxu0 %v6919
      %v8017 = vpop.f32.mrb[0].mxu0
      %v8018 = vadd.f32 %v7913, %v8017
      %v8019 = vpop.f32.mrb[0].mxu0
      %v8020 = vpop.f32.mrb[0].mxu0
      %v8021 = vadd.f32 %v7916, %v8020
      %v8022 = vpop.f32.mrb[0].mxu0
      %8023 = vmatprep.mubr.bf16.mxu0 0
      %8024 = vmatmul.mubr.bf16.gmra.mrb[0].mxu0 %v6928
      %v8025 = vpop.f32.mrb[0].mxu0
      %v8026 = vadd.f32 %v7921, %v8025
      %v8027 = vpop.f32.mrb[0].mxu0
      %v8028 = vpop.f32.mrb[0].mxu0
      %v8029 = vadd.f32 %v7924, %v8028
      %v8030 = vpop.f32.mrb[0].mxu0
      %8031 = vmatprep.mubr.bf16.mxu0 0
      %8032 = vmatmul.mubr.bf16.gmra.mrb[0].mxu0 %v6937
      %v8033 = vpop.f32.mrb[0].mxu0
      %v8034 = vadd.f32 %v7929, %v8033
      %v8035 = vpop.f32.mrb[0].mxu0
      %v8036 = vpop.f32.mrb[0].mxu0
      %v8037 = vadd.f32 %v7932, %v8036
      %v8038 = vpop.f32.mrb[0].mxu0
      %8039 = vmatprep.mubr.bf16.mxu0 0
      %8040 = vmatmul.mubr.bf16.gmra.mrb[0].mxu0 %v6946
      %v8041 = vpop.f32.mrb[0].mxu0
      %v8042 = vadd.f32 %v7937, %v8041
      %v8043 = vpop.f32.mrb[0].mxu0
      %v8044 = vpop.f32.mrb[0].mxu0
      %v8045 = vadd.f32 %v7940, %v8044
      %v8046 = vpop.f32.mrb[0].mxu0
      %8047 = vdwg.mxu0
      %v8192 = vunpack.c.l.b16 %v6722
      %v8193 = vunpack.c.l.b16 %v6723
      %v8194 = vunpack.c.l.b16 %v6724
      %v8195 = vunpack.c.l.b16 %v6725
      %v8196 = vunpack.c.l.b16 %v6726
      %v8197 = vunpack.c.l.b16 %v6727
      %v8198 = vunpack.c.l.b16 %v6728
      %v8199 = vunpack.c.l.b16 %v6729
      %v8200 = vunpack.c.l.b16 %v6730
      %v8201 = vunpack.c.l.b16 %v6731
      %v8202 = vunpack.c.l.b16 %v6732
      %v8203 = vunpack.c.l.b16 %v6733
      %v8204 = vunpack.c.l.b16 %v6734
      %v8205 = vunpack.c.l.b16 %v6735
      %v8206 = vunpack.c.l.b16 %v6736
      %v8207 = vunpack.c.l.b16 %v6737
      %v8208 = vunpack.c.l.b16 %v6738
      %v8209 = vunpack.c.l.b16 %v6739
      %v8210 = vunpack.c.l.b16 %v6740
      %v8211 = vunpack.c.l.b16 %v6741
      %v8212 = vunpack.c.l.b16 %v6742
      %v8213 = vunpack.c.l.b16 %v6743
      %v8214 = vunpack.c.l.b16 %v6744
      %v8215 = vunpack.c.l.b16 %v6745
      %v8216 = vunpack.c.l.b16 %v6746
      %v8217 = vunpack.c.l.b16 %v6747
      %v8218 = vunpack.c.l.b16 %v6748
      %v8219 = vunpack.c.l.b16 %v6749
      %v8220 = vunpack.c.l.b16 %v6750
      %v8221 = vunpack.c.l.b16 %v6751
      %v8222 = vunpack.c.l.b16 %v6752
      %v8223 = vunpack.c.l.b16 %v6753
      %v8224 = vunpack.c.l.b16 %v6754
      %v8225 = vunpack.c.l.b16 %v6755
      %v8226 = vunpack.c.l.b16 %v6756
      %v8227 = vunpack.c.l.b16 %v6757
      %v8228 = vunpack.c.l.b16 %v6758
      %v8229 = vunpack.c.l.b16 %v6759
      %v8230 = vunpack.c.l.b16 %v6760
      %v8231 = vunpack.c.l.b16 %v6761
      %v8232 = vunpack.c.l.b16 %v6762
      %v8233 = vunpack.c.l.b16 %v6763
      %v8234 = vunpack.c.l.b16 %v6764
      %v8235 = vunpack.c.l.b16 %v6765
      %v8236 = vunpack.c.l.b16 %v6766
      %v8237 = vunpack.c.l.b16 %v6767
      %v8238 = vunpack.c.l.b16 %v6768
      %v8239 = vunpack.c.l.b16 %v6769
      %v8240 = vunpack.c.l.b16 %v6770
      %v8241 = vunpack.c.l.b16 %v6771
      %v8242 = vunpack.c.l.b16 %v6772
      %v8243 = vunpack.c.l.b16 %v6773
      %v8244 = vunpack.c.l.b16 %v6774
      %v8245 = vunpack.c.l.b16 %v6775
      %v8246 = vunpack.c.l.b16 %v6776
      %v8247 = vunpack.c.l.b16 %v6777
      %v8248 = vunpack.c.l.b16 %v6778
      %v8249 = vunpack.c.l.b16 %v6779
      %v8250 = vunpack.c.l.b16 %v6780
      %v8251 = vunpack.c.l.b16 %v6781
      %v8252 = vunpack.c.l.b16 %v6782
      %v8253 = vunpack.c.l.b16 %v6783
      %v8254 = vunpack.c.l.b16 %v6784
      %v8255 = vunpack.c.l.b16 %v6785
      %v8256 = vunpack.c.l.b16 %v6786
      %v8257 = vunpack.c.l.b16 %v6787
      %v8258 = vunpack.c.l.b16 %v6788
      %v8259 = vunpack.c.l.b16 %v6789
      %v8260 = vunpack.c.l.b16 %v6790
      %v8261 = vunpack.c.l.b16 %v6791
      %v8262 = vunpack.c.l.b16 %v6792
      %v8263 = vunpack.c.l.b16 %v6793
      %v8264 = vunpack.c.l.b16 %v6794
      %v8265 = vunpack.c.l.b16 %v6795
      %v8266 = vunpack.c.l.b16 %v6796
      %v8267 = vunpack.c.l.b16 %v6797
      %v8268 = vunpack.c.l.b16 %v6798
      %v8269 = vunpack.c.l.b16 %v6799
      %v8270 = vunpack.c.l.b16 %v6800
      %v8271 = vunpack.c.l.b16 %v6801
      %v8272 = vunpack.c.l.b16 %v6802
      %v8273 = vunpack.c.l.b16 %v6803
      %v8274 = vunpack.c.l.b16 %v6804
      %v8275 = vunpack.c.l.b16 %v6805
      %v8276 = vunpack.c.l.b16 %v6806
      %v8277 = vunpack.c.l.b16 %v6807
      %v8278 = vunpack.c.l.b16 %v6808
      %v8279 = vunpack.c.l.b16 %v6809
      %v8280 = vunpack.c.l.b16 %v6810
      %v8281 = vunpack.c.l.b16 %v6811
      %v8282 = vunpack.c.l.b16 %v6812
      %v8283 = vunpack.c.l.b16 %v6813
      %v8284 = vunpack.c.l.b16 %v6814
      %v8285 = vunpack.c.l.b16 %v6815
      %v8286 = vunpack.c.l.b16 %v6816
      %v8287 = vunpack.c.l.b16 %v6817
      %v8288 = vunpack.c.l.b16 %v6818
      %v8289 = vunpack.c.l.b16 %v6819
      %v8290 = vunpack.c.l.b16 %v6820
      %v8291 = vunpack.c.l.b16 %v6821
      %v8292 = vunpack.c.l.b16 %v6822
      %v8293 = vunpack.c.l.b16 %v6823
      %v8294 = vunpack.c.l.b16 %v6824
      %v8295 = vunpack.c.l.b16 %v6825
      %v8296 = vunpack.c.l.b16 %v6826
      %v8297 = vunpack.c.l.b16 %v6827
      %v8298 = vunpack.c.l.b16 %v6828
      %v8299 = vunpack.c.l.b16 %v6829
      %v8300 = vunpack.c.l.b16 %v6830
      %v8301 = vunpack.c.l.b16 %v6831
      %v8302 = vunpack.c.l.b16 %v6832
      %v8303 = vunpack.c.l.b16 %v6833
      %v8304 = vunpack.c.l.b16 %v6834
      %v8305 = vunpack.c.l.b16 %v6835
      %v8306 = vunpack.c.l.b16 %v6836
      %v8307 = vunpack.c.l.b16 %v6837
      %v8308 = vunpack.c.l.b16 %v6838
      %v8309 = vunpack.c.l.b16 %v6839
      %v8310 = vunpack.c.l.b16 %v6840
      %v8311 = vunpack.c.l.b16 %v6841
      %v8312 = vunpack.c.l.b16 %v6842
      %v8313 = vunpack.c.l.b16 %v6843
      %v8314 = vunpack.c.l.b16 %v6844
      %v8315 = vunpack.c.l.b16 %v6845
      %v8316 = vunpack.c.l.b16 %v6846
      %v8317 = vunpack.c.l.b16 %v6847
      %v8318 = vunpack.c.l.b16 %v6848
      %v8319 = vunpack.c.l.b16 %v6849
      %v8320 = vunpack.c.l.b16 %v6850
      %v8321 = vunpack.c.l.b16 %v6851
      %v8322 = vunpack.c.l.b16 %v6852
      %v8323 = vunpack.c.l.b16 %v6853
      %v8324 = vunpack.c.l.b16 %v6854
      %v8325 = vunpack.c.l.b16 %v6855
      %v8326 = vunpack.c.l.b16 %v6856
      %v8327 = vunpack.c.l.b16 %v6857
      %v8328 = vunpack.c.l.b16 %v6858
      %v8329 = vunpack.c.l.b16 %v6859
      %v8330 = vunpack.c.l.b16 %v6860
      %v8331 = vunpack.c.l.b16 %v6861
      %v8332 = vunpack.c.l.b16 %v6862
      %v8333 = vunpack.c.l.b16 %v6863
      %v8334 = vunpack.c.l.b16 %v6864
      %v8335 = vunpack.c.l.b16 %v6865
      %v8336 = vpack.c.b16 %v8193, %v8192
      %v8337 = vpack.c.b16 %v8195, %v8194
      %v8338 = vpack.c.b16 %v8197, %v8196
      %v8339 = vpack.c.b16 %v8199, %v8198
      %v8340 = vpack.c.b16 %v8201, %v8200
      %v8341 = vpack.c.b16 %v8203, %v8202
      %v8342 = vpack.c.b16 %v8205, %v8204
      %v8343 = vpack.c.b16 %v8207, %v8206
      %v8344 = vpack.c.b16 %v8209, %v8208
      %v8345 = vpack.c.b16 %v8211, %v8210
      %v8346 = vpack.c.b16 %v8213, %v8212
      %v8347 = vpack.c.b16 %v8215, %v8214
      %v8348 = vpack.c.b16 %v8217, %v8216
      %v8349 = vpack.c.b16 %v8219, %v8218
      %v8350 = vpack.c.b16 %v8221, %v8220
      %v8351 = vpack.c.b16 %v8223, %v8222
      %v8352 = vpack.c.b16 %v8225, %v8224
      %v8353 = vpack.c.b16 %v8227, %v8226
      %v8354 = vpack.c.b16 %v8229, %v8228
      %v8355 = vpack.c.b16 %v8231, %v8230
      %v8356 = vpack.c.b16 %v8233, %v8232
      %v8357 = vpack.c.b16 %v8235, %v8234
      %v8358 = vpack.c.b16 %v8237, %v8236
      %v8359 = vpack.c.b16 %v8239, %v8238
      %v8360 = vpack.c.b16 %v8241, %v8240
      %v8361 = vpack.c.b16 %v8243, %v8242
      %v8362 = vpack.c.b16 %v8245, %v8244
      %v8363 = vpack.c.b16 %v8247, %v8246
      %v8364 = vpack.c.b16 %v8249, %v8248
      %v8365 = vpack.c.b16 %v8251, %v8250
      %v8366 = vpack.c.b16 %v8253, %v8252
      %v8367 = vpack.c.b16 %v8255, %v8254
      %v8368 = vpack.c.b16 %v8257, %v8256
      %v8369 = vpack.c.b16 %v8259, %v8258
      %v8370 = vpack.c.b16 %v8261, %v8260
      %v8371 = vpack.c.b16 %v8263, %v8262
      %v8372 = vpack.c.b16 %v8265, %v8264
      %v8373 = vpack.c.b16 %v8267, %v8266
      %v8374 = vpack.c.b16 %v8269, %v8268
      %v8375 = vpack.c.b16 %v8271, %v8270
      %v8376 = vpack.c.b16 %v8273, %v8272
      %v8377 = vpack.c.b16 %v8275, %v8274
      %v8378 = vpack.c.b16 %v8277, %v8276
      %v8379 = vpack.c.b16 %v8279, %v8278
      %v8380 = vpack.c.b16 %v8281, %v8280
      %v8381 = vpack.c.b16 %v8283, %v8282
      %v8382 = vpack.c.b16 %v8285, %v8284
      %v8383 = vpack.c.b16 %v8287, %v8286
      %v8384 = vpack.c.b16 %v8289, %v8288
      %v8385 = vpack.c.b16 %v8291, %v8290
      %v8386 = vpack.c.b16 %v8293, %v8292
      %v8387 = vpack.c.b16 %v8295, %v8294
      %v8388 = vpack.c.b16 %v8297, %v8296
      %v8389 = vpack.c.b16 %v8299, %v8298
      %v8390 = vpack.c.b16 %v8301, %v8300
      %v8391 = vpack.c.b16 %v8303, %v8302
      %v8392 = vpack.c.b16 %v8305, %v8304
      %v8393 = vpack.c.b16 %v8307, %v8306
      %v8394 = vpack.c.b16 %v8309, %v8308
      %v8395 = vpack.c.b16 %v8311, %v8310
      %v8396 = vpack.c.b16 %v8313, %v8312
      %v8397 = vpack.c.b16 %v8315, %v8314
      %v8398 = vpack.c.b16 %v8317, %v8316
      %v8399 = vpack.c.b16 %v8319, %v8318
      %v8400 = vpack.c.b16 %v8321, %v8320
      %v8401 = vpack.c.b16 %v8323, %v8322
      %v8402 = vpack.c.b16 %v8325, %v8324
      %v8403 = vpack.c.b16 %v8327, %v8326
      %v8404 = vpack.c.b16 %v8329, %v8328
      %v8405 = vpack.c.b16 %v8331, %v8330
      %v8406 = vpack.c.b16 %v8333, %v8332
      %v8407 = vpack.c.b16 %v8335, %v8334
      %8480 = vmatprep.subr.bf16.mxu0 0
      %8481 = vmatpush1.bf16.msra.mxu0 %v8336
      %8482 = vmatprep.subr.bf16.mxu0 0
      %8483 = vmatpush1.bf16.msra.mxu0 %v8337
      %8484 = vmatprep.subr.bf16.mxu0 0
      %8485 = vmatpush1.bf16.msra.mxu0 %v8338
      %8486 = vmatprep.subr.bf16.mxu0 0
      %8487 = vmatpush1.bf16.msra.mxu0 %v8339
      %8488 = vmatprep.subr.bf16.mxu0 0
      %8489 = vmatpush1.bf16.msra.mxu0 %v8340
      %8490 = vmatprep.subr.bf16.mxu0 0
      %8491 = vmatpush1.bf16.msra.mxu0 %v8341
      %8492 = vmatprep.subr.bf16.mxu0 0
      %8493 = vmatpush1.bf16.msra.mxu0 %v8342
      %8494 = vmatprep.subr.bf16.mxu0 0
      %8495 = vmatpush1.bf16.msra.mxu0 %v8343
      %8496 = vmatprep.subr.bf16.mxu0 0
      %8497 = vmatpush1.bf16.msra.mxu0 %v8344
      %8498 = vmatprep.subr.bf16.mxu0 0
      %8499 = vmatpush1.bf16.msra.mxu0 %v8345
      %8500 = vmatprep.subr.bf16.mxu0 0
      %8501 = vmatpush1.bf16.msra.mxu0 %v8346
      %8502 = vmatprep.subr.bf16.mxu0 0
      %8503 = vmatpush1.bf16.msra.mxu0 %v8347
      %8504 = vmatprep.subr.bf16.mxu0 0
      %8505 = vmatpush1.bf16.msra.mxu0 %v8348
      %8506 = vmatprep.subr.bf16.mxu0 0
      %8507 = vmatpush1.bf16.msra.mxu0 %v8349
      %8508 = vmatprep.subr.bf16.mxu0 0
      %8509 = vmatpush1.bf16.msra.mxu0 %v8350
      %8510 = vmatprep.subr.bf16.mxu0 0
      %8511 = vmatpush1.bf16.msra.mxu0 %v8351
      %8512 = vmatprep.mubr.bf16.mxu0 %v6642
      %8513 = vmatmul.mubr.bf16.gmra.mrb[0].mxu0 %v6641
      %v8514 = vpop.f32.mrb[0].mxu0
      %v8515 = vadd.f32 %v7978, %v8514
      %v8516 = vpop.f32.mrb[0].mxu0
      %v8517 = vpop.f32.mrb[0].mxu0
      %v8518 = vadd.f32 %v7981, %v8517
      %v8519 = vpop.f32.mrb[0].mxu0
      %8520 = vmatprep.mubr.bf16.mxu0 %v6651
      %8521 = vmatmul.mubr.bf16.gmra.mrb[0].mxu0 %v6650
      %v8522 = vpop.f32.mrb[0].mxu0
      %v8523 = vadd.f32 %v7986, %v8522
      %v8524 = vpop.f32.mrb[0].mxu0
      %v8525 = vpop.f32.mrb[0].mxu0
      %v8526 = vadd.f32 %v7989, %v8525
      %v8527 = vpop.f32.mrb[0].mxu0
      %8528 = vmatprep.mubr.bf16.mxu0 %v6660
      %8529 = vmatmul.mubr.bf16.gmra.mrb[0].mxu0 %v6659
      %v8530 = vpop.f32.mrb[0].mxu0
      %v8531 = vadd.f32 %v7994, %v8530
      %v8532 = vpop.f32.mrb[0].mxu0
      %v8533 = vpop.f32.mrb[0].mxu0
      %v8534 = vadd.f32 %v7997, %v8533
      %v8535 = vpop.f32.mrb[0].mxu0
      %8536 = vmatprep.mubr.bf16.mxu0 %v6669
      %8537 = vmatmul.mubr.bf16.gmra.mrb[0].mxu0 %v6668
      %v8538 = vpop.f32.mrb[0].mxu0
      %v8539 = vadd.f32 %v8002, %v8538
      %v8540 = vpop.f32.mrb[0].mxu0
      %v8541 = vpop.f32.mrb[0].mxu0
      %v8542 = vadd.f32 %v8005, %v8541
      %v8543 = vpop.f32.mrb[0].mxu0
      %8544 = vmatprep.mubr.bf16.mxu0 %v6678
      %8545 = vmatmul.mubr.bf16.gmra.mrb[0].mxu0 %v6677
      %v8546 = vpop.f32.mrb[0].mxu0
      %v8547 = vadd.f32 %v8010, %v8546
      %v8548 = vpop.f32.mrb[0].mxu0
      %v8549 = vpop.f32.mrb[0].mxu0
      %v8550 = vadd.f32 %v8013, %v8549
      %v8551 = vpop.f32.mrb[0].mxu0
      %8552 = vmatprep.mubr.bf16.mxu0 %v6687
      %8553 = vmatmul.mubr.bf16.gmra.mrb[0].mxu0 %v6686
      %v8554 = vpop.f32.mrb[0].mxu0
      %v8555 = vadd.f32 %v8018, %v8554
      %v8556 = vpop.f32.mrb[0].mxu0
      %v8557 = vpop.f32.mrb[0].mxu0
      %v8558 = vadd.f32 %v8021, %v8557
      %v8559 = vpop.f32.mrb[0].mxu0
      %8560 = vmatprep.mubr.bf16.mxu0 %v6696
      %8561 = vmatmul.mubr.bf16.gmra.mrb[0].mxu0 %v6695
      %v8562 = vpop.f32.mrb[0].mxu0
      %v8563 = vadd.f32 %v8026, %v8562
      %v8564 = vpop.f32.mrb[0].mxu0
      %v8565 = vpop.f32.mrb[0].mxu0
      %v8566 = vadd.f32 %v8029, %v8565
      %v8567 = vpop.f32.mrb[0].mxu0
      %8568 = vmatprep.mubr.bf16.mxu0 %v6705
      %8569 = vmatmul.mubr.bf16.gmra.mrb[0].mxu0 %v6704
      %v8570 = vpop.f32.mrb[0].mxu0
      %v8571 = vadd.f32 %v8034, %v8570
      %v8572 = vpop.f32.mrb[0].mxu0
      %v8573 = vpop.f32.mrb[0].mxu0
      %v8574 = vadd.f32 %v8037, %v8573
      %v8575 = vpop.f32.mrb[0].mxu0
      %8576 = vmatprep.mubr.bf16.mxu0 %v6714
      %8577 = vmatmul.mubr.bf16.gmra.mrb[0].mxu0 %v6713
      %v8578 = vpop.f32.mrb[0].mxu0
      %v8579 = vadd.f32 %v8042, %v8578
      %v8580 = vpop.f32.mrb[0].mxu0
      %v8581 = vpop.f32.mrb[0].mxu0
      %v8582 = vadd.f32 %v8045, %v8581
      %v8583 = vpop.f32.mrb[0].mxu0
      %8584 = vdwg.mxu0
      %8585 = vmatprep.subr.bf16.mxu0 0
      %8586 = vmatpush1.bf16.msra.mxu0 %v8352
      %8587 = vmatprep.subr.bf16.mxu0 0
      %8588 = vmatpush1.bf16.msra.mxu0 %v8353
      %8589 = vmatprep.subr.bf16.mxu0 0
      %8590 = vmatpush1.bf16.msra.mxu0 %v8354
      %8591 = vmatprep.subr.bf16.mxu0 0
      %8592 = vmatpush1.bf16.msra.mxu0 %v8355
      %8593 = vmatprep.subr.bf16.mxu0 0
      %8594 = vmatpush1.bf16.msra.mxu0 %v8356
      %8595 = vmatprep.subr.bf16.mxu0 0
      %8596 = vmatpush1.bf16.msra.mxu0 %v8357
      %8597 = vmatprep.subr.bf16.mxu0 0
      %8598 = vmatpush1.bf16.msra.mxu0 %v8358
      %8599 = vmatprep.subr.bf16.mxu0 0
      %8600 = vmatpush1.bf16.msra.mxu0 %v8359
      %8601 = vmatprep.subr.bf16.mxu0 0
      %8602 = vmatpush1.bf16.msra.mxu0 %v8360
      %8603 = vmatprep.subr.bf16.mxu0 0
      %8604 = vmatpush1.bf16.msra.mxu0 %v8361
      %8605 = vmatprep.subr.bf16.mxu0 0
      %8606 = vmatpush1.bf16.msra.mxu0 %v8362
      %8607 = vmatprep.subr.bf16.mxu0 0
      %8608 = vmatpush1.bf16.msra.mxu0 %v8363
      %8609 = vmatprep.subr.bf16.mxu0 0
      %8610 = vmatpush1.bf16.msra.mxu0 %v8364
      %8611 = vmatprep.subr.bf16.mxu0 0
      %8612 = vmatpush1.bf16.msra.mxu0 %v8365
      %8613 = vmatprep.subr.bf16.mxu0 0
      %8614 = vmatpush1.bf16.msra.mxu0 %v8366
      %8615 = vmatprep.subr.bf16.mxu0 0
      %8616 = vmatpush1.bf16.msra.mxu0 %v8367
      %8617 = vmatprep.mubr.bf16.mxu0 %v6644
      %8618 = vmatmul.mubr.bf16.gmra.mrb[0].mxu0 %v6643
      %v8619 = vpop.f32.mrb[0].mxu0
      %v8620 = vadd.f32 %v8515, %v8619
      %v8621 = vpop.f32.mrb[0].mxu0
      %v8622 = vpop.f32.mrb[0].mxu0
      %v8623 = vadd.f32 %v8518, %v8622
      %v8624 = vpop.f32.mrb[0].mxu0
      %8625 = vmatprep.mubr.bf16.mxu0 %v6653
      %8626 = vmatmul.mubr.bf16.gmra.mrb[0].mxu0 %v6652
      %v8627 = vpop.f32.mrb[0].mxu0
      %v8628 = vadd.f32 %v8523, %v8627
      %v8629 = vpop.f32.mrb[0].mxu0
      %v8630 = vpop.f32.mrb[0].mxu0
      %v8631 = vadd.f32 %v8526, %v8630
      %v8632 = vpop.f32.mrb[0].mxu0
      %8633 = vmatprep.mubr.bf16.mxu0 %v6662
      %8634 = vmatmul.mubr.bf16.gmra.mrb[0].mxu0 %v6661
      %v8635 = vpop.f32.mrb[0].mxu0
      %v8636 = vadd.f32 %v8531, %v8635
      %v8637 = vpop.f32.mrb[0].mxu0
      %v8638 = vpop.f32.mrb[0].mxu0
      %v8639 = vadd.f32 %v8534, %v8638
      %v8640 = vpop.f32.mrb[0].mxu0
      %8641 = vmatprep.mubr.bf16.mxu0 %v6671
      %8642 = vmatmul.mubr.bf16.gmra.mrb[0].mxu0 %v6670
      %v8643 = vpop.f32.mrb[0].mxu0
      %v8644 = vadd.f32 %v8539, %v8643
      %v8645 = vpop.f32.mrb[0].mxu0
      %v8646 = vpop.f32.mrb[0].mxu0
      %v8647 = vadd.f32 %v8542, %v8646
      %v8648 = vpop.f32.mrb[0].mxu0
      %8649 = vmatprep.mubr.bf16.mxu0 %v6680
      %8650 = vmatmul.mubr.bf16.gmra.mrb[0].mxu0 %v6679
      %v8651 = vpop.f32.mrb[0].mxu0
      %v8652 = vadd.f32 %v8547, %v8651
      %v8653 = vpop.f32.mrb[0].mxu0
      %v8654 = vpop.f32.mrb[0].mxu0
      %v8655 = vadd.f32 %v8550, %v8654
      %v8656 = vpop.f32.mrb[0].mxu0
      %8657 = vmatprep.mubr.bf16.mxu0 %v6689
      %8658 = vmatmul.mubr.bf16.gmra.mrb[0].mxu0 %v6688
      %v8659 = vpop.f32.mrb[0].mxu0
      %v8660 = vadd.f32 %v8555, %v8659
      %v8661 = vpop.f32.mrb[0].mxu0
      %v8662 = vpop.f32.mrb[0].mxu0
      %v8663 = vadd.f32 %v8558, %v8662
      %v8664 = vpop.f32.mrb[0].mxu0
      %8665 = vmatprep.mubr.bf16.mxu0 %v6698
      %8666 = vmatmul.mubr.bf16.gmra.mrb[0].mxu0 %v6697
      %v8667 = vpop.f32.mrb[0].mxu0
      %v8668 = vadd.f32 %v8563, %v8667
      %v8669 = vpop.f32.mrb[0].mxu0
      %v8670 = vpop.f32.mrb[0].mxu0
      %v8671 = vadd.f32 %v8566, %v8670
      %v8672 = vpop.f32.mrb[0].mxu0
      %8673 = vmatprep.mubr.bf16.mxu0 %v6707
      %8674 = vmatmul.mubr.bf16.gmra.mrb[0].mxu0 %v6706
      %v8675 = vpop.f32.mrb[0].mxu0
      %v8676 = vadd.f32 %v8571, %v8675
      %v8677 = vpop.f32.mrb[0].mxu0
      %v8678 = vpop.f32.mrb[0].mxu0
      %v8679 = vadd.f32 %v8574, %v8678
      %v8680 = vpop.f32.mrb[0].mxu0
      %8681 = vmatprep.mubr.bf16.mxu0 %v6716
      %8682 = vmatmul.mubr.bf16.gmra.mrb[0].mxu0 %v6715
      %v8683 = vpop.f32.mrb[0].mxu0
      %v8684 = vadd.f32 %v8579, %v8683
      %v8685 = vpop.f32.mrb[0].mxu0
      %v8686 = vpop.f32.mrb[0].mxu0
      %v8687 = vadd.f32 %v8582, %v8686
      %v8688 = vpop.f32.mrb[0].mxu0
      %8689 = vdwg.mxu0
      %8690 = vmatprep.subr.bf16.mxu0 0
      %8691 = vmatpush1.bf16.msra.mxu0 %v8368
      %8692 = vmatprep.subr.bf16.mxu0 0
      %8693 = vmatpush1.bf16.msra.mxu0 %v8369
      %8694 = vmatprep.subr.bf16.mxu0 0
      %8695 = vmatpush1.bf16.msra.mxu0 %v8370
      %8696 = vmatprep.subr.bf16.mxu0 0
      %8697 = vmatpush1.bf16.msra.mxu0 %v8371
      %8698 = vmatprep.subr.bf16.mxu0 0
      %8699 = vmatpush1.bf16.msra.mxu0 %v8372
      %8700 = vmatprep.subr.bf16.mxu0 0
      %8701 = vmatpush1.bf16.msra.mxu0 %v8373
      %8702 = vmatprep.subr.bf16.mxu0 0
      %8703 = vmatpush1.bf16.msra.mxu0 %v8374
      %8704 = vmatprep.subr.bf16.mxu0 0
      %8705 = vmatpush1.bf16.msra.mxu0 %v8375
      %8706 = vmatprep.subr.bf16.mxu0 0
      %8707 = vmatpush1.bf16.msra.mxu0 %v8376
      %8708 = vmatprep.subr.bf16.mxu0 0
      %8709 = vmatpush1.bf16.msra.mxu0 %v8377
      %8710 = vmatprep.subr.bf16.mxu0 0
      %8711 = vmatpush1.bf16.msra.mxu0 %v8378
      %8712 = vmatprep.subr.bf16.mxu0 0
      %8713 = vmatpush1.bf16.msra.mxu0 %v8379
      %8714 = vmatprep.subr.bf16.mxu0 0
      %8715 = vmatpush1.bf16.msra.mxu0 %v8380
      %8716 = vmatprep.subr.bf16.mxu0 0
      %8717 = vmatpush1.bf16.msra.mxu0 %v8381
      %8718 = vmatprep.subr.bf16.mxu0 0
      %8719 = vmatpush1.bf16.msra.mxu0 %v8382
      %8720 = vmatprep.subr.bf16.mxu0 0
      %8721 = vmatpush1.bf16.msra.mxu0 %v8383
      %8722 = vmatprep.mubr.bf16.mxu0 %v6646
      %8723 = vmatmul.mubr.bf16.gmra.mrb[0].mxu0 %v6645
      %v8724 = vpop.f32.mrb[0].mxu0
      %v8725 = vadd.f32 %v8620, %v8724
      %v8726 = vpop.f32.mrb[0].mxu0
      %v8727 = vpop.f32.mrb[0].mxu0
      %v8728 = vadd.f32 %v8623, %v8727
      %v8729 = vpop.f32.mrb[0].mxu0
      %8730 = vmatprep.mubr.bf16.mxu0 %v6655
      %8731 = vmatmul.mubr.bf16.gmra.mrb[0].mxu0 %v6654
      %v8732 = vpop.f32.mrb[0].mxu0
      %v8733 = vadd.f32 %v8628, %v8732
      %v8734 = vpop.f32.mrb[0].mxu0
      %v8735 = vpop.f32.mrb[0].mxu0
      %v8736 = vadd.f32 %v8631, %v8735
      %v8737 = vpop.f32.mrb[0].mxu0
      %8738 = vmatprep.mubr.bf16.mxu0 %v6664
      %8739 = vmatmul.mubr.bf16.gmra.mrb[0].mxu0 %v6663
      %v8740 = vpop.f32.mrb[0].mxu0
      %v8741 = vadd.f32 %v8636, %v8740
      %v8742 = vpop.f32.mrb[0].mxu0
      %v8743 = vpop.f32.mrb[0].mxu0
      %v8744 = vadd.f32 %v8639, %v8743
      %v8745 = vpop.f32.mrb[0].mxu0
      %8746 = vmatprep.mubr.bf16.mxu0 %v6673
      %8747 = vmatmul.mubr.bf16.gmra.mrb[0].mxu0 %v6672
      %v8748 = vpop.f32.mrb[0].mxu0
      %v8749 = vadd.f32 %v8644, %v8748
      %v8750 = vpop.f32.mrb[0].mxu0
      %v8751 = vpop.f32.mrb[0].mxu0
      %v8752 = vadd.f32 %v8647, %v8751
      %v8753 = vpop.f32.mrb[0].mxu0
      %8754 = vmatprep.mubr.bf16.mxu0 %v6682
      %8755 = vmatmul.mubr.bf16.gmra.mrb[0].mxu0 %v6681
      %v8756 = vpop.f32.mrb[0].mxu0
      %v8757 = vadd.f32 %v8652, %v8756
      %v8758 = vpop.f32.mrb[0].mxu0
      %v8759 = vpop.f32.mrb[0].mxu0
      %v8760 = vadd.f32 %v8655, %v8759
      %v8761 = vpop.f32.mrb[0].mxu0
      %8762 = vmatprep.mubr.bf16.mxu0 %v6691
      %8763 = vmatmul.mubr.bf16.gmra.mrb[0].mxu0 %v6690
      %v8764 = vpop.f32.mrb[0].mxu0
      %v8765 = vadd.f32 %v8660, %v8764
      %v8766 = vpop.f32.mrb[0].mxu0
      %v8767 = vpop.f32.mrb[0].mxu0
      %v8768 = vadd.f32 %v8663, %v8767
      %v8769 = vpop.f32.mrb[0].mxu0
      %8770 = vmatprep.mubr.bf16.mxu0 %v6700
      %8771 = vmatmul.mubr.bf16.gmra.mrb[0].mxu0 %v6699
      %v8772 = vpop.f32.mrb[0].mxu0
      %v8773 = vadd.f32 %v8668, %v8772
      %v8774 = vpop.f32.mrb[0].mxu0
      %v8775 = vpop.f32.mrb[0].mxu0
      %v8776 = vadd.f32 %v8671, %v8775
      %v8777 = vpop.f32.mrb[0].mxu0
      %8778 = vmatprep.mubr.bf16.mxu0 %v6709
      %8779 = vmatmul.mubr.bf16.gmra.mrb[0].mxu0 %v6708
      %v8780 = vpop.f32.mrb[0].mxu0
      %v8781 = vadd.f32 %v8676, %v8780
      %v8782 = vpop.f32.mrb[0].mxu0
      %v8783 = vpop.f32.mrb[0].mxu0
      %v8784 = vadd.f32 %v8679, %v8783
      %v8785 = vpop.f32.mrb[0].mxu0
      %8786 = vmatprep.mubr.bf16.mxu0 %v6718
      %8787 = vmatmul.mubr.bf16.gmra.mrb[0].mxu0 %v6717
      %v8788 = vpop.f32.mrb[0].mxu0
      %v8789 = vadd.f32 %v8684, %v8788
      %v8790 = vpop.f32.mrb[0].mxu0
      %v8791 = vpop.f32.mrb[0].mxu0
      %v8792 = vadd.f32 %v8687, %v8791
      %v8793 = vpop.f32.mrb[0].mxu0
      %8794 = vdwg.mxu0
      %8795 = vmatprep.subr.bf16.mxu0 0
      %8796 = vmatpush1.bf16.msra.mxu0 %v8384
      %8797 = vmatprep.subr.bf16.mxu0 0
      %8798 = vmatpush1.bf16.msra.mxu0 %v8385
      %8799 = vmatprep.subr.bf16.mxu0 0
      %8800 = vmatpush1.bf16.msra.mxu0 %v8386
      %8801 = vmatprep.subr.bf16.mxu0 0
      %8802 = vmatpush1.bf16.msra.mxu0 %v8387
      %8803 = vmatprep.subr.bf16.mxu0 0
      %8804 = vmatpush1.bf16.msra.mxu0 %v8388
      %8805 = vmatprep.subr.bf16.mxu0 0
      %8806 = vmatpush1.bf16.msra.mxu0 %v8389
      %8807 = vmatprep.subr.bf16.mxu0 0
      %8808 = vmatpush1.bf16.msra.mxu0 %v8390
      %8809 = vmatprep.subr.bf16.mxu0 0
      %8810 = vmatpush1.bf16.msra.mxu0 %v8391
      %8811 = vmatprep.subr.bf16.mxu0 0
      %8812 = vmatpush1.bf16.msra.mxu0 %v8392
      %8813 = vmatprep.subr.bf16.mxu0 0
      %8814 = vmatpush1.bf16.msra.mxu0 %v8393
      %8815 = vmatprep.subr.bf16.mxu0 0
      %8816 = vmatpush1.bf16.msra.mxu0 %v8394
      %8817 = vmatprep.subr.bf16.mxu0 0
      %8818 = vmatpush1.bf16.msra.mxu0 %v8395
      %8819 = vmatprep.subr.bf16.mxu0 0
      %8820 = vmatpush1.bf16.msra.mxu0 %v8396
      %8821 = vmatprep.subr.bf16.mxu0 0
      %8822 = vmatpush1.bf16.msra.mxu0 %v8397
      %8823 = vmatprep.subr.bf16.mxu0 0
      %8824 = vmatpush1.bf16.msra.mxu0 %v8398
      %8825 = vmatprep.subr.bf16.mxu0 0
      %8826 = vmatpush1.bf16.msra.mxu0 %v8399
      %8827 = vmatprep.mubr.bf16.mxu0 %v6648
      %8828 = vmatmul.mubr.bf16.gmra.mrb[0].mxu0 %v6647
      %v8829 = vpop.f32.mrb[0].mxu0
      %v8830 = vadd.f32 %v8725, %v8829
      %v8831 = vpop.f32.mrb[0].mxu0
      %v8832 = vpop.f32.mrb[0].mxu0
      %v8833 = vadd.f32 %v8728, %v8832
      %v8834 = vpop.f32.mrb[0].mxu0
      %8835 = vmatprep.mubr.bf16.mxu0 %v6657
      %8836 = vmatmul.mubr.bf16.gmra.mrb[0].mxu0 %v6656
      %v8837 = vpop.f32.mrb[0].mxu0
      %v8838 = vadd.f32 %v8733, %v8837
      %v8839 = vpop.f32.mrb[0].mxu0
      %v8840 = vpop.f32.mrb[0].mxu0
      %v8841 = vadd.f32 %v8736, %v8840
      %v8842 = vpop.f32.mrb[0].mxu0
      %8843 = vmatprep.mubr.bf16.mxu0 %v6666
      %8844 = vmatmul.mubr.bf16.gmra.mrb[0].mxu0 %v6665
      %v8845 = vpop.f32.mrb[0].mxu0
      %v8846 = vadd.f32 %v8741, %v8845
      %v8847 = vpop.f32.mrb[0].mxu0
      %v8848 = vpop.f32.mrb[0].mxu0
      %v8849 = vadd.f32 %v8744, %v8848
      %v8850 = vpop.f32.mrb[0].mxu0
      %8851 = vmatprep.mubr.bf16.mxu0 %v6675
      %8852 = vmatmul.mubr.bf16.gmra.mrb[0].mxu0 %v6674
      %v8853 = vpop.f32.mrb[0].mxu0
      %v8854 = vadd.f32 %v8749, %v8853
      %v8855 = vpop.f32.mrb[0].mxu0
      %v8856 = vpop.f32.mrb[0].mxu0
      %v8857 = vadd.f32 %v8752, %v8856
      %v8858 = vpop.f32.mrb[0].mxu0
      %8859 = vmatprep.mubr.bf16.mxu0 %v6684
      %8860 = vmatmul.mubr.bf16.gmra.mrb[0].mxu0 %v6683
      %v8861 = vpop.f32.mrb[0].mxu0
      %v8862 = vadd.f32 %v8757, %v8861
      %v8863 = vpop.f32.mrb[0].mxu0
      %v8864 = vpop.f32.mrb[0].mxu0
      %v8865 = vadd.f32 %v8760, %v8864
      %v8866 = vpop.f32.mrb[0].mxu0
      %8867 = vmatprep.mubr.bf16.mxu0 %v6693
      %8868 = vmatmul.mubr.bf16.gmra.mrb[0].mxu0 %v6692
      %v8869 = vpop.f32.mrb[0].mxu0
      %v8870 = vadd.f32 %v8765, %v8869
      %v8871 = vpop.f32.mrb[0].mxu0
      %v8872 = vpop.f32.mrb[0].mxu0
      %v8873 = vadd.f32 %v8768, %v8872
      %v8874 = vpop.f32.mrb[0].mxu0
      %8875 = vmatprep.mubr.bf16.mxu0 %v6702
      %8876 = vmatmul.mubr.bf16.gmra.mrb[0].mxu0 %v6701
      %v8877 = vpop.f32.mrb[0].mxu0
      %v8878 = vadd.f32 %v8773, %v8877
      %v8879 = vpop.f32.mrb[0].mxu0
      %v8880 = vpop.f32.mrb[0].mxu0
      %v8881 = vadd.f32 %v8776, %v8880
      %v8882 = vpop.f32.mrb[0].mxu0
      %8883 = vmatprep.mubr.bf16.mxu0 %v6711
      %8884 = vmatmul.mubr.bf16.gmra.mrb[0].mxu0 %v6710
      %v8885 = vpop.f32.mrb[0].mxu0
      %v8886 = vadd.f32 %v8781, %v8885
      %v8887 = vpop.f32.mrb[0].mxu0
      %v8888 = vpop.f32.mrb[0].mxu0
      %v8889 = vadd.f32 %v8784, %v8888
      %v8890 = vpop.f32.mrb[0].mxu0
      %8891 = vmatprep.mubr.bf16.mxu0 %v6720
      %8892 = vmatmul.mubr.bf16.gmra.mrb[0].mxu0 %v6719
      %v8893 = vpop.f32.mrb[0].mxu0
      %v8894 = vadd.f32 %v8789, %v8893
      %v8895 = vpop.f32.mrb[0].mxu0
      %v8896 = vpop.f32.mrb[0].mxu0
      %v8897 = vadd.f32 %v8792, %v8896
      %v8898 = vpop.f32.mrb[0].mxu0
      %8899 = vdwg.mxu0
      %8900 = vmatprep.subr.bf16.mxu0 0
      %8901 = vmatpush1.bf16.msra.mxu0 %v8400
      %8902 = vmatprep.subr.bf16.mxu0 0
      %8903 = vmatpush1.bf16.msra.mxu0 %v8401
      %8904 = vmatprep.subr.bf16.mxu0 0
      %8905 = vmatpush1.bf16.msra.mxu0 %v8402
      %8906 = vmatprep.subr.bf16.mxu0 0
      %8907 = vmatpush1.bf16.msra.mxu0 %v8403
      %8908 = vmatprep.subr.bf16.mxu0 0
      %8909 = vmatpush1.bf16.msra.mxu0 %v8404
      %8910 = vmatprep.subr.bf16.mxu0 0
      %8911 = vmatpush1.bf16.msra.mxu0 %v8405
      %8912 = vmatprep.subr.bf16.mxu0 0
      %8913 = vmatpush1.bf16.msra.mxu0 %v8406
      %8914 = vmatprep.subr.bf16.mxu0 0
      %8915 = vmatpush1.bf16.msra.mxu0 %v8407
      %8916 = vmatprep.subr.bf16.mxu0 0
      %8917 = vmatpush1.bf16.msra.mxu0 0
      %8918 = vmatprep.subr.bf16.mxu0 0
      %8919 = vmatpush1.bf16.msra.mxu0 0
      %8920 = vmatprep.subr.bf16.mxu0 0
      %8921 = vmatpush1.bf16.msra.mxu0 0
      %8922 = vmatprep.subr.bf16.mxu0 0
      %8923 = vmatpush1.bf16.msra.mxu0 0
      %8924 = vmatprep.subr.bf16.mxu0 0
      %8925 = vmatpush1.bf16.msra.mxu0 0
      %8926 = vmatprep.subr.bf16.mxu0 0
      %8927 = vmatpush1.bf16.msra.mxu0 0
      %8928 = vmatprep.subr.bf16.mxu0 0
      %8929 = vmatpush1.bf16.msra.mxu0 0
      %8930 = vmatprep.subr.bf16.mxu0 0
      %8931 = vmatpush1.bf16.msra.mxu0 0
      %8932 = vmatprep.mubr.bf16.mxu0 0
      %8933 = vmatmul.mubr.bf16.gmra.mrb[0].mxu0 %v6649
      %v8934 = vpop.f32.mrb[0].mxu0
      %v8935 = vadd.f32 %v8830, %v8934
      %v8936 = vpop.f32.mrb[0].mxu0
      %v8937 = vpop.f32.mrb[0].mxu0
      %v8938 = vadd.f32 %v8833, %v8937
      %v8939 = vpop.f32.mrb[0].mxu0
      %8940 = vmatprep.mubr.bf16.mxu0 0
      %8941 = vmatmul.mubr.bf16.gmra.mrb[0].mxu0 %v6658
      %v8942 = vpop.f32.mrb[0].mxu0
      %v8943 = vadd.f32 %v8838, %v8942
      %v8944 = vpop.f32.mrb[0].mxu0
      %v8945 = vpop.f32.mrb[0].mxu0
      %v8946 = vadd.f32 %v8841, %v8945
      %v8947 = vpop.f32.mrb[0].mxu0
      %8948 = vmatprep.mubr.bf16.mxu0 0
      %8949 = vmatmul.mubr.bf16.gmra.mrb[0].mxu0 %v6667
      %v8950 = vpop.f32.mrb[0].mxu0
      %v8951 = vadd.f32 %v8846, %v8950
      %v8952 = vpop.f32.mrb[0].mxu0
      %v8953 = vpop.f32.mrb[0].mxu0
      %v8954 = vadd.f32 %v8849, %v8953
      %v8955 = vpop.f32.mrb[0].mxu0
      %8956 = vmatprep.mubr.bf16.mxu0 0
      %8957 = vmatmul.mubr.bf16.gmra.mrb[0].mxu0 %v6676
      %v8958 = vpop.f32.mrb[0].mxu0
      %v8959 = vadd.f32 %v8854, %v8958
      %v8960 = vpop.f32.mrb[0].mxu0
      %v8961 = vpop.f32.mrb[0].mxu0
      %v8962 = vadd.f32 %v8857, %v8961
      %v8963 = vpop.f32.mrb[0].mxu0
      %8964 = vmatprep.mubr.bf16.mxu0 0
      %8965 = vmatmul.mubr.bf16.gmra.mrb[0].mxu0 %v6685
      %v8966 = vpop.f32.mrb[0].mxu0
      %v8967 = vadd.f32 %v8862, %v8966
      %v8968 = vpop.f32.mrb[0].mxu0
      %v8969 = vpop.f32.mrb[0].mxu0
      %v8970 = vadd.f32 %v8865, %v8969
      %v8971 = vpop.f32.mrb[0].mxu0
      %8972 = vmatprep.mubr.bf16.mxu0 0
      %8973 = vmatmul.mubr.bf16.gmra.mrb[0].mxu0 %v6694
      %v8974 = vpop.f32.mrb[0].mxu0
      %v8975 = vadd.f32 %v8870, %v8974
      %v8976 = vpop.f32.mrb[0].mxu0
      %v8977 = vpop.f32.mrb[0].mxu0
      %v8978 = vadd.f32 %v8873, %v8977
      %v8979 = vpop.f32.mrb[0].mxu0
      %8980 = vmatprep.mubr.bf16.mxu0 0
      %8981 = vmatmul.mubr.bf16.gmra.mrb[0].mxu0 %v6703
      %v8982 = vpop.f32.mrb[0].mxu0
      %v8983 = vadd.f32 %v8878, %v8982
      %v8984 = vpop.f32.mrb[0].mxu0
      %v8985 = vpop.f32.mrb[0].mxu0
      %v8986 = vadd.f32 %v8881, %v8985
      %v8987 = vpop.f32.mrb[0].mxu0
      %8988 = vmatprep.mubr.bf16.mxu0 0
      %8989 = vmatmul.mubr.bf16.gmra.mrb[0].mxu0 %v6712
      %v8990 = vpop.f32.mrb[0].mxu0
      %v8991 = vadd.f32 %v8886, %v8990
      %v8992 = vpop.f32.mrb[0].mxu0
      %v8993 = vpop.f32.mrb[0].mxu0
      %v8994 = vadd.f32 %v8889, %v8993
      %v8995 = vpop.f32.mrb[0].mxu0
      %8996 = vmatprep.mubr.bf16.mxu0 0
      %8997 = vmatmul.mubr.bf16.gmra.mrb[0].mxu0 %v6721
      %v8998 = vpop.f32.mrb[0].mxu0
      %v8999 = vadd.f32 %v8894, %v8998
      %v9000 = vpop.f32.mrb[0].mxu0
      %v9001 = vpop.f32.mrb[0].mxu0
      %v9002 = vadd.f32 %v8897, %v9001
      %v9003 = vpop.f32.mrb[0].mxu0
      %9004 = vdwg.mxu0
      %v9005 = vld [vmem:[%s7] sm:$0x1]
      %v9007 = vlaneseq
      %v9008 = vshrl.u32 %v9007, 7
      %v9009 = vsub.s32 0, %v9008
      %v9010 = vrot.slane %v9005, %v9009
      %v9012 = vadd.f32 %v8935, %v9010
      %v9013 = vadd.f32 %v8938, %v9010
      %v9014 = vadd.f32 %v8943, %v9010
      %v9015 = vadd.f32 %v8946, %v9010
      %v9016 = vadd.f32 %v8951, %v9010
      %v9017 = vadd.f32 %v8954, %v9010
      %v9018 = vadd.f32 %v8959, %v9010
      %v9019 = vadd.f32 %v8962, %v9010
      %v9020 = vadd.f32 %v8967, %v9010
      %v9021 = vadd.f32 %v8970, %v9010
      %v9022 = vadd.f32 %v8975, %v9010
      %v9023 = vadd.f32 %v8978, %v9010
      %v9024 = vadd.f32 %v8983, %v9010
      %v9025 = vadd.f32 %v8986, %v9010
      %v9026 = vadd.f32 %v8991, %v9010
      %v9027 = vadd.f32 %v8994, %v9010
      %v9028 = vadd.f32 %v8999, %v9010
      %v9029 = vadd.f32 %v9002, %v9010
      %v9030 = vmax.f32 %v9012, 0.0
      %v9031 = vmax.f32 %v9013, 0.0
      %v9032 = vmax.f32 %v9014, 0.0
      %v9033 = vmax.f32 %v9015, 0.0
      %v9034 = vmax.f32 %v9016, 0.0
      %v9035 = vmax.f32 %v9017, 0.0
      %v9036 = vmax.f32 %v9018, 0.0
      %v9037 = vmax.f32 %v9019, 0.0
      %v9038 = vmax.f32 %v9020, 0.0
      %v9039 = vmax.f32 %v9021, 0.0
      %v9040 = vmax.f32 %v9022, 0.0
      %v9041 = vmax.f32 %v9023, 0.0
      %v9042 = vmax.f32 %v9024, 0.0
      %v9043 = vmax.f32 %v9025, 0.0
      %v9044 = vmax.f32 %v9026, 0.0
      %v9045 = vmax.f32 %v9027, 0.0
      %v9046 = vmax.f32 %v9028, 0.0
      %v9047 = vmax.f32 %v9029, 0.0
      %v9066 = vcombine.high %v9030, %v9030
      %v9067 = vcombine.high %v9031, %v9031
      %v9068 = vcombine.high %v9032, %v9032
      %v9069 = vcombine.high %v9033, %v9033
      %v9070 = vcombine.high %v9034, %v9034
      %v9071 = vcombine.high %v9035, %v9035
      %v9072 = vcombine.high %v9036, %v9036
      %v9073 = vcombine.high %v9037, %v9037
      %v9074 = vcombine.high %v9038, %v9038
      %v9075 = vcombine.high %v9039, %v9039
      %v9076 = vcombine.high %v9040, %v9040
      %v9077 = vcombine.high %v9041, %v9041
      %v9078 = vcombine.high %v9042, %v9042
      %v9079 = vcombine.high %v9043, %v9043
      %v9080 = vcombine.high %v9044, %v9044
      %v9081 = vcombine.high %v9045, %v9045
      %v9082 = vcombine.high %v9046, %v9046
      %v9083 = vcombine.high %v9047, %v9047
      %v9090 = vcombine.low %v9030, %v9066
      %v9091 = vcombine.low %v9067, %v9032
      %v9092 = vcombine.low %v9033, %v9069
      %v9093 = vcombine.low %v9070, %v9035
      %v9094 = vcombine.low %v9036, %v9072
      %v9095 = vcombine.low %v9073, %v9038
      %v9096 = vcombine.low %v9039, %v9075
      %v9097 = vcombine.low %v9076, %v9041
      %v9098 = vcombine.low %v9042, %v9078
      %v9099 = vcombine.low %v9079, %v9044
      %v9100 = vcombine.low %v9045, %v9081
      %v9101 = vcombine.low %v9082, %v9047
      %9114 = vst [vmem:[%s325] sm:$0xff] %v9090
      %9115 = vst [vmem:[%s325 + $0x8] sm:$0xf] %v9031
      %9116 = vst [vmem:[%s325 + $0x10] sm:$0xff] %v9091
      %9117 = vst [vmem:[%s325 + $0x18] sm:$0xf] %v9068
      %9118 = vst [vmem:[%s325 + $0x20] sm:$0xff] %v9092
      %9119 = vst [vmem:[%s325 + $0x28] sm:$0xf] %v9034
      %9120 = vst [vmem:[%s325 + $0x30] sm:$0xff] %v9093
      %9121 = vst [vmem:[%s325 + $0x38] sm:$0xf] %v9071
      %9122 = vst [vmem:[%s325 + $0x40] sm:$0xff] %v9094
      %9123 = vst [vmem:[%s325 + $0x48] sm:$0xf] %v9037
      %9124 = vst [vmem:[%s325 + $0x50] sm:$0xff] %v9095
      %9125 = vst [vmem:[%s325 + $0x58] sm:$0xf] %v9074
      %9126 = vst [vmem:[%s325 + $0x60] sm:$0xff] %v9096
      %9127 = vst [vmem:[%s325 + $0x68] sm:$0xf] %v9040
      %9128 = vst [vmem:[%s325 + $0x70] sm:$0xff] %v9097
      %9129 = vst [vmem:[%s325 + $0x78] sm:$0xf] %v9077
      %9130 = vst [vmem:[%s325 + $0x80] sm:$0xff] %v9098
      %9131 = vst [vmem:[%s325 + $0x88] sm:$0xf] %v9043
      %9132 = vst [vmem:[%s325 + $0x90] sm:$0xff] %v9099
      %9133 = vst [vmem:[%s325 + $0x98] sm:$0xf] %v9080
      %9134 = vst [vmem:[%s325 + $0xa0] sm:$0xff] %v9100
      %9135 = vst [vmem:[%s325 + $0xa8] sm:$0xf] %v9046
      %9136 = vst [vmem:[%s325 + $0xb0] sm:$0xff] %v9101
      %9137 = vst [vmem:[%s325 + $0xb8] sm:$0xf] %v9083
      %p9138 = scmp.lt.s32.totalorder %s19, 1
      %s9139 = scalar_select %p9138, %s19, 1
      %s9140 = smul.addr %s9139, 24
      %s9141 = smul.addr %s9140, 8
      %s9142 = scalar_lea.vmem %s8, %s9141
      // Predicated region
      $region53: #{crop_up_forward.1} parent=51 // pred_check
        %p9143 = pneg %p215
      $region54: #{crop_up_forward.1} parent=51 // pred_check_branch
        %9145 = sbr.rel (%p9143) target = $region56
      $region55: #{crop_up_forward.1} parent=51 // pred_region
        _
      $region56: #{crop_up_forward.1} parent=51 // pred_fallthru
        _
    $region52: #{crop_up_forward.1} parent=5 // pred_fallthru
      _
    %p9146 = scmp.le.s32.totalorder 2, %s14
    // Predicated region
    $region57: #{crop_up_forward.1} parent=5 // pred_check
      %p9147 = pneg %p9146
    $region58: #{crop_up_forward.1} parent=5 // pred_check_branch
      %9149 = sbr.rel (%p9147) target = $region60
    $region59: #{crop_up_forward.1} parent=5 // pred_region
      %s9150 = ssub.s32 %s14, 2
      // Predicated region
      $region61: #{crop_up_forward.1} parent=59 // pred_check
        %p9151 = pneg %p221
      $region62: #{crop_up_forward.1} parent=59 // pred_check_branch
        %9153 = sbr.rel (%p9151) target = $region64
      $region63: #{crop_up_forward.1} parent=59 // pred_region
        %p9154 = scmp.lt.s32.totalorder %s20, 1
        %s9155 = scalar_select %p9154, %s20, 1
        %s9156 = smul.addr %s9155, 24
        %s9157 = smul.addr %s9156, 8
        %s9158 = scalar_lea.vmem %s8, %s9157
      $region64: #{crop_up_forward.1} parent=59 // pred_fallthru
        _
    $region60: #{crop_up_forward.1} parent=5 // pred_fallthru
      _
  $region6: #{crop_up_forward.1} parent=0 // loop_footer
    %s18 = sadd.s32 1, %s14
  $region7: #{crop_up_forward.1} parent=0 // loop_footer_branch
    %13 = sbr.rel target = $region3
  $region8: #{crop_up_forward.1} parent=0 // loop_exit
    _

</llo_original>
